<compile_context>
chip_gen: v7x
topology: tpu7x:2x2x1
jax: 0.10.0
libtpu: 0.0.40
codegen_flags: <defaults>
</compile_context>

<pallas_src>
import functools

import jax
import jax.numpy as jnp
from jax.experimental import pallas as pl
from jax.experimental.pallas import tpu as pltpu

# ----------------------------- model hyper-params (scaled down) ----------------------
IMG = 32              # input resolution (224 in the original)
FEAT_DIM = 256        # stands in for features_dim (2048 in res50)
LOW_FEAT = 64         # stands in for low_feat_dim (512)
C1, C2, C3 = 32, LOW_FEAT, 128   # conv stage widths
N_VERTS = 64          # stands in for 778 MANO verts
N_JOINTS = 21         # Frei joint convention
ROOT_ID = 9           # same as the PyTorch module
POSE_NCOMP = 48       # ncomps for 'mano': [10, 48, None]
SHAPE_NCOMP = 10
N_FACES = 32
PRM_DIM = POSE_NCOMP + SHAPE_NCOMP + 4      # 62 raw hand-encoder outputs
PRM_PAD = 64                                # lane-padded params width
BLEND_IN = POSE_NCOMP + SHAPE_NCOMP         # 58 (= [theta | beta])
J3 = N_JOINTS * 3                           # 63
J3_PAD = 64                                 # lane-padded joints width
V3 = N_VERTS * 3                            # 192 (lane-dense vertex layout)

TAPS = tuple((di, dj) for di in range(3) for dj in range(3))


# ===================================================================================
#  Wrapper-side im2col for stage 1 (3x3, stride 2, pad 1).
#  Rows are ordered phase-major (b, pi, pj, ui, vi) so the conv-1 result can be
#  scattered into zero-padded stride-phase planes with 8 contiguous stores in-kernel.
#  Columns are (di, dj, c) -> lane-dense K=27 (fixes the (17, 3) small-C slab problem).
# ===================================================================================
def _phase_major_im2col(x_nhwc):
    B, H, W, C = x_nhwc.shape
    OH, OW = H // 2, W // 2
    xp = jnp.pad(x_nhwc, ((0, 0), (1, 1), (1, 1), (0, 0)))
    taps = jnp.stack(
        [jnp.stack([xp[:, di:di + 2 * OH:2, dj:dj + 2 * OW:2, :] for dj in range(3)],
                   axis=3)
         for di in range(3)], axis=3)                      # (B, OH, OW, 3, 3, C)
    k = taps.reshape(B, OH, OW, 9 * C)
    k = k.reshape(B, OH // 2, 2, OW // 2, 2, 9 * C)        # oh = 2*ui + rp
    k = k.transpose(0, 2, 4, 1, 3, 5)                      # (b, rp, cp, ui, vi, K)
    k = k[:, ::-1, ::-1]                                   # index by (pi, pj) = (1-rp, 1-cp)
    return k.reshape(B * OH * OW, 9 * C).astype(jnp.bfloat16)


# ===================================================================================
#  Single fused kernel: encoder + light estimator + hand encoder + MANO + centering.
# ===================================================================================
def _fused_forward_kernel(
        # inputs
        p1_ref, w1_ref, b1_ref, w2_ref, b2_ref, w3_ref, b3_ref,
        fcw_ref, fcb_ref, lw_ref, lb_ref,
        hw_ref, hb_ref, how_ref, hob_ref,
        bd_ref, vt_ref, rc_ref, tvj_ref, roff_ref,
        # outputs
        prm_o, light_o, joints_o, verts_o, verts_r_o, joints_r_o, skin_o,
        # scratch
        y1p_ref, p2_ref, y2p_ref, p3_ref, stk_ref,
        *, B, root_col):
    f32 = jnp.float32
    bf16 = jnp.bfloat16

    # ---------------- conv1: one dot, M = B*256, K = 27 -----------------------------
    y1 = jnp.maximum(
        jnp.dot(p1_ref[...], w1_ref[...], preferred_element_type=f32) + b1_ref[...],
        0.0)                                                    # (B*256, C1) f32

    # scatter into zero-padded stride-phase planes (contiguous 8x8 block stores)
    y1p_ref[...] = jnp.zeros_like(y1p_ref)
    for b in range(B):
        for pi in range(2):
            for pj in range(2):
                ofs = ((b * 2 + pi) * 2 + pj) * 64
                blk = y1[ofs:ofs + 64, :].reshape(8, 8, C1)
                y1p_ref[b, pi, pj, 1 - pi:9 - pi, 1 - pj:9 - pj, :] = blk

    # ---------------- conv2: taps folded into K (one dot, M = B*64, K = 288) --------
    for t, (di, dj) in enumerate(TAPS):
        src = y1p_ref[:, di % 2, dj % 2, di // 2:di // 2 + 8, dj // 2:dj // 2 + 8, :]
        p2_ref[:, t * C1:(t + 1) * C1] = src.reshape(B * 64, C1).astype(bf16)
    y2 = jnp.maximum(
        jnp.dot(p2_ref[...], w2_ref[...], preferred_element_type=f32) + b2_ref[...],
        0.0)                                                    # (B*64, C2) f32
    pooled_low = jnp.mean(y2.reshape(B, 64, C2), axis=1)        # low_features GAP

    # scatter conv2 output into padded phase planes (64 tiny per-pixel stores; this
    # avoids any strided loads/stores for the stride-2 resample).
    y2p_ref[...] = jnp.zeros_like(y2p_ref)
    y2v = y2.reshape(B, 8, 8, C2)
    for oh in range(8):
        for ow in range(8):
            y2p_ref[:, (oh + 1) % 2, (ow + 1) % 2,
                    (oh + 1) // 2, (ow + 1) // 2, :] = y2v[:, oh, ow, :]

    # ---------------- conv3: taps folded into K (one dot, M = B*16, K = 576) --------
    for t, (di, dj) in enumerate(TAPS):
        src = y2p_ref[:, di % 2, dj % 2, di // 2:di // 2 + 4, dj // 2:dj // 2 + 4, :]
        p3_ref[:, t * C2:(t + 1) * C2] = src.reshape(B * 16, C2).astype(bf16)
    y3 = jnp.maximum(
        jnp.dot(p3_ref[...], w3_ref[...], preferred_element_type=f32) + b3_ref[...],
        0.0)                                                    # (B*16, C3) f32
    pooled3 = jnp.mean(y3.reshape(B, 16, C3), axis=1)           # features GAP

    # ---------------- encoder FC + LightEstimator -----------------------------------
    feats = jnp.dot(pooled3.astype(bf16), fcw_ref[...],
                    preferred_element_type=f32) + fcb_ref[...]  # (B, FEAT_DIM)
    lraw = jnp.dot(pooled_low.astype(bf16), lw_ref[...],
                   preferred_element_type=f32) + lb_ref[...]    # (B, 6)
    colors = jax.nn.sigmoid(lraw[:, 0:3])
    d = lraw[:, 3:6]
    dirs = d * jax.lax.rsqrt(jnp.sum(d * d, axis=-1, keepdims=True) + 1e-8)
    light_o[:, 0:3] = colors
    light_o[:, 3:6] = dirs

    # ---------------- HandEncoder MLP ------------------------------------------------
    h = jnp.maximum(jnp.dot(feats.astype(bf16), hw_ref[...],
                            preferred_element_type=f32) + hb_ref[...], 0.0)
    prm = jnp.dot(h.astype(bf16), how_ref[...],
                  preferred_element_type=f32) + hob_ref[...]    # (B, 64)
    prm_o[...] = prm

    trans = prm[:, BLEND_IN:BLEND_IN + 3]
    scale1 = 1.0 + prm[:, BLEND_IN + 3:BLEND_IN + 4]

    # ---------------- simplified MyMANOLayer (both passes share one blend dot) ------
    # TODO(synk): full MANO LBS (rodrigues / skinning) is replaced by a linear blend.
    blend_in = prm[:, 0:BLEND_IN]                               # [theta | beta]
    lane = jax.lax.broadcasted_iota(jnp.int32, blend_in.shape, 1)
    blend_in_r = jnp.where(lane < 3, 0.0, blend_in)             # zero global rotation
    stk_ref[0:B, 0:BLEND_IN] = blend_in
    stk_ref[B:2 * B, 0:BLEND_IN] = blend_in_r
    off2 = jnp.dot(stk_ref[0:2 * B, 0:BLEND_IN].astype(bf16), bd_ref[...],
                   preferred_element_type=f32)                  # (2B, V3)

    trans_t = jnp.dot(trans, tvj_ref[:, 0:V3], preferred_element_type=f32)
    verts = (vt_ref[...] + off2[0:B]) * scale1 + trans_t        # (B, V3)
    verts_r = (vt_ref[...] + off2[B:2 * B]) * scale1 + trans_t

    # ---------------- joint regression: both passes share one (R_frei|R_reg) dot ----
    stk_ref[0:B, 0:V3] = verts
    stk_ref[B:2 * B, 0:V3] = verts_r
    joints2 = jnp.dot(stk_ref[0:2 * B, 0:V3], rc_ref[...],
                      preferred_element_type=f32)               # (2B, 128)
    joints_f = joints2[0:B, 0:J3_PAD]                           # Frei joints, main pass
    joints_rr = joints2[B:2 * B, J3_PAD:2 * J3_PAD]             # J_reg joints, _r pass

    # ---------------- root centering: one (Tv|Tj) broadcast dot for both centers ----
    root = joints_f[:, root_col * 3:root_col * 3 + 3]
    center = joints_rr[:, 15:18]                                # joint 5 of the _r pass
    stk_ref[0:B, 0:3] = root
    stk_ref[B:2 * B, 0:3] = center
    cen_off = jnp.dot(stk_ref[0:2 * B, 0:3], tvj_ref[...],
                      preferred_element_type=f32)               # (2B, V3 + 64)
    root_v = cen_off[0:B, 0:V3]
    root_j = cen_off[0:B, V3:V3 + J3_PAD]
    cen_v = cen_off[B:2 * B, 0:V3]
    cen_j = cen_off[B:2 * B, V3:V3 + J3_PAD]

    joints_o[...] = joints_f - root_j
    verts_o[...] = verts - root_v
    skin_o[...] = verts - root_v + roff_ref[...]
    verts_r_o[...] = verts_r - cen_v
    joints_r_o[...] = joints_rr - cen_j


def fused_forward_pallas(patch1, p, B, root_col):
    out_shape = (
        jax.ShapeDtypeStruct((B, PRM_PAD), jnp.float32),   # raw hand params (padded)
        jax.ShapeDtypeStruct((B, 6), jnp.float32),         # light: colors | directions
        jax.ShapeDtypeStruct((B, J3_PAD), jnp.float32),    # centered Frei joints (flat)
        jax.ShapeDtypeStruct((B, V3), jnp.float32),        # centered mano_verts (flat)
        jax.ShapeDtypeStruct((B, V3), jnp.float32),        # centered mano_verts_r
        jax.ShapeDtypeStruct((B, J3_PAD), jnp.float32),    # centered mano_joints_r
        jax.ShapeDtypeStruct((B, V3), jnp.float32),        # skin mesh vertices
    )
    scratch = [
        pltpu.VMEM((B, 2, 2, 9, 9, C1), jnp.float32),      # padded phase planes of y1
        pltpu.VMEM((B * 64, 9 * C1), jnp.bfloat16),        # conv2 im2col patch
        pltpu.VMEM((B, 2, 2, 5, 5, C2), jnp.float32),      # padded phase planes of y2
        pltpu.VMEM((B * 16, 9 * C2), jnp.bfloat16),        # conv3 im2col patch
        pltpu.VMEM((2 * B, V3), jnp.float32),              # row-stacking staging buffer
    ]
    kernel = functools.partial(_fused_forward_kernel, B=B, root_col=root_col)
    return pl.pallas_call(kernel, out_shape=out_shape, scratch_shapes=scratch)(
        patch1, p["w1"], p["b1"], p["w2"], p["b2"], p["w3"], p["b3"],
        p["fc_w"], p["fc_b"], p["light_w"], p["light_b"],
        p["he_h_w"], p["he_h_b"], p["he_o_w"], p["he_o_b"],
        p["blenddirs"], p["v_template"], p["R_cat"], p["Tvj"], p["root_flat"])


# ----------------------------- parameter init (deterministic, synthetic) -------------
def init_params(key):
    ks = jax.random.split(key, 24)
    bf16 = jnp.bfloat16

    def dense(k, shape, fan_in):
        return jax.random.normal(k, shape, jnp.float32) / jnp.sqrt(float(fan_in))

    def conv_w(k, cin, cout):
        # (3,3,cin,cout) -> (9*cin, cout); rows ordered (di, dj, c) to match the patches
        return dense(k, (3, 3, cin, cout), 9 * cin).reshape(9 * cin, cout).astype(bf16)

    p = {}
    # base_encoder (ResEncoder, scaled-down res18-like)
    p["w1"] = conv_w(ks[0], 3, C1)
    p["b1"] = 0.1 * jax.random.normal(ks[1], (1, C1), jnp.float32)
    p["w2"] = conv_w(ks[2], C1, C2)
    p["b2"] = 0.1 * jax.random.normal(ks[3], (1, C2), jnp.float32)
    p["w3"] = conv_w(ks[4], C2, C3)
    p["b3"] = 0.1 * jax.random.normal(ks[5], (1, C3), jnp.float32)
    p["fc_w"] = dense(ks[6], (C3, FEAT_DIM), C3).astype(bf16)
    p["fc_b"] = 0.1 * jax.random.normal(ks[7], (1, FEAT_DIM), jnp.float32)
    # LightEstimator(low_feat_dim) -> 3 colors + 3 directions
    p["light_w"] = dense(ks[8], (LOW_FEAT, 6), LOW_FEAT).astype(bf16)
    p["light_b"] = 0.1 * jax.random.normal(ks[9], (1, 6), jnp.float32)
    # HandEncoder MLP: features -> [pose(48) | shape(10) | trans(3) | scale(1)] (pad 64)
    p["he_h_w"] = dense(ks[10], (FEAT_DIM, 128), FEAT_DIM).astype(bf16)
    p["he_h_b"] = 0.1 * jax.random.normal(ks[11], (1, 128), jnp.float32)
    he_o = dense(ks[12], (128, PRM_DIM), 128)
    p["he_o_w"] = jnp.pad(he_o, ((0, 0), (0, PRM_PAD - PRM_DIM))).astype(bf16)
    he_ob = 0.1 * jax.random.normal(ks[13], (1, PRM_DIM), jnp.float32)
    p["he_o_b"] = jnp.pad(he_ob, ((0, 0), (0, PRM_PAD - PRM_DIM)))
    # synthetic MANO layer (MyMANOLayer), flat (V*3) layout
    posedirs = 0.01 * jax.random.normal(ks[14], (POSE_NCOMP, V3), jnp.float32)
    shapedirs = 0.01 * jax.random.normal(ks[15], (SHAPE_NCOMP, V3), jnp.float32)
    p["blenddirs"] = jnp.concatenate([posedirs, shapedirs], axis=0).astype(bf16)  # (58, V3)
    p["v_template"] = (0.1 * jax.random.normal(ks[16], (N_VERTS, 3),
                                               jnp.float32)).reshape(1, V3)
    eye3 = jnp.eye(3, dtype=jnp.float32)
    jf = jax.random.uniform(ks[17], (N_JOINTS, N_VERTS), jnp.float32)
    jf = jf / jf.sum(axis=1, keepdims=True)
    jr = jax.random.uniform(ks[18], (N_JOINTS, N_VERTS), jnp.float32)
    jr = jr / jr.sum(axis=1, keepdims=True)
    R_frei = jnp.pad(jnp.kron(jf.T, eye3), ((0, 0), (0, J3_PAD - J3)))   # (V3, 64)
    R_reg = jnp.pad(jnp.kron(jr.T, eye3), ((0, 0), (0, J3_PAD - J3)))    # (V3, 64)
    p["R_cat"] = jnp.concatenate([R_frei, R_reg], axis=1)                # (V3, 128)
    Tv = jnp.kron(jnp.ones((1, N_VERTS), jnp.float32), eye3)             # (3, V3)
    Tj = jnp.pad(jnp.kron(jnp.ones((1, N_JOINTS), jnp.float32), eye3),
                 ((0, 0), (0, J3_PAD - J3)))                             # (3, 64)
    p["Tvj"] = jnp.concatenate([Tv, Tj], axis=1)                         # (3, V3+64)
    p["root_flat"] = jnp.tile(jnp.array([[0.0142, 0.0153, 0.9144]], jnp.float32),
                              (1, N_VERTS))                              # (1, V3)
    # TODO(synk): real MANO faces come from assets/mano/MANO_RIGHT.pkl; synthesized here.
    p["mano_face"] = (jnp.arange(N_FACES * 3, dtype=jnp.int32).reshape(1, N_FACES, 3)
                      % N_VERTS).astype(jnp.int16)
    return p


# ----------------------------- full forward -----------------------------------------
@functools.partial(jax.jit, static_argnames=("dat_name", "mode_train"))
def model_forward(params, images_nchw, dat_name="FreiHand", mode_train=True):
    B = images_nchw.shape[0]
    x = jnp.transpose(images_nchw, (0, 2, 3, 1)).astype(jnp.float32)     # NHWC
    patch1 = _phase_major_im2col(x)                                      # (B*256, 27) bf16
    root_col = 0 if (dat_name == "HO3D" and not mode_train) else ROOT_ID

    prm, light, joints_f, verts_f, verts_r_f, joints_r_f, skin_f = fused_forward_pallas(
        patch1, params, B, root_col)

    outputs = {
        "pose_params": prm[:, :POSE_NCOMP],
        "shape_params": prm[:, POSE_NCOMP:POSE_NCOMP + SHAPE_NCOMP],
        "trans": prm[:, BLEND_IN:BLEND_IN + 3],
        "scale": prm[:, BLEND_IN + 3:PRM_DIM],
        "joints": joints_f[:, :J3].reshape(B, N_JOINTS, 3),
        "mano_verts": verts_f.reshape(B, N_VERTS, 3),
        "mano_verts_r": verts_r_f.reshape(B, N_VERTS, 3),
        "mano_joints_r": joints_r_f[:, :J3].reshape(B, N_JOINTS, 3),
        # TODO(synk): skin_meshes is a pytorch3d Meshes in the original; here a vert array.
        "skin_meshes": skin_f.reshape(B, N_VERTS, 3),
        "mano_faces": jnp.tile(params["mano_face"], (B, 1, 1)),
        "light_params": {"colors": light[:, :3], "directions": light[:, 3:6]},
    }
    # TODO(synk): ifRender branch (pytorch3d rasterizer / HardPhongShader) has no Pallas equivalent.
    return outputs


# ----------------------------- pure-JAX reference (same math, no Pallas) -------------
def reference_forward(params, images_nchw):
    f32, bf16 = jnp.float32, jnp.bfloat16
    B = images_nchw.shape[0]
    x = jnp.transpose(images_nchw, (0, 2, 3, 1)).astype(f32)

    def conv(xin, w, b):
        Bb, H, W, C = xin.shape
        OH, OW = H // 2, W // 2
        xp = jnp.pad(xin, ((0, 0), (1, 1), (1, 1), (0, 0)))
        taps = jnp.stack(
            [jnp.stack([xp[:, di:di + 2 * OH:2, dj:dj + 2 * OW:2, :] for dj in range(3)],
                       axis=3) for di in range(3)], axis=3)
        patch = taps.reshape(Bb * OH * OW, 9 * C).astype(bf16)
        y = jnp.maximum(jnp.dot(patch, w, preferred_element_type=f32) + b, 0.0)
        return y.reshape(Bb, OH, OW, -1)

    y1 = conv(x, params["w1"], params["b1"])
    y2 = conv(y1, params["w2"], params["b2"])
    y3 = conv(y2, params["w3"], params["b3"])
    pooled_low = jnp.mean(y2.reshape(B, -1, C2), axis=1)
    pooled3 = jnp.mean(y3.reshape(B, -1, C3), axis=1)
    feats = jnp.dot(pooled3.astype(bf16), params["fc_w"], preferred_element_type=f32) + params["fc_b"]
    lraw = jnp.dot(pooled_low.astype(bf16), params["light_w"], preferred_element_type=f32) + params["light_b"]
    colors = jax.nn.sigmoid(lraw[:, :3])
    d = lraw[:, 3:6]
    dirs = d * jax.lax.rsqrt(jnp.sum(d * d, axis=-1, keepdims=True) + 1e-8)
    h = jnp.maximum(jnp.dot(feats.astype(bf16), params["he_h_w"], preferred_element_type=f32) + params["he_h_b"], 0.0)
    prm = jnp.dot(h.astype(bf16), params["he_o_w"], preferred_element_type=f32) + params["he_o_b"]
    blend_in = prm[:, :BLEND_IN]
    blend_in_r = blend_in.at[:, :3].set(0.0)
    off = jnp.dot(blend_in.astype(bf16), params["blenddirs"], preferred_element_type=f32)
    off_r = jnp.dot(blend_in_r.astype(bf16), params["blenddirs"], preferred_element_type=f32)
    trans = prm[:, BLEND_IN:BLEND_IN + 3]
    scale1 = 1.0 + prm[:, BLEND_IN + 3:BLEND_IN + 4]
    trans_t = jnp.dot(trans, params["Tvj"][:, :V3], preferred_element_type=f32)
    verts = (params["v_template"] + off) * scale1 + trans_t
    verts_r = (params["v_template"] + off_r) * scale1 + trans_t
    jf = jnp.dot(verts, params["R_cat"][:, :J3_PAD], preferred_element_type=f32)
    jrr = jnp.dot(verts_r, params["R_cat"][:, J3_PAD:], preferred_element_type=f32)
    root = jf[:, ROOT_ID * 3:ROOT_ID * 3 + 3]
    center = jrr[:, 15:18]
    root_v = jnp.dot(root, params["Tvj"][:, :V3], preferred_element_type=f32)
    root_j = jnp.dot(root, params["Tvj"][:, V3:], preferred_element_type=f32)
    cen_v = jnp.dot(center, params["Tvj"][:, :V3], preferred_element_type=f32)
    cen_j = jnp.dot(center, params["Tvj"][:, V3:], preferred_element_type=f32)
    return {
        "joints": jf - root_j, "verts": verts - root_v,
        "verts_r": verts_r - cen_v, "joints_r": jrr - cen_j,
        "skin": verts - root_v + params["root_flat"],
        "prm": prm, "light": jnp.concatenate([colors, dirs], axis=-1),
    }


# ----------------------------- main ---------------------------------------------------
if __name__ == "__main__":
    key_in = jax.random.PRNGKey(0)
    key_w = jax.random.PRNGKey(42)

    images = jax.random.normal(key_in, (2, 3, IMG, IMG), jnp.float32)    # NCHW, small
    params = init_params(key_w)

    outputs = model_forward(params, images, dat_name="FreiHand", mode_train=True)
    outputs = jax.block_until_ready(outputs)
    B = images.shape[0]

    # structural checks
    assert outputs["joints"].shape == (B, N_JOINTS, 3)
    assert outputs["mano_verts"].shape == (B, N_VERTS, 3)
    assert outputs["mano_verts_r"].shape == (B, N_VERTS, 3)
    assert outputs["mano_joints_r"].shape == (B, N_JOINTS, 3)
    assert outputs["skin_meshes"].shape == (B, N_VERTS, 3)
    assert outputs["mano_faces"].shape == (B, N_FACES, 3)
    assert outputs["pose_params"].shape == (B, POSE_NCOMP)
    assert outputs["light_params"]["colors"].shape == (B, 3)
    for k in ("joints", "mano_verts", "mano_verts_r", "mano_joints_r", "skin_meshes"):
        assert bool(jnp.all(jnp.isfinite(outputs[k]))), k

    # numerical check against a pure-JAX implementation of the same math
    ref = jax.jit(reference_forward)(params, images)
    ref = jax.block_until_ready(ref)

    def maxdiff(a, b):
        return float(jnp.max(jnp.abs(a - b)))

    checks = {
        "joints": (outputs["joints"].reshape(B, -1), ref["joints"][:, :J3]),
        "mano_verts": (outputs["mano_verts"].reshape(B, -1), ref["verts"]),
        "mano_verts_r": (outputs["mano_verts_r"].reshape(B, -1), ref["verts_r"]),
        "mano_joints_r": (outputs["mano_joints_r"].reshape(B, -1), ref["joints_r"][:, :J3]),
        "skin_meshes": (outputs["skin_meshes"].reshape(B, -1), ref["skin"]),
        "pose_params": (outputs["pose_params"], ref["prm"][:, :POSE_NCOMP]),
        "light": (jnp.concatenate([outputs["light_params"]["colors"],
                                   outputs["light_params"]["directions"]], axis=-1),
                  ref["light"]),
    }
    for name, (a, b) in checks.items():
        d = maxdiff(a, b)
        assert d < 2e-2, f"{name} mismatch vs reference: max|diff| = {d}"

    # root joint must be re-centred (numerically) to the origin
    assert float(jnp.max(jnp.abs(outputs["joints"][:, ROOT_ID, :]))) < 1e-3
    print("KERNEL_OK")
</pallas_src>

<mosaic_0001>
module attributes {stable_mosaic.version = 11 : i64} {
  func.func @_fused_forward_kernel(%arg0: memref<512x27xbf16, #tpu.memory_space<vmem>>, %arg1: memref<27x32xbf16, #tpu.memory_space<vmem>>, %arg2: memref<1x32xf32, #tpu.memory_space<vmem>>, %arg3: memref<288x64xbf16, #tpu.memory_space<vmem>>, %arg4: memref<1x64xf32, #tpu.memory_space<vmem>>, %arg5: memref<576x128xbf16, #tpu.memory_space<vmem>>, %arg6: memref<1x128xf32, #tpu.memory_space<vmem>>, %arg7: memref<128x256xbf16, #tpu.memory_space<vmem>>, %arg8: memref<1x256xf32, #tpu.memory_space<vmem>>, %arg9: memref<64x6xbf16, #tpu.memory_space<vmem>>, %arg10: memref<1x6xf32, #tpu.memory_space<vmem>>, %arg11: memref<256x128xbf16, #tpu.memory_space<vmem>>, %arg12: memref<1x128xf32, #tpu.memory_space<vmem>>, %arg13: memref<128x64xbf16, #tpu.memory_space<vmem>>, %arg14: memref<1x64xf32, #tpu.memory_space<vmem>>, %arg15: memref<58x192xbf16, #tpu.memory_space<vmem>>, %arg16: memref<1x192xf32, #tpu.memory_space<vmem>>, %arg17: memref<192x128xf32, #tpu.memory_space<vmem>>, %arg18: memref<3x256xf32, #tpu.memory_space<vmem>>, %arg19: memref<1x192xf32, #tpu.memory_space<vmem>>, %arg20: memref<2x64xf32, #tpu.memory_space<vmem>>, %arg21: memref<2x6xf32, #tpu.memory_space<vmem>>, %arg22: memref<2x64xf32, #tpu.memory_space<vmem>>, %arg23: memref<2x192xf32, #tpu.memory_space<vmem>>, %arg24: memref<2x192xf32, #tpu.memory_space<vmem>>, %arg25: memref<2x64xf32, #tpu.memory_space<vmem>>, %arg26: memref<2x192xf32, #tpu.memory_space<vmem>>, %arg27: memref<2x2x2x9x9x32xf32, #tpu.memory_space<vmem>>, %arg28: memref<128x288xbf16, #tpu.memory_space<vmem>>, %arg29: memref<2x2x2x5x5x64xf32, #tpu.memory_space<vmem>>, %arg30: memref<32x576xbf16, #tpu.memory_space<vmem>>, %arg31: memref<4x192xf32, #tpu.memory_space<vmem>>) attributes {dimension_semantics = [], scalar_prefetch = 0 : i64, scratch_operands = 5 : i64, tpu.core_type = #tpu.core_type<tc>} {
    %c0 = arith.constant 0 : index
    %c0_0 = arith.constant 0 : index
    %0 = vector.load %arg0[%c0, %c0_0] : memref<512x27xbf16, #tpu.memory_space<vmem>>, vector<512x27xbf16>
    %c0_1 = arith.constant 0 : index
    %c0_2 = arith.constant 0 : index
    %1 = vector.load %arg1[%c0_1, %c0_2] : memref<27x32xbf16, #tpu.memory_space<vmem>>, vector<27x32xbf16>
    %cst = arith.constant dense<0.000000e+00> : vector<512x32xf32>
    %2 = tpu.matmul %0, %1, %cst {dimension_numbers = #tpu.dot_dimension_numbers<[1], [0], [0], [1], [0, 0, 1, 1], [], []>} : vector<512x27xbf16>, vector<27x32xbf16>, vector<512x32xf32> -> vector<512x32xf32>
    %c0_3 = arith.constant 0 : index
    %c0_4 = arith.constant 0 : index
    %3 = vector.load %arg2[%c0_3, %c0_4] : memref<1x32xf32, #tpu.memory_space<vmem>>, vector<1x32xf32>
    %4 = vector.broadcast %3 : vector<1x32xf32> to vector<512x32xf32>
    %5 = arith.addf %2, %4 : vector<512x32xf32>
    %cst_5 = arith.constant 0.000000e+00 : f32
    %6 = vector.broadcast %cst_5 : f32 to vector<512x32xf32>
    %7 = arith.maximumf %5, %6 : vector<512x32xf32>
    %cst_6 = arith.constant 0.000000e+00 : f32
    %8 = vector.broadcast %cst_6 : f32 to vector<2x2x2x9x9x32xf32>
    %c0_7 = arith.constant 0 : index
    %c0_8 = arith.constant 0 : index
    %c0_9 = arith.constant 0 : index
    %c0_10 = arith.constant 0 : index
    %c0_11 = arith.constant 0 : index
    %c0_12 = arith.constant 0 : index
    %9 = vector.load %arg27[%c0_7, %c0_8, %c0_9, %c0_10, %c0_11, %c0_12] : memref<2x2x2x9x9x32xf32, #tpu.memory_space<vmem>>, vector<2x2x2x9x9x32xf32>
    tpu.vector_store %arg27[%c0_7, %c0_8, %c0_9, %c0_10, %c0_11, %c0_12], %8 {strides = array<i32>} : memref<2x2x2x9x9x32xf32, #tpu.memory_space<vmem>>, vector<2x2x2x9x9x32xf32>,
    %10 = vector.extract_strided_slice %7 {offsets = [0, 0], sizes = [64, 32], strides = [1, 1]} : vector<512x32xf32> to vector<64x32xf32>
    %11 = vector.shape_cast %10 : vector<64x32xf32> to vector<8x8x32xf32>
    %c0_13 = arith.constant 0 : index
    %c0_14 = arith.constant 0 : index
    %c0_15 = arith.constant 0 : index
    %c1 = arith.constant 1 : index
    %c1_16 = arith.constant 1 : index
    %c0_17 = arith.constant 0 : index
    %12 = vector.load %arg27[%c0_13, %c0_14, %c0_15, %c1, %c1_16, %c0_17] : memref<2x2x2x9x9x32xf32, #tpu.memory_space<vmem>>, vector<1x1x1x8x8x32xf32>
    %13 = vector.shape_cast %12 : vector<1x1x1x8x8x32xf32> to vector<8x8x32xf32>
    %14 = vector.shape_cast %11 : vector<8x8x32xf32> to vector<1x1x1x8x8x32xf32>
    tpu.vector_store %arg27[%c0_13, %c0_14, %c0_15, %c1, %c1_16, %c0_17], %14 {strides = array<i32>} : memref<2x2x2x9x9x32xf32, #tpu.memory_space<vmem>>, vector<1x1x1x8x8x32xf32>,
    %15 = vector.extract_strided_slice %7 {offsets = [64, 0], sizes = [64, 32], strides = [1, 1]} : vector<512x32xf32> to vector<64x32xf32>
    %16 = vector.shape_cast %15 : vector<64x32xf32> to vector<8x8x32xf32>
    %c0_18 = arith.constant 0 : index
    %c0_19 = arith.constant 0 : index
    %c1_20 = arith.constant 1 : index
    %c1_21 = arith.constant 1 : index
    %c0_22 = arith.constant 0 : index
    %c0_23 = arith.constant 0 : index
    %17 = vector.load %arg27[%c0_18, %c0_19, %c1_20, %c1_21, %c0_22, %c0_23] : memref<2x2x2x9x9x32xf32, #tpu.memory_space<vmem>>, vector<1x1x1x8x8x32xf32>
    %18 = vector.shape_cast %17 : vector<1x1x1x8x8x32xf32> to vector<8x8x32xf32>
    %19 = vector.shape_cast %16 : vector<8x8x32xf32> to vector<1x1x1x8x8x32xf32>
    tpu.vector_store %arg27[%c0_18, %c0_19, %c1_20, %c1_21, %c0_22, %c0_23], %19 {strides = array<i32>} : memref<2x2x2x9x9x32xf32, #tpu.memory_space<vmem>>, vector<1x1x1x8x8x32xf32>,
    %20 = vector.extract_strided_slice %7 {offsets = [128, 0], sizes = [64, 32], strides = [1, 1]} : vector<512x32xf32> to vector<64x32xf32>
    %21 = vector.shape_cast %20 : vector<64x32xf32> to vector<8x8x32xf32>
    %c0_24 = arith.constant 0 : index
    %c1_25 = arith.constant 1 : index
    %c0_26 = arith.constant 0 : index
    %c0_27 = arith.constant 0 : index
    %c1_28 = arith.constant 1 : index
    %c0_29 = arith.constant 0 : index
    %22 = vector.load %arg27[%c0_24, %c1_25, %c0_26, %c0_27, %c1_28, %c0_29] : memref<2x2x2x9x9x32xf32, #tpu.memory_space<vmem>>, vector<1x1x1x8x8x32xf32>
    %23 = vector.shape_cast %22 : vector<1x1x1x8x8x32xf32> to vector<8x8x32xf32>
    %24 = vector.shape_cast %21 : vector<8x8x32xf32> to vector<1x1x1x8x8x32xf32>
    tpu.vector_store %arg27[%c0_24, %c1_25, %c0_26, %c0_27, %c1_28, %c0_29], %24 {strides = array<i32>} : memref<2x2x2x9x9x32xf32, #tpu.memory_space<vmem>>, vector<1x1x1x8x8x32xf32>,
    %25 = vector.extract_strided_slice %7 {offsets = [192, 0], sizes = [64, 32], strides = [1, 1]} : vector<512x32xf32> to vector<64x32xf32>
    %26 = vector.shape_cast %25 : vector<64x32xf32> to vector<8x8x32xf32>
    %c0_30 = arith.constant 0 : index
    %c1_31 = arith.constant 1 : index
    %c1_32 = arith.constant 1 : index
    %c0_33 = arith.constant 0 : index
    %c0_34 = arith.constant 0 : index
    %c0_35 = arith.constant 0 : index
    %27 = vector.load %arg27[%c0_30, %c1_31, %c1_32, %c0_33, %c0_34, %c0_35] : memref<2x2x2x9x9x32xf32, #tpu.memory_space<vmem>>, vector<1x1x1x8x8x32xf32>
    %28 = vector.shape_cast %27 : vector<1x1x1x8x8x32xf32> to vector<8x8x32xf32>
    %29 = vector.shape_cast %26 : vector<8x8x32xf32> to vector<1x1x1x8x8x32xf32>
    tpu.vector_store %arg27[%c0_30, %c1_31, %c1_32, %c0_33, %c0_34, %c0_35], %29 {strides = array<i32>} : memref<2x2x2x9x9x32xf32, #tpu.memory_space<vmem>>, vector<1x1x1x8x8x32xf32>,
    %30 = vector.extract_strided_slice %7 {offsets = [256, 0], sizes = [64, 32], strides = [1, 1]} : vector<512x32xf32> to vector<64x32xf32>
    %31 = vector.shape_cast %30 : vector<64x32xf32> to vector<8x8x32xf32>
    %c1_36 = arith.constant 1 : index
    %c0_37 = arith.constant 0 : index
    %c0_38 = arith.constant 0 : index
    %c1_39 = arith.constant 1 : index
    %c1_40 = arith.constant 1 : index
    %c0_41 = arith.constant 0 : index
    %32 = vector.load %arg27[%c1_36, %c0_37, %c0_38, %c1_39, %c1_40, %c0_41] : memref<2x2x2x9x9x32xf32, #tpu.memory_space<vmem>>, vector<1x1x1x8x8x32xf32>
    %33 = vector.shape_cast %32 : vector<1x1x1x8x8x32xf32> to vector<8x8x32xf32>
    %34 = vector.shape_cast %31 : vector<8x8x32xf32> to vector<1x1x1x8x8x32xf32>
    tpu.vector_store %arg27[%c1_36, %c0_37, %c0_38, %c1_39, %c1_40, %c0_41], %34 {strides = array<i32>} : memref<2x2x2x9x9x32xf32, #tpu.memory_space<vmem>>, vector<1x1x1x8x8x32xf32>,
    %35 = vector.extract_strided_slice %7 {offsets = [320, 0], sizes = [64, 32], strides = [1, 1]} : vector<512x32xf32> to vector<64x32xf32>
    %36 = vector.shape_cast %35 : vector<64x32xf32> to vector<8x8x32xf32>
    %c1_42 = arith.constant 1 : index
    %c0_43 = arith.constant 0 : index
    %c1_44 = arith.constant 1 : index
    %c1_45 = arith.constant 1 : index
    %c0_46 = arith.constant 0 : index
    %c0_47 = arith.constant 0 : index
    %37 = vector.load %arg27[%c1_42, %c0_43, %c1_44, %c1_45, %c0_46, %c0_47] : memref<2x2x2x9x9x32xf32, #tpu.memory_space<vmem>>, vector<1x1x1x8x8x32xf32>
    %38 = vector.shape_cast %37 : vector<1x1x1x8x8x32xf32> to vector<8x8x32xf32>
    %39 = vector.shape_cast %36 : vector<8x8x32xf32> to vector<1x1x1x8x8x32xf32>
    tpu.vector_store %arg27[%c1_42, %c0_43, %c1_44, %c1_45, %c0_46, %c0_47], %39 {strides = array<i32>} : memref<2x2x2x9x9x32xf32, #tpu.memory_space<vmem>>, vector<1x1x1x8x8x32xf32>,
    %40 = vector.extract_strided_slice %7 {offsets = [384, 0], sizes = [64, 32], strides = [1, 1]} : vector<512x32xf32> to vector<64x32xf32>
    %41 = vector.shape_cast %40 : vector<64x32xf32> to vector<8x8x32xf32>
    %c1_48 = arith.constant 1 : index
    %c1_49 = arith.constant 1 : index
    %c0_50 = arith.constant 0 : index
    %c0_51 = arith.constant 0 : index
    %c1_52 = arith.constant 1 : index
    %c0_53 = arith.constant 0 : index
    %42 = vector.load %arg27[%c1_48, %c1_49, %c0_50, %c0_51, %c1_52, %c0_53] : memref<2x2x2x9x9x32xf32, #tpu.memory_space<vmem>>, vector<1x1x1x8x8x32xf32>
    %43 = vector.shape_cast %42 : vector<1x1x1x8x8x32xf32> to vector<8x8x32xf32>
    %44 = vector.shape_cast %41 : vector<8x8x32xf32> to vector<1x1x1x8x8x32xf32>
    tpu.vector_store %arg27[%c1_48, %c1_49, %c0_50, %c0_51, %c1_52, %c0_53], %44 {strides = array<i32>} : memref<2x2x2x9x9x32xf32, #tpu.memory_space<vmem>>, vector<1x1x1x8x8x32xf32>,
    %45 = vector.extract_strided_slice %7 {offsets = [448, 0], sizes = [64, 32], strides = [1, 1]} : vector<512x32xf32> to vector<64x32xf32>
    %46 = vector.shape_cast %45 : vector<64x32xf32> to vector<8x8x32xf32>
    %c1_54 = arith.constant 1 : index
    %c1_55 = arith.constant 1 : index
    %c1_56 = arith.constant 1 : index
    %c0_57 = arith.constant 0 : index
    %c0_58 = arith.constant 0 : index
    %c0_59 = arith.constant 0 : index
    %47 = vector.load %arg27[%c1_54, %c1_55, %c1_56, %c0_57, %c0_58, %c0_59] : memref<2x2x2x9x9x32xf32, #tpu.memory_space<vmem>>, vector<1x1x1x8x8x32xf32>
    %48 = vector.shape_cast %47 : vector<1x1x1x8x8x32xf32> to vector<8x8x32xf32>
    %49 = vector.shape_cast %46 : vector<8x8x32xf32> to vector<1x1x1x8x8x32xf32>
    tpu.vector_store %arg27[%c1_54, %c1_55, %c1_56, %c0_57, %c0_58, %c0_59], %49 {strides = array<i32>} : memref<2x2x2x9x9x32xf32, #tpu.memory_space<vmem>>, vector<1x1x1x8x8x32xf32>,
    %c0_60 = arith.constant 0 : index
    %c0_61 = arith.constant 0 : index
    %c0_62 = arith.constant 0 : index
    %c0_63 = arith.constant 0 : index
    %c0_64 = arith.constant 0 : index
    %c0_65 = arith.constant 0 : index
    %50 = vector.load %arg27[%c0_60, %c0_61, %c0_62, %c0_63, %c0_64, %c0_65] : memref<2x2x2x9x9x32xf32, #tpu.memory_space<vmem>>, vector<2x1x1x8x8x32xf32>
    %51 = vector.shape_cast %50 : vector<2x1x1x8x8x32xf32> to vector<2x8x8x32xf32>
    %52 = vector.shape_cast %51 : vector<2x8x8x32xf32> to vector<128x32xf32>
    %53 = arith.truncf %52 : vector<128x32xf32> to vector<128x32xbf16>
    %c0_66 = arith.constant 0 : index
    %c0_67 = arith.constant 0 : index
    %54 = vector.load %arg28[%c0_66, %c0_67] : memref<128x288xbf16, #tpu.memory_space<vmem>>, vector<128x32xbf16>
    tpu.vector_store %arg28[%c0_66, %c0_67], %53 {strides = array<i32>} : memref<128x288xbf16, #tpu.memory_space<vmem>>, vector<128x32xbf16>,
    %c0_68 = arith.constant 0 : index
    %c0_69 = arith.constant 0 : index
    %c1_70 = arith.constant 1 : index
    %c0_71 = arith.constant 0 : index
    %c0_72 = arith.constant 0 : index
    %c0_73 = arith.constant 0 : index
    %55 = vector.load %arg27[%c0_68, %c0_69, %c1_70, %c0_71, %c0_72, %c0_73] : memref<2x2x2x9x9x32xf32, #tpu.memory_space<vmem>>, vector<2x1x1x8x8x32xf32>
    %56 = vector.shape_cast %55 : vector<2x1x1x8x8x32xf32> to vector<2x8x8x32xf32>
    %57 = vector.shape_cast %56 : vector<2x8x8x32xf32> to vector<128x32xf32>
    %58 = arith.truncf %57 : vector<128x32xf32> to vector<128x32xbf16>
    %c0_74 = arith.constant 0 : index
    %c32 = arith.constant 32 : index
    %59 = vector.load %arg28[%c0_74, %c32] : memref<128x288xbf16, #tpu.memory_space<vmem>>, vector<128x32xbf16>
    tpu.vector_store %arg28[%c0_74, %c32], %58 {strides = array<i32>} : memref<128x288xbf16, #tpu.memory_space<vmem>>, vector<128x32xbf16>,
    %c0_75 = arith.constant 0 : index
    %c0_76 = arith.constant 0 : index
    %c0_77 = arith.constant 0 : index
    %c0_78 = arith.constant 0 : index
    %c1_79 = arith.constant 1 : index
    %c0_80 = arith.constant 0 : index
    %60 = vector.load %arg27[%c0_75, %c0_76, %c0_77, %c0_78, %c1_79, %c0_80] : memref<2x2x2x9x9x32xf32, #tpu.memory_space<vmem>>, vector<2x1x1x8x8x32xf32>
    %61 = vector.shape_cast %60 : vector<2x1x1x8x8x32xf32> to vector<2x8x8x32xf32>
    %62 = vector.shape_cast %61 : vector<2x8x8x32xf32> to vector<128x32xf32>
    %63 = arith.truncf %62 : vector<128x32xf32> to vector<128x32xbf16>
    %c0_81 = arith.constant 0 : index
    %c64 = arith.constant 64 : index
    %64 = vector.load %arg28[%c0_81, %c64] : memref<128x288xbf16, #tpu.memory_space<vmem>>, vector<128x32xbf16>
    tpu.vector_store %arg28[%c0_81, %c64], %63 {strides = array<i32>} : memref<128x288xbf16, #tpu.memory_space<vmem>>, vector<128x32xbf16>,
    %c0_82 = arith.constant 0 : index
    %c1_83 = arith.constant 1 : index
    %c0_84 = arith.constant 0 : index
    %c0_85 = arith.constant 0 : index
    %c0_86 = arith.constant 0 : index
    %c0_87 = arith.constant 0 : index
    %65 = vector.load %arg27[%c0_82, %c1_83, %c0_84, %c0_85, %c0_86, %c0_87] : memref<2x2x2x9x9x32xf32, #tpu.memory_space<vmem>>, vector<2x1x1x8x8x32xf32>
    %66 = vector.shape_cast %65 : vector<2x1x1x8x8x32xf32> to vector<2x8x8x32xf32>
    %67 = vector.shape_cast %66 : vector<2x8x8x32xf32> to vector<128x32xf32>
    %68 = arith.truncf %67 : vector<128x32xf32> to vector<128x32xbf16>
    %c0_88 = arith.constant 0 : index
    %c96 = arith.constant 96 : index
    %69 = vector.load %arg28[%c0_88, %c96] : memref<128x288xbf16, #tpu.memory_space<vmem>>, vector<128x32xbf16>
    tpu.vector_store %arg28[%c0_88, %c96], %68 {strides = array<i32>} : memref<128x288xbf16, #tpu.memory_space<vmem>>, vector<128x32xbf16>,
    %c0_89 = arith.constant 0 : index
    %c1_90 = arith.constant 1 : index
    %c1_91 = arith.constant 1 : index
    %c0_92 = arith.constant 0 : index
    %c0_93 = arith.constant 0 : index
    %c0_94 = arith.constant 0 : index
    %70 = vector.load %arg27[%c0_89, %c1_90, %c1_91, %c0_92, %c0_93, %c0_94] : memref<2x2x2x9x9x32xf32, #tpu.memory_space<vmem>>, vector<2x1x1x8x8x32xf32>
    %71 = vector.shape_cast %70 : vector<2x1x1x8x8x32xf32> to vector<2x8x8x32xf32>
    %72 = vector.shape_cast %71 : vector<2x8x8x32xf32> to vector<128x32xf32>
    %73 = arith.truncf %72 : vector<128x32xf32> to vector<128x32xbf16>
    %c0_95 = arith.constant 0 : index
    %c128 = arith.constant 128 : index
    %74 = vector.load %arg28[%c0_95, %c128] : memref<128x288xbf16, #tpu.memory_space<vmem>>, vector<128x32xbf16>
    tpu.vector_store %arg28[%c0_95, %c128], %73 {strides = array<i32>} : memref<128x288xbf16, #tpu.memory_space<vmem>>, vector<128x32xbf16>,
    %c0_96 = arith.constant 0 : index
    %c1_97 = arith.constant 1 : index
    %c0_98 = arith.constant 0 : index
    %c0_99 = arith.constant 0 : index
    %c1_100 = arith.constant 1 : index
    %c0_101 = arith.constant 0 : index
    %75 = vector.load %arg27[%c0_96, %c1_97, %c0_98, %c0_99, %c1_100, %c0_101] : memref<2x2x2x9x9x32xf32, #tpu.memory_space<vmem>>, vector<2x1x1x8x8x32xf32>
    %76 = vector.shape_cast %75 : vector<2x1x1x8x8x32xf32> to vector<2x8x8x32xf32>
    %77 = vector.shape_cast %76 : vector<2x8x8x32xf32> to vector<128x32xf32>
    %78 = arith.truncf %77 : vector<128x32xf32> to vector<128x32xbf16>
    %c0_102 = arith.constant 0 : index
    %c160 = arith.constant 160 : index
    %79 = vector.load %arg28[%c0_102, %c160] : memref<128x288xbf16, #tpu.memory_space<vmem>>, vector<128x32xbf16>
    tpu.vector_store %arg28[%c0_102, %c160], %78 {strides = array<i32>} : memref<128x288xbf16, #tpu.memory_space<vmem>>, vector<128x32xbf16>,
    %c0_103 = arith.constant 0 : index
    %c0_104 = arith.constant 0 : index
    %c0_105 = arith.constant 0 : index
    %c1_106 = arith.constant 1 : index
    %c0_107 = arith.constant 0 : index
    %c0_108 = arith.constant 0 : index
    %80 = vector.load %arg27[%c0_103, %c0_104, %c0_105, %c1_106, %c0_107, %c0_108] : memref<2x2x2x9x9x32xf32, #tpu.memory_space<vmem>>, vector<2x1x1x8x8x32xf32>
    %81 = vector.shape_cast %80 : vector<2x1x1x8x8x32xf32> to vector<2x8x8x32xf32>
    %82 = vector.shape_cast %81 : vector<2x8x8x32xf32> to vector<128x32xf32>
    %83 = arith.truncf %82 : vector<128x32xf32> to vector<128x32xbf16>
    %c0_109 = arith.constant 0 : index
    %c192 = arith.constant 192 : index
    %84 = vector.load %arg28[%c0_109, %c192] : memref<128x288xbf16, #tpu.memory_space<vmem>>, vector<128x32xbf16>
    tpu.vector_store %arg28[%c0_109, %c192], %83 {strides = array<i32>} : memref<128x288xbf16, #tpu.memory_space<vmem>>, vector<128x32xbf16>,
    %c0_110 = arith.constant 0 : index
    %c0_111 = arith.constant 0 : index
    %c1_112 = arith.constant 1 : index
    %c1_113 = arith.constant 1 : index
    %c0_114 = arith.constant 0 : index
    %c0_115 = arith.constant 0 : index
    %85 = vector.load %arg27[%c0_110, %c0_111, %c1_112, %c1_113, %c0_114, %c0_115] : memref<2x2x2x9x9x32xf32, #tpu.memory_space<vmem>>, vector<2x1x1x8x8x32xf32>
    %86 = vector.shape_cast %85 : vector<2x1x1x8x8x32xf32> to vector<2x8x8x32xf32>
    %87 = vector.shape_cast %86 : vector<2x8x8x32xf32> to vector<128x32xf32>
    %88 = arith.truncf %87 : vector<128x32xf32> to vector<128x32xbf16>
    %c0_116 = arith.constant 0 : index
    %c224 = arith.constant 224 : index
    %89 = vector.load %arg28[%c0_116, %c224] : memref<128x288xbf16, #tpu.memory_space<vmem>>, vector<128x32xbf16>
    tpu.vector_store %arg28[%c0_116, %c224], %88 {strides = array<i32>} : memref<128x288xbf16, #tpu.memory_space<vmem>>, vector<128x32xbf16>,
    %c0_117 = arith.constant 0 : index
    %c0_118 = arith.constant 0 : index
    %c0_119 = arith.constant 0 : index
    %c1_120 = arith.constant 1 : index
    %c1_121 = arith.constant 1 : index
    %c0_122 = arith.constant 0 : index
    %90 = vector.load %arg27[%c0_117, %c0_118, %c0_119, %c1_120, %c1_121, %c0_122] : memref<2x2x2x9x9x32xf32, #tpu.memory_space<vmem>>, vector<2x1x1x8x8x32xf32>
    %91 = vector.shape_cast %90 : vector<2x1x1x8x8x32xf32> to vector<2x8x8x32xf32>
    %92 = vector.shape_cast %91 : vector<2x8x8x32xf32> to vector<128x32xf32>
    %93 = arith.truncf %92 : vector<128x32xf32> to vector<128x32xbf16>
    %c0_123 = arith.constant 0 : index
    %c256 = arith.constant 256 : index
    %94 = vector.load %arg28[%c0_123, %c256] : memref<128x288xbf16, #tpu.memory_space<vmem>>, vector<128x32xbf16>
    tpu.vector_store %arg28[%c0_123, %c256], %93 {strides = array<i32>} : memref<128x288xbf16, #tpu.memory_space<vmem>>, vector<128x32xbf16>,
    %c0_124 = arith.constant 0 : index
    %c0_125 = arith.constant 0 : index
    %95 = vector.load %arg28[%c0_124, %c0_125] : memref<128x288xbf16, #tpu.memory_space<vmem>>, vector<128x288xbf16>
    %c0_126 = arith.constant 0 : index
    %c0_127 = arith.constant 0 : index
    %96 = vector.load %arg3[%c0_126, %c0_127] : memref<288x64xbf16, #tpu.memory_space<vmem>>, vector<288x64xbf16>
    %cst_128 = arith.constant dense<0.000000e+00> : vector<128x64xf32>
    %97 = tpu.matmul %95, %96, %cst_128 {dimension_numbers = #tpu.dot_dimension_numbers<[1], [0], [0], [1], [0, 0, 1, 1], [], []>} : vector<128x288xbf16>, vector<288x64xbf16>, vector<128x64xf32> -> vector<128x64xf32>
    %c0_129 = arith.constant 0 : index
    %c0_130 = arith.constant 0 : index
    %98 = vector.load %arg4[%c0_129, %c0_130] : memref<1x64xf32, #tpu.memory_space<vmem>>, vector<1x64xf32>
    %99 = vector.broadcast %98 : vector<1x64xf32> to vector<128x64xf32>
    %100 = arith.addf %97, %99 : vector<128x64xf32>
    %cst_131 = arith.constant 0.000000e+00 : f32
    %101 = vector.broadcast %cst_131 : f32 to vector<128x64xf32>
    %102 = arith.maximumf %100, %101 : vector<128x64xf32>
    %103 = vector.shape_cast %102 : vector<128x64xf32> to vector<2x64x64xf32>
    %cst_132 = arith.constant dense<0.000000e+00> : vector<2x64xf32>
    %104 = vector.multi_reduction <add>, %103, %cst_132 [1] : vector<2x64x64xf32> to vector<2x64xf32>
    %cst_133 = arith.constant 6.400000e+01 : f32
    %105 = vector.broadcast %cst_133 : f32 to vector<2x64xf32>
    %106 = arith.divf %104, %105 : vector<2x64xf32>
    %cst_134 = arith.constant 0.000000e+00 : f32
    %107 = vector.broadcast %cst_134 : f32 to vector<2x2x2x5x5x64xf32>
    %c0_135 = arith.constant 0 : index
    %c0_136 = arith.constant 0 : index
    %c0_137 = arith.constant 0 : index
    %c0_138 = arith.constant 0 : index
    %c0_139 = arith.constant 0 : index
    %c0_140 = arith.constant 0 : index
    %108 = vector.load %arg29[%c0_135, %c0_136, %c0_137, %c0_138, %c0_139, %c0_140] : memref<2x2x2x5x5x64xf32, #tpu.memory_space<vmem>>, vector<2x2x2x5x5x64xf32>
    tpu.vector_store %arg29[%c0_135, %c0_136, %c0_137, %c0_138, %c0_139, %c0_140], %107 {strides = array<i32>} : memref<2x2x2x5x5x64xf32, #tpu.memory_space<vmem>>, vector<2x2x2x5x5x64xf32>,
    %109 = vector.shape_cast %102 : vector<128x64xf32> to vector<2x8x8x64xf32>
    %110 = vector.extract_strided_slice %109 {offsets = [0, 0, 0, 0], sizes = [2, 1, 1, 64], strides = [1, 1, 1, 1]} : vector<2x8x8x64xf32> to vector<2x1x1x64xf32>
    %111 = vector.shape_cast %110 : vector<2x1x1x64xf32> to vector<2x64xf32>
    %c0_141 = arith.constant 0 : index
    %c1_142 = arith.constant 1 : index
    %c1_143 = arith.constant 1 : index
    %c0_144 = arith.constant 0 : index
    %c0_145 = arith.constant 0 : index
    %c0_146 = arith.constant 0 : index
    %112 = vector.load %arg29[%c0_141, %c1_142, %c1_143, %c0_144, %c0_145, %c0_146] : memref<2x2x2x5x5x64xf32, #tpu.memory_space<vmem>>, vector<2x1x1x1x1x64xf32>
    %113 = vector.shape_cast %112 : vector<2x1x1x1x1x64xf32> to vector<2x64xf32>
    %114 = vector.shape_cast %111 : vector<2x64xf32> to vector<2x1x1x1x1x64xf32>
    tpu.vector_store %arg29[%c0_141, %c1_142, %c1_143, %c0_144, %c0_145, %c0_146], %114 {strides = array<i32>} : memref<2x2x2x5x5x64xf32, #tpu.memory_space<vmem>>, vector<2x1x1x1x1x64xf32>,
    %115 = vector.extract_strided_slice %109 {offsets = [0, 0, 1, 0], sizes = [2, 1, 1, 64], strides = [1, 1, 1, 1]} : vector<2x8x8x64xf32> to vector<2x1x1x64xf32>
    %116 = vector.shape_cast %115 : vector<2x1x1x64xf32> to vector<2x64xf32>
    %c0_147 = arith.constant 0 : index
    %c1_148 = arith.constant 1 : index
    %c0_149 = arith.constant 0 : index
    %c0_150 = arith.constant 0 : index
    %c1_151 = arith.constant 1 : index
    %c0_152 = arith.constant 0 : index
    %117 = vector.load %arg29[%c0_147, %c1_148, %c0_149, %c0_150, %c1_151, %c0_152] : memref<2x2x2x5x5x64xf32, #tpu.memory_space<vmem>>, vector<2x1x1x1x1x64xf32>
    %118 = vector.shape_cast %117 : vector<2x1x1x1x1x64xf32> to vector<2x64xf32>
    %119 = vector.shape_cast %116 : vector<2x64xf32> to vector<2x1x1x1x1x64xf32>
    tpu.vector_store %arg29[%c0_147, %c1_148, %c0_149, %c0_150, %c1_151, %c0_152], %119 {strides = array<i32>} : memref<2x2x2x5x5x64xf32, #tpu.memory_space<vmem>>, vector<2x1x1x1x1x64xf32>,
    %120 = vector.extract_strided_slice %109 {offsets = [0, 0, 2, 0], sizes = [2, 1, 1, 64], strides = [1, 1, 1, 1]} : vector<2x8x8x64xf32> to vector<2x1x1x64xf32>
    %121 = vector.shape_cast %120 : vector<2x1x1x64xf32> to vector<2x64xf32>
    %c0_153 = arith.constant 0 : index
    %c1_154 = arith.constant 1 : index
    %c1_155 = arith.constant 1 : index
    %c0_156 = arith.constant 0 : index
    %c1_157 = arith.constant 1 : index
    %c0_158 = arith.constant 0 : index
    %122 = vector.load %arg29[%c0_153, %c1_154, %c1_155, %c0_156, %c1_157, %c0_158] : memref<2x2x2x5x5x64xf32, #tpu.memory_space<vmem>>, vector<2x1x1x1x1x64xf32>
    %123 = vector.shape_cast %122 : vector<2x1x1x1x1x64xf32> to vector<2x64xf32>
    %124 = vector.shape_cast %121 : vector<2x64xf32> to vector<2x1x1x1x1x64xf32>
    tpu.vector_store %arg29[%c0_153, %c1_154, %c1_155, %c0_156, %c1_157, %c0_158], %124 {strides = array<i32>} : memref<2x2x2x5x5x64xf32, #tpu.memory_space<vmem>>, vector<2x1x1x1x1x64xf32>,
    %125 = vector.extract_strided_slice %109 {offsets = [0, 0, 3, 0], sizes = [2, 1, 1, 64], strides = [1, 1, 1, 1]} : vector<2x8x8x64xf32> to vector<2x1x1x64xf32>
    %126 = vector.shape_cast %125 : vector<2x1x1x64xf32> to vector<2x64xf32>
    %c0_159 = arith.constant 0 : index
    %c1_160 = arith.constant 1 : index
    %c0_161 = arith.constant 0 : index
    %c0_162 = arith.constant 0 : index
    %c2 = arith.constant 2 : index
    %c0_163 = arith.constant 0 : index
    %127 = vector.load %arg29[%c0_159, %c1_160, %c0_161, %c0_162, %c2, %c0_163] : memref<2x2x2x5x5x64xf32, #tpu.memory_space<vmem>>, vector<2x1x1x1x1x64xf32>
    %128 = vector.shape_cast %127 : vector<2x1x1x1x1x64xf32> to vector<2x64xf32>
    %129 = vector.shape_cast %126 : vector<2x64xf32> to vector<2x1x1x1x1x64xf32>
    tpu.vector_store %arg29[%c0_159, %c1_160, %c0_161, %c0_162, %c2, %c0_163], %129 {strides = array<i32>} : memref<2x2x2x5x5x64xf32, #tpu.memory_space<vmem>>, vector<2x1x1x1x1x64xf32>,
    %130 = vector.extract_strided_slice %109 {offsets = [0, 0, 4, 0], sizes = [2, 1, 1, 64], strides = [1, 1, 1, 1]} : vector<2x8x8x64xf32> to vector<2x1x1x64xf32>
    %131 = vector.shape_cast %130 : vector<2x1x1x64xf32> to vector<2x64xf32>
    %c0_164 = arith.constant 0 : index
    %c1_165 = arith.constant 1 : index
    %c1_166 = arith.constant 1 : index
    %c0_167 = arith.constant 0 : index
    %c2_168 = arith.constant 2 : index
    %c0_169 = arith.constant 0 : index
    %132 = vector.load %arg29[%c0_164, %c1_165, %c1_166, %c0_167, %c2_168, %c0_169] : memref<2x2x2x5x5x64xf32, #tpu.memory_space<vmem>>, vector<2x1x1x1x1x64xf32>
    %133 = vector.shape_cast %132 : vector<2x1x1x1x1x64xf32> to vector<2x64xf32>
    %134 = vector.shape_cast %131 : vector<2x64xf32> to vector<2x1x1x1x1x64xf32>
    tpu.vector_store %arg29[%c0_164, %c1_165, %c1_166, %c0_167, %c2_168, %c0_169], %134 {strides = array<i32>} : memref<2x2x2x5x5x64xf32, #tpu.memory_space<vmem>>, vector<2x1x1x1x1x64xf32>,
    %135 = vector.extract_strided_slice %109 {offsets = [0, 0, 5, 0], sizes = [2, 1, 1, 64], strides = [1, 1, 1, 1]} : vector<2x8x8x64xf32> to vector<2x1x1x64xf32>
    %136 = vector.shape_cast %135 : vector<2x1x1x64xf32> to vector<2x64xf32>
    %c0_170 = arith.constant 0 : index
    %c1_171 = arith.constant 1 : index
    %c0_172 = arith.constant 0 : index
    %c0_173 = arith.constant 0 : index
    %c3 = arith.constant 3 : index
    %c0_174 = arith.constant 0 : index
    %137 = vector.load %arg29[%c0_170, %c1_171, %c0_172, %c0_173, %c3, %c0_174] : memref<2x2x2x5x5x64xf32, #tpu.memory_space<vmem>>, vector<2x1x1x1x1x64xf32>
    %138 = vector.shape_cast %137 : vector<2x1x1x1x1x64xf32> to vector<2x64xf32>
    %139 = vector.shape_cast %136 : vector<2x64xf32> to vector<2x1x1x1x1x64xf32>
    tpu.vector_store %arg29[%c0_170, %c1_171, %c0_172, %c0_173, %c3, %c0_174], %139 {strides = array<i32>} : memref<2x2x2x5x5x64xf32, #tpu.memory_space<vmem>>, vector<2x1x1x1x1x64xf32>,
    %140 = vector.extract_strided_slice %109 {offsets = [0, 0, 6, 0], sizes = [2, 1, 1, 64], strides = [1, 1, 1, 1]} : vector<2x8x8x64xf32> to vector<2x1x1x64xf32>
    %141 = vector.shape_cast %140 : vector<2x1x1x64xf32> to vector<2x64xf32>
    %c0_175 = arith.constant 0 : index
    %c1_176 = arith.constant 1 : index
    %c1_177 = arith.constant 1 : index
    %c0_178 = arith.constant 0 : index
    %c3_179 = arith.constant 3 : index
    %c0_180 = arith.constant 0 : index
    %142 = vector.load %arg29[%c0_175, %c1_176, %c1_177, %c0_178, %c3_179, %c0_180] : memref<2x2x2x5x5x64xf32, #tpu.memory_space<vmem>>, vector<2x1x1x1x1x64xf32>
    %143 = vector.shape_cast %142 : vector<2x1x1x1x1x64xf32> to vector<2x64xf32>
    %144 = vector.shape_cast %141 : vector<2x64xf32> to vector<2x1x1x1x1x64xf32>
    tpu.vector_store %arg29[%c0_175, %c1_176, %c1_177, %c0_178, %c3_179, %c0_180], %144 {strides = array<i32>} : memref<2x2x2x5x5x64xf32, #tpu.memory_space<vmem>>, vector<2x1x1x1x1x64xf32>,
    %145 = vector.extract_strided_slice %109 {offsets = [0, 0, 7, 0], sizes = [2, 1, 1, 64], strides = [1, 1, 1, 1]} : vector<2x8x8x64xf32> to vector<2x1x1x64xf32>
    %146 = vector.shape_cast %145 : vector<2x1x1x64xf32> to vector<2x64xf32>
    %c0_181 = arith.constant 0 : index
    %c1_182 = arith.constant 1 : index
    %c0_183 = arith.constant 0 : index
    %c0_184 = arith.constant 0 : index
    %c4 = arith.constant 4 : index
    %c0_185 = arith.constant 0 : index
    %147 = vector.load %arg29[%c0_181, %c1_182, %c0_183, %c0_184, %c4, %c0_185] : memref<2x2x2x5x5x64xf32, #tpu.memory_space<vmem>>, vector<2x1x1x1x1x64xf32>
    %148 = vector.shape_cast %147 : vector<2x1x1x1x1x64xf32> to vector<2x64xf32>
    %149 = vector.shape_cast %146 : vector<2x64xf32> to vector<2x1x1x1x1x64xf32>
    tpu.vector_store %arg29[%c0_181, %c1_182, %c0_183, %c0_184, %c4, %c0_185], %149 {strides = array<i32>} : memref<2x2x2x5x5x64xf32, #tpu.memory_space<vmem>>, vector<2x1x1x1x1x64xf32>,
    %150 = vector.extract_strided_slice %109 {offsets = [0, 1, 0, 0], sizes = [2, 1, 1, 64], strides = [1, 1, 1, 1]} : vector<2x8x8x64xf32> to vector<2x1x1x64xf32>
    %151 = vector.shape_cast %150 : vector<2x1x1x64xf32> to vector<2x64xf32>
    %c0_186 = arith.constant 0 : index
    %c0_187 = arith.constant 0 : index
    %c1_188 = arith.constant 1 : index
    %c1_189 = arith.constant 1 : index
    %c0_190 = arith.constant 0 : index
    %c0_191 = arith.constant 0 : index
    %152 = vector.load %arg29[%c0_186, %c0_187, %c1_188, %c1_189, %c0_190, %c0_191] : memref<2x2x2x5x5x64xf32, #tpu.memory_space<vmem>>, vector<2x1x1x1x1x64xf32>
    %153 = vector.shape_cast %152 : vector<2x1x1x1x1x64xf32> to vector<2x64xf32>
    %154 = vector.shape_cast %151 : vector<2x64xf32> to vector<2x1x1x1x1x64xf32>
    tpu.vector_store %arg29[%c0_186, %c0_187, %c1_188, %c1_189, %c0_190, %c0_191], %154 {strides = array<i32>} : memref<2x2x2x5x5x64xf32, #tpu.memory_space<vmem>>, vector<2x1x1x1x1x64xf32>,
    %155 = vector.extract_strided_slice %109 {offsets = [0, 1, 1, 0], sizes = [2, 1, 1, 64], strides = [1, 1, 1, 1]} : vector<2x8x8x64xf32> to vector<2x1x1x64xf32>
    %156 = vector.shape_cast %155 : vector<2x1x1x64xf32> to vector<2x64xf32>
    %c0_192 = arith.constant 0 : index
    %c0_193 = arith.constant 0 : index
    %c0_194 = arith.constant 0 : index
    %c1_195 = arith.constant 1 : index
    %c1_196 = arith.constant 1 : index
    %c0_197 = arith.constant 0 : index
    %157 = vector.load %arg29[%c0_192, %c0_193, %c0_194, %c1_195, %c1_196, %c0_197] : memref<2x2x2x5x5x64xf32, #tpu.memory_space<vmem>>, vector<2x1x1x1x1x64xf32>
    %158 = vector.shape_cast %157 : vector<2x1x1x1x1x64xf32> to vector<2x64xf32>
    %159 = vector.shape_cast %156 : vector<2x64xf32> to vector<2x1x1x1x1x64xf32>
    tpu.vector_store %arg29[%c0_192, %c0_193, %c0_194, %c1_195, %c1_196, %c0_197], %159 {strides = array<i32>} : memref<2x2x2x5x5x64xf32, #tpu.memory_space<vmem>>, vector<2x1x1x1x1x64xf32>,
    %160 = vector.extract_strided_slice %109 {offsets = [0, 1, 2, 0], sizes = [2, 1, 1, 64], strides = [1, 1, 1, 1]} : vector<2x8x8x64xf32> to vector<2x1x1x64xf32>
    %161 = vector.shape_cast %160 : vector<2x1x1x64xf32> to vector<2x64xf32>
    %c0_198 = arith.constant 0 : index
    %c0_199 = arith.constant 0 : index
    %c1_200 = arith.constant 1 : index
    %c1_201 = arith.constant 1 : index
    %c1_202 = arith.constant 1 : index
    %c0_203 = arith.constant 0 : index
    %162 = vector.load %arg29[%c0_198, %c0_199, %c1_200, %c1_201, %c1_202, %c0_203] : memref<2x2x2x5x5x64xf32, #tpu.memory_space<vmem>>, vector<2x1x1x1x1x64xf32>
    %163 = vector.shape_cast %162 : vector<2x1x1x1x1x64xf32> to vector<2x64xf32>
    %164 = vector.shape_cast %161 : vector<2x64xf32> to vector<2x1x1x1x1x64xf32>
    tpu.vector_store %arg29[%c0_198, %c0_199, %c1_200, %c1_201, %c1_202, %c0_203], %164 {strides = array<i32>} : memref<2x2x2x5x5x64xf32, #tpu.memory_space<vmem>>, vector<2x1x1x1x1x64xf32>,
    %165 = vector.extract_strided_slice %109 {offsets = [0, 1, 3, 0], sizes = [2, 1, 1, 64], strides = [1, 1, 1, 1]} : vector<2x8x8x64xf32> to vector<2x1x1x64xf32>
    %166 = vector.shape_cast %165 : vector<2x1x1x64xf32> to vector<2x64xf32>
    %c0_204 = arith.constant 0 : index
    %c0_205 = arith.constant 0 : index
    %c0_206 = arith.constant 0 : index
    %c1_207 = arith.constant 1 : index
    %c2_208 = arith.constant 2 : index
    %c0_209 = arith.constant 0 : index
    %167 = vector.load %arg29[%c0_204, %c0_205, %c0_206, %c1_207, %c2_208, %c0_209] : memref<2x2x2x5x5x64xf32, #tpu.memory_space<vmem>>, vector<2x1x1x1x1x64xf32>
    %168 = vector.shape_cast %167 : vector<2x1x1x1x1x64xf32> to vector<2x64xf32>
    %169 = vector.shape_cast %166 : vector<2x64xf32> to vector<2x1x1x1x1x64xf32>
    tpu.vector_store %arg29[%c0_204, %c0_205, %c0_206, %c1_207, %c2_208, %c0_209], %169 {strides = array<i32>} : memref<2x2x2x5x5x64xf32, #tpu.memory_space<vmem>>, vector<2x1x1x1x1x64xf32>,
    %170 = vector.extract_strided_slice %109 {offsets = [0, 1, 4, 0], sizes = [2, 1, 1, 64], strides = [1, 1, 1, 1]} : vector<2x8x8x64xf32> to vector<2x1x1x64xf32>
    %171 = vector.shape_cast %170 : vector<2x1x1x64xf32> to vector<2x64xf32>
    %c0_210 = arith.constant 0 : index
    %c0_211 = arith.constant 0 : index
    %c1_212 = arith.constant 1 : index
    %c1_213 = arith.constant 1 : index
    %c2_214 = arith.constant 2 : index
    %c0_215 = arith.constant 0 : index
    %172 = vector.load %arg29[%c0_210, %c0_211, %c1_212, %c1_213, %c2_214, %c0_215] : memref<2x2x2x5x5x64xf32, #tpu.memory_space<vmem>>, vector<2x1x1x1x1x64xf32>
    %173 = vector.shape_cast %172 : vector<2x1x1x1x1x64xf32> to vector<2x64xf32>
    %174 = vector.shape_cast %171 : vector<2x64xf32> to vector<2x1x1x1x1x64xf32>
    tpu.vector_store %arg29[%c0_210, %c0_211, %c1_212, %c1_213, %c2_214, %c0_215], %174 {strides = array<i32>} : memref<2x2x2x5x5x64xf32, #tpu.memory_space<vmem>>, vector<2x1x1x1x1x64xf32>,
    %175 = vector.extract_strided_slice %109 {offsets = [0, 1, 5, 0], sizes = [2, 1, 1, 64], strides = [1, 1, 1, 1]} : vector<2x8x8x64xf32> to vector<2x1x1x64xf32>
    %176 = vector.shape_cast %175 : vector<2x1x1x64xf32> to vector<2x64xf32>
    %c0_216 = arith.constant 0 : index
    %c0_217 = arith.constant 0 : index
    %c0_218 = arith.constant 0 : index
    %c1_219 = arith.constant 1 : index
    %c3_220 = arith.constant 3 : index
    %c0_221 = arith.constant 0 : index
    %177 = vector.load %arg29[%c0_216, %c0_217, %c0_218, %c1_219, %c3_220, %c0_221] : memref<2x2x2x5x5x64xf32, #tpu.memory_space<vmem>>, vector<2x1x1x1x1x64xf32>
    %178 = vector.shape_cast %177 : vector<2x1x1x1x1x64xf32> to vector<2x64xf32>
    %179 = vector.shape_cast %176 : vector<2x64xf32> to vector<2x1x1x1x1x64xf32>
    tpu.vector_store %arg29[%c0_216, %c0_217, %c0_218, %c1_219, %c3_220, %c0_221], %179 {strides = array<i32>} : memref<2x2x2x5x5x64xf32, #tpu.memory_space<vmem>>, vector<2x1x1x1x1x64xf32>,
    %180 = vector.extract_strided_slice %109 {offsets = [0, 1, 6, 0], sizes = [2, 1, 1, 64], strides = [1, 1, 1, 1]} : vector<2x8x8x64xf32> to vector<2x1x1x64xf32>
    %181 = vector.shape_cast %180 : vector<2x1x1x64xf32> to vector<2x64xf32>
    %c0_222 = arith.constant 0 : index
    %c0_223 = arith.constant 0 : index
    %c1_224 = arith.constant 1 : index
    %c1_225 = arith.constant 1 : index
    %c3_226 = arith.constant 3 : index
    %c0_227 = arith.constant 0 : index
    %182 = vector.load %arg29[%c0_222, %c0_223, %c1_224, %c1_225, %c3_226, %c0_227] : memref<2x2x2x5x5x64xf32, #tpu.memory_space<vmem>>, vector<2x1x1x1x1x64xf32>
    %183 = vector.shape_cast %182 : vector<2x1x1x1x1x64xf32> to vector<2x64xf32>
    %184 = vector.shape_cast %181 : vector<2x64xf32> to vector<2x1x1x1x1x64xf32>
    tpu.vector_store %arg29[%c0_222, %c0_223, %c1_224, %c1_225, %c3_226, %c0_227], %184 {strides = array<i32>} : memref<2x2x2x5x5x64xf32, #tpu.memory_space<vmem>>, vector<2x1x1x1x1x64xf32>,
    %185 = vector.extract_strided_slice %109 {offsets = [0, 1, 7, 0], sizes = [2, 1, 1, 64], strides = [1, 1, 1, 1]} : vector<2x8x8x64xf32> to vector<2x1x1x64xf32>
    %186 = vector.shape_cast %185 : vector<2x1x1x64xf32> to vector<2x64xf32>
    %c0_228 = arith.constant 0 : index
    %c0_229 = arith.constant 0 : index
    %c0_230 = arith.constant 0 : index
    %c1_231 = arith.constant 1 : index
    %c4_232 = arith.constant 4 : index
    %c0_233 = arith.constant 0 : index
    %187 = vector.load %arg29[%c0_228, %c0_229, %c0_230, %c1_231, %c4_232, %c0_233] : memref<2x2x2x5x5x64xf32, #tpu.memory_space<vmem>>, vector<2x1x1x1x1x64xf32>
    %188 = vector.shape_cast %187 : vector<2x1x1x1x1x64xf32> to vector<2x64xf32>
    %189 = vector.shape_cast %186 : vector<2x64xf32> to vector<2x1x1x1x1x64xf32>
    tpu.vector_store %arg29[%c0_228, %c0_229, %c0_230, %c1_231, %c4_232, %c0_233], %189 {strides = array<i32>} : memref<2x2x2x5x5x64xf32, #tpu.memory_space<vmem>>, vector<2x1x1x1x1x64xf32>,
    %190 = vector.extract_strided_slice %109 {offsets = [0, 2, 0, 0], sizes = [2, 1, 1, 64], strides = [1, 1, 1, 1]} : vector<2x8x8x64xf32> to vector<2x1x1x64xf32>
    %191 = vector.shape_cast %190 : vector<2x1x1x64xf32> to vector<2x64xf32>
    %c0_234 = arith.constant 0 : index
    %c1_235 = arith.constant 1 : index
    %c1_236 = arith.constant 1 : index
    %c1_237 = arith.constant 1 : index
    %c0_238 = arith.constant 0 : index
    %c0_239 = arith.constant 0 : index
    %192 = vector.load %arg29[%c0_234, %c1_235, %c1_236, %c1_237, %c0_238, %c0_239] : memref<2x2x2x5x5x64xf32, #tpu.memory_space<vmem>>, vector<2x1x1x1x1x64xf32>
    %193 = vector.shape_cast %192 : vector<2x1x1x1x1x64xf32> to vector<2x64xf32>
    %194 = vector.shape_cast %191 : vector<2x64xf32> to vector<2x1x1x1x1x64xf32>
    tpu.vector_store %arg29[%c0_234, %c1_235, %c1_236, %c1_237, %c0_238, %c0_239], %194 {strides = array<i32>} : memref<2x2x2x5x5x64xf32, #tpu.memory_space<vmem>>, vector<2x1x1x1x1x64xf32>,
    %195 = vector.extract_strided_slice %109 {offsets = [0, 2, 1, 0], sizes = [2, 1, 1, 64], strides = [1, 1, 1, 1]} : vector<2x8x8x64xf32> to vector<2x1x1x64xf32>
    %196 = vector.shape_cast %195 : vector<2x1x1x64xf32> to vector<2x64xf32>
    %c0_240 = arith.constant 0 : index
    %c1_241 = arith.constant 1 : index
    %c0_242 = arith.constant 0 : index
    %c1_243 = arith.constant 1 : index
    %c1_244 = arith.constant 1 : index
    %c0_245 = arith.constant 0 : index
    %197 = vector.load %arg29[%c0_240, %c1_241, %c0_242, %c1_243, %c1_244, %c0_245] : memref<2x2x2x5x5x64xf32, #tpu.memory_space<vmem>>, vector<2x1x1x1x1x64xf32>
    %198 = vector.shape_cast %197 : vector<2x1x1x1x1x64xf32> to vector<2x64xf32>
    %199 = vector.shape_cast %196 : vector<2x64xf32> to vector<2x1x1x1x1x64xf32>
    tpu.vector_store %arg29[%c0_240, %c1_241, %c0_242, %c1_243, %c1_244, %c0_245], %199 {strides = array<i32>} : memref<2x2x2x5x5x64xf32, #tpu.memory_space<vmem>>, vector<2x1x1x1x1x64xf32>,
    %200 = vector.extract_strided_slice %109 {offsets = [0, 2, 2, 0], sizes = [2, 1, 1, 64], strides = [1, 1, 1, 1]} : vector<2x8x8x64xf32> to vector<2x1x1x64xf32>
    %201 = vector.shape_cast %200 : vector<2x1x1x64xf32> to vector<2x64xf32>
    %c0_246 = arith.constant 0 : index
    %c1_247 = arith.constant 1 : index
    %c1_248 = arith.constant 1 : index
    %c1_249 = arith.constant 1 : index
    %c1_250 = arith.constant 1 : index
    %c0_251 = arith.constant 0 : index
    %202 = vector.load %arg29[%c0_246, %c1_247, %c1_248, %c1_249, %c1_250, %c0_251] : memref<2x2x2x5x5x64xf32, #tpu.memory_space<vmem>>, vector<2x1x1x1x1x64xf32>
    %203 = vector.shape_cast %202 : vector<2x1x1x1x1x64xf32> to vector<2x64xf32>
    %204 = vector.shape_cast %201 : vector<2x64xf32> to vector<2x1x1x1x1x64xf32>
    tpu.vector_store %arg29[%c0_246, %c1_247, %c1_248, %c1_249, %c1_250, %c0_251], %204 {strides = array<i32>} : memref<2x2x2x5x5x64xf32, #tpu.memory_space<vmem>>, vector<2x1x1x1x1x64xf32>,
    %205 = vector.extract_strided_slice %109 {offsets = [0, 2, 3, 0], sizes = [2, 1, 1, 64], strides = [1, 1, 1, 1]} : vector<2x8x8x64xf32> to vector<2x1x1x64xf32>
    %206 = vector.shape_cast %205 : vector<2x1x1x64xf32> to vector<2x64xf32>
    %c0_252 = arith.constant 0 : index
    %c1_253 = arith.constant 1 : index
    %c0_254 = arith.constant 0 : index
    %c1_255 = arith.constant 1 : index
    %c2_256 = arith.constant 2 : index
    %c0_257 = arith.constant 0 : index
    %207 = vector.load %arg29[%c0_252, %c1_253, %c0_254, %c1_255, %c2_256, %c0_257] : memref<2x2x2x5x5x64xf32, #tpu.memory_space<vmem>>, vector<2x1x1x1x1x64xf32>
    %208 = vector.shape_cast %207 : vector<2x1x1x1x1x64xf32> to vector<2x64xf32>
    %209 = vector.shape_cast %206 : vector<2x64xf32> to vector<2x1x1x1x1x64xf32>
    tpu.vector_store %arg29[%c0_252, %c1_253, %c0_254, %c1_255, %c2_256, %c0_257], %209 {strides = array<i32>} : memref<2x2x2x5x5x64xf32, #tpu.memory_space<vmem>>, vector<2x1x1x1x1x64xf32>,
    %210 = vector.extract_strided_slice %109 {offsets = [0, 2, 4, 0], sizes = [2, 1, 1, 64], strides = [1, 1, 1, 1]} : vector<2x8x8x64xf32> to vector<2x1x1x64xf32>
    %211 = vector.shape_cast %210 : vector<2x1x1x64xf32> to vector<2x64xf32>
    %c0_258 = arith.constant 0 : index
    %c1_259 = arith.constant 1 : index
    %c1_260 = arith.constant 1 : index
    %c1_261 = arith.constant 1 : index
    %c2_262 = arith.constant 2 : index
    %c0_263 = arith.constant 0 : index
    %212 = vector.load %arg29[%c0_258, %c1_259, %c1_260, %c1_261, %c2_262, %c0_263] : memref<2x2x2x5x5x64xf32, #tpu.memory_space<vmem>>, vector<2x1x1x1x1x64xf32>
    %213 = vector.shape_cast %212 : vector<2x1x1x1x1x64xf32> to vector<2x64xf32>
    %214 = vector.shape_cast %211 : vector<2x64xf32> to vector<2x1x1x1x1x64xf32>
    tpu.vector_store %arg29[%c0_258, %c1_259, %c1_260, %c1_261, %c2_262, %c0_263], %214 {strides = array<i32>} : memref<2x2x2x5x5x64xf32, #tpu.memory_space<vmem>>, vector<2x1x1x1x1x64xf32>,
    %215 = vector.extract_strided_slice %109 {offsets = [0, 2, 5, 0], sizes = [2, 1, 1, 64], strides = [1, 1, 1, 1]} : vector<2x8x8x64xf32> to vector<2x1x1x64xf32>
    %216 = vector.shape_cast %215 : vector<2x1x1x64xf32> to vector<2x64xf32>
    %c0_264 = arith.constant 0 : index
    %c1_265 = arith.constant 1 : index
    %c0_266 = arith.constant 0 : index
    %c1_267 = arith.constant 1 : index
    %c3_268 = arith.constant 3 : index
    %c0_269 = arith.constant 0 : index
    %217 = vector.load %arg29[%c0_264, %c1_265, %c0_266, %c1_267, %c3_268, %c0_269] : memref<2x2x2x5x5x64xf32, #tpu.memory_space<vmem>>, vector<2x1x1x1x1x64xf32>
    %218 = vector.shape_cast %217 : vector<2x1x1x1x1x64xf32> to vector<2x64xf32>
    %219 = vector.shape_cast %216 : vector<2x64xf32> to vector<2x1x1x1x1x64xf32>
    tpu.vector_store %arg29[%c0_264, %c1_265, %c0_266, %c1_267, %c3_268, %c0_269], %219 {strides = array<i32>} : memref<2x2x2x5x5x64xf32, #tpu.memory_space<vmem>>, vector<2x1x1x1x1x64xf32>,
    %220 = vector.extract_strided_slice %109 {offsets = [0, 2, 6, 0], sizes = [2, 1, 1, 64], strides = [1, 1, 1, 1]} : vector<2x8x8x64xf32> to vector<2x1x1x64xf32>
    %221 = vector.shape_cast %220 : vector<2x1x1x64xf32> to vector<2x64xf32>
    %c0_270 = arith.constant 0 : index
    %c1_271 = arith.constant 1 : index
    %c1_272 = arith.constant 1 : index
    %c1_273 = arith.constant 1 : index
    %c3_274 = arith.constant 3 : index
    %c0_275 = arith.constant 0 : index
    %222 = vector.load %arg29[%c0_270, %c1_271, %c1_272, %c1_273, %c3_274, %c0_275] : memref<2x2x2x5x5x64xf32, #tpu.memory_space<vmem>>, vector<2x1x1x1x1x64xf32>
    %223 = vector.shape_cast %222 : vector<2x1x1x1x1x64xf32> to vector<2x64xf32>
    %224 = vector.shape_cast %221 : vector<2x64xf32> to vector<2x1x1x1x1x64xf32>
    tpu.vector_store %arg29[%c0_270, %c1_271, %c1_272, %c1_273, %c3_274, %c0_275], %224 {strides = array<i32>} : memref<2x2x2x5x5x64xf32, #tpu.memory_space<vmem>>, vector<2x1x1x1x1x64xf32>,
    %225 = vector.extract_strided_slice %109 {offsets = [0, 2, 7, 0], sizes = [2, 1, 1, 64], strides = [1, 1, 1, 1]} : vector<2x8x8x64xf32> to vector<2x1x1x64xf32>
    %226 = vector.shape_cast %225 : vector<2x1x1x64xf32> to vector<2x64xf32>
    %c0_276 = arith.constant 0 : index
    %c1_277 = arith.constant 1 : index
    %c0_278 = arith.constant 0 : index
    %c1_279 = arith.constant 1 : index
    %c4_280 = arith.constant 4 : index
    %c0_281 = arith.constant 0 : index
    %227 = vector.load %arg29[%c0_276, %c1_277, %c0_278, %c1_279, %c4_280, %c0_281] : memref<2x2x2x5x5x64xf32, #tpu.memory_space<vmem>>, vector<2x1x1x1x1x64xf32>
    %228 = vector.shape_cast %227 : vector<2x1x1x1x1x64xf32> to vector<2x64xf32>
    %229 = vector.shape_cast %226 : vector<2x64xf32> to vector<2x1x1x1x1x64xf32>
    tpu.vector_store %arg29[%c0_276, %c1_277, %c0_278, %c1_279, %c4_280, %c0_281], %229 {strides = array<i32>} : memref<2x2x2x5x5x64xf32, #tpu.memory_space<vmem>>, vector<2x1x1x1x1x64xf32>,
    %230 = vector.extract_strided_slice %109 {offsets = [0, 3, 0, 0], sizes = [2, 1, 1, 64], strides = [1, 1, 1, 1]} : vector<2x8x8x64xf32> to vector<2x1x1x64xf32>
    %231 = vector.shape_cast %230 : vector<2x1x1x64xf32> to vector<2x64xf32>
    %c0_282 = arith.constant 0 : index
    %c0_283 = arith.constant 0 : index
    %c1_284 = arith.constant 1 : index
    %c2_285 = arith.constant 2 : index
    %c0_286 = arith.constant 0 : index
    %c0_287 = arith.constant 0 : index
    %232 = vector.load %arg29[%c0_282, %c0_283, %c1_284, %c2_285, %c0_286, %c0_287] : memref<2x2x2x5x5x64xf32, #tpu.memory_space<vmem>>, vector<2x1x1x1x1x64xf32>
    %233 = vector.shape_cast %232 : vector<2x1x1x1x1x64xf32> to vector<2x64xf32>
    %234 = vector.shape_cast %231 : vector<2x64xf32> to vector<2x1x1x1x1x64xf32>
    tpu.vector_store %arg29[%c0_282, %c0_283, %c1_284, %c2_285, %c0_286, %c0_287], %234 {strides = array<i32>} : memref<2x2x2x5x5x64xf32, #tpu.memory_space<vmem>>, vector<2x1x1x1x1x64xf32>,
    %235 = vector.extract_strided_slice %109 {offsets = [0, 3, 1, 0], sizes = [2, 1, 1, 64], strides = [1, 1, 1, 1]} : vector<2x8x8x64xf32> to vector<2x1x1x64xf32>
    %236 = vector.shape_cast %235 : vector<2x1x1x64xf32> to vector<2x64xf32>
    %c0_288 = arith.constant 0 : index
    %c0_289 = arith.constant 0 : index
    %c0_290 = arith.constant 0 : index
    %c2_291 = arith.constant 2 : index
    %c1_292 = arith.constant 1 : index
    %c0_293 = arith.constant 0 : index
    %237 = vector.load %arg29[%c0_288, %c0_289, %c0_290, %c2_291, %c1_292, %c0_293] : memref<2x2x2x5x5x64xf32, #tpu.memory_space<vmem>>, vector<2x1x1x1x1x64xf32>
    %238 = vector.shape_cast %237 : vector<2x1x1x1x1x64xf32> to vector<2x64xf32>
    %239 = vector.shape_cast %236 : vector<2x64xf32> to vector<2x1x1x1x1x64xf32>
    tpu.vector_store %arg29[%c0_288, %c0_289, %c0_290, %c2_291, %c1_292, %c0_293], %239 {strides = array<i32>} : memref<2x2x2x5x5x64xf32, #tpu.memory_space<vmem>>, vector<2x1x1x1x1x64xf32>,
    %240 = vector.extract_strided_slice %109 {offsets = [0, 3, 2, 0], sizes = [2, 1, 1, 64], strides = [1, 1, 1, 1]} : vector<2x8x8x64xf32> to vector<2x1x1x64xf32>
    %241 = vector.shape_cast %240 : vector<2x1x1x64xf32> to vector<2x64xf32>
    %c0_294 = arith.constant 0 : index
    %c0_295 = arith.constant 0 : index
    %c1_296 = arith.constant 1 : index
    %c2_297 = arith.constant 2 : index
    %c1_298 = arith.constant 1 : index
    %c0_299 = arith.constant 0 : index
    %242 = vector.load %arg29[%c0_294, %c0_295, %c1_296, %c2_297, %c1_298, %c0_299] : memref<2x2x2x5x5x64xf32, #tpu.memory_space<vmem>>, vector<2x1x1x1x1x64xf32>
    %243 = vector.shape_cast %242 : vector<2x1x1x1x1x64xf32> to vector<2x64xf32>
    %244 = vector.shape_cast %241 : vector<2x64xf32> to vector<2x1x1x1x1x64xf32>
    tpu.vector_store %arg29[%c0_294, %c0_295, %c1_296, %c2_297, %c1_298, %c0_299], %244 {strides = array<i32>} : memref<2x2x2x5x5x64xf32, #tpu.memory_space<vmem>>, vector<2x1x1x1x1x64xf32>,
    %245 = vector.extract_strided_slice %109 {offsets = [0, 3, 3, 0], sizes = [2, 1, 1, 64], strides = [1, 1, 1, 1]} : vector<2x8x8x64xf32> to vector<2x1x1x64xf32>
    %246 = vector.shape_cast %245 : vector<2x1x1x64xf32> to vector<2x64xf32>
    %c0_300 = arith.constant 0 : index
    %c0_301 = arith.constant 0 : index
    %c0_302 = arith.constant 0 : index
    %c2_303 = arith.constant 2 : index
    %c2_304 = arith.constant 2 : index
    %c0_305 = arith.constant 0 : index
    %247 = vector.load %arg29[%c0_300, %c0_301, %c0_302, %c2_303, %c2_304, %c0_305] : memref<2x2x2x5x5x64xf32, #tpu.memory_space<vmem>>, vector<2x1x1x1x1x64xf32>
    %248 = vector.shape_cast %247 : vector<2x1x1x1x1x64xf32> to vector<2x64xf32>
    %249 = vector.shape_cast %246 : vector<2x64xf32> to vector<2x1x1x1x1x64xf32>
    tpu.vector_store %arg29[%c0_300, %c0_301, %c0_302, %c2_303, %c2_304, %c0_305], %249 {strides = array<i32>} : memref<2x2x2x5x5x64xf32, #tpu.memory_space<vmem>>, vector<2x1x1x1x1x64xf32>,
    %250 = vector.extract_strided_slice %109 {offsets = [0, 3, 4, 0], sizes = [2, 1, 1, 64], strides = [1, 1, 1, 1]} : vector<2x8x8x64xf32> to vector<2x1x1x64xf32>
    %251 = vector.shape_cast %250 : vector<2x1x1x64xf32> to vector<2x64xf32>
    %c0_306 = arith.constant 0 : index
    %c0_307 = arith.constant 0 : index
    %c1_308 = arith.constant 1 : index
    %c2_309 = arith.constant 2 : index
    %c2_310 = arith.constant 2 : index
    %c0_311 = arith.constant 0 : index
    %252 = vector.load %arg29[%c0_306, %c0_307, %c1_308, %c2_309, %c2_310, %c0_311] : memref<2x2x2x5x5x64xf32, #tpu.memory_space<vmem>>, vector<2x1x1x1x1x64xf32>
    %253 = vector.shape_cast %252 : vector<2x1x1x1x1x64xf32> to vector<2x64xf32>
    %254 = vector.shape_cast %251 : vector<2x64xf32> to vector<2x1x1x1x1x64xf32>
    tpu.vector_store %arg29[%c0_306, %c0_307, %c1_308, %c2_309, %c2_310, %c0_311], %254 {strides = array<i32>} : memref<2x2x2x5x5x64xf32, #tpu.memory_space<vmem>>, vector<2x1x1x1x1x64xf32>,
    %255 = vector.extract_strided_slice %109 {offsets = [0, 3, 5, 0], sizes = [2, 1, 1, 64], strides = [1, 1, 1, 1]} : vector<2x8x8x64xf32> to vector<2x1x1x64xf32>
    %256 = vector.shape_cast %255 : vector<2x1x1x64xf32> to vector<2x64xf32>
    %c0_312 = arith.constant 0 : index
    %c0_313 = arith.constant 0 : index
    %c0_314 = arith.constant 0 : index
    %c2_315 = arith.constant 2 : index
    %c3_316 = arith.constant 3 : index
    %c0_317 = arith.constant 0 : index
    %257 = vector.load %arg29[%c0_312, %c0_313, %c0_314, %c2_315, %c3_316, %c0_317] : memref<2x2x2x5x5x64xf32, #tpu.memory_space<vmem>>, vector<2x1x1x1x1x64xf32>
    %258 = vector.shape_cast %257 : vector<2x1x1x1x1x64xf32> to vector<2x64xf32>
    %259 = vector.shape_cast %256 : vector<2x64xf32> to vector<2x1x1x1x1x64xf32>
    tpu.vector_store %arg29[%c0_312, %c0_313, %c0_314, %c2_315, %c3_316, %c0_317], %259 {strides = array<i32>} : memref<2x2x2x5x5x64xf32, #tpu.memory_space<vmem>>, vector<2x1x1x1x1x64xf32>,
    %260 = vector.extract_strided_slice %109 {offsets = [0, 3, 6, 0], sizes = [2, 1, 1, 64], strides = [1, 1, 1, 1]} : vector<2x8x8x64xf32> to vector<2x1x1x64xf32>
    %261 = vector.shape_cast %260 : vector<2x1x1x64xf32> to vector<2x64xf32>
    %c0_318 = arith.constant 0 : index
    %c0_319 = arith.constant 0 : index
    %c1_320 = arith.constant 1 : index
    %c2_321 = arith.constant 2 : index
    %c3_322 = arith.constant 3 : index
    %c0_323 = arith.constant 0 : index
    %262 = vector.load %arg29[%c0_318, %c0_319, %c1_320, %c2_321, %c3_322, %c0_323] : memref<2x2x2x5x5x64xf32, #tpu.memory_space<vmem>>, vector<2x1x1x1x1x64xf32>
    %263 = vector.shape_cast %262 : vector<2x1x1x1x1x64xf32> to vector<2x64xf32>
    %264 = vector.shape_cast %261 : vector<2x64xf32> to vector<2x1x1x1x1x64xf32>
    tpu.vector_store %arg29[%c0_318, %c0_319, %c1_320, %c2_321, %c3_322, %c0_323], %264 {strides = array<i32>} : memref<2x2x2x5x5x64xf32, #tpu.memory_space<vmem>>, vector<2x1x1x1x1x64xf32>,
    %265 = vector.extract_strided_slice %109 {offsets = [0, 3, 7, 0], sizes = [2, 1, 1, 64], strides = [1, 1, 1, 1]} : vector<2x8x8x64xf32> to vector<2x1x1x64xf32>
    %266 = vector.shape_cast %265 : vector<2x1x1x64xf32> to vector<2x64xf32>
    %c0_324 = arith.constant 0 : index
    %c0_325 = arith.constant 0 : index
    %c0_326 = arith.constant 0 : index
    %c2_327 = arith.constant 2 : index
    %c4_328 = arith.constant 4 : index
    %c0_329 = arith.constant 0 : index
    %267 = vector.load %arg29[%c0_324, %c0_325, %c0_326, %c2_327, %c4_328, %c0_329] : memref<2x2x2x5x5x64xf32, #tpu.memory_space<vmem>>, vector<2x1x1x1x1x64xf32>
    %268 = vector.shape_cast %267 : vector<2x1x1x1x1x64xf32> to vector<2x64xf32>
    %269 = vector.shape_cast %266 : vector<2x64xf32> to vector<2x1x1x1x1x64xf32>
    tpu.vector_store %arg29[%c0_324, %c0_325, %c0_326, %c2_327, %c4_328, %c0_329], %269 {strides = array<i32>} : memref<2x2x2x5x5x64xf32, #tpu.memory_space<vmem>>, vector<2x1x1x1x1x64xf32>,
    %270 = vector.extract_strided_slice %109 {offsets = [0, 4, 0, 0], sizes = [2, 1, 1, 64], strides = [1, 1, 1, 1]} : vector<2x8x8x64xf32> to vector<2x1x1x64xf32>
    %271 = vector.shape_cast %270 : vector<2x1x1x64xf32> to vector<2x64xf32>
    %c0_330 = arith.constant 0 : index
    %c1_331 = arith.constant 1 : index
    %c1_332 = arith.constant 1 : index
    %c2_333 = arith.constant 2 : index
    %c0_334 = arith.constant 0 : index
    %c0_335 = arith.constant 0 : index
    %272 = vector.load %arg29[%c0_330, %c1_331, %c1_332, %c2_333, %c0_334, %c0_335] : memref<2x2x2x5x5x64xf32, #tpu.memory_space<vmem>>, vector<2x1x1x1x1x64xf32>
    %273 = vector.shape_cast %272 : vector<2x1x1x1x1x64xf32> to vector<2x64xf32>
    %274 = vector.shape_cast %271 : vector<2x64xf32> to vector<2x1x1x1x1x64xf32>
    tpu.vector_store %arg29[%c0_330, %c1_331, %c1_332, %c2_333, %c0_334, %c0_335], %274 {strides = array<i32>} : memref<2x2x2x5x5x64xf32, #tpu.memory_space<vmem>>, vector<2x1x1x1x1x64xf32>,
    %275 = vector.extract_strided_slice %109 {offsets = [0, 4, 1, 0], sizes = [2, 1, 1, 64], strides = [1, 1, 1, 1]} : vector<2x8x8x64xf32> to vector<2x1x1x64xf32>
    %276 = vector.shape_cast %275 : vector<2x1x1x64xf32> to vector<2x64xf32>
    %c0_336 = arith.constant 0 : index
    %c1_337 = arith.constant 1 : index
    %c0_338 = arith.constant 0 : index
    %c2_339 = arith.constant 2 : index
    %c1_340 = arith.constant 1 : index
    %c0_341 = arith.constant 0 : index
    %277 = vector.load %arg29[%c0_336, %c1_337, %c0_338, %c2_339, %c1_340, %c0_341] : memref<2x2x2x5x5x64xf32, #tpu.memory_space<vmem>>, vector<2x1x1x1x1x64xf32>
    %278 = vector.shape_cast %277 : vector<2x1x1x1x1x64xf32> to vector<2x64xf32>
    %279 = vector.shape_cast %276 : vector<2x64xf32> to vector<2x1x1x1x1x64xf32>
    tpu.vector_store %arg29[%c0_336, %c1_337, %c0_338, %c2_339, %c1_340, %c0_341], %279 {strides = array<i32>} : memref<2x2x2x5x5x64xf32, #tpu.memory_space<vmem>>, vector<2x1x1x1x1x64xf32>,
    %280 = vector.extract_strided_slice %109 {offsets = [0, 4, 2, 0], sizes = [2, 1, 1, 64], strides = [1, 1, 1, 1]} : vector<2x8x8x64xf32> to vector<2x1x1x64xf32>
    %281 = vector.shape_cast %280 : vector<2x1x1x64xf32> to vector<2x64xf32>
    %c0_342 = arith.constant 0 : index
    %c1_343 = arith.constant 1 : index
    %c1_344 = arith.constant 1 : index
    %c2_345 = arith.constant 2 : index
    %c1_346 = arith.constant 1 : index
    %c0_347 = arith.constant 0 : index
    %282 = vector.load %arg29[%c0_342, %c1_343, %c1_344, %c2_345, %c1_346, %c0_347] : memref<2x2x2x5x5x64xf32, #tpu.memory_space<vmem>>, vector<2x1x1x1x1x64xf32>
    %283 = vector.shape_cast %282 : vector<2x1x1x1x1x64xf32> to vector<2x64xf32>
    %284 = vector.shape_cast %281 : vector<2x64xf32> to vector<2x1x1x1x1x64xf32>
    tpu.vector_store %arg29[%c0_342, %c1_343, %c1_344, %c2_345, %c1_346, %c0_347], %284 {strides = array<i32>} : memref<2x2x2x5x5x64xf32, #tpu.memory_space<vmem>>, vector<2x1x1x1x1x64xf32>,
    %285 = vector.extract_strided_slice %109 {offsets = [0, 4, 3, 0], sizes = [2, 1, 1, 64], strides = [1, 1, 1, 1]} : vector<2x8x8x64xf32> to vector<2x1x1x64xf32>
    %286 = vector.shape_cast %285 : vector<2x1x1x64xf32> to vector<2x64xf32>
    %c0_348 = arith.constant 0 : index
    %c1_349 = arith.constant 1 : index
    %c0_350 = arith.constant 0 : index
    %c2_351 = arith.constant 2 : index
    %c2_352 = arith.constant 2 : index
    %c0_353 = arith.constant 0 : index
    %287 = vector.load %arg29[%c0_348, %c1_349, %c0_350, %c2_351, %c2_352, %c0_353] : memref<2x2x2x5x5x64xf32, #tpu.memory_space<vmem>>, vector<2x1x1x1x1x64xf32>
    %288 = vector.shape_cast %287 : vector<2x1x1x1x1x64xf32> to vector<2x64xf32>
    %289 = vector.shape_cast %286 : vector<2x64xf32> to vector<2x1x1x1x1x64xf32>
    tpu.vector_store %arg29[%c0_348, %c1_349, %c0_350, %c2_351, %c2_352, %c0_353], %289 {strides = array<i32>} : memref<2x2x2x5x5x64xf32, #tpu.memory_space<vmem>>, vector<2x1x1x1x1x64xf32>,
    %290 = vector.extract_strided_slice %109 {offsets = [0, 4, 4, 0], sizes = [2, 1, 1, 64], strides = [1, 1, 1, 1]} : vector<2x8x8x64xf32> to vector<2x1x1x64xf32>
    %291 = vector.shape_cast %290 : vector<2x1x1x64xf32> to vector<2x64xf32>
    %c0_354 = arith.constant 0 : index
    %c1_355 = arith.constant 1 : index
    %c1_356 = arith.constant 1 : index
    %c2_357 = arith.constant 2 : index
    %c2_358 = arith.constant 2 : index
    %c0_359 = arith.constant 0 : index
    %292 = vector.load %arg29[%c0_354, %c1_355, %c1_356, %c2_357, %c2_358, %c0_359] : memref<2x2x2x5x5x64xf32, #tpu.memory_space<vmem>>, vector<2x1x1x1x1x64xf32>
    %293 = vector.shape_cast %292 : vector<2x1x1x1x1x64xf32> to vector<2x64xf32>
    %294 = vector.shape_cast %291 : vector<2x64xf32> to vector<2x1x1x1x1x64xf32>
    tpu.vector_store %arg29[%c0_354, %c1_355, %c1_356, %c2_357, %c2_358, %c0_359], %294 {strides = array<i32>} : memref<2x2x2x5x5x64xf32, #tpu.memory_space<vmem>>, vector<2x1x1x1x1x64xf32>,
    %295 = vector.extract_strided_slice %109 {offsets = [0, 4, 5, 0], sizes = [2, 1, 1, 64], strides = [1, 1, 1, 1]} : vector<2x8x8x64xf32> to vector<2x1x1x64xf32>
    %296 = vector.shape_cast %295 : vector<2x1x1x64xf32> to vector<2x64xf32>
    %c0_360 = arith.constant 0 : index
    %c1_361 = arith.constant 1 : index
    %c0_362 = arith.constant 0 : index
    %c2_363 = arith.constant 2 : index
    %c3_364 = arith.constant 3 : index
    %c0_365 = arith.constant 0 : index
    %297 = vector.load %arg29[%c0_360, %c1_361, %c0_362, %c2_363, %c3_364, %c0_365] : memref<2x2x2x5x5x64xf32, #tpu.memory_space<vmem>>, vector<2x1x1x1x1x64xf32>
    %298 = vector.shape_cast %297 : vector<2x1x1x1x1x64xf32> to vector<2x64xf32>
    %299 = vector.shape_cast %296 : vector<2x64xf32> to vector<2x1x1x1x1x64xf32>
    tpu.vector_store %arg29[%c0_360, %c1_361, %c0_362, %c2_363, %c3_364, %c0_365], %299 {strides = array<i32>} : memref<2x2x2x5x5x64xf32, #tpu.memory_space<vmem>>, vector<2x1x1x1x1x64xf32>,
    %300 = vector.extract_strided_slice %109 {offsets = [0, 4, 6, 0], sizes = [2, 1, 1, 64], strides = [1, 1, 1, 1]} : vector<2x8x8x64xf32> to vector<2x1x1x64xf32>
    %301 = vector.shape_cast %300 : vector<2x1x1x64xf32> to vector<2x64xf32>
    %c0_366 = arith.constant 0 : index
    %c1_367 = arith.constant 1 : index
    %c1_368 = arith.constant 1 : index
    %c2_369 = arith.constant 2 : index
    %c3_370 = arith.constant 3 : index
    %c0_371 = arith.constant 0 : index
    %302 = vector.load %arg29[%c0_366, %c1_367, %c1_368, %c2_369, %c3_370, %c0_371] : memref<2x2x2x5x5x64xf32, #tpu.memory_space<vmem>>, vector<2x1x1x1x1x64xf32>
    %303 = vector.shape_cast %302 : vector<2x1x1x1x1x64xf32> to vector<2x64xf32>
    %304 = vector.shape_cast %301 : vector<2x64xf32> to vector<2x1x1x1x1x64xf32>
    tpu.vector_store %arg29[%c0_366, %c1_367, %c1_368, %c2_369, %c3_370, %c0_371], %304 {strides = array<i32>} : memref<2x2x2x5x5x64xf32, #tpu.memory_space<vmem>>, vector<2x1x1x1x1x64xf32>,
    %305 = vector.extract_strided_slice %109 {offsets = [0, 4, 7, 0], sizes = [2, 1, 1, 64], strides = [1, 1, 1, 1]} : vector<2x8x8x64xf32> to vector<2x1x1x64xf32>
    %306 = vector.shape_cast %305 : vector<2x1x1x64xf32> to vector<2x64xf32>
    %c0_372 = arith.constant 0 : index
    %c1_373 = arith.constant 1 : index
    %c0_374 = arith.constant 0 : index
    %c2_375 = arith.constant 2 : index
    %c4_376 = arith.constant 4 : index
    %c0_377 = arith.constant 0 : index
    %307 = vector.load %arg29[%c0_372, %c1_373, %c0_374, %c2_375, %c4_376, %c0_377] : memref<2x2x2x5x5x64xf32, #tpu.memory_space<vmem>>, vector<2x1x1x1x1x64xf32>
    %308 = vector.shape_cast %307 : vector<2x1x1x1x1x64xf32> to vector<2x64xf32>
    %309 = vector.shape_cast %306 : vector<2x64xf32> to vector<2x1x1x1x1x64xf32>
    tpu.vector_store %arg29[%c0_372, %c1_373, %c0_374, %c2_375, %c4_376, %c0_377], %309 {strides = array<i32>} : memref<2x2x2x5x5x64xf32, #tpu.memory_space<vmem>>, vector<2x1x1x1x1x64xf32>,
    %310 = vector.extract_strided_slice %109 {offsets = [0, 5, 0, 0], sizes = [2, 1, 1, 64], strides = [1, 1, 1, 1]} : vector<2x8x8x64xf32> to vector<2x1x1x64xf32>
    %311 = vector.shape_cast %310 : vector<2x1x1x64xf32> to vector<2x64xf32>
    %c0_378 = arith.constant 0 : index
    %c0_379 = arith.constant 0 : index
    %c1_380 = arith.constant 1 : index
    %c3_381 = arith.constant 3 : index
    %c0_382 = arith.constant 0 : index
    %c0_383 = arith.constant 0 : index
    %312 = vector.load %arg29[%c0_378, %c0_379, %c1_380, %c3_381, %c0_382, %c0_383] : memref<2x2x2x5x5x64xf32, #tpu.memory_space<vmem>>, vector<2x1x1x1x1x64xf32>
    %313 = vector.shape_cast %312 : vector<2x1x1x1x1x64xf32> to vector<2x64xf32>
    %314 = vector.shape_cast %311 : vector<2x64xf32> to vector<2x1x1x1x1x64xf32>
    tpu.vector_store %arg29[%c0_378, %c0_379, %c1_380, %c3_381, %c0_382, %c0_383], %314 {strides = array<i32>} : memref<2x2x2x5x5x64xf32, #tpu.memory_space<vmem>>, vector<2x1x1x1x1x64xf32>,
    %315 = vector.extract_strided_slice %109 {offsets = [0, 5, 1, 0], sizes = [2, 1, 1, 64], strides = [1, 1, 1, 1]} : vector<2x8x8x64xf32> to vector<2x1x1x64xf32>
    %316 = vector.shape_cast %315 : vector<2x1x1x64xf32> to vector<2x64xf32>
    %c0_384 = arith.constant 0 : index
    %c0_385 = arith.constant 0 : index
    %c0_386 = arith.constant 0 : index
    %c3_387 = arith.constant 3 : index
    %c1_388 = arith.constant 1 : index
    %c0_389 = arith.constant 0 : index
    %317 = vector.load %arg29[%c0_384, %c0_385, %c0_386, %c3_387, %c1_388, %c0_389] : memref<2x2x2x5x5x64xf32, #tpu.memory_space<vmem>>, vector<2x1x1x1x1x64xf32>
    %318 = vector.shape_cast %317 : vector<2x1x1x1x1x64xf32> to vector<2x64xf32>
    %319 = vector.shape_cast %316 : vector<2x64xf32> to vector<2x1x1x1x1x64xf32>
    tpu.vector_store %arg29[%c0_384, %c0_385, %c0_386, %c3_387, %c1_388, %c0_389], %319 {strides = array<i32>} : memref<2x2x2x5x5x64xf32, #tpu.memory_space<vmem>>, vector<2x1x1x1x1x64xf32>,
    %320 = vector.extract_strided_slice %109 {offsets = [0, 5, 2, 0], sizes = [2, 1, 1, 64], strides = [1, 1, 1, 1]} : vector<2x8x8x64xf32> to vector<2x1x1x64xf32>
    %321 = vector.shape_cast %320 : vector<2x1x1x64xf32> to vector<2x64xf32>
    %c0_390 = arith.constant 0 : index
    %c0_391 = arith.constant 0 : index
    %c1_392 = arith.constant 1 : index
    %c3_393 = arith.constant 3 : index
    %c1_394 = arith.constant 1 : index
    %c0_395 = arith.constant 0 : index
    %322 = vector.load %arg29[%c0_390, %c0_391, %c1_392, %c3_393, %c1_394, %c0_395] : memref<2x2x2x5x5x64xf32, #tpu.memory_space<vmem>>, vector<2x1x1x1x1x64xf32>
    %323 = vector.shape_cast %322 : vector<2x1x1x1x1x64xf32> to vector<2x64xf32>
    %324 = vector.shape_cast %321 : vector<2x64xf32> to vector<2x1x1x1x1x64xf32>
    tpu.vector_store %arg29[%c0_390, %c0_391, %c1_392, %c3_393, %c1_394, %c0_395], %324 {strides = array<i32>} : memref<2x2x2x5x5x64xf32, #tpu.memory_space<vmem>>, vector<2x1x1x1x1x64xf32>,
    %325 = vector.extract_strided_slice %109 {offsets = [0, 5, 3, 0], sizes = [2, 1, 1, 64], strides = [1, 1, 1, 1]} : vector<2x8x8x64xf32> to vector<2x1x1x64xf32>
    %326 = vector.shape_cast %325 : vector<2x1x1x64xf32> to vector<2x64xf32>
    %c0_396 = arith.constant 0 : index
    %c0_397 = arith.constant 0 : index
    %c0_398 = arith.constant 0 : index
    %c3_399 = arith.constant 3 : index
    %c2_400 = arith.constant 2 : index
    %c0_401 = arith.constant 0 : index
    %327 = vector.load %arg29[%c0_396, %c0_397, %c0_398, %c3_399, %c2_400, %c0_401] : memref<2x2x2x5x5x64xf32, #tpu.memory_space<vmem>>, vector<2x1x1x1x1x64xf32>
    %328 = vector.shape_cast %327 : vector<2x1x1x1x1x64xf32> to vector<2x64xf32>
    %329 = vector.shape_cast %326 : vector<2x64xf32> to vector<2x1x1x1x1x64xf32>
    tpu.vector_store %arg29[%c0_396, %c0_397, %c0_398, %c3_399, %c2_400, %c0_401], %329 {strides = array<i32>} : memref<2x2x2x5x5x64xf32, #tpu.memory_space<vmem>>, vector<2x1x1x1x1x64xf32>,
    %330 = vector.extract_strided_slice %109 {offsets = [0, 5, 4, 0], sizes = [2, 1, 1, 64], strides = [1, 1, 1, 1]} : vector<2x8x8x64xf32> to vector<2x1x1x64xf32>
    %331 = vector.shape_cast %330 : vector<2x1x1x64xf32> to vector<2x64xf32>
    %c0_402 = arith.constant 0 : index
    %c0_403 = arith.constant 0 : index
    %c1_404 = arith.constant 1 : index
    %c3_405 = arith.constant 3 : index
    %c2_406 = arith.constant 2 : index
    %c0_407 = arith.constant 0 : index
    %332 = vector.load %arg29[%c0_402, %c0_403, %c1_404, %c3_405, %c2_406, %c0_407] : memref<2x2x2x5x5x64xf32, #tpu.memory_space<vmem>>, vector<2x1x1x1x1x64xf32>
    %333 = vector.shape_cast %332 : vector<2x1x1x1x1x64xf32> to vector<2x64xf32>
    %334 = vector.shape_cast %331 : vector<2x64xf32> to vector<2x1x1x1x1x64xf32>
    tpu.vector_store %arg29[%c0_402, %c0_403, %c1_404, %c3_405, %c2_406, %c0_407], %334 {strides = array<i32>} : memref<2x2x2x5x5x64xf32, #tpu.memory_space<vmem>>, vector<2x1x1x1x1x64xf32>,
    %335 = vector.extract_strided_slice %109 {offsets = [0, 5, 5, 0], sizes = [2, 1, 1, 64], strides = [1, 1, 1, 1]} : vector<2x8x8x64xf32> to vector<2x1x1x64xf32>
    %336 = vector.shape_cast %335 : vector<2x1x1x64xf32> to vector<2x64xf32>
    %c0_408 = arith.constant 0 : index
    %c0_409 = arith.constant 0 : index
    %c0_410 = arith.constant 0 : index
    %c3_411 = arith.constant 3 : index
    %c3_412 = arith.constant 3 : index
    %c0_413 = arith.constant 0 : index
    %337 = vector.load %arg29[%c0_408, %c0_409, %c0_410, %c3_411, %c3_412, %c0_413] : memref<2x2x2x5x5x64xf32, #tpu.memory_space<vmem>>, vector<2x1x1x1x1x64xf32>
    %338 = vector.shape_cast %337 : vector<2x1x1x1x1x64xf32> to vector<2x64xf32>
    %339 = vector.shape_cast %336 : vector<2x64xf32> to vector<2x1x1x1x1x64xf32>
    tpu.vector_store %arg29[%c0_408, %c0_409, %c0_410, %c3_411, %c3_412, %c0_413], %339 {strides = array<i32>} : memref<2x2x2x5x5x64xf32, #tpu.memory_space<vmem>>, vector<2x1x1x1x1x64xf32>,
    %340 = vector.extract_strided_slice %109 {offsets = [0, 5, 6, 0], sizes = [2, 1, 1, 64], strides = [1, 1, 1, 1]} : vector<2x8x8x64xf32> to vector<2x1x1x64xf32>
    %341 = vector.shape_cast %340 : vector<2x1x1x64xf32> to vector<2x64xf32>
    %c0_414 = arith.constant 0 : index
    %c0_415 = arith.constant 0 : index
    %c1_416 = arith.constant 1 : index
    %c3_417 = arith.constant 3 : index
    %c3_418 = arith.constant 3 : index
    %c0_419 = arith.constant 0 : index
    %342 = vector.load %arg29[%c0_414, %c0_415, %c1_416, %c3_417, %c3_418, %c0_419] : memref<2x2x2x5x5x64xf32, #tpu.memory_space<vmem>>, vector<2x1x1x1x1x64xf32>
    %343 = vector.shape_cast %342 : vector<2x1x1x1x1x64xf32> to vector<2x64xf32>
    %344 = vector.shape_cast %341 : vector<2x64xf32> to vector<2x1x1x1x1x64xf32>
    tpu.vector_store %arg29[%c0_414, %c0_415, %c1_416, %c3_417, %c3_418, %c0_419], %344 {strides = array<i32>} : memref<2x2x2x5x5x64xf32, #tpu.memory_space<vmem>>, vector<2x1x1x1x1x64xf32>,
    %345 = vector.extract_strided_slice %109 {offsets = [0, 5, 7, 0], sizes = [2, 1, 1, 64], strides = [1, 1, 1, 1]} : vector<2x8x8x64xf32> to vector<2x1x1x64xf32>
    %346 = vector.shape_cast %345 : vector<2x1x1x64xf32> to vector<2x64xf32>
    %c0_420 = arith.constant 0 : index
    %c0_421 = arith.constant 0 : index
    %c0_422 = arith.constant 0 : index
    %c3_423 = arith.constant 3 : index
    %c4_424 = arith.constant 4 : index
    %c0_425 = arith.constant 0 : index
    %347 = vector.load %arg29[%c0_420, %c0_421, %c0_422, %c3_423, %c4_424, %c0_425] : memref<2x2x2x5x5x64xf32, #tpu.memory_space<vmem>>, vector<2x1x1x1x1x64xf32>
    %348 = vector.shape_cast %347 : vector<2x1x1x1x1x64xf32> to vector<2x64xf32>
    %349 = vector.shape_cast %346 : vector<2x64xf32> to vector<2x1x1x1x1x64xf32>
    tpu.vector_store %arg29[%c0_420, %c0_421, %c0_422, %c3_423, %c4_424, %c0_425], %349 {strides = array<i32>} : memref<2x2x2x5x5x64xf32, #tpu.memory_space<vmem>>, vector<2x1x1x1x1x64xf32>,
    %350 = vector.extract_strided_slice %109 {offsets = [0, 6, 0, 0], sizes = [2, 1, 1, 64], strides = [1, 1, 1, 1]} : vector<2x8x8x64xf32> to vector<2x1x1x64xf32>
    %351 = vector.shape_cast %350 : vector<2x1x1x64xf32> to vector<2x64xf32>
    %c0_426 = arith.constant 0 : index
    %c1_427 = arith.constant 1 : index
    %c1_428 = arith.constant 1 : index
    %c3_429 = arith.constant 3 : index
    %c0_430 = arith.constant 0 : index
    %c0_431 = arith.constant 0 : index
    %352 = vector.load %arg29[%c0_426, %c1_427, %c1_428, %c3_429, %c0_430, %c0_431] : memref<2x2x2x5x5x64xf32, #tpu.memory_space<vmem>>, vector<2x1x1x1x1x64xf32>
    %353 = vector.shape_cast %352 : vector<2x1x1x1x1x64xf32> to vector<2x64xf32>
    %354 = vector.shape_cast %351 : vector<2x64xf32> to vector<2x1x1x1x1x64xf32>
    tpu.vector_store %arg29[%c0_426, %c1_427, %c1_428, %c3_429, %c0_430, %c0_431], %354 {strides = array<i32>} : memref<2x2x2x5x5x64xf32, #tpu.memory_space<vmem>>, vector<2x1x1x1x1x64xf32>,
    %355 = vector.extract_strided_slice %109 {offsets = [0, 6, 1, 0], sizes = [2, 1, 1, 64], strides = [1, 1, 1, 1]} : vector<2x8x8x64xf32> to vector<2x1x1x64xf32>
    %356 = vector.shape_cast %355 : vector<2x1x1x64xf32> to vector<2x64xf32>
    %c0_432 = arith.constant 0 : index
    %c1_433 = arith.constant 1 : index
    %c0_434 = arith.constant 0 : index
    %c3_435 = arith.constant 3 : index
    %c1_436 = arith.constant 1 : index
    %c0_437 = arith.constant 0 : index
    %357 = vector.load %arg29[%c0_432, %c1_433, %c0_434, %c3_435, %c1_436, %c0_437] : memref<2x2x2x5x5x64xf32, #tpu.memory_space<vmem>>, vector<2x1x1x1x1x64xf32>
    %358 = vector.shape_cast %357 : vector<2x1x1x1x1x64xf32> to vector<2x64xf32>
    %359 = vector.shape_cast %356 : vector<2x64xf32> to vector<2x1x1x1x1x64xf32>
    tpu.vector_store %arg29[%c0_432, %c1_433, %c0_434, %c3_435, %c1_436, %c0_437], %359 {strides = array<i32>} : memref<2x2x2x5x5x64xf32, #tpu.memory_space<vmem>>, vector<2x1x1x1x1x64xf32>,
    %360 = vector.extract_strided_slice %109 {offsets = [0, 6, 2, 0], sizes = [2, 1, 1, 64], strides = [1, 1, 1, 1]} : vector<2x8x8x64xf32> to vector<2x1x1x64xf32>
    %361 = vector.shape_cast %360 : vector<2x1x1x64xf32> to vector<2x64xf32>
    %c0_438 = arith.constant 0 : index
    %c1_439 = arith.constant 1 : index
    %c1_440 = arith.constant 1 : index
    %c3_441 = arith.constant 3 : index
    %c1_442 = arith.constant 1 : index
    %c0_443 = arith.constant 0 : index
    %362 = vector.load %arg29[%c0_438, %c1_439, %c1_440, %c3_441, %c1_442, %c0_443] : memref<2x2x2x5x5x64xf32, #tpu.memory_space<vmem>>, vector<2x1x1x1x1x64xf32>
    %363 = vector.shape_cast %362 : vector<2x1x1x1x1x64xf32> to vector<2x64xf32>
    %364 = vector.shape_cast %361 : vector<2x64xf32> to vector<2x1x1x1x1x64xf32>
    tpu.vector_store %arg29[%c0_438, %c1_439, %c1_440, %c3_441, %c1_442, %c0_443], %364 {strides = array<i32>} : memref<2x2x2x5x5x64xf32, #tpu.memory_space<vmem>>, vector<2x1x1x1x1x64xf32>,
    %365 = vector.extract_strided_slice %109 {offsets = [0, 6, 3, 0], sizes = [2, 1, 1, 64], strides = [1, 1, 1, 1]} : vector<2x8x8x64xf32> to vector<2x1x1x64xf32>
    %366 = vector.shape_cast %365 : vector<2x1x1x64xf32> to vector<2x64xf32>
    %c0_444 = arith.constant 0 : index
    %c1_445 = arith.constant 1 : index
    %c0_446 = arith.constant 0 : index
    %c3_447 = arith.constant 3 : index
    %c2_448 = arith.constant 2 : index
    %c0_449 = arith.constant 0 : index
    %367 = vector.load %arg29[%c0_444, %c1_445, %c0_446, %c3_447, %c2_448, %c0_449] : memref<2x2x2x5x5x64xf32, #tpu.memory_space<vmem>>, vector<2x1x1x1x1x64xf32>
    %368 = vector.shape_cast %367 : vector<2x1x1x1x1x64xf32> to vector<2x64xf32>
    %369 = vector.shape_cast %366 : vector<2x64xf32> to vector<2x1x1x1x1x64xf32>
    tpu.vector_store %arg29[%c0_444, %c1_445, %c0_446, %c3_447, %c2_448, %c0_449], %369 {strides = array<i32>} : memref<2x2x2x5x5x64xf32, #tpu.memory_space<vmem>>, vector<2x1x1x1x1x64xf32>,
    %370 = vector.extract_strided_slice %109 {offsets = [0, 6, 4, 0], sizes = [2, 1, 1, 64], strides = [1, 1, 1, 1]} : vector<2x8x8x64xf32> to vector<2x1x1x64xf32>
    %371 = vector.shape_cast %370 : vector<2x1x1x64xf32> to vector<2x64xf32>
    %c0_450 = arith.constant 0 : index
    %c1_451 = arith.constant 1 : index
    %c1_452 = arith.constant 1 : index
    %c3_453 = arith.constant 3 : index
    %c2_454 = arith.constant 2 : index
    %c0_455 = arith.constant 0 : index
    %372 = vector.load %arg29[%c0_450, %c1_451, %c1_452, %c3_453, %c2_454, %c0_455] : memref<2x2x2x5x5x64xf32, #tpu.memory_space<vmem>>, vector<2x1x1x1x1x64xf32>
    %373 = vector.shape_cast %372 : vector<2x1x1x1x1x64xf32> to vector<2x64xf32>
    %374 = vector.shape_cast %371 : vector<2x64xf32> to vector<2x1x1x1x1x64xf32>
    tpu.vector_store %arg29[%c0_450, %c1_451, %c1_452, %c3_453, %c2_454, %c0_455], %374 {strides = array<i32>} : memref<2x2x2x5x5x64xf32, #tpu.memory_space<vmem>>, vector<2x1x1x1x1x64xf32>,
    %375 = vector.extract_strided_slice %109 {offsets = [0, 6, 5, 0], sizes = [2, 1, 1, 64], strides = [1, 1, 1, 1]} : vector<2x8x8x64xf32> to vector<2x1x1x64xf32>
    %376 = vector.shape_cast %375 : vector<2x1x1x64xf32> to vector<2x64xf32>
    %c0_456 = arith.constant 0 : index
    %c1_457 = arith.constant 1 : index
    %c0_458 = arith.constant 0 : index
    %c3_459 = arith.constant 3 : index
    %c3_460 = arith.constant 3 : index
    %c0_461 = arith.constant 0 : index
    %377 = vector.load %arg29[%c0_456, %c1_457, %c0_458, %c3_459, %c3_460, %c0_461] : memref<2x2x2x5x5x64xf32, #tpu.memory_space<vmem>>, vector<2x1x1x1x1x64xf32>
    %378 = vector.shape_cast %377 : vector<2x1x1x1x1x64xf32> to vector<2x64xf32>
    %379 = vector.shape_cast %376 : vector<2x64xf32> to vector<2x1x1x1x1x64xf32>
    tpu.vector_store %arg29[%c0_456, %c1_457, %c0_458, %c3_459, %c3_460, %c0_461], %379 {strides = array<i32>} : memref<2x2x2x5x5x64xf32, #tpu.memory_space<vmem>>, vector<2x1x1x1x1x64xf32>,
    %380 = vector.extract_strided_slice %109 {offsets = [0, 6, 6, 0], sizes = [2, 1, 1, 64], strides = [1, 1, 1, 1]} : vector<2x8x8x64xf32> to vector<2x1x1x64xf32>
    %381 = vector.shape_cast %380 : vector<2x1x1x64xf32> to vector<2x64xf32>
    %c0_462 = arith.constant 0 : index
    %c1_463 = arith.constant 1 : index
    %c1_464 = arith.constant 1 : index
    %c3_465 = arith.constant 3 : index
    %c3_466 = arith.constant 3 : index
    %c0_467 = arith.constant 0 : index
    %382 = vector.load %arg29[%c0_462, %c1_463, %c1_464, %c3_465, %c3_466, %c0_467] : memref<2x2x2x5x5x64xf32, #tpu.memory_space<vmem>>, vector<2x1x1x1x1x64xf32>
    %383 = vector.shape_cast %382 : vector<2x1x1x1x1x64xf32> to vector<2x64xf32>
    %384 = vector.shape_cast %381 : vector<2x64xf32> to vector<2x1x1x1x1x64xf32>
    tpu.vector_store %arg29[%c0_462, %c1_463, %c1_464, %c3_465, %c3_466, %c0_467], %384 {strides = array<i32>} : memref<2x2x2x5x5x64xf32, #tpu.memory_space<vmem>>, vector<2x1x1x1x1x64xf32>,
    %385 = vector.extract_strided_slice %109 {offsets = [0, 6, 7, 0], sizes = [2, 1, 1, 64], strides = [1, 1, 1, 1]} : vector<2x8x8x64xf32> to vector<2x1x1x64xf32>
    %386 = vector.shape_cast %385 : vector<2x1x1x64xf32> to vector<2x64xf32>
    %c0_468 = arith.constant 0 : index
    %c1_469 = arith.constant 1 : index
    %c0_470 = arith.constant 0 : index
    %c3_471 = arith.constant 3 : index
    %c4_472 = arith.constant 4 : index
    %c0_473 = arith.constant 0 : index
    %387 = vector.load %arg29[%c0_468, %c1_469, %c0_470, %c3_471, %c4_472, %c0_473] : memref<2x2x2x5x5x64xf32, #tpu.memory_space<vmem>>, vector<2x1x1x1x1x64xf32>
    %388 = vector.shape_cast %387 : vector<2x1x1x1x1x64xf32> to vector<2x64xf32>
    %389 = vector.shape_cast %386 : vector<2x64xf32> to vector<2x1x1x1x1x64xf32>
    tpu.vector_store %arg29[%c0_468, %c1_469, %c0_470, %c3_471, %c4_472, %c0_473], %389 {strides = array<i32>} : memref<2x2x2x5x5x64xf32, #tpu.memory_space<vmem>>, vector<2x1x1x1x1x64xf32>,
    %390 = vector.extract_strided_slice %109 {offsets = [0, 7, 0, 0], sizes = [2, 1, 1, 64], strides = [1, 1, 1, 1]} : vector<2x8x8x64xf32> to vector<2x1x1x64xf32>
    %391 = vector.shape_cast %390 : vector<2x1x1x64xf32> to vector<2x64xf32>
    %c0_474 = arith.constant 0 : index
    %c0_475 = arith.constant 0 : index
    %c1_476 = arith.constant 1 : index
    %c4_477 = arith.constant 4 : index
    %c0_478 = arith.constant 0 : index
    %c0_479 = arith.constant 0 : index
    %392 = vector.load %arg29[%c0_474, %c0_475, %c1_476, %c4_477, %c0_478, %c0_479] : memref<2x2x2x5x5x64xf32, #tpu.memory_space<vmem>>, vector<2x1x1x1x1x64xf32>
    %393 = vector.shape_cast %392 : vector<2x1x1x1x1x64xf32> to vector<2x64xf32>
    %394 = vector.shape_cast %391 : vector<2x64xf32> to vector<2x1x1x1x1x64xf32>
    tpu.vector_store %arg29[%c0_474, %c0_475, %c1_476, %c4_477, %c0_478, %c0_479], %394 {strides = array<i32>} : memref<2x2x2x5x5x64xf32, #tpu.memory_space<vmem>>, vector<2x1x1x1x1x64xf32>,
    %395 = vector.extract_strided_slice %109 {offsets = [0, 7, 1, 0], sizes = [2, 1, 1, 64], strides = [1, 1, 1, 1]} : vector<2x8x8x64xf32> to vector<2x1x1x64xf32>
    %396 = vector.shape_cast %395 : vector<2x1x1x64xf32> to vector<2x64xf32>
    %c0_480 = arith.constant 0 : index
    %c0_481 = arith.constant 0 : index
    %c0_482 = arith.constant 0 : index
    %c4_483 = arith.constant 4 : index
    %c1_484 = arith.constant 1 : index
    %c0_485 = arith.constant 0 : index
    %397 = vector.load %arg29[%c0_480, %c0_481, %c0_482, %c4_483, %c1_484, %c0_485] : memref<2x2x2x5x5x64xf32, #tpu.memory_space<vmem>>, vector<2x1x1x1x1x64xf32>
    %398 = vector.shape_cast %397 : vector<2x1x1x1x1x64xf32> to vector<2x64xf32>
    %399 = vector.shape_cast %396 : vector<2x64xf32> to vector<2x1x1x1x1x64xf32>
    tpu.vector_store %arg29[%c0_480, %c0_481, %c0_482, %c4_483, %c1_484, %c0_485], %399 {strides = array<i32>} : memref<2x2x2x5x5x64xf32, #tpu.memory_space<vmem>>, vector<2x1x1x1x1x64xf32>,
    %400 = vector.extract_strided_slice %109 {offsets = [0, 7, 2, 0], sizes = [2, 1, 1, 64], strides = [1, 1, 1, 1]} : vector<2x8x8x64xf32> to vector<2x1x1x64xf32>
    %401 = vector.shape_cast %400 : vector<2x1x1x64xf32> to vector<2x64xf32>
    %c0_486 = arith.constant 0 : index
    %c0_487 = arith.constant 0 : index
    %c1_488 = arith.constant 1 : index
    %c4_489 = arith.constant 4 : index
    %c1_490 = arith.constant 1 : index
    %c0_491 = arith.constant 0 : index
    %402 = vector.load %arg29[%c0_486, %c0_487, %c1_488, %c4_489, %c1_490, %c0_491] : memref<2x2x2x5x5x64xf32, #tpu.memory_space<vmem>>, vector<2x1x1x1x1x64xf32>
    %403 = vector.shape_cast %402 : vector<2x1x1x1x1x64xf32> to vector<2x64xf32>
    %404 = vector.shape_cast %401 : vector<2x64xf32> to vector<2x1x1x1x1x64xf32>
    tpu.vector_store %arg29[%c0_486, %c0_487, %c1_488, %c4_489, %c1_490, %c0_491], %404 {strides = array<i32>} : memref<2x2x2x5x5x64xf32, #tpu.memory_space<vmem>>, vector<2x1x1x1x1x64xf32>,
    %405 = vector.extract_strided_slice %109 {offsets = [0, 7, 3, 0], sizes = [2, 1, 1, 64], strides = [1, 1, 1, 1]} : vector<2x8x8x64xf32> to vector<2x1x1x64xf32>
    %406 = vector.shape_cast %405 : vector<2x1x1x64xf32> to vector<2x64xf32>
    %c0_492 = arith.constant 0 : index
    %c0_493 = arith.constant 0 : index
    %c0_494 = arith.constant 0 : index
    %c4_495 = arith.constant 4 : index
    %c2_496 = arith.constant 2 : index
    %c0_497 = arith.constant 0 : index
    %407 = vector.load %arg29[%c0_492, %c0_493, %c0_494, %c4_495, %c2_496, %c0_497] : memref<2x2x2x5x5x64xf32, #tpu.memory_space<vmem>>, vector<2x1x1x1x1x64xf32>
    %408 = vector.shape_cast %407 : vector<2x1x1x1x1x64xf32> to vector<2x64xf32>
    %409 = vector.shape_cast %406 : vector<2x64xf32> to vector<2x1x1x1x1x64xf32>
    tpu.vector_store %arg29[%c0_492, %c0_493, %c0_494, %c4_495, %c2_496, %c0_497], %409 {strides = array<i32>} : memref<2x2x2x5x5x64xf32, #tpu.memory_space<vmem>>, vector<2x1x1x1x1x64xf32>,
    %410 = vector.extract_strided_slice %109 {offsets = [0, 7, 4, 0], sizes = [2, 1, 1, 64], strides = [1, 1, 1, 1]} : vector<2x8x8x64xf32> to vector<2x1x1x64xf32>
    %411 = vector.shape_cast %410 : vector<2x1x1x64xf32> to vector<2x64xf32>
    %c0_498 = arith.constant 0 : index
    %c0_499 = arith.constant 0 : index
    %c1_500 = arith.constant 1 : index
    %c4_501 = arith.constant 4 : index
    %c2_502 = arith.constant 2 : index
    %c0_503 = arith.constant 0 : index
    %412 = vector.load %arg29[%c0_498, %c0_499, %c1_500, %c4_501, %c2_502, %c0_503] : memref<2x2x2x5x5x64xf32, #tpu.memory_space<vmem>>, vector<2x1x1x1x1x64xf32>
    %413 = vector.shape_cast %412 : vector<2x1x1x1x1x64xf32> to vector<2x64xf32>
    %414 = vector.shape_cast %411 : vector<2x64xf32> to vector<2x1x1x1x1x64xf32>
    tpu.vector_store %arg29[%c0_498, %c0_499, %c1_500, %c4_501, %c2_502, %c0_503], %414 {strides = array<i32>} : memref<2x2x2x5x5x64xf32, #tpu.memory_space<vmem>>, vector<2x1x1x1x1x64xf32>,
    %415 = vector.extract_strided_slice %109 {offsets = [0, 7, 5, 0], sizes = [2, 1, 1, 64], strides = [1, 1, 1, 1]} : vector<2x8x8x64xf32> to vector<2x1x1x64xf32>
    %416 = vector.shape_cast %415 : vector<2x1x1x64xf32> to vector<2x64xf32>
    %c0_504 = arith.constant 0 : index
    %c0_505 = arith.constant 0 : index
    %c0_506 = arith.constant 0 : index
    %c4_507 = arith.constant 4 : index
    %c3_508 = arith.constant 3 : index
    %c0_509 = arith.constant 0 : index
    %417 = vector.load %arg29[%c0_504, %c0_505, %c0_506, %c4_507, %c3_508, %c0_509] : memref<2x2x2x5x5x64xf32, #tpu.memory_space<vmem>>, vector<2x1x1x1x1x64xf32>
    %418 = vector.shape_cast %417 : vector<2x1x1x1x1x64xf32> to vector<2x64xf32>
    %419 = vector.shape_cast %416 : vector<2x64xf32> to vector<2x1x1x1x1x64xf32>
    tpu.vector_store %arg29[%c0_504, %c0_505, %c0_506, %c4_507, %c3_508, %c0_509], %419 {strides = array<i32>} : memref<2x2x2x5x5x64xf32, #tpu.memory_space<vmem>>, vector<2x1x1x1x1x64xf32>,
    %420 = vector.extract_strided_slice %109 {offsets = [0, 7, 6, 0], sizes = [2, 1, 1, 64], strides = [1, 1, 1, 1]} : vector<2x8x8x64xf32> to vector<2x1x1x64xf32>
    %421 = vector.shape_cast %420 : vector<2x1x1x64xf32> to vector<2x64xf32>
    %c0_510 = arith.constant 0 : index
    %c0_511 = arith.constant 0 : index
    %c1_512 = arith.constant 1 : index
    %c4_513 = arith.constant 4 : index
    %c3_514 = arith.constant 3 : index
    %c0_515 = arith.constant 0 : index
    %422 = vector.load %arg29[%c0_510, %c0_511, %c1_512, %c4_513, %c3_514, %c0_515] : memref<2x2x2x5x5x64xf32, #tpu.memory_space<vmem>>, vector<2x1x1x1x1x64xf32>
    %423 = vector.shape_cast %422 : vector<2x1x1x1x1x64xf32> to vector<2x64xf32>
    %424 = vector.shape_cast %421 : vector<2x64xf32> to vector<2x1x1x1x1x64xf32>
    tpu.vector_store %arg29[%c0_510, %c0_511, %c1_512, %c4_513, %c3_514, %c0_515], %424 {strides = array<i32>} : memref<2x2x2x5x5x64xf32, #tpu.memory_space<vmem>>, vector<2x1x1x1x1x64xf32>,
    %425 = vector.extract_strided_slice %109 {offsets = [0, 7, 7, 0], sizes = [2, 1, 1, 64], strides = [1, 1, 1, 1]} : vector<2x8x8x64xf32> to vector<2x1x1x64xf32>
    %426 = vector.shape_cast %425 : vector<2x1x1x64xf32> to vector<2x64xf32>
    %c0_516 = arith.constant 0 : index
    %c0_517 = arith.constant 0 : index
    %c0_518 = arith.constant 0 : index
    %c4_519 = arith.constant 4 : index
    %c4_520 = arith.constant 4 : index
    %c0_521 = arith.constant 0 : index
    %427 = vector.load %arg29[%c0_516, %c0_517, %c0_518, %c4_519, %c4_520, %c0_521] : memref<2x2x2x5x5x64xf32, #tpu.memory_space<vmem>>, vector<2x1x1x1x1x64xf32>
    %428 = vector.shape_cast %427 : vector<2x1x1x1x1x64xf32> to vector<2x64xf32>
    %429 = vector.shape_cast %426 : vector<2x64xf32> to vector<2x1x1x1x1x64xf32>
    tpu.vector_store %arg29[%c0_516, %c0_517, %c0_518, %c4_519, %c4_520, %c0_521], %429 {strides = array<i32>} : memref<2x2x2x5x5x64xf32, #tpu.memory_space<vmem>>, vector<2x1x1x1x1x64xf32>,
    %c0_522 = arith.constant 0 : index
    %c0_523 = arith.constant 0 : index
    %c0_524 = arith.constant 0 : index
    %c0_525 = arith.constant 0 : index
    %c0_526 = arith.constant 0 : index
    %c0_527 = arith.constant 0 : index
    %430 = vector.load %arg29[%c0_522, %c0_523, %c0_524, %c0_525, %c0_526, %c0_527] : memref<2x2x2x5x5x64xf32, #tpu.memory_space<vmem>>, vector<2x1x1x4x4x64xf32>
    %431 = vector.shape_cast %430 : vector<2x1x1x4x4x64xf32> to vector<2x4x4x64xf32>
    %432 = vector.shape_cast %431 : vector<2x4x4x64xf32> to vector<32x64xf32>
    %433 = arith.truncf %432 : vector<32x64xf32> to vector<32x64xbf16>
    %c0_528 = arith.constant 0 : index
    %c0_529 = arith.constant 0 : index
    %434 = vector.load %arg30[%c0_528, %c0_529] : memref<32x576xbf16, #tpu.memory_space<vmem>>, vector<32x64xbf16>
    tpu.vector_store %arg30[%c0_528, %c0_529], %433 {strides = array<i32>} : memref<32x576xbf16, #tpu.memory_space<vmem>>, vector<32x64xbf16>,
    %c0_530 = arith.constant 0 : index
    %c0_531 = arith.constant 0 : index
    %c1_532 = arith.constant 1 : index
    %c0_533 = arith.constant 0 : index
    %c0_534 = arith.constant 0 : index
    %c0_535 = arith.constant 0 : index
    %435 = vector.load %arg29[%c0_530, %c0_531, %c1_532, %c0_533, %c0_534, %c0_535] : memref<2x2x2x5x5x64xf32, #tpu.memory_space<vmem>>, vector<2x1x1x4x4x64xf32>
    %436 = vector.shape_cast %435 : vector<2x1x1x4x4x64xf32> to vector<2x4x4x64xf32>
    %437 = vector.shape_cast %436 : vector<2x4x4x64xf32> to vector<32x64xf32>
    %438 = arith.truncf %437 : vector<32x64xf32> to vector<32x64xbf16>
    %c0_536 = arith.constant 0 : index
    %c64_537 = arith.constant 64 : index
    %439 = vector.load %arg30[%c0_536, %c64_537] : memref<32x576xbf16, #tpu.memory_space<vmem>>, vector<32x64xbf16>
    tpu.vector_store %arg30[%c0_536, %c64_537], %438 {strides = array<i32>} : memref<32x576xbf16, #tpu.memory_space<vmem>>, vector<32x64xbf16>,
    %c0_538 = arith.constant 0 : index
    %c0_539 = arith.constant 0 : index
    %c0_540 = arith.constant 0 : index
    %c0_541 = arith.constant 0 : index
    %c1_542 = arith.constant 1 : index
    %c0_543 = arith.constant 0 : index
    %440 = vector.load %arg29[%c0_538, %c0_539, %c0_540, %c0_541, %c1_542, %c0_543] : memref<2x2x2x5x5x64xf32, #tpu.memory_space<vmem>>, vector<2x1x1x4x4x64xf32>
    %441 = vector.shape_cast %440 : vector<2x1x1x4x4x64xf32> to vector<2x4x4x64xf32>
    %442 = vector.shape_cast %441 : vector<2x4x4x64xf32> to vector<32x64xf32>
    %443 = arith.truncf %442 : vector<32x64xf32> to vector<32x64xbf16>
    %c0_544 = arith.constant 0 : index
    %c128_545 = arith.constant 128 : index
    %444 = vector.load %arg30[%c0_544, %c128_545] : memref<32x576xbf16, #tpu.memory_space<vmem>>, vector<32x64xbf16>
    tpu.vector_store %arg30[%c0_544, %c128_545], %443 {strides = array<i32>} : memref<32x576xbf16, #tpu.memory_space<vmem>>, vector<32x64xbf16>,
    %c0_546 = arith.constant 0 : index
    %c1_547 = arith.constant 1 : index
    %c0_548 = arith.constant 0 : index
    %c0_549 = arith.constant 0 : index
    %c0_550 = arith.constant 0 : index
    %c0_551 = arith.constant 0 : index
    %445 = vector.load %arg29[%c0_546, %c1_547, %c0_548, %c0_549, %c0_550, %c0_551] : memref<2x2x2x5x5x64xf32, #tpu.memory_space<vmem>>, vector<2x1x1x4x4x64xf32>
    %446 = vector.shape_cast %445 : vector<2x1x1x4x4x64xf32> to vector<2x4x4x64xf32>
    %447 = vector.shape_cast %446 : vector<2x4x4x64xf32> to vector<32x64xf32>
    %448 = arith.truncf %447 : vector<32x64xf32> to vector<32x64xbf16>
    %c0_552 = arith.constant 0 : index
    %c192_553 = arith.constant 192 : index
    %449 = vector.load %arg30[%c0_552, %c192_553] : memref<32x576xbf16, #tpu.memory_space<vmem>>, vector<32x64xbf16>
    tpu.vector_store %arg30[%c0_552, %c192_553], %448 {strides = array<i32>} : memref<32x576xbf16, #tpu.memory_space<vmem>>, vector<32x64xbf16>,
    %c0_554 = arith.constant 0 : index
    %c1_555 = arith.constant 1 : index
    %c1_556 = arith.constant 1 : index
    %c0_557 = arith.constant 0 : index
    %c0_558 = arith.constant 0 : index
    %c0_559 = arith.constant 0 : index
    %450 = vector.load %arg29[%c0_554, %c1_555, %c1_556, %c0_557, %c0_558, %c0_559] : memref<2x2x2x5x5x64xf32, #tpu.memory_space<vmem>>, vector<2x1x1x4x4x64xf32>
    %451 = vector.shape_cast %450 : vector<2x1x1x4x4x64xf32> to vector<2x4x4x64xf32>
    %452 = vector.shape_cast %451 : vector<2x4x4x64xf32> to vector<32x64xf32>
    %453 = arith.truncf %452 : vector<32x64xf32> to vector<32x64xbf16>
    %c0_560 = arith.constant 0 : index
    %c256_561 = arith.constant 256 : index
    %454 = vector.load %arg30[%c0_560, %c256_561] : memref<32x576xbf16, #tpu.memory_space<vmem>>, vector<32x64xbf16>
    tpu.vector_store %arg30[%c0_560, %c256_561], %453 {strides = array<i32>} : memref<32x576xbf16, #tpu.memory_space<vmem>>, vector<32x64xbf16>,
    %c0_562 = arith.constant 0 : index
    %c1_563 = arith.constant 1 : index
    %c0_564 = arith.constant 0 : index
    %c0_565 = arith.constant 0 : index
    %c1_566 = arith.constant 1 : index
    %c0_567 = arith.constant 0 : index
    %455 = vector.load %arg29[%c0_562, %c1_563, %c0_564, %c0_565, %c1_566, %c0_567] : memref<2x2x2x5x5x64xf32, #tpu.memory_space<vmem>>, vector<2x1x1x4x4x64xf32>
    %456 = vector.shape_cast %455 : vector<2x1x1x4x4x64xf32> to vector<2x4x4x64xf32>
    %457 = vector.shape_cast %456 : vector<2x4x4x64xf32> to vector<32x64xf32>
    %458 = arith.truncf %457 : vector<32x64xf32> to vector<32x64xbf16>
    %c0_568 = arith.constant 0 : index
    %c320 = arith.constant 320 : index
    %459 = vector.load %arg30[%c0_568, %c320] : memref<32x576xbf16, #tpu.memory_space<vmem>>, vector<32x64xbf16>
    tpu.vector_store %arg30[%c0_568, %c320], %458 {strides = array<i32>} : memref<32x576xbf16, #tpu.memory_space<vmem>>, vector<32x64xbf16>,
    %c0_569 = arith.constant 0 : index
    %c0_570 = arith.constant 0 : index
    %c0_571 = arith.constant 0 : index
    %c1_572 = arith.constant 1 : index
    %c0_573 = arith.constant 0 : index
    %c0_574 = arith.constant 0 : index
    %460 = vector.load %arg29[%c0_569, %c0_570, %c0_571, %c1_572, %c0_573, %c0_574] : memref<2x2x2x5x5x64xf32, #tpu.memory_space<vmem>>, vector<2x1x1x4x4x64xf32>
    %461 = vector.shape_cast %460 : vector<2x1x1x4x4x64xf32> to vector<2x4x4x64xf32>
    %462 = vector.shape_cast %461 : vector<2x4x4x64xf32> to vector<32x64xf32>
    %463 = arith.truncf %462 : vector<32x64xf32> to vector<32x64xbf16>
    %c0_575 = arith.constant 0 : index
    %c384 = arith.constant 384 : index
    %464 = vector.load %arg30[%c0_575, %c384] : memref<32x576xbf16, #tpu.memory_space<vmem>>, vector<32x64xbf16>
    tpu.vector_store %arg30[%c0_575, %c384], %463 {strides = array<i32>} : memref<32x576xbf16, #tpu.memory_space<vmem>>, vector<32x64xbf16>,
    %c0_576 = arith.constant 0 : index
    %c0_577 = arith.constant 0 : index
    %c1_578 = arith.constant 1 : index
    %c1_579 = arith.constant 1 : index
    %c0_580 = arith.constant 0 : index
    %c0_581 = arith.constant 0 : index
    %465 = vector.load %arg29[%c0_576, %c0_577, %c1_578, %c1_579, %c0_580, %c0_581] : memref<2x2x2x5x5x64xf32, #tpu.memory_space<vmem>>, vector<2x1x1x4x4x64xf32>
    %466 = vector.shape_cast %465 : vector<2x1x1x4x4x64xf32> to vector<2x4x4x64xf32>
    %467 = vector.shape_cast %466 : vector<2x4x4x64xf32> to vector<32x64xf32>
    %468 = arith.truncf %467 : vector<32x64xf32> to vector<32x64xbf16>
    %c0_582 = arith.constant 0 : index
    %c448 = arith.constant 448 : index
    %469 = vector.load %arg30[%c0_582, %c448] : memref<32x576xbf16, #tpu.memory_space<vmem>>, vector<32x64xbf16>
    tpu.vector_store %arg30[%c0_582, %c448], %468 {strides = array<i32>} : memref<32x576xbf16, #tpu.memory_space<vmem>>, vector<32x64xbf16>,
    %c0_583 = arith.constant 0 : index
    %c0_584 = arith.constant 0 : index
    %c0_585 = arith.constant 0 : index
    %c1_586 = arith.constant 1 : index
    %c1_587 = arith.constant 1 : index
    %c0_588 = arith.constant 0 : index
    %470 = vector.load %arg29[%c0_583, %c0_584, %c0_585, %c1_586, %c1_587, %c0_588] : memref<2x2x2x5x5x64xf32, #tpu.memory_space<vmem>>, vector<2x1x1x4x4x64xf32>
    %471 = vector.shape_cast %470 : vector<2x1x1x4x4x64xf32> to vector<2x4x4x64xf32>
    %472 = vector.shape_cast %471 : vector<2x4x4x64xf32> to vector<32x64xf32>
    %473 = arith.truncf %472 : vector<32x64xf32> to vector<32x64xbf16>
    %c0_589 = arith.constant 0 : index
    %c512 = arith.constant 512 : index
    %474 = vector.load %arg30[%c0_589, %c512] : memref<32x576xbf16, #tpu.memory_space<vmem>>, vector<32x64xbf16>
    tpu.vector_store %arg30[%c0_589, %c512], %473 {strides = array<i32>} : memref<32x576xbf16, #tpu.memory_space<vmem>>, vector<32x64xbf16>,
    %c0_590 = arith.constant 0 : index
    %c0_591 = arith.constant 0 : index
    %475 = vector.load %arg30[%c0_590, %c0_591] : memref<32x576xbf16, #tpu.memory_space<vmem>>, vector<32x576xbf16>
    %c0_592 = arith.constant 0 : index
    %c0_593 = arith.constant 0 : index
    %476 = vector.load %arg5[%c0_592, %c0_593] : memref<576x128xbf16, #tpu.memory_space<vmem>>, vector<576x128xbf16>
    %cst_594 = arith.constant dense<0.000000e+00> : vector<32x128xf32>
    %477 = tpu.matmul %475, %476, %cst_594 {dimension_numbers = #tpu.dot_dimension_numbers<[1], [0], [0], [1], [0, 0, 1, 1], [], []>} : vector<32x576xbf16>, vector<576x128xbf16>, vector<32x128xf32> -> vector<32x128xf32>
    %c0_595 = arith.constant 0 : index
    %c0_596 = arith.constant 0 : index
    %478 = vector.load %arg6[%c0_595, %c0_596] : memref<1x128xf32, #tpu.memory_space<vmem>>, vector<1x128xf32>
    %479 = vector.broadcast %478 : vector<1x128xf32> to vector<32x128xf32>
    %480 = arith.addf %477, %479 : vector<32x128xf32>
    %cst_597 = arith.constant 0.000000e+00 : f32
    %481 = vector.broadcast %cst_597 : f32 to vector<32x128xf32>
    %482 = arith.maximumf %480, %481 : vector<32x128xf32>
    %483 = vector.shape_cast %482 : vector<32x128xf32> to vector<2x16x128xf32>
    %cst_598 = arith.constant dense<0.000000e+00> : vector<2x128xf32>
    %484 = vector.multi_reduction <add>, %483, %cst_598 [1] : vector<2x16x128xf32> to vector<2x128xf32>
    %cst_599 = arith.constant 1.600000e+01 : f32
    %485 = vector.broadcast %cst_599 : f32 to vector<2x128xf32>
    %486 = arith.divf %484, %485 : vector<2x128xf32>
    %487 = arith.truncf %486 : vector<2x128xf32> to vector<2x128xbf16>
    %c0_600 = arith.constant 0 : index
    %c0_601 = arith.constant 0 : index
    %488 = vector.load %arg7[%c0_600, %c0_601] : memref<128x256xbf16, #tpu.memory_space<vmem>>, vector<128x256xbf16>
    %cst_602 = arith.constant dense<0.000000e+00> : vector<2x256xf32>
    %489 = tpu.matmul %487, %488, %cst_602 {dimension_numbers = #tpu.dot_dimension_numbers<[1], [0], [0], [1], [0, 0, 1, 1], [], []>} : vector<2x128xbf16>, vector<128x256xbf16>, vector<2x256xf32> -> vector<2x256xf32>
    %c0_603 = arith.constant 0 : index
    %c0_604 = arith.constant 0 : index
    %490 = vector.load %arg8[%c0_603, %c0_604] : memref<1x256xf32, #tpu.memory_space<vmem>>, vector<1x256xf32>
    %491 = vector.broadcast %490 : vector<1x256xf32> to vector<2x256xf32>
    %492 = arith.addf %489, %491 : vector<2x256xf32>
    %493 = arith.truncf %106 : vector<2x64xf32> to vector<2x64xbf16>
    %c0_605 = arith.constant 0 : index
    %c0_606 = arith.constant 0 : index
    %494 = vector.load %arg9[%c0_605, %c0_606] : memref<64x6xbf16, #tpu.memory_space<vmem>>, vector<64x6xbf16>
    %cst_607 = arith.constant dense<0.000000e+00> : vector<2x6xf32>
    %495 = tpu.matmul %493, %494, %cst_607 {dimension_numbers = #tpu.dot_dimension_numbers<[1], [0], [0], [1], [0, 0, 1, 1], [], []>} : vector<2x64xbf16>, vector<64x6xbf16>, vector<2x6xf32> -> vector<2x6xf32>
    %c0_608 = arith.constant 0 : index
    %c0_609 = arith.constant 0 : index
    %496 = vector.load %arg10[%c0_608, %c0_609] : memref<1x6xf32, #tpu.memory_space<vmem>>, vector<1x6xf32>
    %497 = vector.broadcast %496 : vector<1x6xf32> to vector<2x6xf32>
    %498 = arith.addf %495, %497 : vector<2x6xf32>
    %499 = vector.extract_strided_slice %498 {offsets = [0, 0], sizes = [2, 3], strides = [1, 1]} : vector<2x6xf32> to vector<2x3xf32>
    %500 = arith.negf %499 : vector<2x3xf32>
    %501 = math.exp %500 : vector<2x3xf32>
    %cst_610 = arith.constant 1.000000e+00 : f32
    %502 = vector.broadcast %cst_610 : f32 to vector<2x3xf32>
    %503 = arith.addf %502, %501 : vector<2x3xf32>
    %504 = arith.divf %502, %503 : vector<2x3xf32>
    %505 = vector.extract_strided_slice %498 {offsets = [0, 3], sizes = [2, 3], strides = [1, 1]} : vector<2x6xf32> to vector<2x3xf32>
    %506 = arith.mulf %505, %505 : vector<2x3xf32>
    %cst_611 = arith.constant dense<0.000000e+00> : vector<2xf32>
    %507 = vector.multi_reduction <add>, %506, %cst_611 [1] : vector<2x3xf32> to vector<2xf32>
    %508 = vector.shape_cast %507 : vector<2xf32> to vector<2x1xf32>
    %cst_612 = arith.constant 9.99999993E-9 : f32
    %509 = vector.broadcast %cst_612 : f32 to vector<2x1xf32>
    %510 = arith.addf %508, %509 : vector<2x1xf32>
    %511 = math.rsqrt %510 : vector<2x1xf32>
    %512 = vector.broadcast %511 : vector<2x1xf32> to vector<2x3xf32>
    %513 = arith.mulf %505, %512 : vector<2x3xf32>
    %c0_613 = arith.constant 0 : index
    %c0_614 = arith.constant 0 : index
    %514 = vector.load %arg21[%c0_613, %c0_614] : memref<2x6xf32, #tpu.memory_space<vmem>>, vector<2x3xf32>
    tpu.vector_store %arg21[%c0_613, %c0_614], %504 {strides = array<i32>} : memref<2x6xf32, #tpu.memory_space<vmem>>, vector<2x3xf32>,
    %c0_615 = arith.constant 0 : index
    %c3_616 = arith.constant 3 : index
    %515 = vector.load %arg21[%c0_615, %c3_616] : memref<2x6xf32, #tpu.memory_space<vmem>>, vector<2x3xf32>
    tpu.vector_store %arg21[%c0_615, %c3_616], %513 {strides = array<i32>} : memref<2x6xf32, #tpu.memory_space<vmem>>, vector<2x3xf32>,
    %516 = arith.truncf %492 : vector<2x256xf32> to vector<2x256xbf16>
    %c0_617 = arith.constant 0 : index
    %c0_618 = arith.constant 0 : index
    %517 = vector.load %arg11[%c0_617, %c0_618] : memref<256x128xbf16, #tpu.memory_space<vmem>>, vector<256x128xbf16>
    %cst_619 = arith.constant dense<0.000000e+00> : vector<2x128xf32>
    %518 = tpu.matmul %516, %517, %cst_619 {dimension_numbers = #tpu.dot_dimension_numbers<[1], [0], [0], [1], [0, 0, 1, 1], [], []>} : vector<2x256xbf16>, vector<256x128xbf16>, vector<2x128xf32> -> vector<2x128xf32>
    %c0_620 = arith.constant 0 : index
    %c0_621 = arith.constant 0 : index
    %519 = vector.load %arg12[%c0_620, %c0_621] : memref<1x128xf32, #tpu.memory_space<vmem>>, vector<1x128xf32>
    %520 = vector.broadcast %519 : vector<1x128xf32> to vector<2x128xf32>
    %521 = arith.addf %518, %520 : vector<2x128xf32>
    %cst_622 = arith.constant 0.000000e+00 : f32
    %522 = vector.broadcast %cst_622 : f32 to vector<2x128xf32>
    %523 = arith.maximumf %521, %522 : vector<2x128xf32>
    %524 = arith.truncf %523 : vector<2x128xf32> to vector<2x128xbf16>
    %c0_623 = arith.constant 0 : index
    %c0_624 = arith.constant 0 : index
    %525 = vector.load %arg13[%c0_623, %c0_624] : memref<128x64xbf16, #tpu.memory_space<vmem>>, vector<128x64xbf16>
    %cst_625 = arith.constant dense<0.000000e+00> : vector<2x64xf32>
    %526 = tpu.matmul %524, %525, %cst_625 {dimension_numbers = #tpu.dot_dimension_numbers<[1], [0], [0], [1], [0, 0, 1, 1], [], []>} : vector<2x128xbf16>, vector<128x64xbf16>, vector<2x64xf32> -> vector<2x64xf32>
    %c0_626 = arith.constant 0 : index
    %c0_627 = arith.constant 0 : index
    %527 = vector.load %arg14[%c0_626, %c0_627] : memref<1x64xf32, #tpu.memory_space<vmem>>, vector<1x64xf32>
    %528 = vector.broadcast %527 : vector<1x64xf32> to vector<2x64xf32>
    %529 = arith.addf %526, %528 : vector<2x64xf32>
    %c0_628 = arith.constant 0 : index
    %c0_629 = arith.constant 0 : index
    %530 = vector.load %arg20[%c0_628, %c0_629] : memref<2x64xf32, #tpu.memory_space<vmem>>, vector<2x64xf32>
    tpu.vector_store %arg20[%c0_628, %c0_629], %529 {strides = array<i32>} : memref<2x64xf32, #tpu.memory_space<vmem>>, vector<2x64xf32>,
    %531 = vector.extract_strided_slice %529 {offsets = [0, 58], sizes = [2, 3], strides = [1, 1]} : vector<2x64xf32> to vector<2x3xf32>
    %532 = vector.extract_strided_slice %529 {offsets = [0, 61], sizes = [2, 1], strides = [1, 1]} : vector<2x64xf32> to vector<2x1xf32>
    %cst_630 = arith.constant 1.000000e+00 : f32
    %533 = vector.broadcast %cst_630 : f32 to vector<2x1xf32>
    %534 = arith.addf %533, %532 : vector<2x1xf32>
    %535 = vector.extract_strided_slice %529 {offsets = [0, 0], sizes = [2, 58], strides = [1, 1]} : vector<2x64xf32> to vector<2x58xf32>
    %536 = tpu.iota {dimensions = array<i32: 1>} : vector<2x58xi32>
    %c3_i32 = arith.constant 3 : i32
    %537 = vector.broadcast %c3_i32 : i32 to vector<2x58xi32>
    %538 = arith.cmpi slt, %536, %537 : vector<2x58xi32>
    %cst_631 = arith.constant 0.000000e+00 : f32
    %539 = vector.broadcast %cst_631 : f32 to vector<2x58xf32>
    %540 = arith.select %538, %539, %535 : vector<2x58xi1>, vector<2x58xf32>
    %c0_632 = arith.constant 0 : index
    %c0_633 = arith.constant 0 : index
    %541 = vector.load %arg31[%c0_632, %c0_633] : memref<4x192xf32, #tpu.memory_space<vmem>>, vector<2x58xf32>
    tpu.vector_store %arg31[%c0_632, %c0_633], %535 {strides = array<i32>} : memref<4x192xf32, #tpu.memory_space<vmem>>, vector<2x58xf32>,
    %c2_634 = arith.constant 2 : index
    %c0_635 = arith.constant 0 : index
    %542 = vector.load %arg31[%c2_634, %c0_635] : memref<4x192xf32, #tpu.memory_space<vmem>>, vector<2x58xf32>
    tpu.vector_store %arg31[%c2_634, %c0_635], %540 {strides = array<i32>} : memref<4x192xf32, #tpu.memory_space<vmem>>, vector<2x58xf32>,
    %c0_636 = arith.constant 0 : index
    %c0_637 = arith.constant 0 : index
    %543 = vector.load %arg31[%c0_636, %c0_637] : memref<4x192xf32, #tpu.memory_space<vmem>>, vector<4x58xf32>
    %544 = arith.truncf %543 : vector<4x58xf32> to vector<4x58xbf16>
    %c0_638 = arith.constant 0 : index
    %c0_639 = arith.constant 0 : index
    %545 = vector.load %arg15[%c0_638, %c0_639] : memref<58x192xbf16, #tpu.memory_space<vmem>>, vector<58x192xbf16>
    %cst_640 = arith.constant dense<0.000000e+00> : vector<4x192xf32>
    %546 = tpu.matmul %544, %545, %cst_640 {dimension_numbers = #tpu.dot_dimension_numbers<[1], [0], [0], [1], [0, 0, 1, 1], [], []>} : vector<4x58xbf16>, vector<58x192xbf16>, vector<4x192xf32> -> vector<4x192xf32>
    %c0_641 = arith.constant 0 : index
    %c0_642 = arith.constant 0 : index
    %547 = vector.load %arg18[%c0_641, %c0_642] : memref<3x256xf32, #tpu.memory_space<vmem>>, vector<3x192xf32>
    %cst_643 = arith.constant dense<0.000000e+00> : vector<2x192xf32>
    %548 = tpu.matmul %531, %547, %cst_643 {dimension_numbers = #tpu.dot_dimension_numbers<[1], [0], [0], [1], [0, 0, 1, 1], [], []>} : vector<2x3xf32>, vector<3x192xf32>, vector<2x192xf32> -> vector<2x192xf32>
    %c0_644 = arith.constant 0 : index
    %c0_645 = arith.constant 0 : index
    %549 = vector.load %arg16[%c0_644, %c0_645] : memref<1x192xf32, #tpu.memory_space<vmem>>, vector<1x192xf32>
    %550 = vector.extract_strided_slice %546 {offsets = [0, 0], sizes = [2, 192], strides = [1, 1]} : vector<4x192xf32> to vector<2x192xf32>
    %551 = vector.broadcast %549 : vector<1x192xf32> to vector<2x192xf32>
    %552 = arith.addf %551, %550 : vector<2x192xf32>
    %553 = vector.broadcast %534 : vector<2x1xf32> to vector<2x192xf32>
    %554 = arith.mulf %552, %553 : vector<2x192xf32>
    %555 = arith.addf %554, %548 : vector<2x192xf32>
    %c0_646 = arith.constant 0 : index
    %c0_647 = arith.constant 0 : index
    %556 = vector.load %arg16[%c0_646, %c0_647] : memref<1x192xf32, #tpu.memory_space<vmem>>, vector<1x192xf32>
    %557 = vector.extract_strided_slice %546 {offsets = [2, 0], sizes = [2, 192], strides = [1, 1]} : vector<4x192xf32> to vector<2x192xf32>
    %558 = vector.broadcast %556 : vector<1x192xf32> to vector<2x192xf32>
    %559 = arith.addf %558, %557 : vector<2x192xf32>
    %560 = vector.broadcast %534 : vector<2x1xf32> to vector<2x192xf32>
    %561 = arith.mulf %559, %560 : vector<2x192xf32>
    %562 = arith.addf %561, %548 : vector<2x192xf32>
    %c0_648 = arith.constant 0 : index
    %c0_649 = arith.constant 0 : index
    %563 = vector.load %arg31[%c0_648, %c0_649] : memref<4x192xf32, #tpu.memory_space<vmem>>, vector<2x192xf32>
    tpu.vector_store %arg31[%c0_648, %c0_649], %555 {strides = array<i32>} : memref<4x192xf32, #tpu.memory_space<vmem>>, vector<2x192xf32>,
    %c2_650 = arith.constant 2 : index
    %c0_651 = arith.constant 0 : index
    %564 = vector.load %arg31[%c2_650, %c0_651] : memref<4x192xf32, #tpu.memory_space<vmem>>, vector<2x192xf32>
    tpu.vector_store %arg31[%c2_650, %c0_651], %562 {strides = array<i32>} : memref<4x192xf32, #tpu.memory_space<vmem>>, vector<2x192xf32>,
    %c0_652 = arith.constant 0 : index
    %c0_653 = arith.constant 0 : index
    %565 = vector.load %arg31[%c0_652, %c0_653] : memref<4x192xf32, #tpu.memory_space<vmem>>, vector<4x192xf32>
    %c0_654 = arith.constant 0 : index
    %c0_655 = arith.constant 0 : index
    %566 = vector.load %arg17[%c0_654, %c0_655] : memref<192x128xf32, #tpu.memory_space<vmem>>, vector<192x128xf32>
    %cst_656 = arith.constant dense<0.000000e+00> : vector<4x128xf32>
    %567 = tpu.matmul %565, %566, %cst_656 {dimension_numbers = #tpu.dot_dimension_numbers<[1], [0], [0], [1], [0, 0, 1, 1], [], []>} : vector<4x192xf32>, vector<192x128xf32>, vector<4x128xf32> -> vector<4x128xf32>
    %568 = vector.extract_strided_slice %567 {offsets = [0, 0], sizes = [2, 64], strides = [1, 1]} : vector<4x128xf32> to vector<2x64xf32>
    %569 = vector.extract_strided_slice %567 {offsets = [2, 64], sizes = [2, 64], strides = [1, 1]} : vector<4x128xf32> to vector<2x64xf32>
    %570 = vector.extract_strided_slice %568 {offsets = [0, 27], sizes = [2, 3], strides = [1, 1]} : vector<2x64xf32> to vector<2x3xf32>
    %571 = vector.extract_strided_slice %569 {offsets = [0, 15], sizes = [2, 3], strides = [1, 1]} : vector<2x64xf32> to vector<2x3xf32>
    %c0_657 = arith.constant 0 : index
    %c0_658 = arith.constant 0 : index
    %572 = vector.load %arg31[%c0_657, %c0_658] : memref<4x192xf32, #tpu.memory_space<vmem>>, vector<2x3xf32>
    tpu.vector_store %arg31[%c0_657, %c0_658], %570 {strides = array<i32>} : memref<4x192xf32, #tpu.memory_space<vmem>>, vector<2x3xf32>,
    %c2_659 = arith.constant 2 : index
    %c0_660 = arith.constant 0 : index
    %573 = vector.load %arg31[%c2_659, %c0_660] : memref<4x192xf32, #tpu.memory_space<vmem>>, vector<2x3xf32>
    tpu.vector_store %arg31[%c2_659, %c0_660], %571 {strides = array<i32>} : memref<4x192xf32, #tpu.memory_space<vmem>>, vector<2x3xf32>,
    %c0_661 = arith.constant 0 : index
    %c0_662 = arith.constant 0 : index
    %574 = vector.load %arg31[%c0_661, %c0_662] : memref<4x192xf32, #tpu.memory_space<vmem>>, vector<4x3xf32>
    %c0_663 = arith.constant 0 : index
    %c0_664 = arith.constant 0 : index
    %575 = vector.load %arg18[%c0_663, %c0_664] : memref<3x256xf32, #tpu.memory_space<vmem>>, vector<3x256xf32>
    %cst_665 = arith.constant dense<0.000000e+00> : vector<4x256xf32>
    %576 = tpu.matmul %574, %575, %cst_665 {dimension_numbers = #tpu.dot_dimension_numbers<[1], [0], [0], [1], [0, 0, 1, 1], [], []>} : vector<4x3xf32>, vector<3x256xf32>, vector<4x256xf32> -> vector<4x256xf32>
    %577 = vector.extract_strided_slice %576 {offsets = [0, 0], sizes = [2, 192], strides = [1, 1]} : vector<4x256xf32> to vector<2x192xf32>
    %578 = vector.extract_strided_slice %576 {offsets = [0, 192], sizes = [2, 64], strides = [1, 1]} : vector<4x256xf32> to vector<2x64xf32>
    %579 = vector.extract_strided_slice %576 {offsets = [2, 0], sizes = [2, 192], strides = [1, 1]} : vector<4x256xf32> to vector<2x192xf32>
    %580 = vector.extract_strided_slice %576 {offsets = [2, 192], sizes = [2, 64], strides = [1, 1]} : vector<4x256xf32> to vector<2x64xf32>
    %581 = arith.subf %568, %578 : vector<2x64xf32>
    %c0_666 = arith.constant 0 : index
    %c0_667 = arith.constant 0 : index
    %582 = vector.load %arg22[%c0_666, %c0_667] : memref<2x64xf32, #tpu.memory_space<vmem>>, vector<2x64xf32>
    tpu.vector_store %arg22[%c0_666, %c0_667], %581 {strides = array<i32>} : memref<2x64xf32, #tpu.memory_space<vmem>>, vector<2x64xf32>,
    %583 = arith.subf %555, %577 : vector<2x192xf32>
    %c0_668 = arith.constant 0 : index
    %c0_669 = arith.constant 0 : index
    %584 = vector.load %arg23[%c0_668, %c0_669] : memref<2x192xf32, #tpu.memory_space<vmem>>, vector<2x192xf32>
    tpu.vector_store %arg23[%c0_668, %c0_669], %583 {strides = array<i32>} : memref<2x192xf32, #tpu.memory_space<vmem>>, vector<2x192xf32>,
    %585 = arith.subf %555, %577 : vector<2x192xf32>
    %c0_670 = arith.constant 0 : index
    %c0_671 = arith.constant 0 : index
    %586 = vector.load %arg19[%c0_670, %c0_671] : memref<1x192xf32, #tpu.memory_space<vmem>>, vector<1x192xf32>
    %587 = vector.broadcast %586 : vector<1x192xf32> to vector<2x192xf32>
    %588 = arith.addf %585, %587 : vector<2x192xf32>
    %c0_672 = arith.constant 0 : index
    %c0_673 = arith.constant 0 : index
    %589 = vector.load %arg26[%c0_672, %c0_673] : memref<2x192xf32, #tpu.memory_space<vmem>>, vector<2x192xf32>
    tpu.vector_store %arg26[%c0_672, %c0_673], %588 {strides = array<i32>} : memref<2x192xf32, #tpu.memory_space<vmem>>, vector<2x192xf32>,
    %590 = arith.subf %562, %579 : vector<2x192xf32>
    %c0_674 = arith.constant 0 : index
    %c0_675 = arith.constant 0 : index
    %591 = vector.load %arg24[%c0_674, %c0_675] : memref<2x192xf32, #tpu.memory_space<vmem>>, vector<2x192xf32>
    tpu.vector_store %arg24[%c0_674, %c0_675], %590 {strides = array<i32>} : memref<2x192xf32, #tpu.memory_space<vmem>>, vector<2x192xf32>,
    %592 = arith.subf %569, %580 : vector<2x64xf32>
    %c0_676 = arith.constant 0 : index
    %c0_677 = arith.constant 0 : index
    %593 = vector.load %arg25[%c0_676, %c0_677] : memref<2x64xf32, #tpu.memory_space<vmem>>, vector<2x64xf32>
    tpu.vector_store %arg25[%c0_676, %c0_677], %592 {strides = array<i32>} : memref<2x64xf32, #tpu.memory_space<vmem>>, vector<2x64xf32>,
    return
  }
}

</mosaic_0001>

<llo_original>
// kernel: model_forward.1
$region0: #{model_forward.1}
  #allocation0 [shape = 'u32[]', space=smem, size = 0x4, offset = 0x4, fixed_abs, tag = 'smem constant byte address 0x4 - core index']
  #allocation1 [shape = 'u32[144,128]{1,0:T(1,128)}', space=vmem, size = 0x12000, scoped, tag = 'internal scratch']
  #allocation2 [shape = 'f32[2,2,2,9,9,32]{5,4,3,2,1,0:T(8,128)}', space=vmem, size = 0x90000, scoped, tag = 'scratch operand']
  #allocation3 [shape = 'bf16[128,288]{1,0:T(16,128)(2,1)}', space=vmem, size = 0x18000, scoped, tag = 'scratch operand']
  #allocation4 [shape = 'f32[2,2,2,5,5,64]{5,4,3,2,1,0:T(8,128)}', space=vmem, size = 0x28000, scoped, tag = 'scratch operand']
  #allocation5 [shape = 'bf16[32,576]{1,0:T(16,128)(2,1)}', space=vmem, size = 0xa000, scoped, tag = 'scratch operand']
  #allocation6 [shape = 'f32[4,192]{1,0:T(4,128)}', space=vmem, size = 0x1000, scoped, tag = 'scratch operand']
  %s0 = inlined_call_operand.vmem [shape: bf16[512,27], index: 0, kind: input, shape index: {}]
  %s1 = inlined_call_operand.vmem [shape: bf16[27,32], index: 1, kind: input, shape index: {}]
  %s2 = inlined_call_operand.vmem [shape: f32[1,32], index: 2, kind: input, shape index: {}]
  %s3 = inlined_call_operand.vmem [shape: bf16[288,64], index: 3, kind: input, shape index: {}]
  %s4 = inlined_call_operand.vmem [shape: f32[1,64], index: 4, kind: input, shape index: {}]
  %s5 = inlined_call_operand.vmem [shape: bf16[576,128], index: 5, kind: input, shape index: {}]
  %s6 = inlined_call_operand.vmem [shape: f32[1,128], index: 6, kind: input, shape index: {}]
  %s7 = inlined_call_operand.vmem [shape: bf16[128,256], index: 7, kind: input, shape index: {}]
  %s8 = inlined_call_operand.vmem [shape: f32[1,256], index: 8, kind: input, shape index: {}]
  %s9 = inlined_call_operand.vmem [shape: bf16[64,6], index: 9, kind: input, shape index: {}]
  %s10 = inlined_call_operand.vmem [shape: f32[1,6], index: 10, kind: input, shape index: {}]
  %s11 = inlined_call_operand.vmem [shape: bf16[256,128], index: 11, kind: input, shape index: {}]
  %s12 = inlined_call_operand.vmem [shape: f32[1,128], index: 12, kind: input, shape index: {}]
  %s13 = inlined_call_operand.vmem [shape: bf16[128,64], index: 13, kind: input, shape index: {}]
  %s14 = inlined_call_operand.vmem [shape: f32[1,64], index: 14, kind: input, shape index: {}]
  %s15 = inlined_call_operand.vmem [shape: bf16[58,192], index: 15, kind: input, shape index: {}]
  %s16 = inlined_call_operand.vmem [shape: f32[1,192], index: 16, kind: input, shape index: {}]
  %s17 = inlined_call_operand.vmem [shape: f32[192,128], index: 17, kind: input, shape index: {}]
  %s18 = inlined_call_operand.vmem [shape: f32[3,256], index: 18, kind: input, shape index: {}]
  %s19 = inlined_call_operand.vmem [shape: f32[1,192], index: 19, kind: input, shape index: {}]
  %s20 = inlined_call_operand.vmem [shape: f32[2,64], index: 20, kind: output, shape index: {0}]
  %s21 = inlined_call_operand.vmem [shape: f32[2,6], index: 21, kind: output, shape index: {1}]
  %s22 = inlined_call_operand.vmem [shape: f32[2,64], index: 22, kind: output, shape index: {2}]
  %s23 = inlined_call_operand.vmem [shape: f32[2,192], index: 23, kind: output, shape index: {3}]
  %s24 = inlined_call_operand.vmem [shape: f32[2,192], index: 24, kind: output, shape index: {4}]
  %s25 = inlined_call_operand.vmem [shape: f32[2,64], index: 25, kind: output, shape index: {5}]
  %s26 = inlined_call_operand.vmem [shape: f32[2,192], index: 26, kind: output, shape index: {6}]
  %27 = xla_tuple %s20, %s21, %s22, %s23, %s24, %s25, %s26
  %s28 = sld [smem:[#allocation0]]
  $region138: #{model_forward.1} parent=0
    _
  %s30 = ssub.s32 1, %s28
  %s31 = scalar_select 0, %s30, %s28
  // Predicated region
  $region2: #{model_forward.1} parent=0 // pred_check
    _
  $region3: #{model_forward.1} parent=0 // pred_check_branch
    %33 = sbr.rel (0) target = $region5
  $region4: #{model_forward.1} parent=0 // pred_region
    _
  $region5: #{model_forward.1} parent=0 // pred_fallthru
    _
  // Predicated region
  $region6: #{model_forward.1} parent=0 // pred_check
    _
  $region7: #{model_forward.1} parent=0 // pred_check_branch
    %35 = sbr.rel (0) target = $region9
  $region8: #{model_forward.1} parent=0 // pred_region
    _
  $region9: #{model_forward.1} parent=0 // pred_fallthru
    _
  // Predicated region
  $region10: #{model_forward.1} parent=0 // pred_check
    _
  $region11: #{model_forward.1} parent=0 // pred_check_branch
    %37 = sbr.rel (0) target = $region13
  $region12: #{model_forward.1} parent=0 // pred_region
    _
  $region13: #{model_forward.1} parent=0 // pred_fallthru
    _
  // Predicated region
  $region14: #{model_forward.1} parent=0 // pred_check
    _
  $region15: #{model_forward.1} parent=0 // pred_check_branch
    %39 = sbr.rel (0) target = $region17
  $region16: #{model_forward.1} parent=0 // pred_region
    _
  $region17: #{model_forward.1} parent=0 // pred_fallthru
    _
  // Predicated region
  $region18: #{model_forward.1} parent=0 // pred_check
    _
  $region19: #{model_forward.1} parent=0 // pred_check_branch
    %41 = sbr.rel (0) target = $region21
  $region20: #{model_forward.1} parent=0 // pred_region
    _
  $region21: #{model_forward.1} parent=0 // pred_fallthru
    _
  // Predicated region
  $region22: #{model_forward.1} parent=0 // pred_check
    _
  $region23: #{model_forward.1} parent=0 // pred_check_branch
    %43 = sbr.rel (0) target = $region25
  $region24: #{model_forward.1} parent=0 // pred_region
    _
  $region25: #{model_forward.1} parent=0 // pred_fallthru
    _
  // Predicated region
  $region26: #{model_forward.1} parent=0 // pred_check
    _
  $region27: #{model_forward.1} parent=0 // pred_check_branch
    %45 = sbr.rel (0) target = $region29
  $region28: #{model_forward.1} parent=0 // pred_region
    _
  $region29: #{model_forward.1} parent=0 // pred_fallthru
    _
  // Predicated region
  $region30: #{model_forward.1} parent=0 // pred_check
    _
  $region31: #{model_forward.1} parent=0 // pred_check_branch
    %47 = sbr.rel (0) target = $region33
  $region32: #{model_forward.1} parent=0 // pred_region
    _
  $region33: #{model_forward.1} parent=0 // pred_fallthru
    _
  // Predicated region
  $region34: #{model_forward.1} parent=0 // pred_check
    _
  $region35: #{model_forward.1} parent=0 // pred_check_branch
    %49 = sbr.rel (0) target = $region37
  $region36: #{model_forward.1} parent=0 // pred_region
    _
  $region37: #{model_forward.1} parent=0 // pred_fallthru
    _
  // Predicated region
  $region38: #{model_forward.1} parent=0 // pred_check
    _
  $region39: #{model_forward.1} parent=0 // pred_check_branch
    %51 = sbr.rel (0) target = $region41
  $region40: #{model_forward.1} parent=0 // pred_region
    _
  $region41: #{model_forward.1} parent=0 // pred_fallthru
    _
  // Predicated region
  $region42: #{model_forward.1} parent=0 // pred_check
    _
  $region43: #{model_forward.1} parent=0 // pred_check_branch
    %53 = sbr.rel (0) target = $region45
  $region44: #{model_forward.1} parent=0 // pred_region
    _
  $region45: #{model_forward.1} parent=0 // pred_fallthru
    _
  // Predicated region
  $region46: #{model_forward.1} parent=0 // pred_check
    _
  $region47: #{model_forward.1} parent=0 // pred_check_branch
    %55 = sbr.rel (0) target = $region49
  $region48: #{model_forward.1} parent=0 // pred_region
    _
  $region49: #{model_forward.1} parent=0 // pred_fallthru
    _
  // Predicated region
  $region50: #{model_forward.1} parent=0 // pred_check
    _
  $region51: #{model_forward.1} parent=0 // pred_check_branch
    %57 = sbr.rel (0) target = $region53
  $region52: #{model_forward.1} parent=0 // pred_region
    _
  $region53: #{model_forward.1} parent=0 // pred_fallthru
    _
  // Predicated region
  $region54: #{model_forward.1} parent=0 // pred_check
    _
  $region55: #{model_forward.1} parent=0 // pred_check_branch
    %59 = sbr.rel (0) target = $region57
  $region56: #{model_forward.1} parent=0 // pred_region
    _
  $region57: #{model_forward.1} parent=0 // pred_fallthru
    _
  // Predicated region
  $region58: #{model_forward.1} parent=0 // pred_check
    _
  $region59: #{model_forward.1} parent=0 // pred_check_branch
    %61 = sbr.rel (0) target = $region61
  $region60: #{model_forward.1} parent=0 // pred_region
    _
  $region61: #{model_forward.1} parent=0 // pred_fallthru
    _
  // Predicated region
  $region62: #{model_forward.1} parent=0 // pred_check
    _
  $region63: #{model_forward.1} parent=0 // pred_check_branch
    %63 = sbr.rel (0) target = $region65
  $region64: #{model_forward.1} parent=0 // pred_region
    _
  $region65: #{model_forward.1} parent=0 // pred_fallthru
    _
  // Predicated region
  $region66: #{model_forward.1} parent=0 // pred_check
    _
  $region67: #{model_forward.1} parent=0 // pred_check_branch
    %65 = sbr.rel (0) target = $region69
  $region68: #{model_forward.1} parent=0 // pred_region
    _
  $region69: #{model_forward.1} parent=0 // pred_fallthru
    _
  // Predicated region
  $region70: #{model_forward.1} parent=0 // pred_check
    _
  $region71: #{model_forward.1} parent=0 // pred_check_branch
    %67 = sbr.rel (0) target = $region73
  $region72: #{model_forward.1} parent=0 // pred_region
    _
  $region73: #{model_forward.1} parent=0 // pred_fallthru
    _
  // Predicated region
  $region74: #{model_forward.1} parent=0 // pred_check
    _
  $region75: #{model_forward.1} parent=0 // pred_check_branch
    %69 = sbr.rel (0) target = $region77
  $region76: #{model_forward.1} parent=0 // pred_region
    _
  $region77: #{model_forward.1} parent=0 // pred_fallthru
    _
  // Predicated region
  $region78: #{model_forward.1} parent=0 // pred_check
    _
  $region79: #{model_forward.1} parent=0 // pred_check_branch
    %71 = sbr.rel (0) target = $region81
  $region80: #{model_forward.1} parent=0 // pred_region
    _
  $region81: #{model_forward.1} parent=0 // pred_fallthru
    _
  %v73 = vld [vmem:[%s0] sm:$0xf]
  %v74 = vld [vmem:[%s0 + $0x4] sm:$0xf]
  %v75 = vld [vmem:[%s0 + $0x8] sm:$0xf]
  %v76 = vld [vmem:[%s0 + $0xc] sm:$0xf]
  %v77 = vld [vmem:[%s0 + $0x10] sm:$0xf]
  %v78 = vld [vmem:[%s0 + $0x14] sm:$0xf]
  %v79 = vld [vmem:[%s0 + $0x18] sm:$0xf]
  %v80 = vld [vmem:[%s0 + $0x1c] sm:$0xf]
  %v81 = vld [vmem:[%s0 + $0x20] sm:$0xf]
  %v82 = vld [vmem:[%s0 + $0x24] sm:$0xf]
  %v83 = vld [vmem:[%s0 + $0x28] sm:$0xf]
  %v84 = vld [vmem:[%s0 + $0x2c] sm:$0xf]
  %v85 = vld [vmem:[%s0 + $0x30] sm:$0xf]
  %v86 = vld [vmem:[%s0 + $0x34] sm:$0xf]
  %v87 = vld [vmem:[%s0 + $0x38] sm:$0xf]
  %v88 = vld [vmem:[%s0 + $0x3c] sm:$0xf]
  %v89 = vld [vmem:[%s0 + $0x40] sm:$0xf]
  %v90 = vld [vmem:[%s0 + $0x44] sm:$0xf]
  %v91 = vld [vmem:[%s0 + $0x48] sm:$0xf]
  %v92 = vld [vmem:[%s0 + $0x4c] sm:$0xf]
  %v93 = vld [vmem:[%s0 + $0x50] sm:$0xf]
  %v94 = vld [vmem:[%s0 + $0x54] sm:$0xf]
  %v95 = vld [vmem:[%s0 + $0x58] sm:$0xf]
  %v96 = vld [vmem:[%s0 + $0x5c] sm:$0xf]
  %v97 = vld [vmem:[%s0 + $0x60] sm:$0xf]
  %v98 = vld [vmem:[%s0 + $0x64] sm:$0xf]
  %v99 = vld [vmem:[%s0 + $0x68] sm:$0xf]
  %v100 = vld [vmem:[%s0 + $0x6c] sm:$0xf]
  %v101 = vld [vmem:[%s0 + $0x70] sm:$0xf]
  %v102 = vld [vmem:[%s0 + $0x74] sm:$0xf]
  %v103 = vld [vmem:[%s0 + $0x78] sm:$0xf]
  %v104 = vld [vmem:[%s0 + $0x7c] sm:$0xf]
  %v105 = vld [vmem:[%s0 + $0x80] sm:$0xf]
  %v106 = vld [vmem:[%s0 + $0x84] sm:$0xf]
  %v107 = vld [vmem:[%s0 + $0x88] sm:$0xf]
  %v108 = vld [vmem:[%s0 + $0x8c] sm:$0xf]
  %v109 = vld [vmem:[%s0 + $0x90] sm:$0xf]
  %v110 = vld [vmem:[%s0 + $0x94] sm:$0xf]
  %v111 = vld [vmem:[%s0 + $0x98] sm:$0xf]
  %v112 = vld [vmem:[%s0 + $0x9c] sm:$0xf]
  %v113 = vld [vmem:[%s0 + $0xa0] sm:$0xf]
  %v114 = vld [vmem:[%s0 + $0xa4] sm:$0xf]
  %v115 = vld [vmem:[%s0 + $0xa8] sm:$0xf]
  %v116 = vld [vmem:[%s0 + $0xac] sm:$0xf]
  %v117 = vld [vmem:[%s0 + $0xb0] sm:$0xf]
  %v118 = vld [vmem:[%s0 + $0xb4] sm:$0xf]
  %v119 = vld [vmem:[%s0 + $0xb8] sm:$0xf]
  %v120 = vld [vmem:[%s0 + $0xbc] sm:$0xf]
  %v121 = vld [vmem:[%s0 + $0xc0] sm:$0xf]
  %v122 = vld [vmem:[%s0 + $0xc4] sm:$0xf]
  %v123 = vld [vmem:[%s0 + $0xc8] sm:$0xf]
  %v124 = vld [vmem:[%s0 + $0xcc] sm:$0xf]
  %v125 = vld [vmem:[%s0 + $0xd0] sm:$0xf]
  %v126 = vld [vmem:[%s0 + $0xd4] sm:$0xf]
  %v127 = vld [vmem:[%s0 + $0xd8] sm:$0xf]
  %v128 = vld [vmem:[%s0 + $0xdc] sm:$0xf]
  %v129 = vld [vmem:[%s0 + $0xe0] sm:$0xf]
  %v130 = vld [vmem:[%s0 + $0xe4] sm:$0xf]
  %v131 = vld [vmem:[%s0 + $0xe8] sm:$0xf]
  %v132 = vld [vmem:[%s0 + $0xec] sm:$0xf]
  %v133 = vld [vmem:[%s0 + $0xf0] sm:$0xf]
  %v134 = vld [vmem:[%s0 + $0xf4] sm:$0xf]
  %v135 = vld [vmem:[%s0 + $0xf8] sm:$0xf]
  %v136 = vld [vmem:[%s0 + $0xfc] sm:$0xf]
  %v137 = vld [vmem:[%s1] sm:$0xf]
  %v138 = vld [vmem:[%s1 + $0x4] sm:$0xf]
  %v139 = vld [vmem:[%s1 + $0x8] sm:$0xf]
  %v140 = vld [vmem:[%s1 + $0xc] sm:$0x3]
  %v141 = vld [vmem:[%s2] sm:$0x1]
  %v143 = vlaneseq
  %v144 = vshrl.u32 %v143, 7
  %v145 = vsub.s32 0, %v144
  %v146 = vrot.slane %v141, %v145
  %v212 = vunpack.c.l.b16 %v73
  %v213 = vunpack.c.l.b16 %v74
  %v214 = vunpack.c.l.b16 %v75
  %v215 = vunpack.c.l.b16 %v76
  %v216 = vunpack.c.l.b16 %v77
  %v217 = vunpack.c.l.b16 %v78
  %v218 = vunpack.c.l.b16 %v79
  %v219 = vunpack.c.l.b16 %v80
  %v220 = vunpack.c.l.b16 %v81
  %v221 = vunpack.c.l.b16 %v82
  %v222 = vunpack.c.l.b16 %v83
  %v223 = vunpack.c.l.b16 %v84
  %v224 = vunpack.c.l.b16 %v85
  %v225 = vunpack.c.l.b16 %v86
  %v226 = vunpack.c.l.b16 %v87
  %v227 = vunpack.c.l.b16 %v88
  %v228 = vunpack.c.l.b16 %v89
  %v229 = vunpack.c.l.b16 %v90
  %v230 = vunpack.c.l.b16 %v91
  %v231 = vunpack.c.l.b16 %v92
  %v232 = vunpack.c.l.b16 %v93
  %v233 = vunpack.c.l.b16 %v94
  %v234 = vunpack.c.l.b16 %v95
  %v235 = vunpack.c.l.b16 %v96
  %v236 = vunpack.c.l.b16 %v97
  %v237 = vunpack.c.l.b16 %v98
  %v238 = vunpack.c.l.b16 %v99
  %v239 = vunpack.c.l.b16 %v100
  %v240 = vunpack.c.l.b16 %v101
  %v241 = vunpack.c.l.b16 %v102
  %v242 = vunpack.c.l.b16 %v103
  %v243 = vunpack.c.l.b16 %v104
  %v244 = vunpack.c.l.b16 %v105
  %v245 = vunpack.c.l.b16 %v106
  %v246 = vunpack.c.l.b16 %v107
  %v247 = vunpack.c.l.b16 %v108
  %v248 = vunpack.c.l.b16 %v109
  %v249 = vunpack.c.l.b16 %v110
  %v250 = vunpack.c.l.b16 %v111
  %v251 = vunpack.c.l.b16 %v112
  %v252 = vunpack.c.l.b16 %v113
  %v253 = vunpack.c.l.b16 %v114
  %v254 = vunpack.c.l.b16 %v115
  %v255 = vunpack.c.l.b16 %v116
  %v256 = vunpack.c.l.b16 %v117
  %v257 = vunpack.c.l.b16 %v118
  %v258 = vunpack.c.l.b16 %v119
  %v259 = vunpack.c.l.b16 %v120
  %v260 = vunpack.c.l.b16 %v121
  %v261 = vunpack.c.l.b16 %v122
  %v262 = vunpack.c.l.b16 %v123
  %v263 = vunpack.c.l.b16 %v124
  %v264 = vunpack.c.l.b16 %v125
  %v265 = vunpack.c.l.b16 %v126
  %v266 = vunpack.c.l.b16 %v127
  %v267 = vunpack.c.l.b16 %v128
  %v268 = vunpack.c.l.b16 %v129
  %v269 = vunpack.c.l.b16 %v130
  %v270 = vunpack.c.l.b16 %v131
  %v271 = vunpack.c.l.b16 %v132
  %v272 = vunpack.c.l.b16 %v133
  %v273 = vunpack.c.l.b16 %v134
  %v274 = vunpack.c.l.b16 %v135
  %v275 = vunpack.c.l.b16 %v136
  %v276 = vpack.c.b16 %v213, %v212
  %v277 = vpack.c.b16 %v215, %v214
  %v278 = vpack.c.b16 %v217, %v216
  %v279 = vpack.c.b16 %v219, %v218
  %v280 = vpack.c.b16 %v221, %v220
  %v281 = vpack.c.b16 %v223, %v222
  %v282 = vpack.c.b16 %v225, %v224
  %v283 = vpack.c.b16 %v227, %v226
  %v284 = vpack.c.b16 %v229, %v228
  %v285 = vpack.c.b16 %v231, %v230
  %v286 = vpack.c.b16 %v233, %v232
  %v287 = vpack.c.b16 %v235, %v234
  %v288 = vpack.c.b16 %v237, %v236
  %v289 = vpack.c.b16 %v239, %v238
  %v290 = vpack.c.b16 %v241, %v240
  %v291 = vpack.c.b16 %v243, %v242
  %v292 = vpack.c.b16 %v245, %v244
  %v293 = vpack.c.b16 %v247, %v246
  %v294 = vpack.c.b16 %v249, %v248
  %v295 = vpack.c.b16 %v251, %v250
  %v296 = vpack.c.b16 %v253, %v252
  %v297 = vpack.c.b16 %v255, %v254
  %v298 = vpack.c.b16 %v257, %v256
  %v299 = vpack.c.b16 %v259, %v258
  %v300 = vpack.c.b16 %v261, %v260
  %v301 = vpack.c.b16 %v263, %v262
  %v302 = vpack.c.b16 %v265, %v264
  %v303 = vpack.c.b16 %v267, %v266
  %v304 = vpack.c.b16 %v269, %v268
  %v305 = vpack.c.b16 %v271, %v270
  %v306 = vpack.c.b16 %v273, %v272
  %v307 = vpack.c.b16 %v275, %v274
  %v312 = vunpack.c.l.b16 %v137
  %v313 = vunpack.c.l.b16 %v138
  %v314 = vunpack.c.l.b16 %v139
  %v315 = vunpack.c.l.b16 %v140
  %v316 = vpack.c.b16 %v313, %v312
  %v317 = vpack.c.b16 %v315, %v314
  %vm319 = vcmask 220160
  %v321 = vsel %vm319, %v276, 0
  %v324 = vsel %vm319, %v277, 0
  %v327 = vsel %vm319, %v278, 0
  %v330 = vsel %vm319, %v279, 0
  %v333 = vsel %vm319, %v280, 0
  %v336 = vsel %vm319, %v281, 0
  %v339 = vsel %vm319, %v282, 0
  %v342 = vsel %vm319, %v283, 0
  %v345 = vsel %vm319, %v284, 0
  %v348 = vsel %vm319, %v285, 0
  %v351 = vsel %vm319, %v286, 0
  %v354 = vsel %vm319, %v287, 0
  %v357 = vsel %vm319, %v288, 0
  %v360 = vsel %vm319, %v289, 0
  %v363 = vsel %vm319, %v290, 0
  %v366 = vsel %vm319, %v291, 0
  %v369 = vsel %vm319, %v292, 0
  %v372 = vsel %vm319, %v293, 0
  %v375 = vsel %vm319, %v294, 0
  %v378 = vsel %vm319, %v295, 0
  %v381 = vsel %vm319, %v296, 0
  %v384 = vsel %vm319, %v297, 0
  %v387 = vsel %vm319, %v298, 0
  %v390 = vsel %vm319, %v299, 0
  %v393 = vsel %vm319, %v300, 0
  %v396 = vsel %vm319, %v301, 0
  %v399 = vsel %vm319, %v302, 0
  %v402 = vsel %vm319, %v303, 0
  %v405 = vsel %vm319, %v304, 0
  %v408 = vsel %vm319, %v305, 0
  %v411 = vsel %vm319, %v306, 0
  %v414 = vsel %vm319, %v307, 0
  %vm416 = vcmask 1044480
  %vm417 = vcmask 1045504
  %v418 = vsel %vm416, 4294967295, 65535
  %v419 = vsel %vm417, %v418, 0
  %v421 = vand.u32 %v317, %v419
  %423 = vmatprep.subr.bf16.mxu0 0
  %424 = vmatpush1.bf16.msra.mxu0 %v316
  %425 = vmatprep.subr.bf16.mxu0 0
  %426 = vmatpush1.bf16.msra.mxu0 %v421
  %427 = vmatprep.subr.bf16.mxu0 0
  %428 = vmatpush1.bf16.msra.mxu0 0
  %429 = vmatprep.subr.bf16.mxu0 0
  %430 = vmatpush1.bf16.msra.mxu0 0
  %431 = vmatprep.subr.bf16.mxu0 0
  %432 = vmatpush1.bf16.msra.mxu0 0
  %433 = vmatprep.subr.bf16.mxu0 0
  %434 = vmatpush1.bf16.msra.mxu0 0
  %435 = vmatprep.subr.bf16.mxu0 0
  %436 = vmatpush1.bf16.msra.mxu0 0
  %437 = vmatprep.subr.bf16.mxu0 0
  %438 = vmatpush1.bf16.msra.mxu0 0
  %439 = vmatprep.subr.bf16.mxu0 0
  %440 = vmatpush1.bf16.msra.mxu0 0
  %441 = vmatprep.subr.bf16.mxu0 0
  %442 = vmatpush1.bf16.msra.mxu0 0
  %443 = vmatprep.subr.bf16.mxu0 0
  %444 = vmatpush1.bf16.msra.mxu0 0
  %445 = vmatprep.subr.bf16.mxu0 0
  %446 = vmatpush1.bf16.msra.mxu0 0
  %447 = vmatprep.subr.bf16.mxu0 0
  %448 = vmatpush1.bf16.msra.mxu0 0
  %449 = vmatprep.subr.bf16.mxu0 0
  %450 = vmatpush1.bf16.msra.mxu0 0
  %451 = vmatprep.subr.bf16.mxu0 0
  %452 = vmatpush1.bf16.msra.mxu0 0
  %453 = vmatprep.subr.bf16.mxu0 0
  %454 = vmatpush1.bf16.msra.mxu0 0
  %455 = vmatprep.mubr.bf16.mxu0 0
  %456 = vmatmul.mubr.bf16.gmra.mrb[0].mxu0 %v321
  %v457 = vpop.f32.mrb[0].mxu0
  %v458 = vadd.f32 %v146, %v457
  %v459 = vpop.f32.mrb[0].mxu0
  %v460 = vpop.f32.mrb[0].mxu0
  %v461 = vadd.f32 %v146, %v460
  %v462 = vpop.f32.mrb[0].mxu0
  %463 = vmatprep.mubr.bf16.mxu0 0
  %464 = vmatmul.mubr.bf16.gmra.mrb[0].mxu0 %v324
  %v465 = vpop.f32.mrb[0].mxu0
  %v466 = vadd.f32 %v146, %v465
  %v467 = vpop.f32.mrb[0].mxu0
  %v468 = vpop.f32.mrb[0].mxu0
  %v469 = vadd.f32 %v146, %v468
  %v470 = vpop.f32.mrb[0].mxu0
  %471 = vmatprep.mubr.bf16.mxu0 0
  %472 = vmatmul.mubr.bf16.gmra.mrb[0].mxu0 %v327
  %v473 = vpop.f32.mrb[0].mxu0
  %v474 = vadd.f32 %v146, %v473
  %v475 = vpop.f32.mrb[0].mxu0
  %v476 = vpop.f32.mrb[0].mxu0
  %v477 = vadd.f32 %v146, %v476
  %v478 = vpop.f32.mrb[0].mxu0
  %479 = vmatprep.mubr.bf16.mxu0 0
  %480 = vmatmul.mubr.bf16.gmra.mrb[0].mxu0 %v330
  %v481 = vpop.f32.mrb[0].mxu0
  %v482 = vadd.f32 %v146, %v481
  %v483 = vpop.f32.mrb[0].mxu0
  %v484 = vpop.f32.mrb[0].mxu0
  %v485 = vadd.f32 %v146, %v484
  %v486 = vpop.f32.mrb[0].mxu0
  %487 = vmatprep.mubr.bf16.mxu0 0
  %488 = vmatmul.mubr.bf16.gmra.mrb[0].mxu0 %v333
  %v489 = vpop.f32.mrb[0].mxu0
  %v490 = vadd.f32 %v146, %v489
  %v491 = vpop.f32.mrb[0].mxu0
  %v492 = vpop.f32.mrb[0].mxu0
  %v493 = vadd.f32 %v146, %v492
  %v494 = vpop.f32.mrb[0].mxu0
  %495 = vmatprep.mubr.bf16.mxu0 0
  %496 = vmatmul.mubr.bf16.gmra.mrb[0].mxu0 %v336
  %v497 = vpop.f32.mrb[0].mxu0
  %v498 = vadd.f32 %v146, %v497
  %v499 = vpop.f32.mrb[0].mxu0
  %v500 = vpop.f32.mrb[0].mxu0
  %v501 = vadd.f32 %v146, %v500
  %v502 = vpop.f32.mrb[0].mxu0
  %503 = vmatprep.mubr.bf16.mxu0 0
  %504 = vmatmul.mubr.bf16.gmra.mrb[0].mxu0 %v339
  %v505 = vpop.f32.mrb[0].mxu0
  %v506 = vadd.f32 %v146, %v505
  %v507 = vpop.f32.mrb[0].mxu0
  %v508 = vpop.f32.mrb[0].mxu0
  %v509 = vadd.f32 %v146, %v508
  %v510 = vpop.f32.mrb[0].mxu0
  %511 = vmatprep.mubr.bf16.mxu0 0
  %512 = vmatmul.mubr.bf16.gmra.mrb[0].mxu0 %v342
  %v513 = vpop.f32.mrb[0].mxu0
  %v514 = vadd.f32 %v146, %v513
  %v515 = vpop.f32.mrb[0].mxu0
  %v516 = vpop.f32.mrb[0].mxu0
  %v517 = vadd.f32 %v146, %v516
  %v518 = vpop.f32.mrb[0].mxu0
  %519 = vmatprep.mubr.bf16.mxu0 0
  %520 = vmatmul.mubr.bf16.gmra.mrb[0].mxu0 %v345
  %v521 = vpop.f32.mrb[0].mxu0
  %v522 = vadd.f32 %v146, %v521
  %v523 = vpop.f32.mrb[0].mxu0
  %v524 = vpop.f32.mrb[0].mxu0
  %v525 = vadd.f32 %v146, %v524
  %v526 = vpop.f32.mrb[0].mxu0
  %527 = vmatprep.mubr.bf16.mxu0 0
  %528 = vmatmul.mubr.bf16.gmra.mrb[0].mxu0 %v348
  %v529 = vpop.f32.mrb[0].mxu0
  %v530 = vadd.f32 %v146, %v529
  %v531 = vpop.f32.mrb[0].mxu0
  %v532 = vpop.f32.mrb[0].mxu0
  %v533 = vadd.f32 %v146, %v532
  %v534 = vpop.f32.mrb[0].mxu0
  %535 = vmatprep.mubr.bf16.mxu0 0
  %536 = vmatmul.mubr.bf16.gmra.mrb[0].mxu0 %v351
  %v537 = vpop.f32.mrb[0].mxu0
  %v538 = vadd.f32 %v146, %v537
  %v539 = vpop.f32.mrb[0].mxu0
  %v540 = vpop.f32.mrb[0].mxu0
  %v541 = vadd.f32 %v146, %v540
  %v542 = vpop.f32.mrb[0].mxu0
  %543 = vmatprep.mubr.bf16.mxu0 0
  %544 = vmatmul.mubr.bf16.gmra.mrb[0].mxu0 %v354
  %v545 = vpop.f32.mrb[0].mxu0
  %v546 = vadd.f32 %v146, %v545
  %v547 = vpop.f32.mrb[0].mxu0
  %v548 = vpop.f32.mrb[0].mxu0
  %v549 = vadd.f32 %v146, %v548
  %v550 = vpop.f32.mrb[0].mxu0
  %551 = vmatprep.mubr.bf16.mxu0 0
  %552 = vmatmul.mubr.bf16.gmra.mrb[0].mxu0 %v357
  %v553 = vpop.f32.mrb[0].mxu0
  %v554 = vadd.f32 %v146, %v553
  %v555 = vpop.f32.mrb[0].mxu0
  %v556 = vpop.f32.mrb[0].mxu0
  %v557 = vadd.f32 %v146, %v556
  %v558 = vpop.f32.mrb[0].mxu0
  %559 = vmatprep.mubr.bf16.mxu0 0
  %560 = vmatmul.mubr.bf16.gmra.mrb[0].mxu0 %v360
  %v561 = vpop.f32.mrb[0].mxu0
  %v562 = vadd.f32 %v146, %v561
  %v563 = vpop.f32.mrb[0].mxu0
  %v564 = vpop.f32.mrb[0].mxu0
  %v565 = vadd.f32 %v146, %v564
  %v566 = vpop.f32.mrb[0].mxu0
  %567 = vmatprep.mubr.bf16.mxu0 0
  %568 = vmatmul.mubr.bf16.gmra.mrb[0].mxu0 %v363
  %v569 = vpop.f32.mrb[0].mxu0
  %v570 = vadd.f32 %v146, %v569
  %v571 = vpop.f32.mrb[0].mxu0
  %v572 = vpop.f32.mrb[0].mxu0
  %v573 = vadd.f32 %v146, %v572
  %v574 = vpop.f32.mrb[0].mxu0
  %575 = vmatprep.mubr.bf16.mxu0 0
  %576 = vmatmul.mubr.bf16.gmra.mrb[0].mxu0 %v366
  %v577 = vpop.f32.mrb[0].mxu0
  %v578 = vadd.f32 %v146, %v577
  %v579 = vpop.f32.mrb[0].mxu0
  %v580 = vpop.f32.mrb[0].mxu0
  %v581 = vadd.f32 %v146, %v580
  %v582 = vpop.f32.mrb[0].mxu0
  %583 = vmatprep.mubr.bf16.mxu0 0
  %584 = vmatmul.mubr.bf16.gmra.mrb[0].mxu0 %v369
  %v585 = vpop.f32.mrb[0].mxu0
  %v586 = vadd.f32 %v146, %v585
  %v587 = vpop.f32.mrb[0].mxu0
  %v588 = vpop.f32.mrb[0].mxu0
  %v589 = vadd.f32 %v146, %v588
  %v590 = vpop.f32.mrb[0].mxu0
  %591 = vmatprep.mubr.bf16.mxu0 0
  %592 = vmatmul.mubr.bf16.gmra.mrb[0].mxu0 %v372
  %v593 = vpop.f32.mrb[0].mxu0
  %v594 = vadd.f32 %v146, %v593
  %v595 = vpop.f32.mrb[0].mxu0
  %v596 = vpop.f32.mrb[0].mxu0
  %v597 = vadd.f32 %v146, %v596
  %v598 = vpop.f32.mrb[0].mxu0
  %599 = vmatprep.mubr.bf16.mxu0 0
  %600 = vmatmul.mubr.bf16.gmra.mrb[0].mxu0 %v375
  %v601 = vpop.f32.mrb[0].mxu0
  %v602 = vadd.f32 %v146, %v601
  %v603 = vpop.f32.mrb[0].mxu0
  %v604 = vpop.f32.mrb[0].mxu0
  %v605 = vadd.f32 %v146, %v604
  %v606 = vpop.f32.mrb[0].mxu0
  %607 = vmatprep.mubr.bf16.mxu0 0
  %608 = vmatmul.mubr.bf16.gmra.mrb[0].mxu0 %v378
  %v609 = vpop.f32.mrb[0].mxu0
  %v610 = vadd.f32 %v146, %v609
  %v611 = vpop.f32.mrb[0].mxu0
  %v612 = vpop.f32.mrb[0].mxu0
  %v613 = vadd.f32 %v146, %v612
  %v614 = vpop.f32.mrb[0].mxu0
  %615 = vmatprep.mubr.bf16.mxu0 0
  %616 = vmatmul.mubr.bf16.gmra.mrb[0].mxu0 %v381
  %v617 = vpop.f32.mrb[0].mxu0
  %v618 = vadd.f32 %v146, %v617
  %v619 = vpop.f32.mrb[0].mxu0
  %v620 = vpop.f32.mrb[0].mxu0
  %v621 = vadd.f32 %v146, %v620
  %v622 = vpop.f32.mrb[0].mxu0
  %623 = vmatprep.mubr.bf16.mxu0 0
  %624 = vmatmul.mubr.bf16.gmra.mrb[0].mxu0 %v384
  %v625 = vpop.f32.mrb[0].mxu0
  %v626 = vadd.f32 %v146, %v625
  %v627 = vpop.f32.mrb[0].mxu0
  %v628 = vpop.f32.mrb[0].mxu0
  %v629 = vadd.f32 %v146, %v628
  %v630 = vpop.f32.mrb[0].mxu0
  %631 = vmatprep.mubr.bf16.mxu0 0
  %632 = vmatmul.mubr.bf16.gmra.mrb[0].mxu0 %v387
  %v633 = vpop.f32.mrb[0].mxu0
  %v634 = vadd.f32 %v146, %v633
  %v635 = vpop.f32.mrb[0].mxu0
  %v636 = vpop.f32.mrb[0].mxu0
  %v637 = vadd.f32 %v146, %v636
  %v638 = vpop.f32.mrb[0].mxu0
  %639 = vmatprep.mubr.bf16.mxu0 0
  %640 = vmatmul.mubr.bf16.gmra.mrb[0].mxu0 %v390
  %v641 = vpop.f32.mrb[0].mxu0
  %v642 = vadd.f32 %v146, %v641
  %v643 = vpop.f32.mrb[0].mxu0
  %v644 = vpop.f32.mrb[0].mxu0
  %v645 = vadd.f32 %v146, %v644
  %v646 = vpop.f32.mrb[0].mxu0
  %647 = vmatprep.mubr.bf16.mxu0 0
  %648 = vmatmul.mubr.bf16.gmra.mrb[0].mxu0 %v393
  %v649 = vpop.f32.mrb[0].mxu0
  %v650 = vadd.f32 %v146, %v649
  %v651 = vpop.f32.mrb[0].mxu0
  %v652 = vpop.f32.mrb[0].mxu0
  %v653 = vadd.f32 %v146, %v652
  %v654 = vpop.f32.mrb[0].mxu0
  %655 = vmatprep.mubr.bf16.mxu0 0
  %656 = vmatmul.mubr.bf16.gmra.mrb[0].mxu0 %v396
  %v657 = vpop.f32.mrb[0].mxu0
  %v658 = vadd.f32 %v146, %v657
  %v659 = vpop.f32.mrb[0].mxu0
  %v660 = vpop.f32.mrb[0].mxu0
  %v661 = vadd.f32 %v146, %v660
  %v662 = vpop.f32.mrb[0].mxu0
  %663 = vmatprep.mubr.bf16.mxu0 0
  %664 = vmatmul.mubr.bf16.gmra.mrb[0].mxu0 %v399
  %v665 = vpop.f32.mrb[0].mxu0
  %v666 = vadd.f32 %v146, %v665
  %v667 = vpop.f32.mrb[0].mxu0
  %v668 = vpop.f32.mrb[0].mxu0
  %v669 = vadd.f32 %v146, %v668
  %v670 = vpop.f32.mrb[0].mxu0
  %671 = vmatprep.mubr.bf16.mxu0 0
  %672 = vmatmul.mubr.bf16.gmra.mrb[0].mxu0 %v402
  %v673 = vpop.f32.mrb[0].mxu0
  %v674 = vadd.f32 %v146, %v673
  %v675 = vpop.f32.mrb[0].mxu0
  %v676 = vpop.f32.mrb[0].mxu0
  %v677 = vadd.f32 %v146, %v676
  %v678 = vpop.f32.mrb[0].mxu0
  %679 = vmatprep.mubr.bf16.mxu0 0
  %680 = vmatmul.mubr.bf16.gmra.mrb[0].mxu0 %v405
  %v681 = vpop.f32.mrb[0].mxu0
  %v682 = vadd.f32 %v146, %v681
  %v683 = vpop.f32.mrb[0].mxu0
  %v684 = vpop.f32.mrb[0].mxu0
  %v685 = vadd.f32 %v146, %v684
  %v686 = vpop.f32.mrb[0].mxu0
  %687 = vmatprep.mubr.bf16.mxu0 0
  %688 = vmatmul.mubr.bf16.gmra.mrb[0].mxu0 %v408
  %v689 = vpop.f32.mrb[0].mxu0
  %v690 = vadd.f32 %v146, %v689
  %v691 = vpop.f32.mrb[0].mxu0
  %v692 = vpop.f32.mrb[0].mxu0
  %v693 = vadd.f32 %v146, %v692
  %v694 = vpop.f32.mrb[0].mxu0
  %695 = vmatprep.mubr.bf16.mxu0 0
  %696 = vmatmul.mubr.bf16.gmra.mrb[0].mxu0 %v411
  %v697 = vpop.f32.mrb[0].mxu0
  %v698 = vadd.f32 %v146, %v697
  %v699 = vpop.f32.mrb[0].mxu0
  %v700 = vpop.f32.mrb[0].mxu0
  %v701 = vadd.f32 %v146, %v700
  %v702 = vpop.f32.mrb[0].mxu0
  %703 = vmatprep.mubr.bf16.mxu0 0
  %704 = vmatmul.mubr.bf16.gmra.mrb[0].mxu0 %v414
  %v705 = vpop.f32.mrb[0].mxu0
  %v706 = vadd.f32 %v146, %v705
  %v707 = vpop.f32.mrb[0].mxu0
  %v708 = vpop.f32.mrb[0].mxu0
  %v709 = vadd.f32 %v146, %v708
  %v710 = vpop.f32.mrb[0].mxu0
  %711 = vdwg.mxu0
  %v712 = vmax.f32 %v458, 0.0
  %v713 = vmax.f32 %v461, 0.0
  %v714 = vmax.f32 %v466, 0.0
  %v715 = vmax.f32 %v469, 0.0
  %v716 = vmax.f32 %v474, 0.0
  %v717 = vmax.f32 %v477, 0.0
  %v718 = vmax.f32 %v482, 0.0
  %v719 = vmax.f32 %v485, 0.0
  %v720 = vmax.f32 %v490, 0.0
  %v721 = vmax.f32 %v493, 0.0
  %v722 = vmax.f32 %v498, 0.0
  %v723 = vmax.f32 %v501, 0.0
  %v724 = vmax.f32 %v506, 0.0
  %v725 = vmax.f32 %v509, 0.0
  %v726 = vmax.f32 %v514, 0.0
  %v727 = vmax.f32 %v517, 0.0
  %v728 = vmax.f32 %v522, 0.0
  %v729 = vmax.f32 %v525, 0.0
  %v730 = vmax.f32 %v530, 0.0
  %v731 = vmax.f32 %v533, 0.0
  %v732 = vmax.f32 %v538, 0.0
  %v733 = vmax.f32 %v541, 0.0
  %v734 = vmax.f32 %v546, 0.0
  %v735 = vmax.f32 %v549, 0.0
  %v736 = vmax.f32 %v554, 0.0
  %v737 = vmax.f32 %v557, 0.0
  %v738 = vmax.f32 %v562, 0.0
  %v739 = vmax.f32 %v565, 0.0
  %v740 = vmax.f32 %v570, 0.0
  %v741 = vmax.f32 %v573, 0.0
  %v742 = vmax.f32 %v578, 0.0
  %v743 = vmax.f32 %v581, 0.0
  %v744 = vmax.f32 %v586, 0.0
  %v745 = vmax.f32 %v589, 0.0
  %v746 = vmax.f32 %v594, 0.0
  %v747 = vmax.f32 %v597, 0.0
  %v748 = vmax.f32 %v602, 0.0
  %v749 = vmax.f32 %v605, 0.0
  %v750 = vmax.f32 %v610, 0.0
  %v751 = vmax.f32 %v613, 0.0
  %v752 = vmax.f32 %v618, 0.0
  %v753 = vmax.f32 %v621, 0.0
  %v754 = vmax.f32 %v626, 0.0
  %v755 = vmax.f32 %v629, 0.0
  %v756 = vmax.f32 %v634, 0.0
  %v757 = vmax.f32 %v637, 0.0
  %v758 = vmax.f32 %v642, 0.0
  %v759 = vmax.f32 %v645, 0.0
  %v760 = vmax.f32 %v650, 0.0
  %v761 = vmax.f32 %v653, 0.0
  %v762 = vmax.f32 %v658, 0.0
  %v763 = vmax.f32 %v661, 0.0
  %v764 = vmax.f32 %v666, 0.0
  %v765 = vmax.f32 %v669, 0.0
  %v766 = vmax.f32 %v674, 0.0
  %v767 = vmax.f32 %v677, 0.0
  %v768 = vmax.f32 %v682, 0.0
  %v769 = vmax.f32 %v685, 0.0
  %v770 = vmax.f32 %v690, 0.0
  %v771 = vmax.f32 %v693, 0.0
  %v772 = vmax.f32 %v698, 0.0
  %v773 = vmax.f32 %v701, 0.0
  %v774 = vmax.f32 %v706, 0.0
  %v775 = vmax.f32 %v709, 0.0
  %vm776 = vcmask 261120
  %777 = vst.msk [vmem:[#allocation2] sm:$0xff] %vm776, 0.0
  %vm778 = vcmask 253952
  %779 = vst.msk [vmem:[#allocation2 + $0x8] sm:$0x1] %vm778, 0.0
  %780 = vst.msk [vmem:[#allocation2 + $0x10] sm:$0xff] %vm776, 0.0
  %781 = vst.msk [vmem:[#allocation2 + $0x18] sm:$0x1] %vm778, 0.0
  %782 = vst.msk [vmem:[#allocation2 + $0x20] sm:$0xff] %vm776, 0.0
  %783 = vst.msk [vmem:[#allocation2 + $0x28] sm:$0x1] %vm778, 0.0
  %784 = vst.msk [vmem:[#allocation2 + $0x30] sm:$0xff] %vm776, 0.0
  %785 = vst.msk [vmem:[#allocation2 + $0x38] sm:$0x1] %vm778, 0.0
  %786 = vst.msk [vmem:[#allocation2 + $0x40] sm:$0xff] %vm776, 0.0
  %787 = vst.msk [vmem:[#allocation2 + $0x48] sm:$0x1] %vm778, 0.0
  %788 = vst.msk [vmem:[#allocation2 + $0x50] sm:$0xff] %vm776, 0.0
  %789 = vst.msk [vmem:[#allocation2 + $0x58] sm:$0x1] %vm778, 0.0
  %790 = vst.msk [vmem:[#allocation2 + $0x60] sm:$0xff] %vm776, 0.0
  %791 = vst.msk [vmem:[#allocation2 + $0x68] sm:$0x1] %vm778, 0.0
  %792 = vst.msk [vmem:[#allocation2 + $0x70] sm:$0xff] %vm776, 0.0
  %793 = vst.msk [vmem:[#allocation2 + $0x78] sm:$0x1] %vm778, 0.0
  %794 = vst.msk [vmem:[#allocation2 + $0x80] sm:$0xff] %vm776, 0.0
  %795 = vst.msk [vmem:[#allocation2 + $0x88] sm:$0x1] %vm778, 0.0
  %796 = vst.msk [vmem:[#allocation2 + $0x90] sm:$0xff] %vm776, 0.0
  %797 = vst.msk [vmem:[#allocation2 + $0x98] sm:$0x1] %vm778, 0.0
  %798 = vst.msk [vmem:[#allocation2 + $0xa0] sm:$0xff] %vm776, 0.0
  %799 = vst.msk [vmem:[#allocation2 + $0xa8] sm:$0x1] %vm778, 0.0
  %800 = vst.msk [vmem:[#allocation2 + $0xb0] sm:$0xff] %vm776, 0.0
  %801 = vst.msk [vmem:[#allocation2 + $0xb8] sm:$0x1] %vm778, 0.0
  %802 = vst.msk [vmem:[#allocation2 + $0xc0] sm:$0xff] %vm776, 0.0
  %803 = vst.msk [vmem:[#allocation2 + $0xc8] sm:$0x1] %vm778, 0.0
  %804 = vst.msk [vmem:[#allocation2 + $0xd0] sm:$0xff] %vm776, 0.0
  %805 = vst.msk [vmem:[#allocation2 + $0xd8] sm:$0x1] %vm778, 0.0
  %806 = vst.msk [vmem:[#allocation2 + $0xe0] sm:$0xff] %vm776, 0.0
  %807 = vst.msk [vmem:[#allocation2 + $0xe8] sm:$0x1] %vm778, 0.0
  %808 = vst.msk [vmem:[#allocation2 + $0xf0] sm:$0xff] %vm776, 0.0
  %809 = vst.msk [vmem:[#allocation2 + $0xf8] sm:$0x1] %vm778, 0.0
  %810 = vst.msk [vmem:[#allocation2 + $0x100] sm:$0xff] %vm776, 0.0
  %811 = vst.msk [vmem:[#allocation2 + $0x108] sm:$0x1] %vm778, 0.0
  %812 = vst.msk [vmem:[#allocation2 + $0x110] sm:$0xff] %vm776, 0.0
  %813 = vst.msk [vmem:[#allocation2 + $0x118] sm:$0x1] %vm778, 0.0
  %814 = vst.msk [vmem:[#allocation2 + $0x120] sm:$0xff] %vm776, 0.0
  %815 = vst.msk [vmem:[#allocation2 + $0x128] sm:$0x1] %vm778, 0.0
  %816 = vst.msk [vmem:[#allocation2 + $0x130] sm:$0xff] %vm776, 0.0
  %817 = vst.msk [vmem:[#allocation2 + $0x138] sm:$0x1] %vm778, 0.0
  %818 = vst.msk [vmem:[#allocation2 + $0x140] sm:$0xff] %vm776, 0.0
  %819 = vst.msk [vmem:[#allocation2 + $0x148] sm:$0x1] %vm778, 0.0
  %820 = vst.msk [vmem:[#allocation2 + $0x150] sm:$0xff] %vm776, 0.0
  %821 = vst.msk [vmem:[#allocation2 + $0x158] sm:$0x1] %vm778, 0.0
  %822 = vst.msk [vmem:[#allocation2 + $0x160] sm:$0xff] %vm776, 0.0
  %823 = vst.msk [vmem:[#allocation2 + $0x168] sm:$0x1] %vm778, 0.0
  %824 = vst.msk [vmem:[#allocation2 + $0x170] sm:$0xff] %vm776, 0.0
  %825 = vst.msk [vmem:[#allocation2 + $0x178] sm:$0x1] %vm778, 0.0
  %826 = vst.msk [vmem:[#allocation2 + $0x180] sm:$0xff] %vm776, 0.0
  %827 = vst.msk [vmem:[#allocation2 + $0x188] sm:$0x1] %vm778, 0.0
  %828 = vst.msk [vmem:[#allocation2 + $0x190] sm:$0xff] %vm776, 0.0
  %829 = vst.msk [vmem:[#allocation2 + $0x198] sm:$0x1] %vm778, 0.0
  %830 = vst.msk [vmem:[#allocation2 + $0x1a0] sm:$0xff] %vm776, 0.0
  %831 = vst.msk [vmem:[#allocation2 + $0x1a8] sm:$0x1] %vm778, 0.0
  %832 = vst.msk [vmem:[#allocation2 + $0x1b0] sm:$0xff] %vm776, 0.0
  %833 = vst.msk [vmem:[#allocation2 + $0x1b8] sm:$0x1] %vm778, 0.0
  %834 = vst.msk [vmem:[#allocation2 + $0x1c0] sm:$0xff] %vm776, 0.0
  %835 = vst.msk [vmem:[#allocation2 + $0x1c8] sm:$0x1] %vm778, 0.0
  %836 = vst.msk [vmem:[#allocation2 + $0x1d0] sm:$0xff] %vm776, 0.0
  %837 = vst.msk [vmem:[#allocation2 + $0x1d8] sm:$0x1] %vm778, 0.0
  %838 = vst.msk [vmem:[#allocation2 + $0x1e0] sm:$0xff] %vm776, 0.0
  %839 = vst.msk [vmem:[#allocation2 + $0x1e8] sm:$0x1] %vm778, 0.0
  %840 = vst.msk [vmem:[#allocation2 + $0x1f0] sm:$0xff] %vm776, 0.0
  %841 = vst.msk [vmem:[#allocation2 + $0x1f8] sm:$0x1] %vm778, 0.0
  %842 = vst.msk [vmem:[#allocation2 + $0x200] sm:$0xff] %vm776, 0.0
  %843 = vst.msk [vmem:[#allocation2 + $0x208] sm:$0x1] %vm778, 0.0
  %844 = vst.msk [vmem:[#allocation2 + $0x210] sm:$0xff] %vm776, 0.0
  %845 = vst.msk [vmem:[#allocation2 + $0x218] sm:$0x1] %vm778, 0.0
  %846 = vst.msk [vmem:[#allocation2 + $0x220] sm:$0xff] %vm776, 0.0
  %847 = vst.msk [vmem:[#allocation2 + $0x228] sm:$0x1] %vm778, 0.0
  %848 = vst.msk [vmem:[#allocation2 + $0x230] sm:$0xff] %vm776, 0.0
  %849 = vst.msk [vmem:[#allocation2 + $0x238] sm:$0x1] %vm778, 0.0
  %850 = vst.msk [vmem:[#allocation2 + $0x240] sm:$0xff] %vm776, 0.0
  %851 = vst.msk [vmem:[#allocation2 + $0x248] sm:$0x1] %vm778, 0.0
  %852 = vst.msk [vmem:[#allocation2 + $0x250] sm:$0xff] %vm776, 0.0
  %853 = vst.msk [vmem:[#allocation2 + $0x258] sm:$0x1] %vm778, 0.0
  %854 = vst.msk [vmem:[#allocation2 + $0x260] sm:$0xff] %vm776, 0.0
  %855 = vst.msk [vmem:[#allocation2 + $0x268] sm:$0x1] %vm778, 0.0
  %856 = vst.msk [vmem:[#allocation2 + $0x270] sm:$0xff] %vm776, 0.0
  %857 = vst.msk [vmem:[#allocation2 + $0x278] sm:$0x1] %vm778, 0.0
  %858 = vst.msk [vmem:[#allocation2 + $0x280] sm:$0xff] %vm776, 0.0
  %859 = vst.msk [vmem:[#allocation2 + $0x288] sm:$0x1] %vm778, 0.0
  %860 = vst.msk [vmem:[#allocation2 + $0x290] sm:$0xff] %vm776, 0.0
  %861 = vst.msk [vmem:[#allocation2 + $0x298] sm:$0x1] %vm778, 0.0
  %862 = vst.msk [vmem:[#allocation2 + $0x2a0] sm:$0xff] %vm776, 0.0
  %863 = vst.msk [vmem:[#allocation2 + $0x2a8] sm:$0x1] %vm778, 0.0
  %864 = vst.msk [vmem:[#allocation2 + $0x2b0] sm:$0xff] %vm776, 0.0
  %865 = vst.msk [vmem:[#allocation2 + $0x2b8] sm:$0x1] %vm778, 0.0
  %866 = vst.msk [vmem:[#allocation2 + $0x2c0] sm:$0xff] %vm776, 0.0
  %867 = vst.msk [vmem:[#allocation2 + $0x2c8] sm:$0x1] %vm778, 0.0
  %868 = vst.msk [vmem:[#allocation2 + $0x2d0] sm:$0xff] %vm776, 0.0
  %869 = vst.msk [vmem:[#allocation2 + $0x2d8] sm:$0x1] %vm778, 0.0
  %870 = vst.msk [vmem:[#allocation2 + $0x2e0] sm:$0xff] %vm776, 0.0
  %871 = vst.msk [vmem:[#allocation2 + $0x2e8] sm:$0x1] %vm778, 0.0
  %872 = vst.msk [vmem:[#allocation2 + $0x2f0] sm:$0xff] %vm776, 0.0
  %873 = vst.msk [vmem:[#allocation2 + $0x2f8] sm:$0x1] %vm778, 0.0
  %874 = vst.msk [vmem:[#allocation2 + $0x300] sm:$0xff] %vm776, 0.0
  %875 = vst.msk [vmem:[#allocation2 + $0x308] sm:$0x1] %vm778, 0.0
  %876 = vst.msk [vmem:[#allocation2 + $0x310] sm:$0xff] %vm776, 0.0
  %877 = vst.msk [vmem:[#allocation2 + $0x318] sm:$0x1] %vm778, 0.0
  %878 = vst.msk [vmem:[#allocation2 + $0x320] sm:$0xff] %vm776, 0.0
  %879 = vst.msk [vmem:[#allocation2 + $0x328] sm:$0x1] %vm778, 0.0
  %880 = vst.msk [vmem:[#allocation2 + $0x330] sm:$0xff] %vm776, 0.0
  %881 = vst.msk [vmem:[#allocation2 + $0x338] sm:$0x1] %vm778, 0.0
  %882 = vst.msk [vmem:[#allocation2 + $0x340] sm:$0xff] %vm776, 0.0
  %883 = vst.msk [vmem:[#allocation2 + $0x348] sm:$0x1] %vm778, 0.0
  %884 = vst.msk [vmem:[#allocation2 + $0x350] sm:$0xff] %vm776, 0.0
  %885 = vst.msk [vmem:[#allocation2 + $0x358] sm:$0x1] %vm778, 0.0
  %886 = vst.msk [vmem:[#allocation2 + $0x360] sm:$0xff] %vm776, 0.0
  %887 = vst.msk [vmem:[#allocation2 + $0x368] sm:$0x1] %vm778, 0.0
  %888 = vst.msk [vmem:[#allocation2 + $0x370] sm:$0xff] %vm776, 0.0
  %889 = vst.msk [vmem:[#allocation2 + $0x378] sm:$0x1] %vm778, 0.0
  %890 = vst.msk [vmem:[#allocation2 + $0x380] sm:$0xff] %vm776, 0.0
  %891 = vst.msk [vmem:[#allocation2 + $0x388] sm:$0x1] %vm778, 0.0
  %892 = vst.msk [vmem:[#allocation2 + $0x390] sm:$0xff] %vm776, 0.0
  %893 = vst.msk [vmem:[#allocation2 + $0x398] sm:$0x1] %vm778, 0.0
  %894 = vst.msk [vmem:[#allocation2 + $0x3a0] sm:$0xff] %vm776, 0.0
  %895 = vst.msk [vmem:[#allocation2 + $0x3a8] sm:$0x1] %vm778, 0.0
  %896 = vst.msk [vmem:[#allocation2 + $0x3b0] sm:$0xff] %vm776, 0.0
  %897 = vst.msk [vmem:[#allocation2 + $0x3b8] sm:$0x1] %vm778, 0.0
  %898 = vst.msk [vmem:[#allocation2 + $0x3c0] sm:$0xff] %vm776, 0.0
  %899 = vst.msk [vmem:[#allocation2 + $0x3c8] sm:$0x1] %vm778, 0.0
  %900 = vst.msk [vmem:[#allocation2 + $0x3d0] sm:$0xff] %vm776, 0.0
  %901 = vst.msk [vmem:[#allocation2 + $0x3d8] sm:$0x1] %vm778, 0.0
  %902 = vst.msk [vmem:[#allocation2 + $0x3e0] sm:$0xff] %vm776, 0.0
  %903 = vst.msk [vmem:[#allocation2 + $0x3e8] sm:$0x1] %vm778, 0.0
  %904 = vst.msk [vmem:[#allocation2 + $0x3f0] sm:$0xff] %vm776, 0.0
  %905 = vst.msk [vmem:[#allocation2 + $0x3f8] sm:$0x1] %vm778, 0.0
  %906 = vst.msk [vmem:[#allocation2 + $0x400] sm:$0xff] %vm776, 0.0
  %907 = vst.msk [vmem:[#allocation2 + $0x408] sm:$0x1] %vm778, 0.0
  %908 = vst.msk [vmem:[#allocation2 + $0x410] sm:$0xff] %vm776, 0.0
  %909 = vst.msk [vmem:[#allocation2 + $0x418] sm:$0x1] %vm778, 0.0
  %910 = vst.msk [vmem:[#allocation2 + $0x420] sm:$0xff] %vm776, 0.0
  %911 = vst.msk [vmem:[#allocation2 + $0x428] sm:$0x1] %vm778, 0.0
  %912 = vst.msk [vmem:[#allocation2 + $0x430] sm:$0xff] %vm776, 0.0
  %913 = vst.msk [vmem:[#allocation2 + $0x438] sm:$0x1] %vm778, 0.0
  %914 = vst.msk [vmem:[#allocation2 + $0x440] sm:$0xff] %vm776, 0.0
  %915 = vst.msk [vmem:[#allocation2 + $0x448] sm:$0x1] %vm778, 0.0
  %916 = vst.msk [vmem:[#allocation2 + $0x450] sm:$0xff] %vm776, 0.0
  %917 = vst.msk [vmem:[#allocation2 + $0x458] sm:$0x1] %vm778, 0.0
  %918 = vst.msk [vmem:[#allocation2 + $0x460] sm:$0xff] %vm776, 0.0
  %919 = vst.msk [vmem:[#allocation2 + $0x468] sm:$0x1] %vm778, 0.0
  %920 = vst.msk [vmem:[#allocation2 + $0x470] sm:$0xff] %vm776, 0.0
  %921 = vst.msk [vmem:[#allocation2 + $0x478] sm:$0x1] %vm778, 0.0
  %s922 = scalar_lea.vmem [#allocation2], 16
  %923 = vst.msk [vmem:[%s922 + $0x1] sm:$0xff] %vm776, %v712
  %924 = vst.msk [vmem:[%s922 + $0x11] sm:$0xff] %vm776, %v713
  %925 = vst.msk [vmem:[%s922 + $0x21] sm:$0xff] %vm776, %v714
  %926 = vst.msk [vmem:[%s922 + $0x31] sm:$0xff] %vm776, %v715
  %927 = vst.msk [vmem:[%s922 + $0x41] sm:$0xff] %vm776, %v716
  %928 = vst.msk [vmem:[%s922 + $0x51] sm:$0xff] %vm776, %v717
  %929 = vst.msk [vmem:[%s922 + $0x61] sm:$0xff] %vm776, %v718
  %930 = vst.msk [vmem:[%s922 + $0x71] sm:$0xff] %vm776, %v719
  %s931 = scalar_lea.vmem [#allocation2], 160
  %932 = vst.msk [vmem:[%s931] sm:$0xff] %vm776, %v720
  %933 = vst.msk [vmem:[%s931 + $0x10] sm:$0xff] %vm776, %v721
  %934 = vst.msk [vmem:[%s931 + $0x20] sm:$0xff] %vm776, %v722
  %935 = vst.msk [vmem:[%s931 + $0x30] sm:$0xff] %vm776, %v723
  %936 = vst.msk [vmem:[%s931 + $0x40] sm:$0xff] %vm776, %v724
  %937 = vst.msk [vmem:[%s931 + $0x50] sm:$0xff] %vm776, %v725
  %938 = vst.msk [vmem:[%s931 + $0x60] sm:$0xff] %vm776, %v726
  %939 = vst.msk [vmem:[%s931 + $0x70] sm:$0xff] %vm776, %v727
  %s940 = scalar_lea.vmem [#allocation2], 288
  %941 = vst.msk [vmem:[%s940 + $0x1] sm:$0xff] %vm776, %v728
  %942 = vst.msk [vmem:[%s940 + $0x11] sm:$0xff] %vm776, %v729
  %943 = vst.msk [vmem:[%s940 + $0x21] sm:$0xff] %vm776, %v730
  %944 = vst.msk [vmem:[%s940 + $0x31] sm:$0xff] %vm776, %v731
  %945 = vst.msk [vmem:[%s940 + $0x41] sm:$0xff] %vm776, %v732
  %946 = vst.msk [vmem:[%s940 + $0x51] sm:$0xff] %vm776, %v733
  %947 = vst.msk [vmem:[%s940 + $0x61] sm:$0xff] %vm776, %v734
  %948 = vst.msk [vmem:[%s940 + $0x71] sm:$0xff] %vm776, %v735
  %s949 = scalar_lea.vmem [#allocation2], 432
  %950 = vst.msk [vmem:[%s949] sm:$0xff] %vm776, %v736
  %951 = vst.msk [vmem:[%s949 + $0x10] sm:$0xff] %vm776, %v737
  %952 = vst.msk [vmem:[%s949 + $0x20] sm:$0xff] %vm776, %v738
  %953 = vst.msk [vmem:[%s949 + $0x30] sm:$0xff] %vm776, %v739
  %954 = vst.msk [vmem:[%s949 + $0x40] sm:$0xff] %vm776, %v740
  %955 = vst.msk [vmem:[%s949 + $0x50] sm:$0xff] %vm776, %v741
  %956 = vst.msk [vmem:[%s949 + $0x60] sm:$0xff] %vm776, %v742
  %957 = vst.msk [vmem:[%s949 + $0x70] sm:$0xff] %vm776, %v743
  %s958 = scalar_lea.vmem [#allocation2], 592
  %959 = vst.msk [vmem:[%s958 + $0x1] sm:$0xff] %vm776, %v744
  %960 = vst.msk [vmem:[%s958 + $0x11] sm:$0xff] %vm776, %v745
  %961 = vst.msk [vmem:[%s958 + $0x21] sm:$0xff] %vm776, %v746
  %962 = vst.msk [vmem:[%s958 + $0x31] sm:$0xff] %vm776, %v747
  %963 = vst.msk [vmem:[%s958 + $0x41] sm:$0xff] %vm776, %v748
  %964 = vst.msk [vmem:[%s958 + $0x51] sm:$0xff] %vm776, %v749
  %965 = vst.msk [vmem:[%s958 + $0x61] sm:$0xff] %vm776, %v750
  %966 = vst.msk [vmem:[%s958 + $0x71] sm:$0xff] %vm776, %v751
  %s967 = scalar_lea.vmem [#allocation2], 736
  %968 = vst.msk [vmem:[%s967] sm:$0xff] %vm776, %v752
  %969 = vst.msk [vmem:[%s967 + $0x10] sm:$0xff] %vm776, %v753
  %970 = vst.msk [vmem:[%s967 + $0x20] sm:$0xff] %vm776, %v754
  %971 = vst.msk [vmem:[%s967 + $0x30] sm:$0xff] %vm776, %v755
  %972 = vst.msk [vmem:[%s967 + $0x40] sm:$0xff] %vm776, %v756
  %973 = vst.msk [vmem:[%s967 + $0x50] sm:$0xff] %vm776, %v757
  %974 = vst.msk [vmem:[%s967 + $0x60] sm:$0xff] %vm776, %v758
  %975 = vst.msk [vmem:[%s967 + $0x70] sm:$0xff] %vm776, %v759
  %s976 = scalar_lea.vmem [#allocation2], 864
  %977 = vst.msk [vmem:[%s976 + $0x1] sm:$0xff] %vm776, %v760
  %978 = vst.msk [vmem:[%s976 + $0x11] sm:$0xff] %vm776, %v761
  %979 = vst.msk [vmem:[%s976 + $0x21] sm:$0xff] %vm776, %v762
  %980 = vst.msk [vmem:[%s976 + $0x31] sm:$0xff] %vm776, %v763
  %981 = vst.msk [vmem:[%s976 + $0x41] sm:$0xff] %vm776, %v764
  %982 = vst.msk [vmem:[%s976 + $0x51] sm:$0xff] %vm776, %v765
  %983 = vst.msk [vmem:[%s976 + $0x61] sm:$0xff] %vm776, %v766
  %984 = vst.msk [vmem:[%s976 + $0x71] sm:$0xff] %vm776, %v767
  %s985 = scalar_lea.vmem [#allocation2], 1008
  %986 = vst.msk [vmem:[%s985] sm:$0xff] %vm776, %v768
  %987 = vst.msk [vmem:[%s985 + $0x10] sm:$0xff] %vm776, %v769
  %988 = vst.msk [vmem:[%s985 + $0x20] sm:$0xff] %vm776, %v770
  %989 = vst.msk [vmem:[%s985 + $0x30] sm:$0xff] %vm776, %v771
  %990 = vst.msk [vmem:[%s985 + $0x40] sm:$0xff] %vm776, %v772
  %991 = vst.msk [vmem:[%s985 + $0x50] sm:$0xff] %vm776, %v773
  %992 = vst.msk [vmem:[%s985 + $0x60] sm:$0xff] %vm776, %v774
  %993 = vst.msk [vmem:[%s985 + $0x70] sm:$0xff] %vm776, %v775
  %v994 = vld [vmem:[#allocation2] sm:$0xff]
  %v995 = vld [vmem:[#allocation2 + $0x10] sm:$0xff]
  %v996 = vld [vmem:[#allocation2 + $0x20] sm:$0xff]
  %v997 = vld [vmem:[#allocation2 + $0x30] sm:$0xff]
  %v998 = vld [vmem:[#allocation2 + $0x40] sm:$0xff]
  %v999 = vld [vmem:[#allocation2 + $0x50] sm:$0xff]
  %v1000 = vld [vmem:[#allocation2 + $0x60] sm:$0xff]
  %v1001 = vld [vmem:[#allocation2 + $0x70] sm:$0xff]
  %v1002 = vld [vmem:[#allocation2 + $0x240] sm:$0xff]
  %v1003 = vld [vmem:[#allocation2 + $0x250] sm:$0xff]
  %v1004 = vld [vmem:[#allocation2 + $0x260] sm:$0xff]
  %v1005 = vld [vmem:[#allocation2 + $0x270] sm:$0xff]
  %v1006 = vld [vmem:[#allocation2 + $0x280] sm:$0xff]
  %v1007 = vld [vmem:[#allocation2 + $0x290] sm:$0xff]
  %v1008 = vld [vmem:[#allocation2 + $0x2a0] sm:$0xff]
  %v1009 = vld [vmem:[#allocation2 + $0x2b0] sm:$0xff]
  %v1010 = vpack.c.bf16 %v995, %v994
  %v1011 = vpack.c.bf16 %v997, %v996
  %v1012 = vpack.c.bf16 %v999, %v998
  %v1013 = vpack.c.bf16 %v1001, %v1000
  %v1014 = vpack.c.bf16 %v1003, %v1002
  %v1015 = vpack.c.bf16 %v1005, %v1004
  %v1016 = vpack.c.bf16 %v1007, %v1006
  %v1017 = vpack.c.bf16 %v1009, %v1008
  %1018 = vst.msk [vmem:[#allocation3] sm:$0xff] %vm776, %v1010
  %1019 = vst.msk [vmem:[#allocation3 + $0x18] sm:$0xff] %vm776, %v1011
  %1020 = vst.msk [vmem:[#allocation3 + $0x30] sm:$0xff] %vm776, %v1012
  %1021 = vst.msk [vmem:[#allocation3 + $0x48] sm:$0xff] %vm776, %v1013
  %1022 = vst.msk [vmem:[#allocation3 + $0x60] sm:$0xff] %vm776, %v1014
  %1023 = vst.msk [vmem:[#allocation3 + $0x78] sm:$0xff] %vm776, %v1015
  %1024 = vst.msk [vmem:[#allocation3 + $0x90] sm:$0xff] %vm776, %v1016
  %1025 = vst.msk [vmem:[#allocation3 + $0xa8] sm:$0xff] %vm776, %v1017
  %s1026 = scalar_lea.vmem [#allocation2], 144
  %v1027 = vld [vmem:[%s1026] sm:$0xff]
  %v1028 = vld [vmem:[%s1026 + $0x10] sm:$0xff]
  %v1029 = vld [vmem:[%s1026 + $0x20] sm:$0xff]
  %v1030 = vld [vmem:[%s1026 + $0x30] sm:$0xff]
  %v1031 = vld [vmem:[%s1026 + $0x40] sm:$0xff]
  %v1032 = vld [vmem:[%s1026 + $0x50] sm:$0xff]
  %v1033 = vld [vmem:[%s1026 + $0x60] sm:$0xff]
  %v1034 = vld [vmem:[%s1026 + $0x70] sm:$0xff]
  %v1035 = vld [vmem:[%s1026 + $0x240] sm:$0xff]
  %v1036 = vld [vmem:[%s1026 + $0x250] sm:$0xff]
  %v1037 = vld [vmem:[%s1026 + $0x260] sm:$0xff]
  %v1038 = vld [vmem:[%s1026 + $0x270] sm:$0xff]
  %v1039 = vld [vmem:[%s1026 + $0x280] sm:$0xff]
  %v1040 = vld [vmem:[%s1026 + $0x290] sm:$0xff]
  %v1041 = vld [vmem:[%s1026 + $0x2a0] sm:$0xff]
  %v1042 = vld [vmem:[%s1026 + $0x2b0] sm:$0xff]
  %v1043 = vpack.c.bf16 %v1028, %v1027
  %v1044 = vpack.c.bf16 %v1030, %v1029
  %v1045 = vpack.c.bf16 %v1032, %v1031
  %v1046 = vpack.c.bf16 %v1034, %v1033
  %v1047 = vpack.c.bf16 %v1036, %v1035
  %v1048 = vpack.c.bf16 %v1038, %v1037
  %v1049 = vpack.c.bf16 %v1040, %v1039
  %v1050 = vpack.c.bf16 %v1042, %v1041
  %1059 = vrot.lane.b32.xlu0 %v1043, 32
  %v1060 = vpop.permute.xlu0 %1059
  %1061 = vrot.lane.b32.xlu0 %v1044, 32
  %v1062 = vpop.permute.xlu0 %1061
  %1063 = vrot.lane.b32.xlu0 %v1045, 32
  %v1064 = vpop.permute.xlu0 %1063
  %1065 = vrot.lane.b32.xlu0 %v1046, 32
  %v1066 = vpop.permute.xlu0 %1065
  %1067 = vrot.lane.b32.xlu0 %v1047, 32
  %v1068 = vpop.permute.xlu0 %1067
  %1069 = vrot.lane.b32.xlu0 %v1048, 32
  %v1070 = vpop.permute.xlu0 %1069
  %1071 = vrot.lane.b32.xlu0 %v1049, 32
  %v1072 = vpop.permute.xlu0 %1071
  %1073 = vrot.lane.b32.xlu0 %v1050, 32
  %v1074 = vpop.permute.xlu0 %1073
  %vm1083 = vcmask 523520
  %1084 = vst.msk [vmem:[#allocation3] sm:$0xff] %vm1083, %v1060
  %1085 = vst.msk [vmem:[#allocation3 + $0x18] sm:$0xff] %vm1083, %v1062
  %1086 = vst.msk [vmem:[#allocation3 + $0x30] sm:$0xff] %vm1083, %v1064
  %1087 = vst.msk [vmem:[#allocation3 + $0x48] sm:$0xff] %vm1083, %v1066
  %1088 = vst.msk [vmem:[#allocation3 + $0x60] sm:$0xff] %vm1083, %v1068
  %1089 = vst.msk [vmem:[#allocation3 + $0x78] sm:$0xff] %vm1083, %v1070
  %1090 = vst.msk [vmem:[#allocation3 + $0x90] sm:$0xff] %vm1083, %v1072
  %1091 = vst.msk [vmem:[#allocation3 + $0xa8] sm:$0xff] %vm1083, %v1074
  %v1092 = vld [vmem:[#allocation2 + $0x1] sm:$0xff]
  %v1093 = vld [vmem:[#allocation2 + $0x11] sm:$0xff]
  %v1094 = vld [vmem:[#allocation2 + $0x21] sm:$0xff]
  %v1095 = vld [vmem:[#allocation2 + $0x31] sm:$0xff]
  %v1096 = vld [vmem:[#allocation2 + $0x41] sm:$0xff]
  %v1097 = vld [vmem:[#allocation2 + $0x51] sm:$0xff]
  %v1098 = vld [vmem:[#allocation2 + $0x61] sm:$0xff]
  %v1099 = vld [vmem:[#allocation2 + $0x71] sm:$0xff]
  %v1100 = vld [vmem:[#allocation2 + $0x241] sm:$0xff]
  %v1101 = vld [vmem:[#allocation2 + $0x251] sm:$0xff]
  %v1102 = vld [vmem:[#allocation2 + $0x261] sm:$0xff]
  %v1103 = vld [vmem:[#allocation2 + $0x271] sm:$0xff]
  %v1104 = vld [vmem:[#allocation2 + $0x281] sm:$0xff]
  %v1105 = vld [vmem:[#allocation2 + $0x291] sm:$0xff]
  %v1106 = vld [vmem:[#allocation2 + $0x2a1] sm:$0xff]
  %v1107 = vld [vmem:[#allocation2 + $0x2b1] sm:$0xff]
  %v1108 = vpack.c.bf16 %v1093, %v1092
  %v1109 = vpack.c.bf16 %v1095, %v1094
  %v1110 = vpack.c.bf16 %v1097, %v1096
  %v1111 = vpack.c.bf16 %v1099, %v1098
  %v1112 = vpack.c.bf16 %v1101, %v1100
  %v1113 = vpack.c.bf16 %v1103, %v1102
  %v1114 = vpack.c.bf16 %v1105, %v1104
  %v1115 = vpack.c.bf16 %v1107, %v1106
  %1124 = vrot.lane.b32.xlu0 %v1108, 64
  %v1125 = vpop.permute.xlu0 %1124
  %1126 = vrot.lane.b32.xlu0 %v1109, 64
  %v1127 = vpop.permute.xlu0 %1126
  %1128 = vrot.lane.b32.xlu0 %v1110, 64
  %v1129 = vpop.permute.xlu0 %1128
  %1130 = vrot.lane.b32.xlu0 %v1111, 64
  %v1131 = vpop.permute.xlu0 %1130
  %1132 = vrot.lane.b32.xlu0 %v1112, 64
  %v1133 = vpop.permute.xlu0 %1132
  %1134 = vrot.lane.b32.xlu0 %v1113, 64
  %v1135 = vpop.permute.xlu0 %1134
  %1136 = vrot.lane.b32.xlu0 %v1114, 64
  %v1137 = vpop.permute.xlu0 %1136
  %1138 = vrot.lane.b32.xlu0 %v1115, 64
  %v1139 = vpop.permute.xlu0 %1138
  %vm1148 = vcmask 785920
  %1149 = vst.msk [vmem:[#allocation3] sm:$0xff] %vm1148, %v1125
  %1150 = vst.msk [vmem:[#allocation3 + $0x18] sm:$0xff] %vm1148, %v1127
  %1151 = vst.msk [vmem:[#allocation3 + $0x30] sm:$0xff] %vm1148, %v1129
  %1152 = vst.msk [vmem:[#allocation3 + $0x48] sm:$0xff] %vm1148, %v1131
  %1153 = vst.msk [vmem:[#allocation3 + $0x60] sm:$0xff] %vm1148, %v1133
  %1154 = vst.msk [vmem:[#allocation3 + $0x78] sm:$0xff] %vm1148, %v1135
  %1155 = vst.msk [vmem:[#allocation3 + $0x90] sm:$0xff] %vm1148, %v1137
  %1156 = vst.msk [vmem:[#allocation3 + $0xa8] sm:$0xff] %vm1148, %v1139
  %v1157 = vld [vmem:[%s940] sm:$0xff]
  %v1158 = vld [vmem:[%s940 + $0x10] sm:$0xff]
  %v1159 = vld [vmem:[%s940 + $0x20] sm:$0xff]
  %v1160 = vld [vmem:[%s940 + $0x30] sm:$0xff]
  %v1161 = vld [vmem:[%s940 + $0x40] sm:$0xff]
  %v1162 = vld [vmem:[%s940 + $0x50] sm:$0xff]
  %v1163 = vld [vmem:[%s940 + $0x60] sm:$0xff]
  %v1164 = vld [vmem:[%s940 + $0x70] sm:$0xff]
  %v1165 = vld [vmem:[%s940 + $0x240] sm:$0xff]
  %v1166 = vld [vmem:[%s940 + $0x250] sm:$0xff]
  %v1167 = vld [vmem:[%s940 + $0x260] sm:$0xff]
  %v1168 = vld [vmem:[%s940 + $0x270] sm:$0xff]
  %v1169 = vld [vmem:[%s940 + $0x280] sm:$0xff]
  %v1170 = vld [vmem:[%s940 + $0x290] sm:$0xff]
  %v1171 = vld [vmem:[%s940 + $0x2a0] sm:$0xff]
  %v1172 = vld [vmem:[%s940 + $0x2b0] sm:$0xff]
  %v1173 = vpack.c.bf16 %v1158, %v1157
  %v1174 = vpack.c.bf16 %v1160, %v1159
  %v1175 = vpack.c.bf16 %v1162, %v1161
  %v1176 = vpack.c.bf16 %v1164, %v1163
  %v1177 = vpack.c.bf16 %v1166, %v1165
  %v1178 = vpack.c.bf16 %v1168, %v1167
  %v1179 = vpack.c.bf16 %v1170, %v1169
  %v1180 = vpack.c.bf16 %v1172, %v1171
  %1189 = vrot.lane.b32.xlu0 %v1173, 96
  %v1190 = vpop.permute.xlu0 %1189
  %1191 = vrot.lane.b32.xlu0 %v1174, 96
  %v1192 = vpop.permute.xlu0 %1191
  %1193 = vrot.lane.b32.xlu0 %v1175, 96
  %v1194 = vpop.permute.xlu0 %1193
  %1195 = vrot.lane.b32.xlu0 %v1176, 96
  %v1196 = vpop.permute.xlu0 %1195
  %1197 = vrot.lane.b32.xlu0 %v1177, 96
  %v1198 = vpop.permute.xlu0 %1197
  %1199 = vrot.lane.b32.xlu0 %v1178, 96
  %v1200 = vpop.permute.xlu0 %1199
  %1201 = vrot.lane.b32.xlu0 %v1179, 96
  %v1202 = vpop.permute.xlu0 %1201
  %1203 = vrot.lane.b32.xlu0 %v1180, 96
  %v1204 = vpop.permute.xlu0 %1203
  %vm1213 = vcmask 1048320
  %1214 = vst.msk [vmem:[#allocation3] sm:$0xff] %vm1213, %v1190
  %1215 = vst.msk [vmem:[#allocation3 + $0x18] sm:$0xff] %vm1213, %v1192
  %1216 = vst.msk [vmem:[#allocation3 + $0x30] sm:$0xff] %vm1213, %v1194
  %1217 = vst.msk [vmem:[#allocation3 + $0x48] sm:$0xff] %vm1213, %v1196
  %1218 = vst.msk [vmem:[#allocation3 + $0x60] sm:$0xff] %vm1213, %v1198
  %1219 = vst.msk [vmem:[#allocation3 + $0x78] sm:$0xff] %vm1213, %v1200
  %1220 = vst.msk [vmem:[#allocation3 + $0x90] sm:$0xff] %vm1213, %v1202
  %1221 = vst.msk [vmem:[#allocation3 + $0xa8] sm:$0xff] %vm1213, %v1204
  %v1222 = vld [vmem:[%s949] sm:$0xff]
  %v1223 = vld [vmem:[%s949 + $0x10] sm:$0xff]
  %v1224 = vld [vmem:[%s949 + $0x20] sm:$0xff]
  %v1225 = vld [vmem:[%s949 + $0x30] sm:$0xff]
  %v1226 = vld [vmem:[%s949 + $0x40] sm:$0xff]
  %v1227 = vld [vmem:[%s949 + $0x50] sm:$0xff]
  %v1228 = vld [vmem:[%s949 + $0x60] sm:$0xff]
  %v1229 = vld [vmem:[%s949 + $0x70] sm:$0xff]
  %v1230 = vld [vmem:[%s949 + $0x240] sm:$0xff]
  %v1231 = vld [vmem:[%s949 + $0x250] sm:$0xff]
  %v1232 = vld [vmem:[%s949 + $0x260] sm:$0xff]
  %v1233 = vld [vmem:[%s949 + $0x270] sm:$0xff]
  %v1234 = vld [vmem:[%s949 + $0x280] sm:$0xff]
  %v1235 = vld [vmem:[%s949 + $0x290] sm:$0xff]
  %v1236 = vld [vmem:[%s949 + $0x2a0] sm:$0xff]
  %v1237 = vld [vmem:[%s949 + $0x2b0] sm:$0xff]
  %v1238 = vpack.c.bf16 %v1223, %v1222
  %v1239 = vpack.c.bf16 %v1225, %v1224
  %v1240 = vpack.c.bf16 %v1227, %v1226
  %v1241 = vpack.c.bf16 %v1229, %v1228
  %v1242 = vpack.c.bf16 %v1231, %v1230
  %v1243 = vpack.c.bf16 %v1233, %v1232
  %v1244 = vpack.c.bf16 %v1235, %v1234
  %v1245 = vpack.c.bf16 %v1237, %v1236
  %1246 = vst.msk [vmem:[#allocation3 + $0x8] sm:$0xff] %vm776, %v1238
  %1247 = vst.msk [vmem:[#allocation3 + $0x20] sm:$0xff] %vm776, %v1239
  %1248 = vst.msk [vmem:[#allocation3 + $0x38] sm:$0xff] %vm776, %v1240
  %1249 = vst.msk [vmem:[#allocation3 + $0x50] sm:$0xff] %vm776, %v1241
  %1250 = vst.msk [vmem:[#allocation3 + $0x68] sm:$0xff] %vm776, %v1242
  %1251 = vst.msk [vmem:[#allocation3 + $0x80] sm:$0xff] %vm776, %v1243
  %1252 = vst.msk [vmem:[#allocation3 + $0x98] sm:$0xff] %vm776, %v1244
  %1253 = vst.msk [vmem:[#allocation3 + $0xb0] sm:$0xff] %vm776, %v1245
  %v1254 = vld [vmem:[%s940 + $0x1] sm:$0xff]
  %v1255 = vld [vmem:[%s940 + $0x11] sm:$0xff]
  %v1256 = vld [vmem:[%s940 + $0x21] sm:$0xff]
  %v1257 = vld [vmem:[%s940 + $0x31] sm:$0xff]
  %v1258 = vld [vmem:[%s940 + $0x41] sm:$0xff]
  %v1259 = vld [vmem:[%s940 + $0x51] sm:$0xff]
  %v1260 = vld [vmem:[%s940 + $0x61] sm:$0xff]
  %v1261 = vld [vmem:[%s940 + $0x71] sm:$0xff]
  %v1262 = vld [vmem:[%s940 + $0x241] sm:$0xff]
  %v1263 = vld [vmem:[%s940 + $0x251] sm:$0xff]
  %v1264 = vld [vmem:[%s940 + $0x261] sm:$0xff]
  %v1265 = vld [vmem:[%s940 + $0x271] sm:$0xff]
  %v1266 = vld [vmem:[%s940 + $0x281] sm:$0xff]
  %v1267 = vld [vmem:[%s940 + $0x291] sm:$0xff]
  %v1268 = vld [vmem:[%s940 + $0x2a1] sm:$0xff]
  %v1269 = vld [vmem:[%s940 + $0x2b1] sm:$0xff]
  %v1270 = vpack.c.bf16 %v1255, %v1254
  %v1271 = vpack.c.bf16 %v1257, %v1256
  %v1272 = vpack.c.bf16 %v1259, %v1258
  %v1273 = vpack.c.bf16 %v1261, %v1260
  %v1274 = vpack.c.bf16 %v1263, %v1262
  %v1275 = vpack.c.bf16 %v1265, %v1264
  %v1276 = vpack.c.bf16 %v1267, %v1266
  %v1277 = vpack.c.bf16 %v1269, %v1268
  %1286 = vrot.lane.b32.xlu0 %v1270, 32
  %v1287 = vpop.permute.xlu0 %1286
  %1288 = vrot.lane.b32.xlu0 %v1271, 32
  %v1289 = vpop.permute.xlu0 %1288
  %1290 = vrot.lane.b32.xlu0 %v1272, 32
  %v1291 = vpop.permute.xlu0 %1290
  %1292 = vrot.lane.b32.xlu0 %v1273, 32
  %v1293 = vpop.permute.xlu0 %1292
  %1294 = vrot.lane.b32.xlu0 %v1274, 32
  %v1295 = vpop.permute.xlu0 %1294
  %1296 = vrot.lane.b32.xlu0 %v1275, 32
  %v1297 = vpop.permute.xlu0 %1296
  %1298 = vrot.lane.b32.xlu0 %v1276, 32
  %v1299 = vpop.permute.xlu0 %1298
  %1300 = vrot.lane.b32.xlu0 %v1277, 32
  %v1301 = vpop.permute.xlu0 %1300
  %1310 = vst.msk [vmem:[#allocation3 + $0x8] sm:$0xff] %vm1083, %v1287
  %1311 = vst.msk [vmem:[#allocation3 + $0x20] sm:$0xff] %vm1083, %v1289
  %1312 = vst.msk [vmem:[#allocation3 + $0x38] sm:$0xff] %vm1083, %v1291
  %1313 = vst.msk [vmem:[#allocation3 + $0x50] sm:$0xff] %vm1083, %v1293
  %1314 = vst.msk [vmem:[#allocation3 + $0x68] sm:$0xff] %vm1083, %v1295
  %1315 = vst.msk [vmem:[#allocation3 + $0x80] sm:$0xff] %vm1083, %v1297
  %1316 = vst.msk [vmem:[#allocation3 + $0x98] sm:$0xff] %vm1083, %v1299
  %1317 = vst.msk [vmem:[#allocation3 + $0xb0] sm:$0xff] %vm1083, %v1301
  %v1318 = vld [vmem:[%s922] sm:$0xff]
  %v1319 = vld [vmem:[%s922 + $0x10] sm:$0xff]
  %v1320 = vld [vmem:[%s922 + $0x20] sm:$0xff]
  %v1321 = vld [vmem:[%s922 + $0x30] sm:$0xff]
  %v1322 = vld [vmem:[%s922 + $0x40] sm:$0xff]
  %v1323 = vld [vmem:[%s922 + $0x50] sm:$0xff]
  %v1324 = vld [vmem:[%s922 + $0x60] sm:$0xff]
  %v1325 = vld [vmem:[%s922 + $0x70] sm:$0xff]
  %v1326 = vld [vmem:[%s922 + $0x240] sm:$0xff]
  %v1327 = vld [vmem:[%s922 + $0x250] sm:$0xff]
  %v1328 = vld [vmem:[%s922 + $0x260] sm:$0xff]
  %v1329 = vld [vmem:[%s922 + $0x270] sm:$0xff]
  %v1330 = vld [vmem:[%s922 + $0x280] sm:$0xff]
  %v1331 = vld [vmem:[%s922 + $0x290] sm:$0xff]
  %v1332 = vld [vmem:[%s922 + $0x2a0] sm:$0xff]
  %v1333 = vld [vmem:[%s922 + $0x2b0] sm:$0xff]
  %v1334 = vpack.c.bf16 %v1319, %v1318
  %v1335 = vpack.c.bf16 %v1321, %v1320
  %v1336 = vpack.c.bf16 %v1323, %v1322
  %v1337 = vpack.c.bf16 %v1325, %v1324
  %v1338 = vpack.c.bf16 %v1327, %v1326
  %v1339 = vpack.c.bf16 %v1329, %v1328
  %v1340 = vpack.c.bf16 %v1331, %v1330
  %v1341 = vpack.c.bf16 %v1333, %v1332
  %1350 = vrot.lane.b32.xlu0 %v1334, 64
  %v1351 = vpop.permute.xlu0 %1350
  %1352 = vrot.lane.b32.xlu0 %v1335, 64
  %v1353 = vpop.permute.xlu0 %1352
  %1354 = vrot.lane.b32.xlu0 %v1336, 64
  %v1355 = vpop.permute.xlu0 %1354
  %1356 = vrot.lane.b32.xlu0 %v1337, 64
  %v1357 = vpop.permute.xlu0 %1356
  %1358 = vrot.lane.b32.xlu0 %v1338, 64
  %v1359 = vpop.permute.xlu0 %1358
  %1360 = vrot.lane.b32.xlu0 %v1339, 64
  %v1361 = vpop.permute.xlu0 %1360
  %1362 = vrot.lane.b32.xlu0 %v1340, 64
  %v1363 = vpop.permute.xlu0 %1362
  %1364 = vrot.lane.b32.xlu0 %v1341, 64
  %v1365 = vpop.permute.xlu0 %1364
  %1374 = vst.msk [vmem:[#allocation3 + $0x8] sm:$0xff] %vm1148, %v1351
  %1375 = vst.msk [vmem:[#allocation3 + $0x20] sm:$0xff] %vm1148, %v1353
  %1376 = vst.msk [vmem:[#allocation3 + $0x38] sm:$0xff] %vm1148, %v1355
  %1377 = vst.msk [vmem:[#allocation3 + $0x50] sm:$0xff] %vm1148, %v1357
  %1378 = vst.msk [vmem:[#allocation3 + $0x68] sm:$0xff] %vm1148, %v1359
  %1379 = vst.msk [vmem:[#allocation3 + $0x80] sm:$0xff] %vm1148, %v1361
  %1380 = vst.msk [vmem:[#allocation3 + $0x98] sm:$0xff] %vm1148, %v1363
  %1381 = vst.msk [vmem:[#allocation3 + $0xb0] sm:$0xff] %vm1148, %v1365
  %v1382 = vld [vmem:[%s931] sm:$0xff]
  %v1383 = vld [vmem:[%s931 + $0x10] sm:$0xff]
  %v1384 = vld [vmem:[%s931 + $0x20] sm:$0xff]
  %v1385 = vld [vmem:[%s931 + $0x30] sm:$0xff]
  %v1386 = vld [vmem:[%s931 + $0x40] sm:$0xff]
  %v1387 = vld [vmem:[%s931 + $0x50] sm:$0xff]
  %v1388 = vld [vmem:[%s931 + $0x60] sm:$0xff]
  %v1389 = vld [vmem:[%s931 + $0x70] sm:$0xff]
  %v1390 = vld [vmem:[%s931 + $0x240] sm:$0xff]
  %v1391 = vld [vmem:[%s931 + $0x250] sm:$0xff]
  %v1392 = vld [vmem:[%s931 + $0x260] sm:$0xff]
  %v1393 = vld [vmem:[%s931 + $0x270] sm:$0xff]
  %v1394 = vld [vmem:[%s931 + $0x280] sm:$0xff]
  %v1395 = vld [vmem:[%s931 + $0x290] sm:$0xff]
  %v1396 = vld [vmem:[%s931 + $0x2a0] sm:$0xff]
  %v1397 = vld [vmem:[%s931 + $0x2b0] sm:$0xff]
  %v1398 = vpack.c.bf16 %v1383, %v1382
  %v1399 = vpack.c.bf16 %v1385, %v1384
  %v1400 = vpack.c.bf16 %v1387, %v1386
  %v1401 = vpack.c.bf16 %v1389, %v1388
  %v1402 = vpack.c.bf16 %v1391, %v1390
  %v1403 = vpack.c.bf16 %v1393, %v1392
  %v1404 = vpack.c.bf16 %v1395, %v1394
  %v1405 = vpack.c.bf16 %v1397, %v1396
  %1414 = vrot.lane.b32.xlu0 %v1398, 96
  %v1415 = vpop.permute.xlu0 %1414
  %1416 = vrot.lane.b32.xlu0 %v1399, 96
  %v1417 = vpop.permute.xlu0 %1416
  %1418 = vrot.lane.b32.xlu0 %v1400, 96
  %v1419 = vpop.permute.xlu0 %1418
  %1420 = vrot.lane.b32.xlu0 %v1401, 96
  %v1421 = vpop.permute.xlu0 %1420
  %1422 = vrot.lane.b32.xlu0 %v1402, 96
  %v1423 = vpop.permute.xlu0 %1422
  %1424 = vrot.lane.b32.xlu0 %v1403, 96
  %v1425 = vpop.permute.xlu0 %1424
  %1426 = vrot.lane.b32.xlu0 %v1404, 96
  %v1427 = vpop.permute.xlu0 %1426
  %1428 = vrot.lane.b32.xlu0 %v1405, 96
  %v1429 = vpop.permute.xlu0 %1428
  %1438 = vst.msk [vmem:[#allocation3 + $0x8] sm:$0xff] %vm1213, %v1415
  %1439 = vst.msk [vmem:[#allocation3 + $0x20] sm:$0xff] %vm1213, %v1417
  %1440 = vst.msk [vmem:[#allocation3 + $0x38] sm:$0xff] %vm1213, %v1419
  %1441 = vst.msk [vmem:[#allocation3 + $0x50] sm:$0xff] %vm1213, %v1421
  %1442 = vst.msk [vmem:[#allocation3 + $0x68] sm:$0xff] %vm1213, %v1423
  %1443 = vst.msk [vmem:[#allocation3 + $0x80] sm:$0xff] %vm1213, %v1425
  %1444 = vst.msk [vmem:[#allocation3 + $0x98] sm:$0xff] %vm1213, %v1427
  %1445 = vst.msk [vmem:[#allocation3 + $0xb0] sm:$0xff] %vm1213, %v1429
  %v1446 = vld [vmem:[%s922 + $0x1] sm:$0xff]
  %v1447 = vld [vmem:[%s922 + $0x11] sm:$0xff]
  %v1448 = vld [vmem:[%s922 + $0x21] sm:$0xff]
  %v1449 = vld [vmem:[%s922 + $0x31] sm:$0xff]
  %v1450 = vld [vmem:[%s922 + $0x41] sm:$0xff]
  %v1451 = vld [vmem:[%s922 + $0x51] sm:$0xff]
  %v1452 = vld [vmem:[%s922 + $0x61] sm:$0xff]
  %v1453 = vld [vmem:[%s922 + $0x71] sm:$0xff]
  %v1454 = vld [vmem:[%s922 + $0x241] sm:$0xff]
  %v1455 = vld [vmem:[%s922 + $0x251] sm:$0xff]
  %v1456 = vld [vmem:[%s922 + $0x261] sm:$0xff]
  %v1457 = vld [vmem:[%s922 + $0x271] sm:$0xff]
  %v1458 = vld [vmem:[%s922 + $0x281] sm:$0xff]
  %v1459 = vld [vmem:[%s922 + $0x291] sm:$0xff]
  %v1460 = vld [vmem:[%s922 + $0x2a1] sm:$0xff]
  %v1461 = vld [vmem:[%s922 + $0x2b1] sm:$0xff]
  %v1462 = vpack.c.bf16 %v1447, %v1446
  %v1463 = vpack.c.bf16 %v1449, %v1448
  %v1464 = vpack.c.bf16 %v1451, %v1450
  %v1465 = vpack.c.bf16 %v1453, %v1452
  %v1466 = vpack.c.bf16 %v1455, %v1454
  %v1467 = vpack.c.bf16 %v1457, %v1456
  %v1468 = vpack.c.bf16 %v1459, %v1458
  %v1469 = vpack.c.bf16 %v1461, %v1460
  %1470 = vst.msk [vmem:[#allocation3 + $0x10] sm:$0xff] %vm776, %v1462
  %1471 = vst.msk [vmem:[#allocation3 + $0x28] sm:$0xff] %vm776, %v1463
  %1472 = vst.msk [vmem:[#allocation3 + $0x40] sm:$0xff] %vm776, %v1464
  %1473 = vst.msk [vmem:[#allocation3 + $0x58] sm:$0xff] %vm776, %v1465
  %1474 = vst.msk [vmem:[#allocation3 + $0x70] sm:$0xff] %vm776, %v1466
  %1475 = vst.msk [vmem:[#allocation3 + $0x88] sm:$0xff] %vm776, %v1467
  %1476 = vst.msk [vmem:[#allocation3 + $0xa0] sm:$0xff] %vm776, %v1468
  %1477 = vst.msk [vmem:[#allocation3 + $0xb8] sm:$0xff] %vm776, %v1469
  %v1478 = vld [vmem:[#allocation3] sm:$0xff]
  %v1479 = vld [vmem:[#allocation3 + $0x8] sm:$0xff]
  %v1480 = vld [vmem:[#allocation3 + $0x10] sm:$0xff]
  %v1481 = vld [vmem:[#allocation3 + $0x18] sm:$0xff]
  %v1482 = vld [vmem:[#allocation3 + $0x20] sm:$0xff]
  %v1483 = vld [vmem:[#allocation3 + $0x28] sm:$0xff]
  %v1484 = vld [vmem:[#allocation3 + $0x30] sm:$0xff]
  %v1485 = vld [vmem:[#allocation3 + $0x38] sm:$0xff]
  %v1486 = vld [vmem:[#allocation3 + $0x40] sm:$0xff]
  %v1487 = vld [vmem:[#allocation3 + $0x48] sm:$0xff]
  %v1488 = vld [vmem:[#allocation3 + $0x50] sm:$0xff]
  %v1489 = vld [vmem:[#allocation3 + $0x58] sm:$0xff]
  %v1490 = vld [vmem:[#allocation3 + $0x60] sm:$0xff]
  %v1491 = vld [vmem:[#allocation3 + $0x68] sm:$0xff]
  %v1492 = vld [vmem:[#allocation3 + $0x70] sm:$0xff]
  %v1493 = vld [vmem:[#allocation3 + $0x78] sm:$0xff]
  %v1494 = vld [vmem:[#allocation3 + $0x80] sm:$0xff]
  %v1495 = vld [vmem:[#allocation3 + $0x88] sm:$0xff]
  %v1496 = vld [vmem:[#allocation3 + $0x90] sm:$0xff]
  %v1497 = vld [vmem:[#allocation3 + $0x98] sm:$0xff]
  %v1498 = vld [vmem:[#allocation3 + $0xa0] sm:$0xff]
  %v1499 = vld [vmem:[#allocation3 + $0xa8] sm:$0xff]
  %v1500 = vld [vmem:[#allocation3 + $0xb0] sm:$0xff]
  %v1501 = vld [vmem:[#allocation3 + $0xb8] sm:$0xff]
  %v1502 = vld [vmem:[%s3] sm:$0xf]
  %v1503 = vld [vmem:[%s3 + $0x4] sm:$0xf]
  %v1504 = vld [vmem:[%s3 + $0x8] sm:$0xf]
  %v1505 = vld [vmem:[%s3 + $0xc] sm:$0xf]
  %v1506 = vld [vmem:[%s3 + $0x10] sm:$0xf]
  %v1507 = vld [vmem:[%s3 + $0x14] sm:$0xf]
  %v1508 = vld [vmem:[%s3 + $0x18] sm:$0xf]
  %v1509 = vld [vmem:[%s3 + $0x1c] sm:$0xf]
  %v1510 = vld [vmem:[%s3 + $0x20] sm:$0xf]
  %v1511 = vld [vmem:[%s3 + $0x24] sm:$0xf]
  %v1512 = vld [vmem:[%s3 + $0x28] sm:$0xf]
  %v1513 = vld [vmem:[%s3 + $0x2c] sm:$0xf]
  %v1514 = vld [vmem:[%s3 + $0x30] sm:$0xf]
  %v1515 = vld [vmem:[%s3 + $0x34] sm:$0xf]
  %v1516 = vld [vmem:[%s3 + $0x38] sm:$0xf]
  %v1517 = vld [vmem:[%s3 + $0x3c] sm:$0xf]
  %v1518 = vld [vmem:[%s3 + $0x40] sm:$0xf]
  %v1519 = vld [vmem:[%s3 + $0x44] sm:$0xf]
  %v1520 = vld [vmem:[%s3 + $0x48] sm:$0xf]
  %v1521 = vld [vmem:[%s3 + $0x4c] sm:$0xf]
  %v1522 = vld [vmem:[%s3 + $0x50] sm:$0xf]
  %v1523 = vld [vmem:[%s3 + $0x54] sm:$0xf]
  %v1524 = vld [vmem:[%s3 + $0x58] sm:$0xf]
  %v1525 = vld [vmem:[%s3 + $0x5c] sm:$0xf]
  %v1526 = vld [vmem:[%s3 + $0x60] sm:$0xf]
  %v1527 = vld [vmem:[%s3 + $0x64] sm:$0xf]
  %v1528 = vld [vmem:[%s3 + $0x68] sm:$0xf]
  %v1529 = vld [vmem:[%s3 + $0x6c] sm:$0xf]
  %v1530 = vld [vmem:[%s3 + $0x70] sm:$0xf]
  %v1531 = vld [vmem:[%s3 + $0x74] sm:$0xf]
  %v1532 = vld [vmem:[%s3 + $0x78] sm:$0xf]
  %v1533 = vld [vmem:[%s3 + $0x7c] sm:$0xf]
  %v1534 = vld [vmem:[%s3 + $0x80] sm:$0xf]
  %v1535 = vld [vmem:[%s3 + $0x84] sm:$0xf]
  %v1536 = vld [vmem:[%s3 + $0x88] sm:$0xf]
  %v1537 = vld [vmem:[%s3 + $0x8c] sm:$0xf]
  %v1538 = vld [vmem:[%s4] sm:$0x1]
  %v1540 = vlaneseq
  %v1541 = vshrl.u32 %v1540, 7
  %v1542 = vsub.s32 0, %v1541
  %v1543 = vrot.slane %v1538, %v1542
  %v1581 = vunpack.c.l.b16 %v1502
  %v1582 = vunpack.c.l.b16 %v1503
  %v1583 = vunpack.c.l.b16 %v1504
  %v1584 = vunpack.c.l.b16 %v1505
  %v1585 = vunpack.c.l.b16 %v1506
  %v1586 = vunpack.c.l.b16 %v1507
  %v1587 = vunpack.c.l.b16 %v1508
  %v1588 = vunpack.c.l.b16 %v1509
  %v1589 = vunpack.c.l.b16 %v1510
  %v1590 = vunpack.c.l.b16 %v1511
  %v1591 = vunpack.c.l.b16 %v1512
  %v1592 = vunpack.c.l.b16 %v1513
  %v1593 = vunpack.c.l.b16 %v1514
  %v1594 = vunpack.c.l.b16 %v1515
  %v1595 = vunpack.c.l.b16 %v1516
  %v1596 = vunpack.c.l.b16 %v1517
  %v1597 = vunpack.c.l.b16 %v1518
  %v1598 = vunpack.c.l.b16 %v1519
  %v1599 = vunpack.c.l.b16 %v1520
  %v1600 = vunpack.c.l.b16 %v1521
  %v1601 = vunpack.c.l.b16 %v1522
  %v1602 = vunpack.c.l.b16 %v1523
  %v1603 = vunpack.c.l.b16 %v1524
  %v1604 = vunpack.c.l.b16 %v1525
  %v1605 = vunpack.c.l.b16 %v1526
  %v1606 = vunpack.c.l.b16 %v1527
  %v1607 = vunpack.c.l.b16 %v1528
  %v1608 = vunpack.c.l.b16 %v1529
  %v1609 = vunpack.c.l.b16 %v1530
  %v1610 = vunpack.c.l.b16 %v1531
  %v1611 = vunpack.c.l.b16 %v1532
  %v1612 = vunpack.c.l.b16 %v1533
  %v1613 = vunpack.c.l.b16 %v1534
  %v1614 = vunpack.c.l.b16 %v1535
  %v1615 = vunpack.c.l.b16 %v1536
  %v1616 = vunpack.c.l.b16 %v1537
  %v1617 = vpack.c.b16 %v1582, %v1581
  %v1618 = vpack.c.b16 %v1584, %v1583
  %v1619 = vpack.c.b16 %v1586, %v1585
  %v1620 = vpack.c.b16 %v1588, %v1587
  %v1621 = vpack.c.b16 %v1590, %v1589
  %v1622 = vpack.c.b16 %v1592, %v1591
  %v1623 = vpack.c.b16 %v1594, %v1593
  %v1624 = vpack.c.b16 %v1596, %v1595
  %v1625 = vpack.c.b16 %v1598, %v1597
  %v1626 = vpack.c.b16 %v1600, %v1599
  %v1627 = vpack.c.b16 %v1602, %v1601
  %v1628 = vpack.c.b16 %v1604, %v1603
  %v1629 = vpack.c.b16 %v1606, %v1605
  %v1630 = vpack.c.b16 %v1608, %v1607
  %v1631 = vpack.c.b16 %v1610, %v1609
  %v1632 = vpack.c.b16 %v1612, %v1611
  %v1633 = vpack.c.b16 %v1614, %v1613
  %v1634 = vpack.c.b16 %v1616, %v1615
  %v1654 = vsel %vm776, %v1480, 0
  %v1657 = vsel %vm776, %v1483, 0
  %v1660 = vsel %vm776, %v1486, 0
  %v1663 = vsel %vm776, %v1489, 0
  %v1666 = vsel %vm776, %v1492, 0
  %v1669 = vsel %vm776, %v1495, 0
  %v1672 = vsel %vm776, %v1498, 0
  %v1675 = vsel %vm776, %v1501, 0
  %1677 = vmatprep.subr.bf16.mxu0 0
  %1678 = vmatpush1.bf16.msra.mxu0 %v1617
  %1679 = vmatprep.subr.bf16.mxu0 0
  %1680 = vmatpush1.bf16.msra.mxu0 %v1618
  %1681 = vmatprep.subr.bf16.mxu0 0
  %1682 = vmatpush1.bf16.msra.mxu0 %v1619
  %1683 = vmatprep.subr.bf16.mxu0 0
  %1684 = vmatpush1.bf16.msra.mxu0 %v1620
  %1685 = vmatprep.subr.bf16.mxu0 0
  %1686 = vmatpush1.bf16.msra.mxu0 %v1621
  %1687 = vmatprep.subr.bf16.mxu0 0
  %1688 = vmatpush1.bf16.msra.mxu0 %v1622
  %1689 = vmatprep.subr.bf16.mxu0 0
  %1690 = vmatpush1.bf16.msra.mxu0 %v1623
  %1691 = vmatprep.subr.bf16.mxu0 0
  %1692 = vmatpush1.bf16.msra.mxu0 %v1624
  %1693 = vmatprep.subr.bf16.mxu0 0
  %1694 = vmatpush1.bf16.msra.mxu0 %v1625
  %1695 = vmatprep.subr.bf16.mxu0 0
  %1696 = vmatpush1.bf16.msra.mxu0 %v1626
  %1697 = vmatprep.subr.bf16.mxu0 0
  %1698 = vmatpush1.bf16.msra.mxu0 %v1627
  %1699 = vmatprep.subr.bf16.mxu0 0
  %1700 = vmatpush1.bf16.msra.mxu0 %v1628
  %1701 = vmatprep.subr.bf16.mxu0 0
  %1702 = vmatpush1.bf16.msra.mxu0 %v1629
  %1703 = vmatprep.subr.bf16.mxu0 0
  %1704 = vmatpush1.bf16.msra.mxu0 %v1630
  %1705 = vmatprep.subr.bf16.mxu0 0
  %1706 = vmatpush1.bf16.msra.mxu0 %v1631
  %1707 = vmatprep.subr.bf16.mxu0 0
  %1708 = vmatpush1.bf16.msra.mxu0 %v1632
  %1709 = vmatprep.mubr.bf16.mxu0 %v1479
  %1710 = vmatmul.mubr.bf16.gmra.mrb[0].mxu0 %v1478
  %v1711 = vpop.f32.mrb[0].mxu0
  %v1712 = vadd.f32 %v1543, %v1711
  %v1713 = vpop.f32.mrb[0].mxu0
  %v1714 = vpop.f32.mrb[0].mxu0
  %v1715 = vadd.f32 %v1543, %v1714
  %v1716 = vpop.f32.mrb[0].mxu0
  %1717 = vmatprep.mubr.bf16.mxu0 %v1482
  %1718 = vmatmul.mubr.bf16.gmra.mrb[0].mxu0 %v1481
  %v1719 = vpop.f32.mrb[0].mxu0
  %v1720 = vadd.f32 %v1543, %v1719
  %v1721 = vpop.f32.mrb[0].mxu0
  %v1722 = vpop.f32.mrb[0].mxu0
  %v1723 = vadd.f32 %v1543, %v1722
  %v1724 = vpop.f32.mrb[0].mxu0
  %1725 = vmatprep.mubr.bf16.mxu0 %v1485
  %1726 = vmatmul.mubr.bf16.gmra.mrb[0].mxu0 %v1484
  %v1727 = vpop.f32.mrb[0].mxu0
  %v1728 = vadd.f32 %v1543, %v1727
  %v1729 = vpop.f32.mrb[0].mxu0
  %v1730 = vpop.f32.mrb[0].mxu0
  %v1731 = vadd.f32 %v1543, %v1730
  %v1732 = vpop.f32.mrb[0].mxu0
  %1733 = vmatprep.mubr.bf16.mxu0 %v1488
  %1734 = vmatmul.mubr.bf16.gmra.mrb[0].mxu0 %v1487
  %v1735 = vpop.f32.mrb[0].mxu0
  %v1736 = vadd.f32 %v1543, %v1735
  %v1737 = vpop.f32.mrb[0].mxu0
  %v1738 = vpop.f32.mrb[0].mxu0
  %v1739 = vadd.f32 %v1543, %v1738
  %v1740 = vpop.f32.mrb[0].mxu0
  %1741 = vmatprep.mubr.bf16.mxu0 %v1491
  %1742 = vmatmul.mubr.bf16.gmra.mrb[0].mxu0 %v1490
  %v1743 = vpop.f32.mrb[0].mxu0
  %v1744 = vadd.f32 %v1543, %v1743
  %v1745 = vpop.f32.mrb[0].mxu0
  %v1746 = vpop.f32.mrb[0].mxu0
  %v1747 = vadd.f32 %v1543, %v1746
  %v1748 = vpop.f32.mrb[0].mxu0
  %1749 = vmatprep.mubr.bf16.mxu0 %v1494
  %1750 = vmatmul.mubr.bf16.gmra.mrb[0].mxu0 %v1493
  %v1751 = vpop.f32.mrb[0].mxu0
  %v1752 = vadd.f32 %v1543, %v1751
  %v1753 = vpop.f32.mrb[0].mxu0
  %v1754 = vpop.f32.mrb[0].mxu0
  %v1755 = vadd.f32 %v1543, %v1754
  %v1756 = vpop.f32.mrb[0].mxu0
  %1757 = vmatprep.mubr.bf16.mxu0 %v1497
  %1758 = vmatmul.mubr.bf16.gmra.mrb[0].mxu0 %v1496
  %v1759 = vpop.f32.mrb[0].mxu0
  %v1760 = vadd.f32 %v1543, %v1759
  %v1761 = vpop.f32.mrb[0].mxu0
  %v1762 = vpop.f32.mrb[0].mxu0
  %v1763 = vadd.f32 %v1543, %v1762
  %v1764 = vpop.f32.mrb[0].mxu0
  %1765 = vmatprep.mubr.bf16.mxu0 %v1500
  %1766 = vmatmul.mubr.bf16.gmra.mrb[0].mxu0 %v1499
  %v1767 = vpop.f32.mrb[0].mxu0
  %v1768 = vadd.f32 %v1543, %v1767
  %v1769 = vpop.f32.mrb[0].mxu0
  %v1770 = vpop.f32.mrb[0].mxu0
  %v1771 = vadd.f32 %v1543, %v1770
  %v1772 = vpop.f32.mrb[0].mxu0
  %1773 = vdwg.mxu0
  %1774 = vmatprep.subr.bf16.mxu0 0
  %1775 = vmatpush1.bf16.msra.mxu0 %v1633
  %1776 = vmatprep.subr.bf16.mxu0 0
  %1777 = vmatpush1.bf16.msra.mxu0 %v1634
  %1778 = vmatprep.subr.bf16.mxu0 0
  %1779 = vmatpush1.bf16.msra.mxu0 0
  %1780 = vmatprep.subr.bf16.mxu0 0
  %1781 = vmatpush1.bf16.msra.mxu0 0
  %1782 = vmatprep.subr.bf16.mxu0 0
  %1783 = vmatpush1.bf16.msra.mxu0 0
  %1784 = vmatprep.subr.bf16.mxu0 0
  %1785 = vmatpush1.bf16.msra.mxu0 0
  %1786 = vmatprep.subr.bf16.mxu0 0
  %1787 = vmatpush1.bf16.msra.mxu0 0
  %1788 = vmatprep.subr.bf16.mxu0 0
  %1789 = vmatpush1.bf16.msra.mxu0 0
  %1790 = vmatprep.subr.bf16.mxu0 0
  %1791 = vmatpush1.bf16.msra.mxu0 0
  %1792 = vmatprep.subr.bf16.mxu0 0
  %1793 = vmatpush1.bf16.msra.mxu0 0
  %1794 = vmatprep.subr.bf16.mxu0 0
  %1795 = vmatpush1.bf16.msra.mxu0 0
  %1796 = vmatprep.subr.bf16.mxu0 0
  %1797 = vmatpush1.bf16.msra.mxu0 0
  %1798 = vmatprep.subr.bf16.mxu0 0
  %1799 = vmatpush1.bf16.msra.mxu0 0
  %1800 = vmatprep.subr.bf16.mxu0 0
  %1801 = vmatpush1.bf16.msra.mxu0 0
  %1802 = vmatprep.subr.bf16.mxu0 0
  %1803 = vmatpush1.bf16.msra.mxu0 0
  %1804 = vmatprep.subr.bf16.mxu0 0
  %1805 = vmatpush1.bf16.msra.mxu0 0
  %1806 = vmatprep.mubr.bf16.mxu0 0
  %1807 = vmatmul.mubr.bf16.gmra.mrb[0].mxu0 %v1654
  %v1808 = vpop.f32.mrb[0].mxu0
  %v1809 = vadd.f32 %v1712, %v1808
  %v1810 = vpop.f32.mrb[0].mxu0
  %v1811 = vpop.f32.mrb[0].mxu0
  %v1812 = vadd.f32 %v1715, %v1811
  %v1813 = vpop.f32.mrb[0].mxu0
  %1814 = vmatprep.mubr.bf16.mxu0 0
  %1815 = vmatmul.mubr.bf16.gmra.mrb[0].mxu0 %v1657
  %v1816 = vpop.f32.mrb[0].mxu0
  %v1817 = vadd.f32 %v1720, %v1816
  %v1818 = vpop.f32.mrb[0].mxu0
  %v1819 = vpop.f32.mrb[0].mxu0
  %v1820 = vadd.f32 %v1723, %v1819
  %v1821 = vpop.f32.mrb[0].mxu0
  %1822 = vmatprep.mubr.bf16.mxu0 0
  %1823 = vmatmul.mubr.bf16.gmra.mrb[0].mxu0 %v1660
  %v1824 = vpop.f32.mrb[0].mxu0
  %v1825 = vadd.f32 %v1728, %v1824
  %v1826 = vpop.f32.mrb[0].mxu0
  %v1827 = vpop.f32.mrb[0].mxu0
  %v1828 = vadd.f32 %v1731, %v1827
  %v1829 = vpop.f32.mrb[0].mxu0
  %1830 = vmatprep.mubr.bf16.mxu0 0
  %1831 = vmatmul.mubr.bf16.gmra.mrb[0].mxu0 %v1663
  %v1832 = vpop.f32.mrb[0].mxu0
  %v1833 = vadd.f32 %v1736, %v1832
  %v1834 = vpop.f32.mrb[0].mxu0
  %v1835 = vpop.f32.mrb[0].mxu0
  %v1836 = vadd.f32 %v1739, %v1835
  %v1837 = vpop.f32.mrb[0].mxu0
  %1838 = vmatprep.mubr.bf16.mxu0 0
  %1839 = vmatmul.mubr.bf16.gmra.mrb[0].mxu0 %v1666
  %v1840 = vpop.f32.mrb[0].mxu0
  %v1841 = vadd.f32 %v1744, %v1840
  %v1842 = vpop.f32.mrb[0].mxu0
  %v1843 = vpop.f32.mrb[0].mxu0
  %v1844 = vadd.f32 %v1747, %v1843
  %v1845 = vpop.f32.mrb[0].mxu0
  %1846 = vmatprep.mubr.bf16.mxu0 0
  %1847 = vmatmul.mubr.bf16.gmra.mrb[0].mxu0 %v1669
  %v1848 = vpop.f32.mrb[0].mxu0
  %v1849 = vadd.f32 %v1752, %v1848
  %v1850 = vpop.f32.mrb[0].mxu0
  %v1851 = vpop.f32.mrb[0].mxu0
  %v1852 = vadd.f32 %v1755, %v1851
  %v1853 = vpop.f32.mrb[0].mxu0
  %1854 = vmatprep.mubr.bf16.mxu0 0
  %1855 = vmatmul.mubr.bf16.gmra.mrb[0].mxu0 %v1672
  %v1856 = vpop.f32.mrb[0].mxu0
  %v1857 = vadd.f32 %v1760, %v1856
  %v1858 = vpop.f32.mrb[0].mxu0
  %v1859 = vpop.f32.mrb[0].mxu0
  %v1860 = vadd.f32 %v1763, %v1859
  %v1861 = vpop.f32.mrb[0].mxu0
  %1862 = vmatprep.mubr.bf16.mxu0 0
  %1863 = vmatmul.mubr.bf16.gmra.mrb[0].mxu0 %v1675
  %v1864 = vpop.f32.mrb[0].mxu0
  %v1865 = vadd.f32 %v1768, %v1864
  %v1866 = vpop.f32.mrb[0].mxu0
  %v1867 = vpop.f32.mrb[0].mxu0
  %v1868 = vadd.f32 %v1771, %v1867
  %v1869 = vpop.f32.mrb[0].mxu0
  %1870 = vdwg.mxu0
  %v1871 = vmax.f32 %v1809, 0.0
  %v1872 = vmax.f32 %v1812, 0.0
  %v1873 = vmax.f32 %v1817, 0.0
  %v1874 = vmax.f32 %v1820, 0.0
  %v1875 = vmax.f32 %v1825, 0.0
  %v1876 = vmax.f32 %v1828, 0.0
  %v1877 = vmax.f32 %v1833, 0.0
  %v1878 = vmax.f32 %v1836, 0.0
  %v1879 = vmax.f32 %v1841, 0.0
  %v1880 = vmax.f32 %v1844, 0.0
  %v1881 = vmax.f32 %v1849, 0.0
  %v1882 = vmax.f32 %v1852, 0.0
  %v1883 = vmax.f32 %v1857, 0.0
  %v1884 = vmax.f32 %v1860, 0.0
  %v1885 = vmax.f32 %v1865, 0.0
  %v1886 = vmax.f32 %v1868, 0.0
  %vm1887 = vcmask 523264
  %v1888 = vsel %vm1887, %v1871, 0.0
  %v1889 = vsel %vm1887, %v1872, 0.0
  %v1890 = vadd.f32 %v1888, %v1889
  %v1891 = vsel %vm1887, %v1873, 0.0
  %v1892 = vadd.f32 %v1890, %v1891
  %v1893 = vsel %vm1887, %v1874, 0.0
  %v1894 = vadd.f32 %v1892, %v1893
  %v1895 = vsel %vm1887, %v1875, 0.0
  %v1896 = vadd.f32 %v1894, %v1895
  %v1897 = vsel %vm1887, %v1876, 0.0
  %v1898 = vadd.f32 %v1896, %v1897
  %v1899 = vsel %vm1887, %v1877, 0.0
  %v1900 = vadd.f32 %v1898, %v1899
  %v1901 = vsel %vm1887, %v1878, 0.0
  %v1902 = vadd.f32 %v1900, %v1901
  %v1903 = vrot.slane %v1902, 4
  %v1904 = vadd.f32 %v1902, %v1903
  %v1905 = vrot.slane %v1904, 2
  %v1906 = vadd.f32 %v1904, %v1905
  %v1907 = vrot.slane %v1906, 1
  %v1908 = vadd.f32 %v1906, %v1907
  %v1909 = vsel %vm1887, %v1879, 0.0
  %v1910 = vsel %vm1887, %v1880, 0.0
  %v1911 = vadd.f32 %v1909, %v1910
  %v1912 = vsel %vm1887, %v1881, 0.0
  %v1913 = vadd.f32 %v1911, %v1912
  %v1914 = vsel %vm1887, %v1882, 0.0
  %v1915 = vadd.f32 %v1913, %v1914
  %v1916 = vsel %vm1887, %v1883, 0.0
  %v1917 = vadd.f32 %v1915, %v1916
  %v1918 = vsel %vm1887, %v1884, 0.0
  %v1919 = vadd.f32 %v1917, %v1918
  %v1920 = vsel %vm1887, %v1885, 0.0
  %v1921 = vadd.f32 %v1919, %v1920
  %v1922 = vsel %vm1887, %v1886, 0.0
  %v1923 = vadd.f32 %v1921, %v1922
  %v1924 = vrot.slane %v1923, 4
  %v1925 = vadd.f32 %v1923, %v1924
  %v1926 = vrot.slane %v1925, 2
  %v1927 = vadd.f32 %v1925, %v1926
  %v1928 = vrot.slane %v1927, 1
  %v1929 = vadd.f32 %v1927, %v1928
  %v1930 = vrcp.pop 64.0
  %v1931 = vmul.f32 %v1908, %v1930
  %v1932 = vmul.f32 %v1929, %v1930
  %vm1933 = vcmask 520192
  %1934 = vst.msk [vmem:[#allocation4] sm:$0x1f] %vm1933, 0.0
  %1935 = vst.msk [vmem:[#allocation4 + $0x8] sm:$0x1f] %vm1933, 0.0
  %1936 = vst.msk [vmem:[#allocation4 + $0x10] sm:$0x1f] %vm1933, 0.0
  %1937 = vst.msk [vmem:[#allocation4 + $0x18] sm:$0x1f] %vm1933, 0.0
  %1938 = vst.msk [vmem:[#allocation4 + $0x20] sm:$0x1f] %vm1933, 0.0
  %1939 = vst.msk [vmem:[#allocation4 + $0x28] sm:$0x1f] %vm1933, 0.0
  %1940 = vst.msk [vmem:[#allocation4 + $0x30] sm:$0x1f] %vm1933, 0.0
  %1941 = vst.msk [vmem:[#allocation4 + $0x38] sm:$0x1f] %vm1933, 0.0
  %1942 = vst.msk [vmem:[#allocation4 + $0x40] sm:$0x1f] %vm1933, 0.0
  %1943 = vst.msk [vmem:[#allocation4 + $0x48] sm:$0x1f] %vm1933, 0.0
  %1944 = vst.msk [vmem:[#allocation4 + $0x50] sm:$0x1f] %vm1933, 0.0
  %1945 = vst.msk [vmem:[#allocation4 + $0x58] sm:$0x1f] %vm1933, 0.0
  %1946 = vst.msk [vmem:[#allocation4 + $0x60] sm:$0x1f] %vm1933, 0.0
  %1947 = vst.msk [vmem:[#allocation4 + $0x68] sm:$0x1f] %vm1933, 0.0
  %1948 = vst.msk [vmem:[#allocation4 + $0x70] sm:$0x1f] %vm1933, 0.0
  %1949 = vst.msk [vmem:[#allocation4 + $0x78] sm:$0x1f] %vm1933, 0.0
  %1950 = vst.msk [vmem:[#allocation4 + $0x80] sm:$0x1f] %vm1933, 0.0
  %1951 = vst.msk [vmem:[#allocation4 + $0x88] sm:$0x1f] %vm1933, 0.0
  %1952 = vst.msk [vmem:[#allocation4 + $0x90] sm:$0x1f] %vm1933, 0.0
  %1953 = vst.msk [vmem:[#allocation4 + $0x98] sm:$0x1f] %vm1933, 0.0
  %1954 = vst.msk [vmem:[#allocation4 + $0xa0] sm:$0x1f] %vm1933, 0.0
  %1955 = vst.msk [vmem:[#allocation4 + $0xa8] sm:$0x1f] %vm1933, 0.0
  %1956 = vst.msk [vmem:[#allocation4 + $0xb0] sm:$0x1f] %vm1933, 0.0
  %1957 = vst.msk [vmem:[#allocation4 + $0xb8] sm:$0x1f] %vm1933, 0.0
  %1958 = vst.msk [vmem:[#allocation4 + $0xc0] sm:$0x1f] %vm1933, 0.0
  %1959 = vst.msk [vmem:[#allocation4 + $0xc8] sm:$0x1f] %vm1933, 0.0
  %1960 = vst.msk [vmem:[#allocation4 + $0xd0] sm:$0x1f] %vm1933, 0.0
  %1961 = vst.msk [vmem:[#allocation4 + $0xd8] sm:$0x1f] %vm1933, 0.0
  %1962 = vst.msk [vmem:[#allocation4 + $0xe0] sm:$0x1f] %vm1933, 0.0
  %1963 = vst.msk [vmem:[#allocation4 + $0xe8] sm:$0x1f] %vm1933, 0.0
  %1964 = vst.msk [vmem:[#allocation4 + $0xf0] sm:$0x1f] %vm1933, 0.0
  %1965 = vst.msk [vmem:[#allocation4 + $0xf8] sm:$0x1f] %vm1933, 0.0
  %1966 = vst.msk [vmem:[#allocation4 + $0x100] sm:$0x1f] %vm1933, 0.0
  %1967 = vst.msk [vmem:[#allocation4 + $0x108] sm:$0x1f] %vm1933, 0.0
  %1968 = vst.msk [vmem:[#allocation4 + $0x110] sm:$0x1f] %vm1933, 0.0
  %1969 = vst.msk [vmem:[#allocation4 + $0x118] sm:$0x1f] %vm1933, 0.0
  %1970 = vst.msk [vmem:[#allocation4 + $0x120] sm:$0x1f] %vm1933, 0.0
  %1971 = vst.msk [vmem:[#allocation4 + $0x128] sm:$0x1f] %vm1933, 0.0
  %1972 = vst.msk [vmem:[#allocation4 + $0x130] sm:$0x1f] %vm1933, 0.0
  %1973 = vst.msk [vmem:[#allocation4 + $0x138] sm:$0x1f] %vm1933, 0.0
  %s1974 = scalar_lea.vmem [#allocation4], 120
  %vm1975 = vcmask 516096
  %1976 = vst.msk [vmem:[%s1974] sm:$0x1] %vm1975, %v1871
  %1977 = vst.msk [vmem:[%s1974 + $0xa0] sm:$0x1] %vm1975, %v1879
  %s1978 = scalar_lea.vmem [#allocation4], 80
  %vm1979 = vcmask 517121
  %1980 = vst.msk [vmem:[%s1978] sm:$0x2] %vm1979, %v1871
  %1981 = vst.msk [vmem:[%s1978 + $0xa0] sm:$0x2] %vm1979, %v1879
  %vm1982 = vcmask 518146
  %1983 = vst.msk [vmem:[%s1974 - $0x1] sm:$0x4] %vm1982, %v1871
  %1984 = vst.msk [vmem:[%s1974 + $0x9f] sm:$0x4] %vm1982, %v1879
  %vm1985 = vcmask 519171
  %1986 = vst.msk [vmem:[%s1978 - $0x1] sm:$0x8] %vm1985, %v1871
  %1987 = vst.msk [vmem:[%s1978 + $0x9f] sm:$0x8] %vm1985, %v1879
  %vm1988 = vcmask 520196
  %1989 = vst.msk [vmem:[%s1974 - $0x2] sm:$0x10] %vm1988, %v1871
  %1990 = vst.msk [vmem:[%s1974 + $0x9e] sm:$0x10] %vm1988, %v1879
  %vm1991 = vcmask 521221
  %1992 = vst.msk [vmem:[%s1978 - $0x2] sm:$0x20] %vm1991, %v1871
  %1993 = vst.msk [vmem:[%s1978 + $0x9e] sm:$0x20] %vm1991, %v1879
  %vm1994 = vcmask 522246
  %1995 = vst.msk [vmem:[%s1974 - $0x3] sm:$0x40] %vm1994, %v1871
  %1996 = vst.msk [vmem:[%s1974 + $0x9d] sm:$0x40] %vm1994, %v1879
  %vm1997 = vcmask 523271
  %1998 = vst.msk [vmem:[%s1978 - $0x3] sm:$0x80] %vm1997, %v1871
  %1999 = vst.msk [vmem:[%s1978 + $0x9d] sm:$0x80] %vm1997, %v1879
  %s2000 = scalar_lea.vmem [#allocation4], 48
  %2001 = vst.msk [vmem:[%s2000] sm:$0x1] %vm1975, %v1872
  %2002 = vst.msk [vmem:[%s2000 + $0xa0] sm:$0x1] %vm1975, %v1880
  %s2003 = scalar_lea.vmem [#allocation4], 8
  %2004 = vst.msk [vmem:[%s2003] sm:$0x2] %vm1979, %v1872
  %2005 = vst.msk [vmem:[%s2003 + $0xa0] sm:$0x2] %vm1979, %v1880
  %2006 = vst.msk [vmem:[%s2000 - $0x1] sm:$0x4] %vm1982, %v1872
  %2007 = vst.msk [vmem:[%s2000 + $0x9f] sm:$0x4] %vm1982, %v1880
  %2008 = vst.msk [vmem:[%s2003 - $0x1] sm:$0x8] %vm1985, %v1872
  %2009 = vst.msk [vmem:[%s2003 + $0x9f] sm:$0x8] %vm1985, %v1880
  %2010 = vst.msk [vmem:[%s2000 - $0x2] sm:$0x10] %vm1988, %v1872
  %2011 = vst.msk [vmem:[%s2000 + $0x9e] sm:$0x10] %vm1988, %v1880
  %2012 = vst.msk [vmem:[%s2003 - $0x2] sm:$0x20] %vm1991, %v1872
  %2013 = vst.msk [vmem:[%s2003 + $0x9e] sm:$0x20] %vm1991, %v1880
  %2014 = vst.msk [vmem:[%s2000 - $0x3] sm:$0x40] %vm1994, %v1872
  %2015 = vst.msk [vmem:[%s2000 + $0x9d] sm:$0x40] %vm1994, %v1880
  %2016 = vst.msk [vmem:[%s2003 - $0x3] sm:$0x80] %vm1997, %v1872
  %2017 = vst.msk [vmem:[%s2003 + $0x9d] sm:$0x80] %vm1997, %v1880
  %s2018 = scalar_lea.vmem [#allocation4], 128
  %2019 = vst.msk [vmem:[%s2018] sm:$0x1] %vm1975, %v1873
  %2020 = vst.msk [vmem:[%s2018 + $0xa0] sm:$0x1] %vm1975, %v1881
  %s2021 = scalar_lea.vmem [#allocation4], 88
  %2022 = vst.msk [vmem:[%s2021] sm:$0x2] %vm1979, %v1873
  %2023 = vst.msk [vmem:[%s2021 + $0xa0] sm:$0x2] %vm1979, %v1881
  %2024 = vst.msk [vmem:[%s2018 - $0x1] sm:$0x4] %vm1982, %v1873
  %2025 = vst.msk [vmem:[%s2018 + $0x9f] sm:$0x4] %vm1982, %v1881
  %2026 = vst.msk [vmem:[%s2021 - $0x1] sm:$0x8] %vm1985, %v1873
  %2027 = vst.msk [vmem:[%s2021 + $0x9f] sm:$0x8] %vm1985, %v1881
  %2028 = vst.msk [vmem:[%s2018 - $0x2] sm:$0x10] %vm1988, %v1873
  %2029 = vst.msk [vmem:[%s2018 + $0x9e] sm:$0x10] %vm1988, %v1881
  %2030 = vst.msk [vmem:[%s2021 - $0x2] sm:$0x20] %vm1991, %v1873
  %2031 = vst.msk [vmem:[%s2021 + $0x9e] sm:$0x20] %vm1991, %v1881
  %2032 = vst.msk [vmem:[%s2018 - $0x3] sm:$0x40] %vm1994, %v1873
  %2033 = vst.msk [vmem:[%s2018 + $0x9d] sm:$0x40] %vm1994, %v1881
  %2034 = vst.msk [vmem:[%s2021 - $0x3] sm:$0x80] %vm1997, %v1873
  %2035 = vst.msk [vmem:[%s2021 + $0x9d] sm:$0x80] %vm1997, %v1881
  %s2036 = scalar_lea.vmem [#allocation4], 56
  %2037 = vst.msk [vmem:[%s2036] sm:$0x1] %vm1975, %v1874
  %2038 = vst.msk [vmem:[%s2036 + $0xa0] sm:$0x1] %vm1975, %v1882
  %s2039 = scalar_lea.vmem [#allocation4], 16
  %2040 = vst.msk [vmem:[%s2039] sm:$0x2] %vm1979, %v1874
  %2041 = vst.msk [vmem:[%s2039 + $0xa0] sm:$0x2] %vm1979, %v1882
  %2042 = vst.msk [vmem:[%s2036 - $0x1] sm:$0x4] %vm1982, %v1874
  %2043 = vst.msk [vmem:[%s2036 + $0x9f] sm:$0x4] %vm1982, %v1882
  %2044 = vst.msk [vmem:[%s2039 - $0x1] sm:$0x8] %vm1985, %v1874
  %2045 = vst.msk [vmem:[%s2039 + $0x9f] sm:$0x8] %vm1985, %v1882
  %2046 = vst.msk [vmem:[%s2036 - $0x2] sm:$0x10] %vm1988, %v1874
  %2047 = vst.msk [vmem:[%s2036 + $0x9e] sm:$0x10] %vm1988, %v1882
  %2048 = vst.msk [vmem:[%s2039 - $0x2] sm:$0x20] %vm1991, %v1874
  %2049 = vst.msk [vmem:[%s2039 + $0x9e] sm:$0x20] %vm1991, %v1882
  %2050 = vst.msk [vmem:[%s2036 - $0x3] sm:$0x40] %vm1994, %v1874
  %2051 = vst.msk [vmem:[%s2036 + $0x9d] sm:$0x40] %vm1994, %v1882
  %2052 = vst.msk [vmem:[%s2039 - $0x3] sm:$0x80] %vm1997, %v1874
  %2053 = vst.msk [vmem:[%s2039 + $0x9d] sm:$0x80] %vm1997, %v1882
  %s2054 = scalar_lea.vmem [#allocation4], 136
  %2055 = vst.msk [vmem:[%s2054] sm:$0x1] %vm1975, %v1875
  %2056 = vst.msk [vmem:[%s2054 + $0xa0] sm:$0x1] %vm1975, %v1883
  %s2057 = scalar_lea.vmem [#allocation4], 96
  %2058 = vst.msk [vmem:[%s2057] sm:$0x2] %vm1979, %v1875
  %2059 = vst.msk [vmem:[%s2057 + $0xa0] sm:$0x2] %vm1979, %v1883
  %2060 = vst.msk [vmem:[%s2054 - $0x1] sm:$0x4] %vm1982, %v1875
  %2061 = vst.msk [vmem:[%s2054 + $0x9f] sm:$0x4] %vm1982, %v1883
  %2062 = vst.msk [vmem:[%s2057 - $0x1] sm:$0x8] %vm1985, %v1875
  %2063 = vst.msk [vmem:[%s2057 + $0x9f] sm:$0x8] %vm1985, %v1883
  %2064 = vst.msk [vmem:[%s2054 - $0x2] sm:$0x10] %vm1988, %v1875
  %2065 = vst.msk [vmem:[%s2054 + $0x9e] sm:$0x10] %vm1988, %v1883
  %2066 = vst.msk [vmem:[%s2057 - $0x2] sm:$0x20] %vm1991, %v1875
  %2067 = vst.msk [vmem:[%s2057 + $0x9e] sm:$0x20] %vm1991, %v1883
  %2068 = vst.msk [vmem:[%s2054 - $0x3] sm:$0x40] %vm1994, %v1875
  %2069 = vst.msk [vmem:[%s2054 + $0x9d] sm:$0x40] %vm1994, %v1883
  %2070 = vst.msk [vmem:[%s2057 - $0x3] sm:$0x80] %vm1997, %v1875
  %2071 = vst.msk [vmem:[%s2057 + $0x9d] sm:$0x80] %vm1997, %v1883
  %s2072 = scalar_lea.vmem [#allocation4], 64
  %2073 = vst.msk [vmem:[%s2072] sm:$0x1] %vm1975, %v1876
  %2074 = vst.msk [vmem:[%s2072 + $0xa0] sm:$0x1] %vm1975, %v1884
  %s2075 = scalar_lea.vmem [#allocation4], 24
  %2076 = vst.msk [vmem:[%s2075] sm:$0x2] %vm1979, %v1876
  %2077 = vst.msk [vmem:[%s2075 + $0xa0] sm:$0x2] %vm1979, %v1884
  %2078 = vst.msk [vmem:[%s2072 - $0x1] sm:$0x4] %vm1982, %v1876
  %2079 = vst.msk [vmem:[%s2072 + $0x9f] sm:$0x4] %vm1982, %v1884
  %2080 = vst.msk [vmem:[%s2075 - $0x1] sm:$0x8] %vm1985, %v1876
  %2081 = vst.msk [vmem:[%s2075 + $0x9f] sm:$0x8] %vm1985, %v1884
  %2082 = vst.msk [vmem:[%s2072 - $0x2] sm:$0x10] %vm1988, %v1876
  %2083 = vst.msk [vmem:[%s2072 + $0x9e] sm:$0x10] %vm1988, %v1884
  %2084 = vst.msk [vmem:[%s2075 - $0x2] sm:$0x20] %vm1991, %v1876
  %2085 = vst.msk [vmem:[%s2075 + $0x9e] sm:$0x20] %vm1991, %v1884
  %2086 = vst.msk [vmem:[%s2072 - $0x3] sm:$0x40] %vm1994, %v1876
  %2087 = vst.msk [vmem:[%s2072 + $0x9d] sm:$0x40] %vm1994, %v1884
  %2088 = vst.msk [vmem:[%s2075 - $0x3] sm:$0x80] %vm1997, %v1876
  %2089 = vst.msk [vmem:[%s2075 + $0x9d] sm:$0x80] %vm1997, %v1884
  %s2090 = scalar_lea.vmem [#allocation4], 144
  %2091 = vst.msk [vmem:[%s2090] sm:$0x1] %vm1975, %v1877
  %2092 = vst.msk [vmem:[%s2090 + $0xa0] sm:$0x1] %vm1975, %v1885
  %s2093 = scalar_lea.vmem [#allocation4], 104
  %2094 = vst.msk [vmem:[%s2093] sm:$0x2] %vm1979, %v1877
  %2095 = vst.msk [vmem:[%s2093 + $0xa0] sm:$0x2] %vm1979, %v1885
  %2096 = vst.msk [vmem:[%s2090 - $0x1] sm:$0x4] %vm1982, %v1877
  %2097 = vst.msk [vmem:[%s2090 + $0x9f] sm:$0x4] %vm1982, %v1885
  %2098 = vst.msk [vmem:[%s2093 - $0x1] sm:$0x8] %vm1985, %v1877
  %2099 = vst.msk [vmem:[%s2093 + $0x9f] sm:$0x8] %vm1985, %v1885
  %2100 = vst.msk [vmem:[%s2090 - $0x2] sm:$0x10] %vm1988, %v1877
  %2101 = vst.msk [vmem:[%s2090 + $0x9e] sm:$0x10] %vm1988, %v1885
  %2102 = vst.msk [vmem:[%s2093 - $0x2] sm:$0x20] %vm1991, %v1877
  %2103 = vst.msk [vmem:[%s2093 + $0x9e] sm:$0x20] %vm1991, %v1885
  %2104 = vst.msk [vmem:[%s2090 - $0x3] sm:$0x40] %vm1994, %v1877
  %2105 = vst.msk [vmem:[%s2090 + $0x9d] sm:$0x40] %vm1994, %v1885
  %2106 = vst.msk [vmem:[%s2093 - $0x3] sm:$0x80] %vm1997, %v1877
  %2107 = vst.msk [vmem:[%s2093 + $0x9d] sm:$0x80] %vm1997, %v1885
  %s2108 = scalar_lea.vmem [#allocation4], 72
  %2109 = vst.msk [vmem:[%s2108] sm:$0x1] %vm1975, %v1878
  %2110 = vst.msk [vmem:[%s2108 + $0xa0] sm:$0x1] %vm1975, %v1886
  %s2111 = scalar_lea.vmem [#allocation4], 32
  %2112 = vst.msk [vmem:[%s2111] sm:$0x2] %vm1979, %v1878
  %2113 = vst.msk [vmem:[%s2111 + $0xa0] sm:$0x2] %vm1979, %v1886
  %2114 = vst.msk [vmem:[%s2108 - $0x1] sm:$0x4] %vm1982, %v1878
  %2115 = vst.msk [vmem:[%s2108 + $0x9f] sm:$0x4] %vm1982, %v1886
  %2116 = vst.msk [vmem:[%s2111 - $0x1] sm:$0x8] %vm1985, %v1878
  %2117 = vst.msk [vmem:[%s2111 + $0x9f] sm:$0x8] %vm1985, %v1886
  %2118 = vst.msk [vmem:[%s2108 - $0x2] sm:$0x10] %vm1988, %v1878
  %2119 = vst.msk [vmem:[%s2108 + $0x9e] sm:$0x10] %vm1988, %v1886
  %2120 = vst.msk [vmem:[%s2111 - $0x2] sm:$0x20] %vm1991, %v1878
  %2121 = vst.msk [vmem:[%s2111 + $0x9e] sm:$0x20] %vm1991, %v1886
  %2122 = vst.msk [vmem:[%s2108 - $0x3] sm:$0x40] %vm1994, %v1878
  %2123 = vst.msk [vmem:[%s2108 + $0x9d] sm:$0x40] %vm1994, %v1886
  %2124 = vst.msk [vmem:[%s2111 - $0x3] sm:$0x80] %vm1997, %v1878
  %2125 = vst.msk [vmem:[%s2111 + $0x9d] sm:$0x80] %vm1997, %v1886
  %v2126 = vld [vmem:[#allocation4] sm:$0xf]
  %v2127 = vld [vmem:[#allocation4 + $0x8] sm:$0xf]
  %v2128 = vld [vmem:[#allocation4 + $0x10] sm:$0xf]
  %v2129 = vld [vmem:[#allocation4 + $0x18] sm:$0xf]
  %v2130 = vld [vmem:[#allocation4 + $0xa0] sm:$0xf]
  %v2131 = vld [vmem:[#allocation4 + $0xa8] sm:$0xf]
  %v2132 = vld [vmem:[#allocation4 + $0xb0] sm:$0xf]
  %v2133 = vld [vmem:[#allocation4 + $0xb8] sm:$0xf]
  %v2142 = vcombine.low %v2126, %v2127
  %v2143 = vcombine.low %v2128, %v2129
  %v2144 = vcombine.low %v2130, %v2131
  %v2145 = vcombine.low %v2132, %v2133
  %v2150 = vpack.c.bf16 %v2143, %v2142
  %v2151 = vpack.c.bf16 %v2145, %v2144
  %2152 = vst.msk [vmem:[#allocation5] sm:$0xff] %vm1887, %v2150
  %2153 = vst.msk [vmem:[#allocation5 + $0x28] sm:$0xff] %vm1887, %v2151
  %s2154 = scalar_lea.vmem [#allocation4], 40
  %v2155 = vld [vmem:[%s2154] sm:$0xf]
  %v2156 = vld [vmem:[%s2154 + $0x8] sm:$0xf]
  %v2157 = vld [vmem:[%s2154 + $0x10] sm:$0xf]
  %v2158 = vld [vmem:[%s2154 + $0x18] sm:$0xf]
  %v2159 = vld [vmem:[%s2154 + $0xa0] sm:$0xf]
  %v2160 = vld [vmem:[%s2154 + $0xa8] sm:$0xf]
  %v2161 = vld [vmem:[%s2154 + $0xb0] sm:$0xf]
  %v2162 = vld [vmem:[%s2154 + $0xb8] sm:$0xf]
  %v2171 = vcombine.low %v2155, %v2156
  %v2172 = vcombine.low %v2157, %v2158
  %v2173 = vcombine.low %v2159, %v2160
  %v2174 = vcombine.low %v2161, %v2162
  %v2179 = vpack.c.bf16 %v2172, %v2171
  %v2180 = vpack.c.bf16 %v2174, %v2173
  %2183 = vrot.lane.b32.xlu0 %v2179, 64
  %v2184 = vpop.permute.xlu0 %2183
  %2185 = vrot.lane.b32.xlu0 %v2180, 64
  %v2186 = vpop.permute.xlu0 %2185
  %vm2189 = vcmask 1048064
  %2190 = vst.msk [vmem:[#allocation5] sm:$0xff] %vm2189, %v2184
  %2191 = vst.msk [vmem:[#allocation5 + $0x28] sm:$0xff] %vm2189, %v2186
  %v2192 = vld [vmem:[#allocation4 + $0x1] sm:$0xf]
  %v2193 = vld [vmem:[#allocation4 + $0x9] sm:$0xf]
  %v2194 = vld [vmem:[#allocation4 + $0x11] sm:$0xf]
  %v2195 = vld [vmem:[#allocation4 + $0x19] sm:$0xf]
  %v2196 = vld [vmem:[#allocation4 + $0xa1] sm:$0xf]
  %v2197 = vld [vmem:[#allocation4 + $0xa9] sm:$0xf]
  %v2198 = vld [vmem:[#allocation4 + $0xb1] sm:$0xf]
  %v2199 = vld [vmem:[#allocation4 + $0xb9] sm:$0xf]
  %v2208 = vcombine.low %v2192, %v2193
  %v2209 = vcombine.low %v2194, %v2195
  %v2210 = vcombine.low %v2196, %v2197
  %v2211 = vcombine.low %v2198, %v2199
  %v2216 = vpack.c.bf16 %v2209, %v2208
  %v2217 = vpack.c.bf16 %v2211, %v2210
  %2218 = vst.msk [vmem:[#allocation5 + $0x8] sm:$0xff] %vm1887, %v2216
  %2219 = vst.msk [vmem:[#allocation5 + $0x30] sm:$0xff] %vm1887, %v2217
  %v2220 = vld [vmem:[%s1978] sm:$0xf]
  %v2221 = vld [vmem:[%s1978 + $0x8] sm:$0xf]
  %v2222 = vld [vmem:[%s1978 + $0x10] sm:$0xf]
  %v2223 = vld [vmem:[%s1978 + $0x18] sm:$0xf]
  %v2224 = vld [vmem:[%s1978 + $0xa0] sm:$0xf]
  %v2225 = vld [vmem:[%s1978 + $0xa8] sm:$0xf]
  %v2226 = vld [vmem:[%s1978 + $0xb0] sm:$0xf]
  %v2227 = vld [vmem:[%s1978 + $0xb8] sm:$0xf]
  %v2236 = vcombine.low %v2220, %v2221
  %v2237 = vcombine.low %v2222, %v2223
  %v2238 = vcombine.low %v2224, %v2225
  %v2239 = vcombine.low %v2226, %v2227
  %v2244 = vpack.c.bf16 %v2237, %v2236
  %v2245 = vpack.c.bf16 %v2239, %v2238
  %2248 = vrot.lane.b32.xlu0 %v2244, 64
  %v2249 = vpop.permute.xlu0 %2248
  %2250 = vrot.lane.b32.xlu0 %v2245, 64
  %v2251 = vpop.permute.xlu0 %2250
  %2254 = vst.msk [vmem:[#allocation5 + $0x8] sm:$0xff] %vm2189, %v2249
  %2255 = vst.msk [vmem:[#allocation5 + $0x30] sm:$0xff] %vm2189, %v2251
  %v2256 = vld [vmem:[%s1974] sm:$0xf]
  %v2257 = vld [vmem:[%s1974 + $0x8] sm:$0xf]
  %v2258 = vld [vmem:[%s1974 + $0x10] sm:$0xf]
  %v2259 = vld [vmem:[%s1974 + $0x18] sm:$0xf]
  %v2260 = vld [vmem:[%s1974 + $0xa0] sm:$0xf]
  %v2261 = vld [vmem:[%s1974 + $0xa8] sm:$0xf]
  %v2262 = vld [vmem:[%s1974 + $0xb0] sm:$0xf]
  %v2263 = vld [vmem:[%s1974 + $0xb8] sm:$0xf]
  %v2272 = vcombine.low %v2256, %v2257
  %v2273 = vcombine.low %v2258, %v2259
  %v2274 = vcombine.low %v2260, %v2261
  %v2275 = vcombine.low %v2262, %v2263
  %v2280 = vpack.c.bf16 %v2273, %v2272
  %v2281 = vpack.c.bf16 %v2275, %v2274
  %2282 = vst.msk [vmem:[#allocation5 + $0x10] sm:$0xff] %vm1887, %v2280
  %2283 = vst.msk [vmem:[#allocation5 + $0x38] sm:$0xff] %vm1887, %v2281
  %v2284 = vld [vmem:[%s1978 + $0x1] sm:$0xf]
  %v2285 = vld [vmem:[%s1978 + $0x9] sm:$0xf]
  %v2286 = vld [vmem:[%s1978 + $0x11] sm:$0xf]
  %v2287 = vld [vmem:[%s1978 + $0x19] sm:$0xf]
  %v2288 = vld [vmem:[%s1978 + $0xa1] sm:$0xf]
  %v2289 = vld [vmem:[%s1978 + $0xa9] sm:$0xf]
  %v2290 = vld [vmem:[%s1978 + $0xb1] sm:$0xf]
  %v2291 = vld [vmem:[%s1978 + $0xb9] sm:$0xf]
  %v2300 = vcombine.low %v2284, %v2285
  %v2301 = vcombine.low %v2286, %v2287
  %v2302 = vcombine.low %v2288, %v2289
  %v2303 = vcombine.low %v2290, %v2291
  %v2308 = vpack.c.bf16 %v2301, %v2300
  %v2309 = vpack.c.bf16 %v2303, %v2302
  %2312 = vrot.lane.b32.xlu0 %v2308, 64
  %v2313 = vpop.permute.xlu0 %2312
  %2314 = vrot.lane.b32.xlu0 %v2309, 64
  %v2315 = vpop.permute.xlu0 %2314
  %2318 = vst.msk [vmem:[#allocation5 + $0x10] sm:$0xff] %vm2189, %v2313
  %2319 = vst.msk [vmem:[#allocation5 + $0x38] sm:$0xff] %vm2189, %v2315
  %v2320 = vld [vmem:[%s2003] sm:$0xf]
  %v2321 = vld [vmem:[%s2003 + $0x8] sm:$0xf]
  %v2322 = vld [vmem:[%s2003 + $0x10] sm:$0xf]
  %v2323 = vld [vmem:[%s2003 + $0x18] sm:$0xf]
  %v2324 = vld [vmem:[%s2003 + $0xa0] sm:$0xf]
  %v2325 = vld [vmem:[%s2003 + $0xa8] sm:$0xf]
  %v2326 = vld [vmem:[%s2003 + $0xb0] sm:$0xf]
  %v2327 = vld [vmem:[%s2003 + $0xb8] sm:$0xf]
  %v2336 = vcombine.low %v2320, %v2321
  %v2337 = vcombine.low %v2322, %v2323
  %v2338 = vcombine.low %v2324, %v2325
  %v2339 = vcombine.low %v2326, %v2327
  %v2344 = vpack.c.bf16 %v2337, %v2336
  %v2345 = vpack.c.bf16 %v2339, %v2338
  %2346 = vst.msk [vmem:[#allocation5 + $0x18] sm:$0xff] %vm1887, %v2344
  %2347 = vst.msk [vmem:[#allocation5 + $0x40] sm:$0xff] %vm1887, %v2345
  %v2348 = vld [vmem:[%s2000] sm:$0xf]
  %v2349 = vld [vmem:[%s2000 + $0x8] sm:$0xf]
  %v2350 = vld [vmem:[%s2000 + $0x10] sm:$0xf]
  %v2351 = vld [vmem:[%s2000 + $0x18] sm:$0xf]
  %v2352 = vld [vmem:[%s2000 + $0xa0] sm:$0xf]
  %v2353 = vld [vmem:[%s2000 + $0xa8] sm:$0xf]
  %v2354 = vld [vmem:[%s2000 + $0xb0] sm:$0xf]
  %v2355 = vld [vmem:[%s2000 + $0xb8] sm:$0xf]
  %v2364 = vcombine.low %v2348, %v2349
  %v2365 = vcombine.low %v2350, %v2351
  %v2366 = vcombine.low %v2352, %v2353
  %v2367 = vcombine.low %v2354, %v2355
  %v2372 = vpack.c.bf16 %v2365, %v2364
  %v2373 = vpack.c.bf16 %v2367, %v2366
  %2376 = vrot.lane.b32.xlu0 %v2372, 64
  %v2377 = vpop.permute.xlu0 %2376
  %2378 = vrot.lane.b32.xlu0 %v2373, 64
  %v2379 = vpop.permute.xlu0 %2378
  %2382 = vst.msk [vmem:[#allocation5 + $0x18] sm:$0xff] %vm2189, %v2377
  %2383 = vst.msk [vmem:[#allocation5 + $0x40] sm:$0xff] %vm2189, %v2379
  %v2384 = vld [vmem:[%s2003 + $0x1] sm:$0xf]
  %v2385 = vld [vmem:[%s2003 + $0x9] sm:$0xf]
  %v2386 = vld [vmem:[%s2003 + $0x11] sm:$0xf]
  %v2387 = vld [vmem:[%s2003 + $0x19] sm:$0xf]
  %v2388 = vld [vmem:[%s2003 + $0xa1] sm:$0xf]
  %v2389 = vld [vmem:[%s2003 + $0xa9] sm:$0xf]
  %v2390 = vld [vmem:[%s2003 + $0xb1] sm:$0xf]
  %v2391 = vld [vmem:[%s2003 + $0xb9] sm:$0xf]
  %v2400 = vcombine.low %v2384, %v2385
  %v2401 = vcombine.low %v2386, %v2387
  %v2402 = vcombine.low %v2388, %v2389
  %v2403 = vcombine.low %v2390, %v2391
  %v2408 = vpack.c.bf16 %v2401, %v2400
  %v2409 = vpack.c.bf16 %v2403, %v2402
  %2410 = vst.msk [vmem:[#allocation5 + $0x20] sm:$0xff] %vm1887, %v2408
  %2411 = vst.msk [vmem:[#allocation5 + $0x48] sm:$0xff] %vm1887, %v2409
  %v2412 = vld [vmem:[#allocation5] sm:$0xff]
  %v2413 = vld [vmem:[#allocation5 + $0x8] sm:$0xff]
  %v2414 = vld [vmem:[#allocation5 + $0x10] sm:$0xff]
  %v2415 = vld [vmem:[#allocation5 + $0x18] sm:$0xff]
  %v2416 = vld [vmem:[#allocation5 + $0x20] sm:$0xff]
  %v2417 = vld [vmem:[#allocation5 + $0x28] sm:$0xff]
  %v2418 = vld [vmem:[#allocation5 + $0x30] sm:$0xff]
  %v2419 = vld [vmem:[#allocation5 + $0x38] sm:$0xff]
  %v2420 = vld [vmem:[#allocation5 + $0x40] sm:$0xff]
  %v2421 = vld [vmem:[#allocation5 + $0x48] sm:$0xff]
  %v2422 = vld [vmem:[%s5] sm:$0xf]
  %v2423 = vld [vmem:[%s5 + $0x4] sm:$0xf]
  %v2424 = vld [vmem:[%s5 + $0x8] sm:$0xf]
  %v2425 = vld [vmem:[%s5 + $0xc] sm:$0xf]
  %v2426 = vld [vmem:[%s5 + $0x10] sm:$0xf]
  %v2427 = vld [vmem:[%s5 + $0x14] sm:$0xf]
  %v2428 = vld [vmem:[%s5 + $0x18] sm:$0xf]
  %v2429 = vld [vmem:[%s5 + $0x1c] sm:$0xf]
  %v2430 = vld [vmem:[%s5 + $0x20] sm:$0xf]
  %v2431 = vld [vmem:[%s5 + $0x24] sm:$0xf]
  %v2432 = vld [vmem:[%s5 + $0x28] sm:$0xf]
  %v2433 = vld [vmem:[%s5 + $0x2c] sm:$0xf]
  %v2434 = vld [vmem:[%s5 + $0x30] sm:$0xf]
  %v2435 = vld [vmem:[%s5 + $0x34] sm:$0xf]
  %v2436 = vld [vmem:[%s5 + $0x38] sm:$0xf]
  %v2437 = vld [vmem:[%s5 + $0x3c] sm:$0xf]
  %v2438 = vld [vmem:[%s5 + $0x40] sm:$0xf]
  %v2439 = vld [vmem:[%s5 + $0x44] sm:$0xf]
  %v2440 = vld [vmem:[%s5 + $0x48] sm:$0xf]
  %v2441 = vld [vmem:[%s5 + $0x4c] sm:$0xf]
  %v2442 = vld [vmem:[%s5 + $0x50] sm:$0xf]
  %v2443 = vld [vmem:[%s5 + $0x54] sm:$0xf]
  %v2444 = vld [vmem:[%s5 + $0x58] sm:$0xf]
  %v2445 = vld [vmem:[%s5 + $0x5c] sm:$0xf]
  %v2446 = vld [vmem:[%s5 + $0x60] sm:$0xf]
  %v2447 = vld [vmem:[%s5 + $0x64] sm:$0xf]
  %v2448 = vld [vmem:[%s5 + $0x68] sm:$0xf]
  %v2449 = vld [vmem:[%s5 + $0x6c] sm:$0xf]
  %v2450 = vld [vmem:[%s5 + $0x70] sm:$0xf]
  %v2451 = vld [vmem:[%s5 + $0x74] sm:$0xf]
  %v2452 = vld [vmem:[%s5 + $0x78] sm:$0xf]
  %v2453 = vld [vmem:[%s5 + $0x7c] sm:$0xf]
  %v2454 = vld [vmem:[%s5 + $0x80] sm:$0xf]
  %v2455 = vld [vmem:[%s5 + $0x84] sm:$0xf]
  %v2456 = vld [vmem:[%s5 + $0x88] sm:$0xf]
  %v2457 = vld [vmem:[%s5 + $0x8c] sm:$0xf]
  %v2458 = vld [vmem:[%s5 + $0x90] sm:$0xf]
  %v2459 = vld [vmem:[%s5 + $0x94] sm:$0xf]
  %v2460 = vld [vmem:[%s5 + $0x98] sm:$0xf]
  %v2461 = vld [vmem:[%s5 + $0x9c] sm:$0xf]
  %v2462 = vld [vmem:[%s5 + $0xa0] sm:$0xf]
  %v2463 = vld [vmem:[%s5 + $0xa4] sm:$0xf]
  %v2464 = vld [vmem:[%s5 + $0xa8] sm:$0xf]
  %v2465 = vld [vmem:[%s5 + $0xac] sm:$0xf]
  %v2466 = vld [vmem:[%s5 + $0xb0] sm:$0xf]
  %v2467 = vld [vmem:[%s5 + $0xb4] sm:$0xf]
  %v2468 = vld [vmem:[%s5 + $0xb8] sm:$0xf]
  %v2469 = vld [vmem:[%s5 + $0xbc] sm:$0xf]
  %v2470 = vld [vmem:[%s5 + $0xc0] sm:$0xf]
  %v2471 = vld [vmem:[%s5 + $0xc4] sm:$0xf]
  %v2472 = vld [vmem:[%s5 + $0xc8] sm:$0xf]
  %v2473 = vld [vmem:[%s5 + $0xcc] sm:$0xf]
  %v2474 = vld [vmem:[%s5 + $0xd0] sm:$0xf]
  %v2475 = vld [vmem:[%s5 + $0xd4] sm:$0xf]
  %v2476 = vld [vmem:[%s5 + $0xd8] sm:$0xf]
  %v2477 = vld [vmem:[%s5 + $0xdc] sm:$0xf]
  %v2478 = vld [vmem:[%s5 + $0xe0] sm:$0xf]
  %v2479 = vld [vmem:[%s5 + $0xe4] sm:$0xf]
  %v2480 = vld [vmem:[%s5 + $0xe8] sm:$0xf]
  %v2481 = vld [vmem:[%s5 + $0xec] sm:$0xf]
  %v2482 = vld [vmem:[%s5 + $0xf0] sm:$0xf]
  %v2483 = vld [vmem:[%s5 + $0xf4] sm:$0xf]
  %v2484 = vld [vmem:[%s5 + $0xf8] sm:$0xf]
  %v2485 = vld [vmem:[%s5 + $0xfc] sm:$0xf]
  %v2486 = vld [vmem:[%s5 + $0x100] sm:$0xf]
  %v2487 = vld [vmem:[%s5 + $0x104] sm:$0xf]
  %v2488 = vld [vmem:[%s5 + $0x108] sm:$0xf]
  %v2489 = vld [vmem:[%s5 + $0x10c] sm:$0xf]
  %v2490 = vld [vmem:[%s5 + $0x110] sm:$0xf]
  %v2491 = vld [vmem:[%s5 + $0x114] sm:$0xf]
  %v2492 = vld [vmem:[%s5 + $0x118] sm:$0xf]
  %v2493 = vld [vmem:[%s5 + $0x11c] sm:$0xf]
  %v2494 = vld [vmem:[%s6] sm:$0x1]
  %v2496 = vlaneseq
  %v2497 = vshrl.u32 %v2496, 7
  %v2498 = vsub.s32 0, %v2497
  %v2499 = vrot.slane %v2494, %v2498
  %v2573 = vunpack.c.l.b16 %v2422
  %v2574 = vunpack.c.l.b16 %v2423
  %v2575 = vunpack.c.l.b16 %v2424
  %v2576 = vunpack.c.l.b16 %v2425
  %v2577 = vunpack.c.l.b16 %v2426
  %v2578 = vunpack.c.l.b16 %v2427
  %v2579 = vunpack.c.l.b16 %v2428
  %v2580 = vunpack.c.l.b16 %v2429
  %v2581 = vunpack.c.l.b16 %v2430
  %v2582 = vunpack.c.l.b16 %v2431
  %v2583 = vunpack.c.l.b16 %v2432
  %v2584 = vunpack.c.l.b16 %v2433
  %v2585 = vunpack.c.l.b16 %v2434
  %v2586 = vunpack.c.l.b16 %v2435
  %v2587 = vunpack.c.l.b16 %v2436
  %v2588 = vunpack.c.l.b16 %v2437
  %v2589 = vunpack.c.l.b16 %v2438
  %v2590 = vunpack.c.l.b16 %v2439
  %v2591 = vunpack.c.l.b16 %v2440
  %v2592 = vunpack.c.l.b16 %v2441
  %v2593 = vunpack.c.l.b16 %v2442
  %v2594 = vunpack.c.l.b16 %v2443
  %v2595 = vunpack.c.l.b16 %v2444
  %v2596 = vunpack.c.l.b16 %v2445
  %v2597 = vunpack.c.l.b16 %v2446
  %v2598 = vunpack.c.l.b16 %v2447
  %v2599 = vunpack.c.l.b16 %v2448
  %v2600 = vunpack.c.l.b16 %v2449
  %v2601 = vunpack.c.l.b16 %v2450
  %v2602 = vunpack.c.l.b16 %v2451
  %v2603 = vunpack.c.l.b16 %v2452
  %v2604 = vunpack.c.l.b16 %v2453
  %v2605 = vunpack.c.l.b16 %v2454
  %v2606 = vunpack.c.l.b16 %v2455
  %v2607 = vunpack.c.l.b16 %v2456
  %v2608 = vunpack.c.l.b16 %v2457
  %v2609 = vunpack.c.l.b16 %v2458
  %v2610 = vunpack.c.l.b16 %v2459
  %v2611 = vunpack.c.l.b16 %v2460
  %v2612 = vunpack.c.l.b16 %v2461
  %v2613 = vunpack.c.l.b16 %v2462
  %v2614 = vunpack.c.l.b16 %v2463
  %v2615 = vunpack.c.l.b16 %v2464
  %v2616 = vunpack.c.l.b16 %v2465
  %v2617 = vunpack.c.l.b16 %v2466
  %v2618 = vunpack.c.l.b16 %v2467
  %v2619 = vunpack.c.l.b16 %v2468
  %v2620 = vunpack.c.l.b16 %v2469
  %v2621 = vunpack.c.l.b16 %v2470
  %v2622 = vunpack.c.l.b16 %v2471
  %v2623 = vunpack.c.l.b16 %v2472
  %v2624 = vunpack.c.l.b16 %v2473
  %v2625 = vunpack.c.l.b16 %v2474
  %v2626 = vunpack.c.l.b16 %v2475
  %v2627 = vunpack.c.l.b16 %v2476
  %v2628 = vunpack.c.l.b16 %v2477
  %v2629 = vunpack.c.l.b16 %v2478
  %v2630 = vunpack.c.l.b16 %v2479
  %v2631 = vunpack.c.l.b16 %v2480
  %v2632 = vunpack.c.l.b16 %v2481
  %v2633 = vunpack.c.l.b16 %v2482
  %v2634 = vunpack.c.l.b16 %v2483
  %v2635 = vunpack.c.l.b16 %v2484
  %v2636 = vunpack.c.l.b16 %v2485
  %v2637 = vunpack.c.l.b16 %v2486
  %v2638 = vunpack.c.l.b16 %v2487
  %v2639 = vunpack.c.l.b16 %v2488
  %v2640 = vunpack.c.l.b16 %v2489
  %v2641 = vunpack.c.l.b16 %v2490
  %v2642 = vunpack.c.l.b16 %v2491
  %v2643 = vunpack.c.l.b16 %v2492
  %v2644 = vunpack.c.l.b16 %v2493
  %v2645 = vpack.c.b16 %v2574, %v2573
  %v2646 = vpack.c.b16 %v2576, %v2575
  %v2647 = vpack.c.b16 %v2578, %v2577
  %v2648 = vpack.c.b16 %v2580, %v2579
  %v2649 = vpack.c.b16 %v2582, %v2581
  %v2650 = vpack.c.b16 %v2584, %v2583
  %v2651 = vpack.c.b16 %v2586, %v2585
  %v2652 = vpack.c.b16 %v2588, %v2587
  %v2653 = vpack.c.b16 %v2590, %v2589
  %v2654 = vpack.c.b16 %v2592, %v2591
  %v2655 = vpack.c.b16 %v2594, %v2593
  %v2656 = vpack.c.b16 %v2596, %v2595
  %v2657 = vpack.c.b16 %v2598, %v2597
  %v2658 = vpack.c.b16 %v2600, %v2599
  %v2659 = vpack.c.b16 %v2602, %v2601
  %v2660 = vpack.c.b16 %v2604, %v2603
  %v2661 = vpack.c.b16 %v2606, %v2605
  %v2662 = vpack.c.b16 %v2608, %v2607
  %v2663 = vpack.c.b16 %v2610, %v2609
  %v2664 = vpack.c.b16 %v2612, %v2611
  %v2665 = vpack.c.b16 %v2614, %v2613
  %v2666 = vpack.c.b16 %v2616, %v2615
  %v2667 = vpack.c.b16 %v2618, %v2617
  %v2668 = vpack.c.b16 %v2620, %v2619
  %v2669 = vpack.c.b16 %v2622, %v2621
  %v2670 = vpack.c.b16 %v2624, %v2623
  %v2671 = vpack.c.b16 %v2626, %v2625
  %v2672 = vpack.c.b16 %v2628, %v2627
  %v2673 = vpack.c.b16 %v2630, %v2629
  %v2674 = vpack.c.b16 %v2632, %v2631
  %v2675 = vpack.c.b16 %v2634, %v2633
  %v2676 = vpack.c.b16 %v2636, %v2635
  %v2677 = vpack.c.b16 %v2638, %v2637
  %v2678 = vpack.c.b16 %v2640, %v2639
  %v2679 = vpack.c.b16 %v2642, %v2641
  %v2680 = vpack.c.b16 %v2644, %v2643
  %v2718 = vsel %vm1887, %v2416, 0
  %v2721 = vsel %vm1887, %v2421, 0
  %2723 = vmatprep.subr.bf16.mxu0 0
  %2724 = vmatpush1.bf16.msra.mxu0 %v2645
  %2725 = vmatprep.subr.bf16.mxu0 0
  %2726 = vmatpush1.bf16.msra.mxu0 %v2646
  %2727 = vmatprep.subr.bf16.mxu0 0
  %2728 = vmatpush1.bf16.msra.mxu0 %v2647
  %2729 = vmatprep.subr.bf16.mxu0 0
  %2730 = vmatpush1.bf16.msra.mxu0 %v2648
  %2731 = vmatprep.subr.bf16.mxu0 0
  %2732 = vmatpush1.bf16.msra.mxu0 %v2649
  %2733 = vmatprep.subr.bf16.mxu0 0
  %2734 = vmatpush1.bf16.msra.mxu0 %v2650
  %2735 = vmatprep.subr.bf16.mxu0 0
  %2736 = vmatpush1.bf16.msra.mxu0 %v2651
  %2737 = vmatprep.subr.bf16.mxu0 0
  %2738 = vmatpush1.bf16.msra.mxu0 %v2652
  %2739 = vmatprep.subr.bf16.mxu0 0
  %2740 = vmatpush1.bf16.msra.mxu0 %v2653
  %2741 = vmatprep.subr.bf16.mxu0 0
  %2742 = vmatpush1.bf16.msra.mxu0 %v2654
  %2743 = vmatprep.subr.bf16.mxu0 0
  %2744 = vmatpush1.bf16.msra.mxu0 %v2655
  %2745 = vmatprep.subr.bf16.mxu0 0
  %2746 = vmatpush1.bf16.msra.mxu0 %v2656
  %2747 = vmatprep.subr.bf16.mxu0 0
  %2748 = vmatpush1.bf16.msra.mxu0 %v2657
  %2749 = vmatprep.subr.bf16.mxu0 0
  %2750 = vmatpush1.bf16.msra.mxu0 %v2658
  %2751 = vmatprep.subr.bf16.mxu0 0
  %2752 = vmatpush1.bf16.msra.mxu0 %v2659
  %2753 = vmatprep.subr.bf16.mxu0 0
  %2754 = vmatpush1.bf16.msra.mxu0 %v2660
  %2755 = vmatprep.mubr.bf16.mxu0 %v2413
  %2756 = vmatmul.mubr.bf16.gmra.mrb[0].mxu0 %v2412
  %v2757 = vpop.f32.mrb[0].mxu0
  %v2758 = vadd.f32 %v2499, %v2757
  %v2759 = vpop.f32.mrb[0].mxu0
  %v2760 = vpop.f32.mrb[0].mxu0
  %v2761 = vadd.f32 %v2499, %v2760
  %v2762 = vpop.f32.mrb[0].mxu0
  %2763 = vmatprep.mubr.bf16.mxu0 %v2418
  %2764 = vmatmul.mubr.bf16.gmra.mrb[0].mxu0 %v2417
  %v2765 = vpop.f32.mrb[0].mxu0
  %v2766 = vadd.f32 %v2499, %v2765
  %v2767 = vpop.f32.mrb[0].mxu0
  %v2768 = vpop.f32.mrb[0].mxu0
  %v2769 = vadd.f32 %v2499, %v2768
  %v2770 = vpop.f32.mrb[0].mxu0
  %2771 = vdwg.mxu0
  %2772 = vmatprep.subr.bf16.mxu0 0
  %2773 = vmatpush1.bf16.msra.mxu0 %v2661
  %2774 = vmatprep.subr.bf16.mxu0 0
  %2775 = vmatpush1.bf16.msra.mxu0 %v2662
  %2776 = vmatprep.subr.bf16.mxu0 0
  %2777 = vmatpush1.bf16.msra.mxu0 %v2663
  %2778 = vmatprep.subr.bf16.mxu0 0
  %2779 = vmatpush1.bf16.msra.mxu0 %v2664
  %2780 = vmatprep.subr.bf16.mxu0 0
  %2781 = vmatpush1.bf16.msra.mxu0 %v2665
  %2782 = vmatprep.subr.bf16.mxu0 0
  %2783 = vmatpush1.bf16.msra.mxu0 %v2666
  %2784 = vmatprep.subr.bf16.mxu0 0
  %2785 = vmatpush1.bf16.msra.mxu0 %v2667
  %2786 = vmatprep.subr.bf16.mxu0 0
  %2787 = vmatpush1.bf16.msra.mxu0 %v2668
  %2788 = vmatprep.subr.bf16.mxu0 0
  %2789 = vmatpush1.bf16.msra.mxu0 %v2669
  %2790 = vmatprep.subr.bf16.mxu0 0
  %2791 = vmatpush1.bf16.msra.mxu0 %v2670
  %2792 = vmatprep.subr.bf16.mxu0 0
  %2793 = vmatpush1.bf16.msra.mxu0 %v2671
  %2794 = vmatprep.subr.bf16.mxu0 0
  %2795 = vmatpush1.bf16.msra.mxu0 %v2672
  %2796 = vmatprep.subr.bf16.mxu0 0
  %2797 = vmatpush1.bf16.msra.mxu0 %v2673
  %2798 = vmatprep.subr.bf16.mxu0 0
  %2799 = vmatpush1.bf16.msra.mxu0 %v2674
  %2800 = vmatprep.subr.bf16.mxu0 0
  %2801 = vmatpush1.bf16.msra.mxu0 %v2675
  %2802 = vmatprep.subr.bf16.mxu0 0
  %2803 = vmatpush1.bf16.msra.mxu0 %v2676
  %2804 = vmatprep.mubr.bf16.mxu0 %v2415
  %2805 = vmatmul.mubr.bf16.gmra.mrb[0].mxu0 %v2414
  %v2806 = vpop.f32.mrb[0].mxu0
  %v2807 = vadd.f32 %v2758, %v2806
  %v2808 = vpop.f32.mrb[0].mxu0
  %v2809 = vpop.f32.mrb[0].mxu0
  %v2810 = vadd.f32 %v2761, %v2809
  %v2811 = vpop.f32.mrb[0].mxu0
  %2812 = vmatprep.mubr.bf16.mxu0 %v2420
  %2813 = vmatmul.mubr.bf16.gmra.mrb[0].mxu0 %v2419
  %v2814 = vpop.f32.mrb[0].mxu0
  %v2815 = vadd.f32 %v2766, %v2814
  %v2816 = vpop.f32.mrb[0].mxu0
  %v2817 = vpop.f32.mrb[0].mxu0
  %v2818 = vadd.f32 %v2769, %v2817
  %v2819 = vpop.f32.mrb[0].mxu0
  %2820 = vdwg.mxu0
  %2821 = vmatprep.subr.bf16.mxu0 0
  %2822 = vmatpush1.bf16.msra.mxu0 %v2677
  %2823 = vmatprep.subr.bf16.mxu0 0
  %2824 = vmatpush1.bf16.msra.mxu0 %v2678
  %2825 = vmatprep.subr.bf16.mxu0 0
  %2826 = vmatpush1.bf16.msra.mxu0 %v2679
  %2827 = vmatprep.subr.bf16.mxu0 0
  %2828 = vmatpush1.bf16.msra.mxu0 %v2680
  %2829 = vmatprep.subr.bf16.mxu0 0
  %2830 = vmatpush1.bf16.msra.mxu0 0
  %2831 = vmatprep.subr.bf16.mxu0 0
  %2832 = vmatpush1.bf16.msra.mxu0 0
  %2833 = vmatprep.subr.bf16.mxu0 0
  %2834 = vmatpush1.bf16.msra.mxu0 0
  %2835 = vmatprep.subr.bf16.mxu0 0
  %2836 = vmatpush1.bf16.msra.mxu0 0
  %2837 = vmatprep.subr.bf16.mxu0 0
  %2838 = vmatpush1.bf16.msra.mxu0 0
  %2839 = vmatprep.subr.bf16.mxu0 0
  %2840 = vmatpush1.bf16.msra.mxu0 0
  %2841 = vmatprep.subr.bf16.mxu0 0
  %2842 = vmatpush1.bf16.msra.mxu0 0
  %2843 = vmatprep.subr.bf16.mxu0 0
  %2844 = vmatpush1.bf16.msra.mxu0 0
  %2845 = vmatprep.subr.bf16.mxu0 0
  %2846 = vmatpush1.bf16.msra.mxu0 0
  %2847 = vmatprep.subr.bf16.mxu0 0
  %2848 = vmatpush1.bf16.msra.mxu0 0
  %2849 = vmatprep.subr.bf16.mxu0 0
  %2850 = vmatpush1.bf16.msra.mxu0 0
  %2851 = vmatprep.subr.bf16.mxu0 0
  %2852 = vmatpush1.bf16.msra.mxu0 0
  %2853 = vmatprep.mubr.bf16.mxu0 0
  %2854 = vmatmul.mubr.bf16.gmra.mrb[0].mxu0 %v2718
  %v2855 = vpop.f32.mrb[0].mxu0
  %v2856 = vadd.f32 %v2807, %v2855
  %v2857 = vpop.f32.mrb[0].mxu0
  %v2858 = vpop.f32.mrb[0].mxu0
  %v2859 = vadd.f32 %v2810, %v2858
  %v2860 = vpop.f32.mrb[0].mxu0
  %2861 = vmatprep.mubr.bf16.mxu0 0
  %2862 = vmatmul.mubr.bf16.gmra.mrb[0].mxu0 %v2721
  %v2863 = vpop.f32.mrb[0].mxu0
  %v2864 = vadd.f32 %v2815, %v2863
  %v2865 = vpop.f32.mrb[0].mxu0
  %v2866 = vpop.f32.mrb[0].mxu0
  %v2867 = vadd.f32 %v2818, %v2866
  %v2868 = vpop.f32.mrb[0].mxu0
  %2869 = vdwg.mxu0
  %v2870 = vmax.f32 %v2856, 0.0
  %v2871 = vmax.f32 %v2859, 0.0
  %v2872 = vmax.f32 %v2864, 0.0
  %v2873 = vmax.f32 %v2867, 0.0
  %v2874 = vadd.f32 %v2870, %v2871
  %v2875 = vrot.slane %v2874, 4
  %v2876 = vadd.f32 %v2874, %v2875
  %v2877 = vrot.slane %v2876, 2
  %v2878 = vadd.f32 %v2876, %v2877
  %v2879 = vrot.slane %v2878, 1
  %v2880 = vadd.f32 %v2878, %v2879
  %v2881 = vadd.f32 %v2872, %v2873
  %v2882 = vrot.slane %v2881, 4
  %v2883 = vadd.f32 %v2881, %v2882
  %v2884 = vrot.slane %v2883, 2
  %v2885 = vadd.f32 %v2883, %v2884
  %v2886 = vrot.slane %v2885, 1
  %v2887 = vadd.f32 %v2885, %v2886
  %v2888 = vrcp.pop 16.0
  %v2889 = vmul.f32 %v2880, %v2888
  %v2890 = vmul.f32 %v2887, %v2888
  %v2891 = vpack.c.bf16 %v2889, %v2889
  %v2892 = vpack.c.bf16 %v2890, %v2890
  %v2893 = vld [vmem:[%s7] sm:$0xff]
  %v2894 = vld [vmem:[%s7 + $0x8] sm:$0xff]
  %v2895 = vld [vmem:[%s7 + $0x10] sm:$0xff]
  %v2896 = vld [vmem:[%s7 + $0x18] sm:$0xff]
  %v2897 = vld [vmem:[%s7 + $0x20] sm:$0xff]
  %v2898 = vld [vmem:[%s7 + $0x28] sm:$0xff]
  %v2899 = vld [vmem:[%s7 + $0x30] sm:$0xff]
  %v2900 = vld [vmem:[%s7 + $0x38] sm:$0xff]
  %v2901 = vld [vmem:[%s7 + $0x40] sm:$0xff]
  %v2902 = vld [vmem:[%s7 + $0x48] sm:$0xff]
  %v2903 = vld [vmem:[%s7 + $0x50] sm:$0xff]
  %v2904 = vld [vmem:[%s7 + $0x58] sm:$0xff]
  %v2905 = vld [vmem:[%s7 + $0x60] sm:$0xff]
  %v2906 = vld [vmem:[%s7 + $0x68] sm:$0xff]
  %v2907 = vld [vmem:[%s7 + $0x70] sm:$0xff]
  %v2908 = vld [vmem:[%s7 + $0x78] sm:$0xff]
  %v2909 = vld [vmem:[%s8] sm:$0x3]
  %v2911 = vlaneseq
  %v2912 = vshrl.u32 %v2911, 7
  %v2913 = vsub.s32 0, %v2912
  %v2914 = vrot.slane %v2909, %v2913
  %v2915 = vlaneseq
  %v2916 = vshrl.u32 %v2915, 7
  %v2917 = vsub.s32 1, %v2916
  %v2918 = vrot.slane %v2909, %v2917
  %v2923 = vunpack.c.l.b16 %v2891
  %v2924 = vunpack.c.l.b16 %v2892
  %vm2925 = vcmask 1041409
  %v2926 = vsel %vm2925, %v2924, %v2923
  %v2927 = vpack.c.b16 %v2926, %v2926
  %v2945 = vunpack.c.l.b16 %v2893
  %v2946 = vunpack.c.h.b16 %v2893
  %v2947 = vunpack.c.l.b16 %v2894
  %v2948 = vunpack.c.h.b16 %v2894
  %v2949 = vunpack.c.l.b16 %v2895
  %v2950 = vunpack.c.h.b16 %v2895
  %v2951 = vunpack.c.l.b16 %v2896
  %v2952 = vunpack.c.h.b16 %v2896
  %v2953 = vunpack.c.l.b16 %v2897
  %v2954 = vunpack.c.h.b16 %v2897
  %v2955 = vunpack.c.l.b16 %v2898
  %v2956 = vunpack.c.h.b16 %v2898
  %v2957 = vunpack.c.l.b16 %v2899
  %v2958 = vunpack.c.h.b16 %v2899
  %v2959 = vunpack.c.l.b16 %v2900
  %v2960 = vunpack.c.h.b16 %v2900
  %v2961 = vunpack.c.l.b16 %v2901
  %v2962 = vunpack.c.h.b16 %v2901
  %v2963 = vunpack.c.l.b16 %v2902
  %v2964 = vunpack.c.h.b16 %v2902
  %v2965 = vunpack.c.l.b16 %v2903
  %v2966 = vunpack.c.h.b16 %v2903
  %v2967 = vunpack.c.l.b16 %v2904
  %v2968 = vunpack.c.h.b16 %v2904
  %v2969 = vunpack.c.l.b16 %v2905
  %v2970 = vunpack.c.h.b16 %v2905
  %v2971 = vunpack.c.l.b16 %v2906
  %v2972 = vunpack.c.h.b16 %v2906
  %v2973 = vunpack.c.l.b16 %v2907
  %v2974 = vunpack.c.h.b16 %v2907
  %v2975 = vunpack.c.l.b16 %v2908
  %v2976 = vunpack.c.h.b16 %v2908
  %v2977 = vpack.c.b16 %v2947, %v2945
  %v2978 = vpack.c.b16 %v2948, %v2946
  %v2979 = vpack.c.b16 %v2951, %v2949
  %v2980 = vpack.c.b16 %v2952, %v2950
  %v2981 = vpack.c.b16 %v2955, %v2953
  %v2982 = vpack.c.b16 %v2956, %v2954
  %v2983 = vpack.c.b16 %v2959, %v2957
  %v2984 = vpack.c.b16 %v2960, %v2958
  %v2985 = vpack.c.b16 %v2963, %v2961
  %v2986 = vpack.c.b16 %v2964, %v2962
  %v2987 = vpack.c.b16 %v2967, %v2965
  %v2988 = vpack.c.b16 %v2968, %v2966
  %v2989 = vpack.c.b16 %v2971, %v2969
  %v2990 = vpack.c.b16 %v2972, %v2970
  %v2991 = vpack.c.b16 %v2975, %v2973
  %v2992 = vpack.c.b16 %v2976, %v2974
  %3009 = vmatprep.subr.bf16.mxu0 %v2978
  %3010 = vmatpush1.bf16.msra.mxu0 %v2977
  %3011 = vmatprep.subr.bf16.mxu0 %v2980
  %3012 = vmatpush1.bf16.msra.mxu0 %v2979
  %3013 = vmatprep.subr.bf16.mxu0 %v2982
  %3014 = vmatpush1.bf16.msra.mxu0 %v2981
  %3015 = vmatprep.subr.bf16.mxu0 %v2984
  %3016 = vmatpush1.bf16.msra.mxu0 %v2983
  %3017 = vmatprep.subr.bf16.mxu0 %v2986
  %3018 = vmatpush1.bf16.msra.mxu0 %v2985
  %3019 = vmatprep.subr.bf16.mxu0 %v2988
  %3020 = vmatpush1.bf16.msra.mxu0 %v2987
  %3021 = vmatprep.subr.bf16.mxu0 %v2990
  %3022 = vmatpush1.bf16.msra.mxu0 %v2989
  %3023 = vmatprep.subr.bf16.mxu0 %v2992
  %3024 = vmatpush1.bf16.msra.mxu0 %v2991
  %3025 = vmatprep.subr.bf16.mxu0 0
  %3026 = vmatpush1.bf16.msra.mxu0 0
  %3027 = vmatprep.subr.bf16.mxu0 0
  %3028 = vmatpush1.bf16.msra.mxu0 0
  %3029 = vmatprep.subr.bf16.mxu0 0
  %3030 = vmatpush1.bf16.msra.mxu0 0
  %3031 = vmatprep.subr.bf16.mxu0 0
  %3032 = vmatpush1.bf16.msra.mxu0 0
  %3033 = vmatprep.subr.bf16.mxu0 0
  %3034 = vmatpush1.bf16.msra.mxu0 0
  %3035 = vmatprep.subr.bf16.mxu0 0
  %3036 = vmatpush1.bf16.msra.mxu0 0
  %3037 = vmatprep.subr.bf16.mxu0 0
  %3038 = vmatpush1.bf16.msra.mxu0 0
  %3039 = vmatprep.subr.bf16.mxu0 0
  %3040 = vmatpush1.bf16.msra.mxu0 0
  %3041 = vmatprep.mubr.bf16.mxu0 0
  %3042 = vmatmul.mubr.bf16.gmra.mrb[0].mxu0 %v2927
  %v3043 = vpop.f32.mrb[0].mxu0
  %v3044 = vadd.f32 %v2914, %v3043
  %v3045 = vpop.f32.mrb[0].mxu0
  %v3046 = vadd.f32 %v2918, %v3045
  %v3047 = vpop.f32.mrb[0].mxu0
  %v3048 = vpop.f32.mrb[0].mxu0
  %3049 = vdwg.mxu0
  %v3050 = vpack.c.bf16 %v1931, %v1931
  %v3051 = vpack.c.bf16 %v1932, %v1932
  %v3052 = vld [vmem:[%s9] sm:$0xf]
  %v3053 = vld [vmem:[%s9 + $0x4] sm:$0xf]
  %v3054 = vld [vmem:[%s9 + $0x8] sm:$0xf]
  %v3055 = vld [vmem:[%s9 + $0xc] sm:$0xf]
  %v3056 = vld [vmem:[%s9 + $0x10] sm:$0xf]
  %v3057 = vld [vmem:[%s9 + $0x14] sm:$0xf]
  %v3058 = vld [vmem:[%s9 + $0x18] sm:$0xf]
  %v3059 = vld [vmem:[%s9 + $0x1c] sm:$0xf]
  %v3060 = vld [vmem:[%s10] sm:$0x1]
  %v3062 = vlaneseq
  %v3063 = vshrl.u32 %v3062, 7
  %v3064 = vsub.s32 0, %v3063
  %v3065 = vrot.slane %v3060, %v3064
  %v3069 = vunpack.c.l.b16 %v3050
  %v3070 = vunpack.c.l.b16 %v3051
  %v3071 = vsel %vm2925, %v3070, %v3069
  %v3072 = vpack.c.b16 %v3071, %v3071
  %v3081 = vunpack.c.l.b16 %v3052
  %v3082 = vunpack.c.l.b16 %v3053
  %v3083 = vunpack.c.l.b16 %v3054
  %v3084 = vunpack.c.l.b16 %v3055
  %v3085 = vunpack.c.l.b16 %v3056
  %v3086 = vunpack.c.l.b16 %v3057
  %v3087 = vunpack.c.l.b16 %v3058
  %v3088 = vunpack.c.l.b16 %v3059
  %v3089 = vpack.c.b16 %v3082, %v3081
  %v3090 = vpack.c.b16 %v3084, %v3083
  %v3091 = vpack.c.b16 %v3086, %v3085
  %v3092 = vpack.c.b16 %v3088, %v3087
  %v3098 = vsel %vm1887, %v3072, 0
  %3100 = vmatprep.subr.bf16.mxu0 0
  %3101 = vmatpush1.bf16.msra.mxu0 %v3089
  %3102 = vmatprep.subr.bf16.mxu0 0
  %3103 = vmatpush1.bf16.msra.mxu0 %v3090
  %3104 = vmatprep.subr.bf16.mxu0 0
  %3105 = vmatpush1.bf16.msra.mxu0 %v3091
  %3106 = vmatprep.subr.bf16.mxu0 0
  %3107 = vmatpush1.bf16.msra.mxu0 %v3092
  %3108 = vmatprep.subr.bf16.mxu0 0
  %3109 = vmatpush1.bf16.msra.mxu0 0
  %3110 = vmatprep.subr.bf16.mxu0 0
  %3111 = vmatpush1.bf16.msra.mxu0 0
  %3112 = vmatprep.subr.bf16.mxu0 0
  %3113 = vmatpush1.bf16.msra.mxu0 0
  %3114 = vmatprep.subr.bf16.mxu0 0
  %3115 = vmatpush1.bf16.msra.mxu0 0
  %3116 = vmatprep.subr.bf16.mxu0 0
  %3117 = vmatpush1.bf16.msra.mxu0 0
  %3118 = vmatprep.subr.bf16.mxu0 0
  %3119 = vmatpush1.bf16.msra.mxu0 0
  %3120 = vmatprep.subr.bf16.mxu0 0
  %3121 = vmatpush1.bf16.msra.mxu0 0
  %3122 = vmatprep.subr.bf16.mxu0 0
  %3123 = vmatpush1.bf16.msra.mxu0 0
  %3124 = vmatprep.subr.bf16.mxu0 0
  %3125 = vmatpush1.bf16.msra.mxu0 0
  %3126 = vmatprep.subr.bf16.mxu0 0
  %3127 = vmatpush1.bf16.msra.mxu0 0
  %3128 = vmatprep.subr.bf16.mxu0 0
  %3129 = vmatpush1.bf16.msra.mxu0 0
  %3130 = vmatprep.subr.bf16.mxu0 0
  %3131 = vmatpush1.bf16.msra.mxu0 0
  %3132 = vmatprep.mubr.bf16.mxu0 0
  %3133 = vmatmul.mubr.bf16.gmra.mrb[0].mxu0 %v3098
  %v3134 = vpop.f32.mrb[0].mxu0
  %v3135 = vadd.f32 %v3065, %v3134
  %v3136 = vpop.f32.mrb[0].mxu0
  %v3137 = vpop.f32.mrb[0].mxu0
  %v3138 = vpop.f32.mrb[0].mxu0
  %3139 = vdwg.mxu0
  %v3140 = vxor.u32 %v3135, 2147483648
  %v3141 = vmul.f32 %v3140, 1.442695
  %v3142 = vpow.pop %v3141
  %v3143 = vadd.f32 %v3142, 1.0
  %v3144 = vrcp.pop %v3143
  %v3145 = vmul.f32 1.0, %v3144
  %v3146 = vmul.f32 %v3135, %v3135
  %3148 = vrot.lane.b32.xlu0 %v3146, 125
  %v3149 = vpop.permute.xlu0 %3148
  %vm3151 = vcmask 17408
  %v3152 = vsel %vm3151, %v3149, 0.0
  %3153 = vadd.xlane.f32.xlu0 %v3152
  %v3154 = vpop.xlane.xlu0 %3153
  %v3155 = vadd.f32 %v3154, 1e-08
  %v3156 = vrsqrt.pop %v3155
  %v3157 = vmul.f32 %v3135, %v3156
  %3158 = vst.msk [vmem:[%s21] sm:$0x3] %vm3151, %v3145
  %vm3159 = vcmask 42008
  %3160 = vst.msk [vmem:[%s21] sm:$0x3] %vm3159, %v3157
  %v3161 = vpack.c.bf16 %v3044, %v3044
  %v3162 = vpack.c.bf16 %v3046, %v3046
  %v3163 = vld [vmem:[%s11] sm:$0xf]
  %v3164 = vld [vmem:[%s11 + $0x4] sm:$0xf]
  %v3165 = vld [vmem:[%s11 + $0x8] sm:$0xf]
  %v3166 = vld [vmem:[%s11 + $0xc] sm:$0xf]
  %v3167 = vld [vmem:[%s11 + $0x10] sm:$0xf]
  %v3168 = vld [vmem:[%s11 + $0x14] sm:$0xf]
  %v3169 = vld [vmem:[%s11 + $0x18] sm:$0xf]
  %v3170 = vld [vmem:[%s11 + $0x1c] sm:$0xf]
  %v3171 = vld [vmem:[%s11 + $0x20] sm:$0xf]
  %v3172 = vld [vmem:[%s11 + $0x24] sm:$0xf]
  %v3173 = vld [vmem:[%s11 + $0x28] sm:$0xf]
  %v3174 = vld [vmem:[%s11 + $0x2c] sm:$0xf]
  %v3175 = vld [vmem:[%s11 + $0x30] sm:$0xf]
  %v3176 = vld [vmem:[%s11 + $0x34] sm:$0xf]
  %v3177 = vld [vmem:[%s11 + $0x38] sm:$0xf]
  %v3178 = vld [vmem:[%s11 + $0x3c] sm:$0xf]
  %v3179 = vld [vmem:[%s11 + $0x40] sm:$0xf]
  %v3180 = vld [vmem:[%s11 + $0x44] sm:$0xf]
  %v3181 = vld [vmem:[%s11 + $0x48] sm:$0xf]
  %v3182 = vld [vmem:[%s11 + $0x4c] sm:$0xf]
  %v3183 = vld [vmem:[%s11 + $0x50] sm:$0xf]
  %v3184 = vld [vmem:[%s11 + $0x54] sm:$0xf]
  %v3185 = vld [vmem:[%s11 + $0x58] sm:$0xf]
  %v3186 = vld [vmem:[%s11 + $0x5c] sm:$0xf]
  %v3187 = vld [vmem:[%s11 + $0x60] sm:$0xf]
  %v3188 = vld [vmem:[%s11 + $0x64] sm:$0xf]
  %v3189 = vld [vmem:[%s11 + $0x68] sm:$0xf]
  %v3190 = vld [vmem:[%s11 + $0x6c] sm:$0xf]
  %v3191 = vld [vmem:[%s11 + $0x70] sm:$0xf]
  %v3192 = vld [vmem:[%s11 + $0x74] sm:$0xf]
  %v3193 = vld [vmem:[%s11 + $0x78] sm:$0xf]
  %v3194 = vld [vmem:[%s11 + $0x7c] sm:$0xf]
  %v3195 = vld [vmem:[%s12] sm:$0x1]
  %v3197 = vlaneseq
  %v3198 = vshrl.u32 %v3197, 7
  %v3199 = vsub.s32 0, %v3198
  %v3200 = vrot.slane %v3195, %v3199
  %v3234 = vunpack.c.l.b16 %v3163
  %v3235 = vunpack.c.l.b16 %v3164
  %v3236 = vunpack.c.l.b16 %v3165
  %v3237 = vunpack.c.l.b16 %v3166
  %v3238 = vunpack.c.l.b16 %v3167
  %v3239 = vunpack.c.l.b16 %v3168
  %v3240 = vunpack.c.l.b16 %v3169
  %v3241 = vunpack.c.l.b16 %v3170
  %v3242 = vunpack.c.l.b16 %v3171
  %v3243 = vunpack.c.l.b16 %v3172
  %v3244 = vunpack.c.l.b16 %v3173
  %v3245 = vunpack.c.l.b16 %v3174
  %v3246 = vunpack.c.l.b16 %v3175
  %v3247 = vunpack.c.l.b16 %v3176
  %v3248 = vunpack.c.l.b16 %v3177
  %v3249 = vunpack.c.l.b16 %v3178
  %v3250 = vunpack.c.l.b16 %v3179
  %v3251 = vunpack.c.l.b16 %v3180
  %v3252 = vunpack.c.l.b16 %v3181
  %v3253 = vunpack.c.l.b16 %v3182
  %v3254 = vunpack.c.l.b16 %v3183
  %v3255 = vunpack.c.l.b16 %v3184
  %v3256 = vunpack.c.l.b16 %v3185
  %v3257 = vunpack.c.l.b16 %v3186
  %v3258 = vunpack.c.l.b16 %v3187
  %v3259 = vunpack.c.l.b16 %v3188
  %v3260 = vunpack.c.l.b16 %v3189
  %v3261 = vunpack.c.l.b16 %v3190
  %v3262 = vunpack.c.l.b16 %v3191
  %v3263 = vunpack.c.l.b16 %v3192
  %v3264 = vunpack.c.l.b16 %v3193
  %v3265 = vunpack.c.l.b16 %v3194
  %v3266 = vpack.c.b16 %v3235, %v3234
  %v3267 = vpack.c.b16 %v3237, %v3236
  %v3268 = vpack.c.b16 %v3239, %v3238
  %v3269 = vpack.c.b16 %v3241, %v3240
  %v3270 = vpack.c.b16 %v3243, %v3242
  %v3271 = vpack.c.b16 %v3245, %v3244
  %v3272 = vpack.c.b16 %v3247, %v3246
  %v3273 = vpack.c.b16 %v3249, %v3248
  %v3274 = vpack.c.b16 %v3251, %v3250
  %v3275 = vpack.c.b16 %v3253, %v3252
  %v3276 = vpack.c.b16 %v3255, %v3254
  %v3277 = vpack.c.b16 %v3257, %v3256
  %v3278 = vpack.c.b16 %v3259, %v3258
  %v3279 = vpack.c.b16 %v3261, %v3260
  %v3280 = vpack.c.b16 %v3263, %v3262
  %v3281 = vpack.c.b16 %v3265, %v3264
  %3298 = vmatprep.subr.bf16.mxu0 0
  %3299 = vmatpush1.bf16.msra.mxu0 %v3266
  %3300 = vmatprep.subr.bf16.mxu0 0
  %3301 = vmatpush1.bf16.msra.mxu0 %v3267
  %3302 = vmatprep.subr.bf16.mxu0 0
  %3303 = vmatpush1.bf16.msra.mxu0 %v3268
  %3304 = vmatprep.subr.bf16.mxu0 0
  %3305 = vmatpush1.bf16.msra.mxu0 %v3269
  %3306 = vmatprep.subr.bf16.mxu0 0
  %3307 = vmatpush1.bf16.msra.mxu0 %v3270
  %3308 = vmatprep.subr.bf16.mxu0 0
  %3309 = vmatpush1.bf16.msra.mxu0 %v3271
  %3310 = vmatprep.subr.bf16.mxu0 0
  %3311 = vmatpush1.bf16.msra.mxu0 %v3272
  %3312 = vmatprep.subr.bf16.mxu0 0
  %3313 = vmatpush1.bf16.msra.mxu0 %v3273
  %3314 = vmatprep.subr.bf16.mxu0 0
  %3315 = vmatpush1.bf16.msra.mxu0 %v3274
  %3316 = vmatprep.subr.bf16.mxu0 0
  %3317 = vmatpush1.bf16.msra.mxu0 %v3275
  %3318 = vmatprep.subr.bf16.mxu0 0
  %3319 = vmatpush1.bf16.msra.mxu0 %v3276
  %3320 = vmatprep.subr.bf16.mxu0 0
  %3321 = vmatpush1.bf16.msra.mxu0 %v3277
  %3322 = vmatprep.subr.bf16.mxu0 0
  %3323 = vmatpush1.bf16.msra.mxu0 %v3278
  %3324 = vmatprep.subr.bf16.mxu0 0
  %3325 = vmatpush1.bf16.msra.mxu0 %v3279
  %3326 = vmatprep.subr.bf16.mxu0 0
  %3327 = vmatpush1.bf16.msra.mxu0 %v3280
  %3328 = vmatprep.subr.bf16.mxu0 0
  %3329 = vmatpush1.bf16.msra.mxu0 %v3281
  %3330 = vmatprep.mubr.bf16.mxu0 %v3162
  %3331 = vmatmul.mubr.bf16.gmra.mrb[0].mxu0 %v3161
  %v3332 = vpop.f32.mrb[0].mxu0
  %v3333 = vadd.f32 %v3200, %v3332
  %v3334 = vpop.f32.mrb[0].mxu0
  %v3335 = vpop.f32.mrb[0].mxu0
  %v3336 = vpop.f32.mrb[0].mxu0
  %3337 = vdwg.mxu0
  %v3338 = vmax.f32 %v3333, 0.0
  %v3339 = vpack.c.bf16 %v3338, %v3338
  %v3340 = vld [vmem:[%s13] sm:$0xf]
  %v3341 = vld [vmem:[%s13 + $0x4] sm:$0xf]
  %v3342 = vld [vmem:[%s13 + $0x8] sm:$0xf]
  %v3343 = vld [vmem:[%s13 + $0xc] sm:$0xf]
  %v3344 = vld [vmem:[%s13 + $0x10] sm:$0xf]
  %v3345 = vld [vmem:[%s13 + $0x14] sm:$0xf]
  %v3346 = vld [vmem:[%s13 + $0x18] sm:$0xf]
  %v3347 = vld [vmem:[%s13 + $0x1c] sm:$0xf]
  %v3348 = vld [vmem:[%s13 + $0x20] sm:$0xf]
  %v3349 = vld [vmem:[%s13 + $0x24] sm:$0xf]
  %v3350 = vld [vmem:[%s13 + $0x28] sm:$0xf]
  %v3351 = vld [vmem:[%s13 + $0x2c] sm:$0xf]
  %v3352 = vld [vmem:[%s13 + $0x30] sm:$0xf]
  %v3353 = vld [vmem:[%s13 + $0x34] sm:$0xf]
  %v3354 = vld [vmem:[%s13 + $0x38] sm:$0xf]
  %v3355 = vld [vmem:[%s13 + $0x3c] sm:$0xf]
  %v3356 = vld [vmem:[%s14] sm:$0x1]
  %v3358 = vlaneseq
  %v3359 = vshrl.u32 %v3358, 7
  %v3360 = vsub.s32 0, %v3359
  %v3361 = vrot.slane %v3356, %v3360
  %v3379 = vunpack.c.l.b16 %v3340
  %v3380 = vunpack.c.l.b16 %v3341
  %v3381 = vunpack.c.l.b16 %v3342
  %v3382 = vunpack.c.l.b16 %v3343
  %v3383 = vunpack.c.l.b16 %v3344
  %v3384 = vunpack.c.l.b16 %v3345
  %v3385 = vunpack.c.l.b16 %v3346
  %v3386 = vunpack.c.l.b16 %v3347
  %v3387 = vunpack.c.l.b16 %v3348
  %v3388 = vunpack.c.l.b16 %v3349
  %v3389 = vunpack.c.l.b16 %v3350
  %v3390 = vunpack.c.l.b16 %v3351
  %v3391 = vunpack.c.l.b16 %v3352
  %v3392 = vunpack.c.l.b16 %v3353
  %v3393 = vunpack.c.l.b16 %v3354
  %v3394 = vunpack.c.l.b16 %v3355
  %v3395 = vpack.c.b16 %v3380, %v3379
  %v3396 = vpack.c.b16 %v3382, %v3381
  %v3397 = vpack.c.b16 %v3384, %v3383
  %v3398 = vpack.c.b16 %v3386, %v3385
  %v3399 = vpack.c.b16 %v3388, %v3387
  %v3400 = vpack.c.b16 %v3390, %v3389
  %v3401 = vpack.c.b16 %v3392, %v3391
  %v3402 = vpack.c.b16 %v3394, %v3393
  %3411 = vmatprep.subr.bf16.mxu0 0
  %3412 = vmatpush1.bf16.msra.mxu0 %v3395
  %3413 = vmatprep.subr.bf16.mxu0 0
  %3414 = vmatpush1.bf16.msra.mxu0 %v3396
  %3415 = vmatprep.subr.bf16.mxu0 0
  %3416 = vmatpush1.bf16.msra.mxu0 %v3397
  %3417 = vmatprep.subr.bf16.mxu0 0
  %3418 = vmatpush1.bf16.msra.mxu0 %v3398
  %3419 = vmatprep.subr.bf16.mxu0 0
  %3420 = vmatpush1.bf16.msra.mxu0 %v3399
  %3421 = vmatprep.subr.bf16.mxu0 0
  %3422 = vmatpush1.bf16.msra.mxu0 %v3400
  %3423 = vmatprep.subr.bf16.mxu0 0
  %3424 = vmatpush1.bf16.msra.mxu0 %v3401
  %3425 = vmatprep.subr.bf16.mxu0 0
  %3426 = vmatpush1.bf16.msra.mxu0 %v3402
  %3427 = vmatprep.subr.bf16.mxu0 0
  %3428 = vmatpush1.bf16.msra.mxu0 0
  %3429 = vmatprep.subr.bf16.mxu0 0
  %3430 = vmatpush1.bf16.msra.mxu0 0
  %3431 = vmatprep.subr.bf16.mxu0 0
  %3432 = vmatpush1.bf16.msra.mxu0 0
  %3433 = vmatprep.subr.bf16.mxu0 0
  %3434 = vmatpush1.bf16.msra.mxu0 0
  %3435 = vmatprep.subr.bf16.mxu0 0
  %3436 = vmatpush1.bf16.msra.mxu0 0
  %3437 = vmatprep.subr.bf16.mxu0 0
  %3438 = vmatpush1.bf16.msra.mxu0 0
  %3439 = vmatprep.subr.bf16.mxu0 0
  %3440 = vmatpush1.bf16.msra.mxu0 0
  %3441 = vmatprep.subr.bf16.mxu0 0
  %3442 = vmatpush1.bf16.msra.mxu0 0
  %3443 = vmatprep.mubr.bf16.mxu0 0
  %3444 = vmatmul.mubr.bf16.gmra.mrb[0].mxu0 %v3339
  %v3445 = vpop.f32.mrb[0].mxu0
  %v3446 = vadd.f32 %v3361, %v3445
  %v3447 = vpop.f32.mrb[0].mxu0
  %v3448 = vpop.f32.mrb[0].mxu0
  %v3449 = vpop.f32.mrb[0].mxu0
  %3450 = vdwg.mxu0
  %vm3451 = vcmask 517120
  %3452 = vst.msk [vmem:[%s20] sm:$0x3] %vm3451, %v3446
  %v3453 = vadd.f32 %v3446, 1.0
  %v3454 = vlaneseq
  %v3455 = vand.u32 %v3454, 127
  %vm3456 = vcmp.lt.s32.totalorder %v3455, 3
  %v3457 = vsel %vm3456, 0.0, %v3446
  %vm3458 = vcmask 467968
  %3459 = vst.msk [vmem:[#allocation6] sm:$0x3] %vm3458, %v3446
  %v3461 = vrot.slane %v3457, 6
  %vm3463 = vcmask 470018
  %3464 = vst.msk [vmem:[#allocation6] sm:$0xc] %vm3463, %v3461
  %v3465 = vld [vmem:[#allocation6] sm:$0xf]
  %v3466 = vpack.c.bf16 %v3465, %v3465
  %v3467 = vld [vmem:[%s15] sm:$0xff]
  %v3468 = vld [vmem:[%s15 + $0x8] sm:$0xff]
  %v3469 = vld [vmem:[%s15 + $0x10] sm:$0xff]
  %v3470 = vld [vmem:[%s15 + $0x18] sm:$0xff]
  %v3471 = vld [vmem:[%s15 + $0x20] sm:$0xff]
  %v3472 = vld [vmem:[%s15 + $0x28] sm:$0xff]
  %v3473 = vld [vmem:[%s15 + $0x30] sm:$0xff]
  %v3474 = vld [vmem:[%s15 + $0x38] sm:$0x11]
  %v3483 = vunpack.c.l.b16 %v3467
  %v3484 = vunpack.c.h.b16 %v3467
  %v3485 = vunpack.c.l.b16 %v3468
  %v3486 = vunpack.c.h.b16 %v3468
  %v3487 = vunpack.c.l.b16 %v3469
  %v3488 = vunpack.c.h.b16 %v3469
  %v3489 = vunpack.c.l.b16 %v3470
  %v3490 = vunpack.c.h.b16 %v3470
  %v3491 = vunpack.c.l.b16 %v3471
  %v3492 = vunpack.c.h.b16 %v3471
  %v3493 = vunpack.c.l.b16 %v3472
  %v3494 = vunpack.c.h.b16 %v3472
  %v3495 = vunpack.c.l.b16 %v3473
  %v3496 = vunpack.c.h.b16 %v3473
  %v3497 = vunpack.c.l.b16 %v3474
  %v3498 = vunpack.c.h.b16 %v3474
  %v3499 = vpack.c.b16 %v3485, %v3483
  %v3500 = vpack.c.b16 %v3486, %v3484
  %v3501 = vpack.c.b16 %v3489, %v3487
  %v3502 = vpack.c.b16 %v3490, %v3488
  %v3503 = vpack.c.b16 %v3493, %v3491
  %v3504 = vpack.c.b16 %v3494, %v3492
  %v3505 = vpack.c.b16 %v3497, %v3495
  %v3506 = vpack.c.b16 %v3498, %v3496
  %vm3513 = vcmask 474112
  %v3515 = vsel %vm3513, %v3466, 0
  %v3518 = vsel %vm416, %v3505, 0
  %v3521 = vsel %vm416, %v3506, 0
  %3523 = vmatprep.subr.bf16.mxu0 %v3500
  %3524 = vmatpush1.bf16.msra.mxu0 %v3499
  %3525 = vmatprep.subr.bf16.mxu0 %v3502
  %3526 = vmatpush1.bf16.msra.mxu0 %v3501
  %3527 = vmatprep.subr.bf16.mxu0 %v3504
  %3528 = vmatpush1.bf16.msra.mxu0 %v3503
  %3529 = vmatprep.subr.bf16.mxu0 %v3521
  %3530 = vmatpush1.bf16.msra.mxu0 %v3518
  %3531 = vmatprep.subr.bf16.mxu0 0
  %3532 = vmatpush1.bf16.msra.mxu0 0
  %3533 = vmatprep.subr.bf16.mxu0 0
  %3534 = vmatpush1.bf16.msra.mxu0 0
  %3535 = vmatprep.subr.bf16.mxu0 0
  %3536 = vmatpush1.bf16.msra.mxu0 0
  %3537 = vmatprep.subr.bf16.mxu0 0
  %3538 = vmatpush1.bf16.msra.mxu0 0
  %3539 = vmatprep.subr.bf16.mxu0 0
  %3540 = vmatpush1.bf16.msra.mxu0 0
  %3541 = vmatprep.subr.bf16.mxu0 0
  %3542 = vmatpush1.bf16.msra.mxu0 0
  %3543 = vmatprep.subr.bf16.mxu0 0
  %3544 = vmatpush1.bf16.msra.mxu0 0
  %3545 = vmatprep.subr.bf16.mxu0 0
  %3546 = vmatpush1.bf16.msra.mxu0 0
  %3547 = vmatprep.subr.bf16.mxu0 0
  %3548 = vmatpush1.bf16.msra.mxu0 0
  %3549 = vmatprep.subr.bf16.mxu0 0
  %3550 = vmatpush1.bf16.msra.mxu0 0
  %3551 = vmatprep.subr.bf16.mxu0 0
  %3552 = vmatpush1.bf16.msra.mxu0 0
  %3553 = vmatprep.subr.bf16.mxu0 0
  %3554 = vmatpush1.bf16.msra.mxu0 0
  %3555 = vmatprep.mubr.bf16.mxu0 0
  %3556 = vmatmul.mubr.bf16.gmra.mrb[0].mxu0 %v3515
  %v3557 = vpop.f32.mrb[0].mxu0
  %v3558 = vadd.f32 0.0, %v3557
  %v3559 = vpop.f32.mrb[0].mxu0
  %v3560 = vadd.f32 0.0, %v3559
  %v3561 = vpop.f32.mrb[0].mxu0
  %v3562 = vpop.f32.mrb[0].mxu0
  %3563 = vdwg.mxu0
  %v3564 = vld [vmem:[%s18] sm:$0x77]
  %3566 = vrot.lane.b32.xlu0 %v3446, 70
  %v3567 = vpop.permute.xlu0 %3566
  %v3569 = vcombine.high %v3564, %v3564
  %vm3570 = vcmask 23552
  %v3571 = vsel %vm3570, %v3567, 0
  %vm3573 = vcmask 1042432
  %v3574 = vsel %vm3573, %v3564, 0
  %v3576 = vsel %vm3573, %v3569, 0
  %3578 = vmatprep.subr.mxu0 %v3576
  %3579 = vmatpush1.msra.mxu0 %v3574
  %3580 = vmatprep.subr.mxu0 0.0
  %3581 = vmatpush1.msra.mxu0 0.0
  %3582 = vmatprep.subr.mxu0 0.0
  %3583 = vmatpush1.msra.mxu0 0.0
  %3584 = vmatprep.subr.mxu0 0.0
  %3585 = vmatpush1.msra.mxu0 0.0
  %3586 = vmatprep.subr.mxu0 0.0
  %3587 = vmatpush1.msra.mxu0 0.0
  %3588 = vmatprep.subr.mxu0 0.0
  %3589 = vmatpush1.msra.mxu0 0.0
  %3590 = vmatprep.subr.mxu0 0.0
  %3591 = vmatpush1.msra.mxu0 0.0
  %3592 = vmatprep.subr.mxu0 0.0
  %3593 = vmatpush1.msra.mxu0 0.0
  %3594 = vmatprep.subr.mxu0 0.0
  %3595 = vmatpush1.msra.mxu0 0.0
  %3596 = vmatprep.subr.mxu0 0.0
  %3597 = vmatpush1.msra.mxu0 0.0
  %3598 = vmatprep.subr.mxu0 0.0
  %3599 = vmatpush1.msra.mxu0 0.0
  %3600 = vmatprep.subr.mxu0 0.0
  %3601 = vmatpush1.msra.mxu0 0.0
  %3602 = vmatprep.subr.mxu0 0.0
  %3603 = vmatpush1.msra.mxu0 0.0
  %3604 = vmatprep.subr.mxu0 0.0
  %3605 = vmatpush1.msra.mxu0 0.0
  %3606 = vmatprep.subr.mxu0 0.0
  %3607 = vmatpush1.msra.mxu0 0.0
  %3608 = vmatprep.subr.mxu0 0.0
  %3609 = vmatpush1.msra.mxu0 0.0
  %3610 = vmatprep.subr.mxu0 0.0
  %3611 = vmatpush1.msra.mxu0 0.0
  %3612 = vmatprep.subr.mxu0 0.0
  %3613 = vmatpush1.msra.mxu0 0.0
  %3614 = vmatprep.subr.mxu0 0.0
  %3615 = vmatpush1.msra.mxu0 0.0
  %3616 = vmatprep.subr.mxu0 0.0
  %3617 = vmatpush1.msra.mxu0 0.0
  %3618 = vmatprep.subr.mxu0 0.0
  %3619 = vmatpush1.msra.mxu0 0.0
  %3620 = vmatprep.subr.mxu0 0.0
  %3621 = vmatpush1.msra.mxu0 0.0
  %3622 = vmatprep.subr.mxu0 0.0
  %3623 = vmatpush1.msra.mxu0 0.0
  %3624 = vmatprep.subr.mxu0 0.0
  %3625 = vmatpush1.msra.mxu0 0.0
  %3626 = vmatprep.subr.mxu0 0.0
  %3627 = vmatpush1.msra.mxu0 0.0
  %3628 = vmatprep.subr.mxu0 0.0
  %3629 = vmatpush1.msra.mxu0 0.0
  %3630 = vmatprep.subr.mxu0 0.0
  %3631 = vmatpush1.msra.mxu0 0.0
  %3632 = vmatprep.subr.mxu0 0.0
  %3633 = vmatpush1.msra.mxu0 0.0
  %3634 = vmatprep.subr.mxu0 0.0
  %3635 = vmatpush1.msra.mxu0 0.0
  %3636 = vmatprep.subr.mxu0 0.0
  %3637 = vmatpush1.msra.mxu0 0.0
  %3638 = vmatprep.subr.mxu0 0.0
  %3639 = vmatpush1.msra.mxu0 0.0
  %3640 = vmatprep.subr.mxu0 0.0
  %3641 = vmatpush1.msra.mxu0 0.0
  %3642 = vmatprep.mubr.f32.mxu0 0.0
  %3643 = vmatmul.mubr.f32.gmra.mrb[0].mxu0 %v3571
  %v3644 = vpop.f32.mrb[0].mxu0
  %v3645 = vadd.f32 0.0, %v3644
  %v3646 = vpop.f32.mrb[0].mxu0
  %v3647 = vadd.f32 0.0, %v3646
  %3648 = vdwg.mxu0
  %v3649 = vld [vmem:[%s16] sm:$0x3]
  %v3651 = vlaneseq
  %v3652 = vshrl.u32 %v3651, 7
  %v3653 = vsub.s32 0, %v3652
  %v3654 = vrot.slane %v3649, %v3653
  %v3655 = vlaneseq
  %v3656 = vshrl.u32 %v3655, 7
  %v3657 = vsub.s32 1, %v3656
  %v3658 = vrot.slane %v3649, %v3657
  %v3661 = vadd.f32 %v3654, %v3558
  %v3662 = vadd.f32 %v3658, %v3560
  %3664 = vset.pattern.permute.xlu0 61
  %3665 = vperm.xlu0 %3664, %v3453
  %v3666 = vpop.permute.xlu0 %3665
  %v3668 = vmul.f32 %v3661, %v3666
  %v3669 = vmul.f32 %v3662, %v3666
  %v3670 = vadd.f32 %v3668, %v3645
  %v3671 = vadd.f32 %v3669, %v3647
  %v3672 = vrot.slane %v3666, 6
  %v3674 = vmul.f32 %v3661, %v3672
  %v3675 = vmul.f32 %v3662, %v3672
  %v3678 = vrot.slane %v3645, 6
  %v3679 = vrot.slane %v3647, 6
  %v3682 = vadd.f32 %v3674, %v3678
  %v3683 = vadd.f32 %v3675, %v3679
  %v3686 = vcombine.low %v3670, %v3671
  %vm3688 = vcmask 1041408
  %vm3689 = vcmask 521220
  %vm3690 = vmor %vm3689, %vm3688
  %3691 = vst.msk [vmem:[#allocation6] sm:$0x33] %vm3690, %v3686
  %v3694 = vcombine.low %v3682, %v3683
  %vm3696 = vcmask 1043458
  %vm3697 = vcmask 523270
  %vm3698 = vmor %vm3697, %vm3696
  %3699 = vst.msk [vmem:[#allocation6] sm:$0xcc] %vm3698, %v3694
  %v3700 = vld [vmem:[#allocation6] sm:$0xff]
  %v3701 = vld [vmem:[%s17] sm:$0xff]
  %v3702 = vld [vmem:[%s17 + $0x8] sm:$0xff]
  %v3703 = vld [vmem:[%s17 + $0x10] sm:$0xff]
  %v3704 = vld [vmem:[%s17 + $0x18] sm:$0xff]
  %v3705 = vld [vmem:[%s17 + $0x20] sm:$0xff]
  %v3706 = vld [vmem:[%s17 + $0x28] sm:$0xff]
  %v3707 = vld [vmem:[%s17 + $0x30] sm:$0xff]
  %v3708 = vld [vmem:[%s17 + $0x38] sm:$0xff]
  %v3709 = vld [vmem:[%s17 + $0x40] sm:$0xff]
  %v3710 = vld [vmem:[%s17 + $0x48] sm:$0xff]
  %v3711 = vld [vmem:[%s17 + $0x50] sm:$0xff]
  %v3712 = vld [vmem:[%s17 + $0x58] sm:$0xff]
  %v3713 = vld [vmem:[%s17 + $0x60] sm:$0xff]
  %v3714 = vld [vmem:[%s17 + $0x68] sm:$0xff]
  %v3715 = vld [vmem:[%s17 + $0x70] sm:$0xff]
  %v3716 = vld [vmem:[%s17 + $0x78] sm:$0xff]
  %v3717 = vld [vmem:[%s17 + $0x80] sm:$0xff]
  %v3718 = vld [vmem:[%s17 + $0x88] sm:$0xff]
  %v3719 = vld [vmem:[%s17 + $0x90] sm:$0xff]
  %v3720 = vld [vmem:[%s17 + $0x98] sm:$0xff]
  %v3721 = vld [vmem:[%s17 + $0xa0] sm:$0xff]
  %v3722 = vld [vmem:[%s17 + $0xa8] sm:$0xff]
  %v3723 = vld [vmem:[%s17 + $0xb0] sm:$0xff]
  %v3724 = vld [vmem:[%s17 + $0xb8] sm:$0xff]
  %v3726 = vcombine.high %v3700, %v3700
  %v3727 = vsel %vm1887, %v3726, 0
  %3729 = vmatprep.subr.mxu0 0.0
  %3730 = vmatpush1.msra.mxu0 %v3701
  %3731 = vmatprep.subr.mxu0 0.0
  %3732 = vmatpush1.msra.mxu0 %v3702
  %3733 = vmatprep.subr.mxu0 0.0
  %3734 = vmatpush1.msra.mxu0 %v3703
  %3735 = vmatprep.subr.mxu0 0.0
  %3736 = vmatpush1.msra.mxu0 %v3704
  %3737 = vmatprep.subr.mxu0 0.0
  %3738 = vmatpush1.msra.mxu0 %v3705
  %3739 = vmatprep.subr.mxu0 0.0
  %3740 = vmatpush1.msra.mxu0 %v3706
  %3741 = vmatprep.subr.mxu0 0.0
  %3742 = vmatpush1.msra.mxu0 %v3707
  %3743 = vmatprep.subr.mxu0 0.0
  %3744 = vmatpush1.msra.mxu0 %v3708
  %3745 = vmatprep.subr.mxu0 0.0
  %3746 = vmatpush1.msra.mxu0 %v3709
  %3747 = vmatprep.subr.mxu0 0.0
  %3748 = vmatpush1.msra.mxu0 %v3710
  %3749 = vmatprep.subr.mxu0 0.0
  %3750 = vmatpush1.msra.mxu0 %v3711
  %3751 = vmatprep.subr.mxu0 0.0
  %3752 = vmatpush1.msra.mxu0 %v3712
  %3753 = vmatprep.subr.mxu0 0.0
  %3754 = vmatpush1.msra.mxu0 %v3713
  %3755 = vmatprep.subr.mxu0 0.0
  %3756 = vmatpush1.msra.mxu0 %v3714
  %3757 = vmatprep.subr.mxu0 0.0
  %3758 = vmatpush1.msra.mxu0 %v3715
  %3759 = vmatprep.subr.mxu0 0.0
  %3760 = vmatpush1.msra.mxu0 %v3716
  %3761 = vmatprep.subr.mxu0 0.0
  %3762 = vmatpush1.msra.mxu0 %v3717
  %3763 = vmatprep.subr.mxu0 0.0
  %3764 = vmatpush1.msra.mxu0 %v3718
  %3765 = vmatprep.subr.mxu0 0.0
  %3766 = vmatpush1.msra.mxu0 %v3719
  %3767 = vmatprep.subr.mxu0 0.0
  %3768 = vmatpush1.msra.mxu0 %v3720
  %3769 = vmatprep.subr.mxu0 0.0
  %3770 = vmatpush1.msra.mxu0 %v3721
  %3771 = vmatprep.subr.mxu0 0.0
  %3772 = vmatpush1.msra.mxu0 %v3722
  %3773 = vmatprep.subr.mxu0 0.0
  %3774 = vmatpush1.msra.mxu0 %v3723
  %3775 = vmatprep.subr.mxu0 0.0
  %3776 = vmatpush1.msra.mxu0 %v3724
  %3777 = vmatprep.subr.mxu0 0.0
  %3778 = vmatpush1.msra.mxu0 0.0
  %3779 = vmatprep.subr.mxu0 0.0
  %3780 = vmatpush1.msra.mxu0 0.0
  %3781 = vmatprep.subr.mxu0 0.0
  %3782 = vmatpush1.msra.mxu0 0.0
  %3783 = vmatprep.subr.mxu0 0.0
  %3784 = vmatpush1.msra.mxu0 0.0
  %3785 = vmatprep.subr.mxu0 0.0
  %3786 = vmatpush1.msra.mxu0 0.0
  %3787 = vmatprep.subr.mxu0 0.0
  %3788 = vmatpush1.msra.mxu0 0.0
  %3789 = vmatprep.subr.mxu0 0.0
  %3790 = vmatpush1.msra.mxu0 0.0
  %3791 = vmatprep.subr.mxu0 0.0
  %3792 = vmatpush1.msra.mxu0 0.0
  %3793 = vmatprep.mubr.f32.mxu0 %v3727
  %3794 = vmatmul.mubr.f32.gmra.mrb[0].mxu0 %v3700
  %v3795 = vpop.f32.mrb[0].mxu0
  %v3796 = vadd.f32 0.0, %v3795
  %v3797 = vpop.f32.mrb[0].mxu0
  %3798 = vdwg.mxu0
  %3800 = vrot.lane.b32.xlu0 %v3796, 101
  %v3801 = vpop.permute.xlu0 %3800
  %3803 = vst.msk [vmem:[#allocation6] sm:$0x3] %vm3151, %v3801
  %3804 = vrot.lane.b32.xlu0 %v3796, 49
  %v3805 = vpop.permute.xlu0 %3804
  %vm3807 = vcmask 19458
  %3808 = vst.msk [vmem:[#allocation6] sm:$0xc] %vm3807, %v3805
  %v3809 = vld [vmem:[#allocation6] sm:$0xf]
  %v3810 = vld [vmem:[%s18] sm:$0x77]
  %v3812 = vcombine.high %v3810, %v3810
  %v3814 = vsel %vm3570, %v3809, 0
  %v3816 = vsel %vm3573, %v3810, 0
  %v3818 = vsel %vm3573, %v3812, 0
  %3820 = vmatprep.subr.mxu0 %v3818
  %3821 = vmatpush1.msra.mxu0 %v3816
  %3822 = vmatprep.subr.mxu0 0.0
  %3823 = vmatpush1.msra.mxu0 0.0
  %3824 = vmatprep.subr.mxu0 0.0
  %3825 = vmatpush1.msra.mxu0 0.0
  %3826 = vmatprep.subr.mxu0 0.0
  %3827 = vmatpush1.msra.mxu0 0.0
  %3828 = vmatprep.subr.mxu0 0.0
  %3829 = vmatpush1.msra.mxu0 0.0
  %3830 = vmatprep.subr.mxu0 0.0
  %3831 = vmatpush1.msra.mxu0 0.0
  %3832 = vmatprep.subr.mxu0 0.0
  %3833 = vmatpush1.msra.mxu0 0.0
  %3834 = vmatprep.subr.mxu0 0.0
  %3835 = vmatpush1.msra.mxu0 0.0
  %3836 = vmatprep.subr.mxu0 0.0
  %3837 = vmatpush1.msra.mxu0 0.0
  %3838 = vmatprep.subr.mxu0 0.0
  %3839 = vmatpush1.msra.mxu0 0.0
  %3840 = vmatprep.subr.mxu0 0.0
  %3841 = vmatpush1.msra.mxu0 0.0
  %3842 = vmatprep.subr.mxu0 0.0
  %3843 = vmatpush1.msra.mxu0 0.0
  %3844 = vmatprep.subr.mxu0 0.0
  %3845 = vmatpush1.msra.mxu0 0.0
  %3846 = vmatprep.subr.mxu0 0.0
  %3847 = vmatpush1.msra.mxu0 0.0
  %3848 = vmatprep.subr.mxu0 0.0
  %3849 = vmatpush1.msra.mxu0 0.0
  %3850 = vmatprep.subr.mxu0 0.0
  %3851 = vmatpush1.msra.mxu0 0.0
  %3852 = vmatprep.subr.mxu0 0.0
  %3853 = vmatpush1.msra.mxu0 0.0
  %3854 = vmatprep.subr.mxu0 0.0
  %3855 = vmatpush1.msra.mxu0 0.0
  %3856 = vmatprep.subr.mxu0 0.0
  %3857 = vmatpush1.msra.mxu0 0.0
  %3858 = vmatprep.subr.mxu0 0.0
  %3859 = vmatpush1.msra.mxu0 0.0
  %3860 = vmatprep.subr.mxu0 0.0
  %3861 = vmatpush1.msra.mxu0 0.0
  %3862 = vmatprep.subr.mxu0 0.0
  %3863 = vmatpush1.msra.mxu0 0.0
  %3864 = vmatprep.subr.mxu0 0.0
  %3865 = vmatpush1.msra.mxu0 0.0
  %3866 = vmatprep.subr.mxu0 0.0
  %3867 = vmatpush1.msra.mxu0 0.0
  %3868 = vmatprep.subr.mxu0 0.0
  %3869 = vmatpush1.msra.mxu0 0.0
  %3870 = vmatprep.subr.mxu0 0.0
  %3871 = vmatpush1.msra.mxu0 0.0
  %3872 = vmatprep.subr.mxu0 0.0
  %3873 = vmatpush1.msra.mxu0 0.0
  %3874 = vmatprep.subr.mxu0 0.0
  %3875 = vmatpush1.msra.mxu0 0.0
  %3876 = vmatprep.subr.mxu0 0.0
  %3877 = vmatpush1.msra.mxu0 0.0
  %3878 = vmatprep.subr.mxu0 0.0
  %3879 = vmatpush1.msra.mxu0 0.0
  %3880 = vmatprep.subr.mxu0 0.0
  %3881 = vmatpush1.msra.mxu0 0.0
  %3882 = vmatprep.subr.mxu0 0.0
  %3883 = vmatpush1.msra.mxu0 0.0
  %3884 = vmatprep.mubr.f32.mxu0 0.0
  %3885 = vmatmul.mubr.f32.gmra.mrb[0].mxu0 %v3814
  %v3886 = vpop.f32.mrb[0].mxu0
  %v3887 = vadd.f32 0.0, %v3886
  %v3888 = vpop.f32.mrb[0].mxu0
  %v3889 = vadd.f32 0.0, %v3888
  %3890 = vdwg.mxu0
  %3892 = vrot.lane.b32.xlu0 %v3889, 64
  %v3893 = vpop.permute.xlu0 %3892
  %v3895 = vsub.f32 %v3796, %v3893
  %3896 = vst.msk [vmem:[%s22] sm:$0x3] %vm3451, %v3895
  %v3897 = vsub.f32 %v3670, %v3887
  %v3898 = vsub.f32 %v3671, %v3889
  %v3901 = vcombine.low %v3897, %v3898
  %v3903 = vunpack.c.l.s4 1983009808
  %v3904 = vunpack.c.0.s8 %v3903
  %v3905 = vlaneseq
  %v3906 = vshrl.u32 %v3905, 7
  %v3907 = vsub.s32 %v3904, %v3906
  %v3908 = vrot.slane %v3901, %v3907
  %vm3910 = vcmask 519170
  %vm3911 = vmor %vm3910, %vm3688
  %3912 = vst.msk [vmem:[%s23] sm:$0xf] %vm3911, %v3908
  %v3913 = vld [vmem:[%s19] sm:$0x3]
  %v3915 = vlaneseq
  %v3916 = vshrl.u32 %v3915, 7
  %v3917 = vsub.s32 0, %v3916
  %v3918 = vrot.slane %v3913, %v3917
  %v3919 = vlaneseq
  %v3920 = vshrl.u32 %v3919, 7
  %v3921 = vsub.s32 1, %v3920
  %v3922 = vrot.slane %v3913, %v3921
  %v3925 = vadd.f32 %v3897, %v3918
  %v3926 = vadd.f32 %v3898, %v3922
  %v3929 = vcombine.low %v3925, %v3926
  %v3931 = vunpack.c.l.s4 1983009808
  %v3932 = vunpack.c.0.s8 %v3931
  %v3933 = vlaneseq
  %v3934 = vshrl.u32 %v3933, 7
  %v3935 = vsub.s32 %v3932, %v3934
  %v3936 = vrot.slane %v3929, %v3935
  %3938 = vst.msk [vmem:[%s26] sm:$0xf] %vm3911, %v3936
  %v3939 = vsub.f32 %v3682, %v3887
  %v3940 = vsub.f32 %v3683, %v3889
  %v3943 = vcombine.low %v3939, %v3940
  %v3945 = vunpack.c.l.s4 1983009808
  %v3946 = vunpack.c.0.s8 %v3945
  %v3947 = vlaneseq
  %v3948 = vshrl.u32 %v3947, 7
  %v3949 = vsub.s32 %v3946, %v3948
  %v3950 = vrot.slane %v3943, %v3949
  %v3951 = vcombine.high %v3950, %v3950
  %3953 = vst.msk [vmem:[%s24] sm:$0xf] %vm3911, %v3951
  %v3954 = vsub.f32 %v3796, %v3889
  %3956 = vrot.lane.b32.xlu0 %v3954, 64
  %v3957 = vpop.permute.xlu0 %3956
  %3959 = vst.msk [vmem:[%s25 - $0x2] sm:$0xc] %vm3910, %v3957
  // Predicated region
  $region82: #{model_forward.1} parent=0 // pred_check
    _
  $region83: #{model_forward.1} parent=0 // pred_check_branch
    %3961 = sbr.rel (0) target = $region85
  $region84: #{model_forward.1} parent=0 // pred_region
    _
  $region85: #{model_forward.1} parent=0 // pred_fallthru
    _
  // Predicated region
  $region86: #{model_forward.1} parent=0 // pred_check
    _
  $region87: #{model_forward.1} parent=0 // pred_check_branch
    %3963 = sbr.rel (0) target = $region89
  $region88: #{model_forward.1} parent=0 // pred_region
    _
  $region89: #{model_forward.1} parent=0 // pred_fallthru
    _
  // Predicated region
  $region90: #{model_forward.1} parent=0 // pred_check
    _
  $region91: #{model_forward.1} parent=0 // pred_check_branch
    %3965 = sbr.rel (0) target = $region93
  $region92: #{model_forward.1} parent=0 // pred_region
    _
  $region93: #{model_forward.1} parent=0 // pred_fallthru
    _
  // Predicated region
  $region94: #{model_forward.1} parent=0 // pred_check
    _
  $region95: #{model_forward.1} parent=0 // pred_check_branch
    %3967 = sbr.rel (0) target = $region97
  $region96: #{model_forward.1} parent=0 // pred_region
    _
  $region97: #{model_forward.1} parent=0 // pred_fallthru
    _
  // Predicated region
  $region98: #{model_forward.1} parent=0 // pred_check
    _
  $region99: #{model_forward.1} parent=0 // pred_check_branch
    %3969 = sbr.rel (0) target = $region101
  $region100: #{model_forward.1} parent=0 // pred_region
    _
  $region101: #{model_forward.1} parent=0 // pred_fallthru
    _
  // Predicated region
  $region102: #{model_forward.1} parent=0 // pred_check
    _
  $region103: #{model_forward.1} parent=0 // pred_check_branch
    %3971 = sbr.rel (0) target = $region105
  $region104: #{model_forward.1} parent=0 // pred_region
    _
  $region105: #{model_forward.1} parent=0 // pred_fallthru
    _
  // Predicated region
  $region106: #{model_forward.1} parent=0 // pred_check
    _
  $region107: #{model_forward.1} parent=0 // pred_check_branch
    %3973 = sbr.rel (0) target = $region109
  $region108: #{model_forward.1} parent=0 // pred_region
    _
  $region109: #{model_forward.1} parent=0 // pred_fallthru
    _
  // Predicated region
  $region110: #{model_forward.1} parent=0 // pred_check
    _
  $region111: #{model_forward.1} parent=0 // pred_check_branch
    %3975 = sbr.rel (0) target = $region113
  $region112: #{model_forward.1} parent=0 // pred_region
    _
  $region113: #{model_forward.1} parent=0 // pred_fallthru
    _
  // Predicated region
  $region114: #{model_forward.1} parent=0 // pred_check
    _
  $region115: #{model_forward.1} parent=0 // pred_check_branch
    %3977 = sbr.rel (0) target = $region117
  $region116: #{model_forward.1} parent=0 // pred_region
    _
  $region117: #{model_forward.1} parent=0 // pred_fallthru
    _
  // Predicated region
  $region118: #{model_forward.1} parent=0 // pred_check
    _
  $region119: #{model_forward.1} parent=0 // pred_check_branch
    %3979 = sbr.rel (0) target = $region121
  $region120: #{model_forward.1} parent=0 // pred_region
    _
  $region121: #{model_forward.1} parent=0 // pred_fallthru
    _
  // Predicated region
  $region122: #{model_forward.1} parent=0 // pred_check
    _
  $region123: #{model_forward.1} parent=0 // pred_check_branch
    %3981 = sbr.rel (0) target = $region125
  $region124: #{model_forward.1} parent=0 // pred_region
    _
  $region125: #{model_forward.1} parent=0 // pred_fallthru
    _
  // Predicated region
  $region126: #{model_forward.1} parent=0 // pred_check
    _
  $region127: #{model_forward.1} parent=0 // pred_check_branch
    %3983 = sbr.rel (0) target = $region129
  $region128: #{model_forward.1} parent=0 // pred_region
    _
  $region129: #{model_forward.1} parent=0 // pred_fallthru
    _
  // Predicated region
  $region130: #{model_forward.1} parent=0 // pred_check
    _
  $region131: #{model_forward.1} parent=0 // pred_check_branch
    %3985 = sbr.rel (0) target = $region133
  $region132: #{model_forward.1} parent=0 // pred_region
    _
  $region133: #{model_forward.1} parent=0 // pred_fallthru
    _
  // Predicated region
  $region134: #{model_forward.1} parent=0 // pred_check
    _
  $region135: #{model_forward.1} parent=0 // pred_check_branch
    %3987 = sbr.rel (0) target = $region137
  $region136: #{model_forward.1} parent=0 // pred_region
    _
  $region137: #{model_forward.1} parent=0 // pred_fallthru
    _

</llo_original>
